<compile_context>
chip_gen: v7x
topology: tpu7x:2x2x1
jax: 0.10.0
libtpu: 0.0.40
codegen_flags: <defaults>
</compile_context>

<pallas_src>
import numpy as np
import jax
import jax.numpy as jnp
from jax.experimental import pallas as pl
from jax.experimental.pallas import tpu as pltpu


# ----------------------------------------------------------------------------
# Fixed geometry (32x32 input, three 5x5 SAME convs, three 2x2 pools).
# Flat activation layout per stage: lane index = oh*Wp + ow over the zero-
# padded (H+4)x(W+4) grid; channels (padded to 8/8/16/16) on sublanes.
# ----------------------------------------------------------------------------
_TAPS = [(kh, kw) for kh in range(5) for kw in range(5)]

_WP1, _L1, _L1C = 36, 31 * 36 + 32, 30 * 36 + 31   # stage 1: 36x36 padded grid
_WP2, _L2 = 20, 15 * 20 + 16                        # stage 2: 20x20 padded grid
_WP3, _L3 = 12, 7 * 12 + 8                          # stage 3: 12x12 padded grid


# ----------------------------------------------------------------------------
# The fused kernel: one grid step = one image through the whole network.
# ----------------------------------------------------------------------------
def _net_kernel(x_ref, w1_ref, b1_ref, sel1_ref,
                w2_ref, b2_ref, sel2_ref,
                w3_ref, b3_ref, sel3_ref,
                cmask_ref,
                fc1w_ref, fc1b_ref, fc2w_ref, fc2b_ref, fc3w_ref, fc3b_ref,
                o_ref, col1, col2, col3):
    f32 = jnp.float32
    bf16 = jnp.bfloat16

    # ---- stage 1: conv1 (3->6, SAME) -> maxpool(2,2) -> relu ---------------
    xv = x_ref[0]                                            # (8, 1296) bf16
    for t, (kh, kw) in enumerate(_TAPS):                     # in-kernel im2col
        off = kh * _WP1 + kw
        col1[t * 8:(t + 1) * 8, :] = xv[:, off:off + _L1]
    acc1 = jnp.dot(w1_ref[...], col1[...],
                   preferred_element_type=f32)               # (8, 1148)
    # 2x2 max over the 4 window positions (bias is per-channel -> commutes).
    m = jnp.maximum(
        jnp.maximum(acc1[:, 0:_L1C], acc1[:, 1:1 + _L1C]),
        jnp.maximum(acc1[:, _WP1:_WP1 + _L1C], acc1[:, _WP1 + 1:_WP1 + 1 + _L1C]))
    z1 = jnp.maximum(m + b1_ref[...], 0.0).astype(bf16)      # (8, 1111)
    # stride-2 select + repack into stage-2's zero-padded 20x20 flat grid.
    a2 = jnp.dot(z1, sel1_ref[...],
                 preferred_element_type=f32).astype(bf16)    # (8, 400)

    # ---- stage 2: conv2 (6->12, SAME) -> relu -> avgpool(2,2) --------------
    for t, (kh, kw) in enumerate(_TAPS):
        off = kh * _WP2 + kw
        col2[t * 8:(t + 1) * 8, :] = a2[:, off:off + _L2]
    acc2 = jnp.dot(w2_ref[...], col2[...],
                   preferred_element_type=f32)               # (16, 316)
    r2 = jnp.maximum(acc2 + b2_ref[...], 0.0).astype(bf16)
    # avg-pool weights (0.25) folded into the selection matrix.
    a3 = jnp.dot(r2, sel2_ref[...],
                 preferred_element_type=f32).astype(bf16)    # (16, 144)

    # ---- stage 3: conv3 (12->16, SAME) -> relu -> avgpool(2,2) -> flatten --
    for t, (kh, kw) in enumerate(_TAPS):
        off = kh * _WP3 + kw
        col3[t * 16:(t + 1) * 16, :] = a3[:, off:off + _L3]
    acc3 = jnp.dot(w3_ref[...], col3[...],
                   preferred_element_type=f32)               # (16, 92)
    r3 = jnp.maximum(acc3 + b3_ref[...], 0.0).astype(bf16)
    # pooled values broadcast to all 16 channel groups of the flatten index...
    out3 = jnp.dot(r3, sel3_ref[...],
                   preferred_element_type=f32)               # (16, 256)
    # ...then the per-channel block is picked with a 0/1 mask + sublane sum,
    # giving the FC input in torch's NCHW x.view(-1, 256) order.
    fc_in = jnp.sum(out3 * cmask_ref[...], axis=0,
                    keepdims=True).astype(bf16)              # (1, 256)

    # ---- fc1 -> relu -> fc2 -> relu -> fc3 (all VMEM-resident) -------------
    h = jnp.dot(fc_in, fc1w_ref[...], preferred_element_type=f32) + fc1b_ref[...]
    h = jnp.maximum(h, 0.0).astype(bf16)
    h = jnp.dot(h, fc2w_ref[...], preferred_element_type=f32) + fc2b_ref[...]
    h = jnp.maximum(h, 0.0).astype(bf16)
    out = jnp.dot(h, fc3w_ref[...], preferred_element_type=f32) + fc3b_ref[...]
    o_ref[0] = out                                           # (1, 10)


# ----------------------------------------------------------------------------
# Constant selection matrices (built once at init, host side).
#   src lane = oh*Wp + ow in the stage's conv-output flat grid
#   dst lane = (oh2+2)*Wp_next + (ow2+2) in the next stage's padded flat grid
# ----------------------------------------------------------------------------
def _make_sel_max(h, w, wp_next):
    """Stage 1: 0/1 selector (window max is computed before this matmul)."""
    wp = w + 4
    src_len = (h - 2) * wp + (w - 2) + 1
    dst_len = (h // 2 + 4) * wp_next
    sel = np.zeros((src_len, dst_len), np.float32)
    for oh2 in range(h // 2):
        for ow2 in range(w // 2):
            sel[(2 * oh2) * wp + 2 * ow2,
                (oh2 + 2) * wp_next + (ow2 + 2)] = 1.0
    return jnp.asarray(sel, jnp.bfloat16)


def _make_sel_avg(h, w, wp_next):
    """Stages 2: avg-pool weights (0.25) folded into the selector."""
    wp = w + 4
    src_len = (h - 1) * wp + w
    dst_len = (h // 2 + 4) * wp_next
    sel = np.zeros((src_len, dst_len), np.float32)
    for oh2 in range(h // 2):
        for ow2 in range(w // 2):
            dst = (oh2 + 2) * wp_next + (ow2 + 2)
            for ph in range(2):
                for pw in range(2):
                    sel[(2 * oh2 + ph) * wp + (2 * ow2 + pw), dst] = 0.25
    return jnp.asarray(sel, jnp.bfloat16)


def _make_sel_avg_fc(h, w, c):
    """Stage 3: avg-pool + emit directly into torch NCHW flatten columns
    (the same spatial pattern is repeated for every channel group; the kernel
    picks the matching channel row with a 0/1 mask)."""
    wp = w + 4
    h2, w2 = h // 2, w // 2
    src_len = (h - 1) * wp + w
    sel = np.zeros((src_len, c * h2 * w2), np.float32)
    for ch in range(c):
        for oh2 in range(h2):
            for ow2 in range(w2):
                dst = ch * (h2 * w2) + oh2 * w2 + ow2
                for ph in range(2):
                    for pw in range(2):
                        sel[(2 * oh2 + ph) * wp + (2 * ow2 + pw), dst] = 0.25
    return jnp.asarray(sel, jnp.bfloat16)


def _make_channel_mask(c, s):
    m = np.zeros((c, c * s), np.float32)
    for ch in range(c):
        m[ch, ch * s:(ch + 1) * s] = 1.0
    return jnp.asarray(m, jnp.float32)


# ----------------------------------------------------------------------------
# Parameter init (deterministic, synthetic) + one-time layout preparation.
# ----------------------------------------------------------------------------
def init_params():
    key = jax.random.PRNGKey(1234)
    ks = jax.random.split(key, 12)

    def conv_w(k, cout, cin, kk):
        s = 1.0 / np.sqrt(cin * kk * kk)
        return jax.random.uniform(k, (cout, cin, kk, kk), jnp.float32, -s, s)

    def lin_w(k, cout, cin):
        s = 1.0 / np.sqrt(cin)
        return jax.random.uniform(k, (cout, cin), jnp.float32, -s, s)

    def bias(k, n, fan_in):
        s = 1.0 / np.sqrt(fan_in)
        return jax.random.uniform(k, (n,), jnp.float32, -s, s)

    def prep_conv(w, bvec, cin_pad, cout_pad):
        # (Cout, Cin, 5, 5) -> (Cout_pad, 25*Cin_pad) bf16, K ordered
        # (kh, kw, cin) to match the in-kernel im2col row layout; channel pads
        # are zero so they contribute nothing.
        cout, cin, kk, _ = w.shape
        wt = jnp.transpose(w, (0, 2, 3, 1))
        wt = jnp.pad(wt, ((0, cout_pad - cout), (0, 0), (0, 0),
                          (0, cin_pad - cin)))
        wmat = wt.reshape(cout_pad, kk * kk * cin_pad).astype(jnp.bfloat16)
        bcol = jnp.pad(bvec, (0, cout_pad - cout)).reshape(cout_pad, 1)
        return wmat, bcol

    p = {}
    p["conv1_w"], p["conv1_b"] = prep_conv(conv_w(ks[0], 6, 3, 5),
                                           bias(ks[1], 6, 3 * 25), 8, 8)
    p["conv2_w"], p["conv2_b"] = prep_conv(conv_w(ks[2], 12, 6, 5),
                                           bias(ks[3], 12, 6 * 25), 8, 16)
    p["conv3_w"], p["conv3_b"] = prep_conv(conv_w(ks[4], 16, 12, 5),
                                           bias(ks[5], 16, 12 * 25), 16, 16)
    # pool/downsample/repack selection matrices + channel pick mask.
    p["sel1"] = _make_sel_max(32, 32, 20)        # (1111, 400)
    p["sel2"] = _make_sel_avg(16, 16, 12)        # (316, 144)
    p["sel3"] = _make_sel_avg_fc(8, 8, 16)       # (92, 256)
    p["cmask"] = _make_channel_mask(16, 16)      # (16, 256)
    # FC weights pre-transposed once at init; bf16 on the hot path.
    p["fc1_w"] = lin_w(ks[6], 120, 256).T.astype(jnp.bfloat16)
    p["fc1_b"] = bias(ks[7], 120, 256).reshape(1, 120)
    p["fc2_w"] = lin_w(ks[8], 84, 120).T.astype(jnp.bfloat16)
    p["fc2_b"] = bias(ks[9], 84, 120).reshape(1, 84)
    p["fc3_w"] = lin_w(ks[10], 10, 84).T.astype(jnp.bfloat16)
    p["fc3_b"] = bias(ks[11], 10, 84).reshape(1, 10)
    return p


# ----------------------------------------------------------------------------
# Forward pass: one pallas_call, grid over batch.
# ----------------------------------------------------------------------------
@jax.jit
def net_forward(x, params):
    b = x.shape[0]
    # Only remaining XLA glue: zero-pad channels (3->8) + spatial (+2 ring),
    # flatten the padded 36x36 grid onto lanes, cast bf16.
    xp = jnp.pad(x, ((0, 0), (0, 5), (2, 2), (2, 2)))
    xp = xp.reshape(b, 8, 36 * 36).astype(jnp.bfloat16)

    full = lambda i: (0, 0)
    out = pl.pallas_call(
        _net_kernel,
        out_shape=jax.ShapeDtypeStruct((b, 1, 10), jnp.float32),
        grid=(b,),
        in_specs=[
            pl.BlockSpec((1, 8, 36 * 36), lambda i: (i, 0, 0)),   # x
            pl.BlockSpec((8, 200), full),                         # conv1_w
            pl.BlockSpec((8, 1), full),                           # conv1_b
            pl.BlockSpec((_L1C, 400), full),                      # sel1
            pl.BlockSpec((16, 200), full),                        # conv2_w
            pl.BlockSpec((16, 1), full),                          # conv2_b
            pl.BlockSpec((_L2, 144), full),                       # sel2
            pl.BlockSpec((16, 400), full),                        # conv3_w
            pl.BlockSpec((16, 1), full),                          # conv3_b
            pl.BlockSpec((_L3, 256), full),                       # sel3
            pl.BlockSpec((16, 256), full),                        # cmask
            pl.BlockSpec((256, 120), full),                       # fc1_w
            pl.BlockSpec((1, 120), full),                         # fc1_b
            pl.BlockSpec((120, 84), full),                        # fc2_w
            pl.BlockSpec((1, 84), full),                          # fc2_b
            pl.BlockSpec((84, 10), full),                         # fc3_w
            pl.BlockSpec((1, 10), full),                          # fc3_b
        ],
        out_specs=pl.BlockSpec((1, 1, 10), lambda i: (i, 0, 0)),
        scratch_shapes=[
            pltpu.VMEM((200, _L1), jnp.bfloat16),   # im2col stage 1
            pltpu.VMEM((200, _L2), jnp.bfloat16),   # im2col stage 2
            pltpu.VMEM((400, _L3), jnp.bfloat16),   # im2col stage 3
        ],
        # ~3 MB total VMEM (inputs + double-buffering + scratch): well under
        # the default scoped limit on v5e/v6e/v7x, so no explicit override.
        compiler_params=pltpu.CompilerParams(
            dimension_semantics=("parallel",)),
    )(xp, params["conv1_w"], params["conv1_b"], params["sel1"],
      params["conv2_w"], params["conv2_b"], params["sel2"],
      params["conv3_w"], params["conv3_b"], params["sel3"],
      params["cmask"],
      params["fc1_w"], params["fc1_b"], params["fc2_w"], params["fc2_b"],
      params["fc3_w"], params["fc3_b"])
    return out.reshape(b, 10)


if __name__ == "__main__":
    key = jax.random.PRNGKey(0)
    x = jax.random.normal(key, (2, 3, 32, 32), jnp.float32)   # NCHW input
    params = init_params()
    out = net_forward(x, params)
    jax.block_until_ready(out)
    assert out.shape == (2, 10)
    assert bool(jnp.all(jnp.isfinite(out)))
    print("KERNEL_OK")
</pallas_src>

<mosaic_0001>
module attributes {stable_mosaic.version = 11 : i64} {
  func.func @_net_kernel(%arg0: i32, %arg1: memref<1x8x1296xbf16, #tpu.memory_space<vmem>>, %arg2: memref<8x200xbf16, #tpu.memory_space<vmem>>, %arg3: memref<8x1xf32, #tpu.memory_space<vmem>>, %arg4: memref<1111x400xbf16, #tpu.memory_space<vmem>>, %arg5: memref<16x200xbf16, #tpu.memory_space<vmem>>, %arg6: memref<16x1xf32, #tpu.memory_space<vmem>>, %arg7: memref<316x144xbf16, #tpu.memory_space<vmem>>, %arg8: memref<16x400xbf16, #tpu.memory_space<vmem>>, %arg9: memref<16x1xf32, #tpu.memory_space<vmem>>, %arg10: memref<92x256xbf16, #tpu.memory_space<vmem>>, %arg11: memref<16x256xf32, #tpu.memory_space<vmem>>, %arg12: memref<256x120xbf16, #tpu.memory_space<vmem>>, %arg13: memref<1x120xf32, #tpu.memory_space<vmem>>, %arg14: memref<120x84xbf16, #tpu.memory_space<vmem>>, %arg15: memref<1x84xf32, #tpu.memory_space<vmem>>, %arg16: memref<84x10xbf16, #tpu.memory_space<vmem>>, %arg17: memref<1x10xf32, #tpu.memory_space<vmem>>, %arg18: memref<1x1x10xf32, #tpu.memory_space<vmem>>, %arg19: memref<200x1148xbf16, #tpu.memory_space<vmem>>, %arg20: memref<200x316xbf16, #tpu.memory_space<vmem>>, %arg21: memref<400x92xbf16, #tpu.memory_space<vmem>>) attributes {dimension_semantics = [#tpu.dimension_semantics<parallel>], iteration_bounds = array<i64: 2>, scalar_prefetch = 0 : i64, scratch_operands = 3 : i64, tpu.core_type = #tpu.core_type<tc>, window_params = [{transform_indices = @transform_0, window_bounds = array<i64: 1, 8, 1296>}, {pipeline_mode = #tpu.pipeline_mode<synchronous>, transform_indices = @transform_1, window_bounds = array<i64: 8, 200>}, {pipeline_mode = #tpu.pipeline_mode<synchronous>, transform_indices = @transform_2, window_bounds = array<i64: 8, 1>}, {pipeline_mode = #tpu.pipeline_mode<synchronous>, transform_indices = @transform_3, window_bounds = array<i64: 1111, 400>}, {pipeline_mode = #tpu.pipeline_mode<synchronous>, transform_indices = @transform_4, window_bounds = array<i64: 16, 200>}, {pipeline_mode = #tpu.pipeline_mode<synchronous>, transform_indices = @transform_5, window_bounds = array<i64: 16, 1>}, {pipeline_mode = #tpu.pipeline_mode<synchronous>, transform_indices = @transform_6, window_bounds = array<i64: 316, 144>}, {pipeline_mode = #tpu.pipeline_mode<synchronous>, transform_indices = @transform_7, window_bounds = array<i64: 16, 400>}, {pipeline_mode = #tpu.pipeline_mode<synchronous>, transform_indices = @transform_8, window_bounds = array<i64: 16, 1>}, {pipeline_mode = #tpu.pipeline_mode<synchronous>, transform_indices = @transform_9, window_bounds = array<i64: 92, 256>}, {pipeline_mode = #tpu.pipeline_mode<synchronous>, transform_indices = @transform_10, window_bounds = array<i64: 16, 256>}, {pipeline_mode = #tpu.pipeline_mode<synchronous>, transform_indices = @transform_11, window_bounds = array<i64: 256, 120>}, {pipeline_mode = #tpu.pipeline_mode<synchronous>, transform_indices = @transform_12, window_bounds = array<i64: 1, 120>}, {pipeline_mode = #tpu.pipeline_mode<synchronous>, transform_indices = @transform_13, window_bounds = array<i64: 120, 84>}, {pipeline_mode = #tpu.pipeline_mode<synchronous>, transform_indices = @transform_14, window_bounds = array<i64: 1, 84>}, {pipeline_mode = #tpu.pipeline_mode<synchronous>, transform_indices = @transform_15, window_bounds = array<i64: 84, 10>}, {pipeline_mode = #tpu.pipeline_mode<synchronous>, transform_indices = @transform_16, window_bounds = array<i64: 1, 10>}, {transform_indices = @transform_17, window_bounds = array<i64: 1, 1, 10>}]} {
    %c0 = arith.constant 0 : index
    %c0_0 = arith.constant 0 : index
    %c0_1 = arith.constant 0 : index
    %0 = vector.load %arg1[%c0, %c0_0, %c0_1] : memref<1x8x1296xbf16, #tpu.memory_space<vmem>>, vector<1x8x1296xbf16>
    %1 = vector.shape_cast %0 : vector<1x8x1296xbf16> to vector<8x1296xbf16>
    %2 = vector.extract_strided_slice %1 {offsets = [0, 0], sizes = [8, 1148], strides = [1, 1]} : vector<8x1296xbf16> to vector<8x1148xbf16>
    %c0_2 = arith.constant 0 : index
    %c0_3 = arith.constant 0 : index
    %3 = vector.load %arg19[%c0_2, %c0_3] : memref<200x1148xbf16, #tpu.memory_space<vmem>>, vector<8x1148xbf16>
    tpu.vector_store %arg19[%c0_2, %c0_3], %2 {strides = array<i32>} : memref<200x1148xbf16, #tpu.memory_space<vmem>>, vector<8x1148xbf16>,
    %4 = vector.extract_strided_slice %1 {offsets = [0, 1], sizes = [8, 1148], strides = [1, 1]} : vector<8x1296xbf16> to vector<8x1148xbf16>
    %c8 = arith.constant 8 : index
    %c0_4 = arith.constant 0 : index
    %5 = vector.load %arg19[%c8, %c0_4] : memref<200x1148xbf16, #tpu.memory_space<vmem>>, vector<8x1148xbf16>
    tpu.vector_store %arg19[%c8, %c0_4], %4 {strides = array<i32>} : memref<200x1148xbf16, #tpu.memory_space<vmem>>, vector<8x1148xbf16>,
    %6 = vector.extract_strided_slice %1 {offsets = [0, 2], sizes = [8, 1148], strides = [1, 1]} : vector<8x1296xbf16> to vector<8x1148xbf16>
    %c16 = arith.constant 16 : index
    %c0_5 = arith.constant 0 : index
    %7 = vector.load %arg19[%c16, %c0_5] : memref<200x1148xbf16, #tpu.memory_space<vmem>>, vector<8x1148xbf16>
    tpu.vector_store %arg19[%c16, %c0_5], %6 {strides = array<i32>} : memref<200x1148xbf16, #tpu.memory_space<vmem>>, vector<8x1148xbf16>,
    %8 = vector.extract_strided_slice %1 {offsets = [0, 3], sizes = [8, 1148], strides = [1, 1]} : vector<8x1296xbf16> to vector<8x1148xbf16>
    %c24 = arith.constant 24 : index
    %c0_6 = arith.constant 0 : index
    %9 = vector.load %arg19[%c24, %c0_6] : memref<200x1148xbf16, #tpu.memory_space<vmem>>, vector<8x1148xbf16>
    tpu.vector_store %arg19[%c24, %c0_6], %8 {strides = array<i32>} : memref<200x1148xbf16, #tpu.memory_space<vmem>>, vector<8x1148xbf16>,
    %10 = vector.extract_strided_slice %1 {offsets = [0, 4], sizes = [8, 1148], strides = [1, 1]} : vector<8x1296xbf16> to vector<8x1148xbf16>
    %c32 = arith.constant 32 : index
    %c0_7 = arith.constant 0 : index
    %11 = vector.load %arg19[%c32, %c0_7] : memref<200x1148xbf16, #tpu.memory_space<vmem>>, vector<8x1148xbf16>
    tpu.vector_store %arg19[%c32, %c0_7], %10 {strides = array<i32>} : memref<200x1148xbf16, #tpu.memory_space<vmem>>, vector<8x1148xbf16>,
    %12 = vector.extract_strided_slice %1 {offsets = [0, 36], sizes = [8, 1148], strides = [1, 1]} : vector<8x1296xbf16> to vector<8x1148xbf16>
    %c40 = arith.constant 40 : index
    %c0_8 = arith.constant 0 : index
    %13 = vector.load %arg19[%c40, %c0_8] : memref<200x1148xbf16, #tpu.memory_space<vmem>>, vector<8x1148xbf16>
    tpu.vector_store %arg19[%c40, %c0_8], %12 {strides = array<i32>} : memref<200x1148xbf16, #tpu.memory_space<vmem>>, vector<8x1148xbf16>,
    %14 = vector.extract_strided_slice %1 {offsets = [0, 37], sizes = [8, 1148], strides = [1, 1]} : vector<8x1296xbf16> to vector<8x1148xbf16>
    %c48 = arith.constant 48 : index
    %c0_9 = arith.constant 0 : index
    %15 = vector.load %arg19[%c48, %c0_9] : memref<200x1148xbf16, #tpu.memory_space<vmem>>, vector<8x1148xbf16>
    tpu.vector_store %arg19[%c48, %c0_9], %14 {strides = array<i32>} : memref<200x1148xbf16, #tpu.memory_space<vmem>>, vector<8x1148xbf16>,
    %16 = vector.extract_strided_slice %1 {offsets = [0, 38], sizes = [8, 1148], strides = [1, 1]} : vector<8x1296xbf16> to vector<8x1148xbf16>
    %c56 = arith.constant 56 : index
    %c0_10 = arith.constant 0 : index
    %17 = vector.load %arg19[%c56, %c0_10] : memref<200x1148xbf16, #tpu.memory_space<vmem>>, vector<8x1148xbf16>
    tpu.vector_store %arg19[%c56, %c0_10], %16 {strides = array<i32>} : memref<200x1148xbf16, #tpu.memory_space<vmem>>, vector<8x1148xbf16>,
    %18 = vector.extract_strided_slice %1 {offsets = [0, 39], sizes = [8, 1148], strides = [1, 1]} : vector<8x1296xbf16> to vector<8x1148xbf16>
    %c64 = arith.constant 64 : index
    %c0_11 = arith.constant 0 : index
    %19 = vector.load %arg19[%c64, %c0_11] : memref<200x1148xbf16, #tpu.memory_space<vmem>>, vector<8x1148xbf16>
    tpu.vector_store %arg19[%c64, %c0_11], %18 {strides = array<i32>} : memref<200x1148xbf16, #tpu.memory_space<vmem>>, vector<8x1148xbf16>,
    %20 = vector.extract_strided_slice %1 {offsets = [0, 40], sizes = [8, 1148], strides = [1, 1]} : vector<8x1296xbf16> to vector<8x1148xbf16>
    %c72 = arith.constant 72 : index
    %c0_12 = arith.constant 0 : index
    %21 = vector.load %arg19[%c72, %c0_12] : memref<200x1148xbf16, #tpu.memory_space<vmem>>, vector<8x1148xbf16>
    tpu.vector_store %arg19[%c72, %c0_12], %20 {strides = array<i32>} : memref<200x1148xbf16, #tpu.memory_space<vmem>>, vector<8x1148xbf16>,
    %22 = vector.extract_strided_slice %1 {offsets = [0, 72], sizes = [8, 1148], strides = [1, 1]} : vector<8x1296xbf16> to vector<8x1148xbf16>
    %c80 = arith.constant 80 : index
    %c0_13 = arith.constant 0 : index
    %23 = vector.load %arg19[%c80, %c0_13] : memref<200x1148xbf16, #tpu.memory_space<vmem>>, vector<8x1148xbf16>
    tpu.vector_store %arg19[%c80, %c0_13], %22 {strides = array<i32>} : memref<200x1148xbf16, #tpu.memory_space<vmem>>, vector<8x1148xbf16>,
    %24 = vector.extract_strided_slice %1 {offsets = [0, 73], sizes = [8, 1148], strides = [1, 1]} : vector<8x1296xbf16> to vector<8x1148xbf16>
    %c88 = arith.constant 88 : index
    %c0_14 = arith.constant 0 : index
    %25 = vector.load %arg19[%c88, %c0_14] : memref<200x1148xbf16, #tpu.memory_space<vmem>>, vector<8x1148xbf16>
    tpu.vector_store %arg19[%c88, %c0_14], %24 {strides = array<i32>} : memref<200x1148xbf16, #tpu.memory_space<vmem>>, vector<8x1148xbf16>,
    %26 = vector.extract_strided_slice %1 {offsets = [0, 74], sizes = [8, 1148], strides = [1, 1]} : vector<8x1296xbf16> to vector<8x1148xbf16>
    %c96 = arith.constant 96 : index
    %c0_15 = arith.constant 0 : index
    %27 = vector.load %arg19[%c96, %c0_15] : memref<200x1148xbf16, #tpu.memory_space<vmem>>, vector<8x1148xbf16>
    tpu.vector_store %arg19[%c96, %c0_15], %26 {strides = array<i32>} : memref<200x1148xbf16, #tpu.memory_space<vmem>>, vector<8x1148xbf16>,
    %28 = vector.extract_strided_slice %1 {offsets = [0, 75], sizes = [8, 1148], strides = [1, 1]} : vector<8x1296xbf16> to vector<8x1148xbf16>
    %c104 = arith.constant 104 : index
    %c0_16 = arith.constant 0 : index
    %29 = vector.load %arg19[%c104, %c0_16] : memref<200x1148xbf16, #tpu.memory_space<vmem>>, vector<8x1148xbf16>
    tpu.vector_store %arg19[%c104, %c0_16], %28 {strides = array<i32>} : memref<200x1148xbf16, #tpu.memory_space<vmem>>, vector<8x1148xbf16>,
    %30 = vector.extract_strided_slice %1 {offsets = [0, 76], sizes = [8, 1148], strides = [1, 1]} : vector<8x1296xbf16> to vector<8x1148xbf16>
    %c112 = arith.constant 112 : index
    %c0_17 = arith.constant 0 : index
    %31 = vector.load %arg19[%c112, %c0_17] : memref<200x1148xbf16, #tpu.memory_space<vmem>>, vector<8x1148xbf16>
    tpu.vector_store %arg19[%c112, %c0_17], %30 {strides = array<i32>} : memref<200x1148xbf16, #tpu.memory_space<vmem>>, vector<8x1148xbf16>,
    %32 = vector.extract_strided_slice %1 {offsets = [0, 108], sizes = [8, 1148], strides = [1, 1]} : vector<8x1296xbf16> to vector<8x1148xbf16>
    %c120 = arith.constant 120 : index
    %c0_18 = arith.constant 0 : index
    %33 = vector.load %arg19[%c120, %c0_18] : memref<200x1148xbf16, #tpu.memory_space<vmem>>, vector<8x1148xbf16>
    tpu.vector_store %arg19[%c120, %c0_18], %32 {strides = array<i32>} : memref<200x1148xbf16, #tpu.memory_space<vmem>>, vector<8x1148xbf16>,
    %34 = vector.extract_strided_slice %1 {offsets = [0, 109], sizes = [8, 1148], strides = [1, 1]} : vector<8x1296xbf16> to vector<8x1148xbf16>
    %c128 = arith.constant 128 : index
    %c0_19 = arith.constant 0 : index
    %35 = vector.load %arg19[%c128, %c0_19] : memref<200x1148xbf16, #tpu.memory_space<vmem>>, vector<8x1148xbf16>
    tpu.vector_store %arg19[%c128, %c0_19], %34 {strides = array<i32>} : memref<200x1148xbf16, #tpu.memory_space<vmem>>, vector<8x1148xbf16>,
    %36 = vector.extract_strided_slice %1 {offsets = [0, 110], sizes = [8, 1148], strides = [1, 1]} : vector<8x1296xbf16> to vector<8x1148xbf16>
    %c136 = arith.constant 136 : index
    %c0_20 = arith.constant 0 : index
    %37 = vector.load %arg19[%c136, %c0_20] : memref<200x1148xbf16, #tpu.memory_space<vmem>>, vector<8x1148xbf16>
    tpu.vector_store %arg19[%c136, %c0_20], %36 {strides = array<i32>} : memref<200x1148xbf16, #tpu.memory_space<vmem>>, vector<8x1148xbf16>,
    %38 = vector.extract_strided_slice %1 {offsets = [0, 111], sizes = [8, 1148], strides = [1, 1]} : vector<8x1296xbf16> to vector<8x1148xbf16>
    %c144 = arith.constant 144 : index
    %c0_21 = arith.constant 0 : index
    %39 = vector.load %arg19[%c144, %c0_21] : memref<200x1148xbf16, #tpu.memory_space<vmem>>, vector<8x1148xbf16>
    tpu.vector_store %arg19[%c144, %c0_21], %38 {strides = array<i32>} : memref<200x1148xbf16, #tpu.memory_space<vmem>>, vector<8x1148xbf16>,
    %40 = vector.extract_strided_slice %1 {offsets = [0, 112], sizes = [8, 1148], strides = [1, 1]} : vector<8x1296xbf16> to vector<8x1148xbf16>
    %c152 = arith.constant 152 : index
    %c0_22 = arith.constant 0 : index
    %41 = vector.load %arg19[%c152, %c0_22] : memref<200x1148xbf16, #tpu.memory_space<vmem>>, vector<8x1148xbf16>
    tpu.vector_store %arg19[%c152, %c0_22], %40 {strides = array<i32>} : memref<200x1148xbf16, #tpu.memory_space<vmem>>, vector<8x1148xbf16>,
    %42 = vector.extract_strided_slice %1 {offsets = [0, 144], sizes = [8, 1148], strides = [1, 1]} : vector<8x1296xbf16> to vector<8x1148xbf16>
    %c160 = arith.constant 160 : index
    %c0_23 = arith.constant 0 : index
    %43 = vector.load %arg19[%c160, %c0_23] : memref<200x1148xbf16, #tpu.memory_space<vmem>>, vector<8x1148xbf16>
    tpu.vector_store %arg19[%c160, %c0_23], %42 {strides = array<i32>} : memref<200x1148xbf16, #tpu.memory_space<vmem>>, vector<8x1148xbf16>,
    %44 = vector.extract_strided_slice %1 {offsets = [0, 145], sizes = [8, 1148], strides = [1, 1]} : vector<8x1296xbf16> to vector<8x1148xbf16>
    %c168 = arith.constant 168 : index
    %c0_24 = arith.constant 0 : index
    %45 = vector.load %arg19[%c168, %c0_24] : memref<200x1148xbf16, #tpu.memory_space<vmem>>, vector<8x1148xbf16>
    tpu.vector_store %arg19[%c168, %c0_24], %44 {strides = array<i32>} : memref<200x1148xbf16, #tpu.memory_space<vmem>>, vector<8x1148xbf16>,
    %46 = vector.extract_strided_slice %1 {offsets = [0, 146], sizes = [8, 1148], strides = [1, 1]} : vector<8x1296xbf16> to vector<8x1148xbf16>
    %c176 = arith.constant 176 : index
    %c0_25 = arith.constant 0 : index
    %47 = vector.load %arg19[%c176, %c0_25] : memref<200x1148xbf16, #tpu.memory_space<vmem>>, vector<8x1148xbf16>
    tpu.vector_store %arg19[%c176, %c0_25], %46 {strides = array<i32>} : memref<200x1148xbf16, #tpu.memory_space<vmem>>, vector<8x1148xbf16>,
    %48 = vector.extract_strided_slice %1 {offsets = [0, 147], sizes = [8, 1148], strides = [1, 1]} : vector<8x1296xbf16> to vector<8x1148xbf16>
    %c184 = arith.constant 184 : index
    %c0_26 = arith.constant 0 : index
    %49 = vector.load %arg19[%c184, %c0_26] : memref<200x1148xbf16, #tpu.memory_space<vmem>>, vector<8x1148xbf16>
    tpu.vector_store %arg19[%c184, %c0_26], %48 {strides = array<i32>} : memref<200x1148xbf16, #tpu.memory_space<vmem>>, vector<8x1148xbf16>,
    %50 = vector.extract_strided_slice %1 {offsets = [0, 148], sizes = [8, 1148], strides = [1, 1]} : vector<8x1296xbf16> to vector<8x1148xbf16>
    %c192 = arith.constant 192 : index
    %c0_27 = arith.constant 0 : index
    %51 = vector.load %arg19[%c192, %c0_27] : memref<200x1148xbf16, #tpu.memory_space<vmem>>, vector<8x1148xbf16>
    tpu.vector_store %arg19[%c192, %c0_27], %50 {strides = array<i32>} : memref<200x1148xbf16, #tpu.memory_space<vmem>>, vector<8x1148xbf16>,
    %c0_28 = arith.constant 0 : index
    %c0_29 = arith.constant 0 : index
    %52 = vector.load %arg2[%c0_28, %c0_29] : memref<8x200xbf16, #tpu.memory_space<vmem>>, vector<8x200xbf16>
    %c0_30 = arith.constant 0 : index
    %c0_31 = arith.constant 0 : index
    %53 = vector.load %arg19[%c0_30, %c0_31] : memref<200x1148xbf16, #tpu.memory_space<vmem>>, vector<200x1148xbf16>
    %cst = arith.constant dense<0.000000e+00> : vector<8x1148xf32>
    %54 = tpu.matmul %52, %53, %cst {dimension_numbers = #tpu.dot_dimension_numbers<[1], [0], [0], [1], [0, 0, 1, 1], [], []>} : vector<8x200xbf16>, vector<200x1148xbf16>, vector<8x1148xf32> -> vector<8x1148xf32>
    %55 = vector.extract_strided_slice %54 {offsets = [0, 0], sizes = [8, 1111], strides = [1, 1]} : vector<8x1148xf32> to vector<8x1111xf32>
    %56 = vector.extract_strided_slice %54 {offsets = [0, 1], sizes = [8, 1111], strides = [1, 1]} : vector<8x1148xf32> to vector<8x1111xf32>
    %57 = arith.maximumf %55, %56 : vector<8x1111xf32>
    %58 = vector.extract_strided_slice %54 {offsets = [0, 36], sizes = [8, 1111], strides = [1, 1]} : vector<8x1148xf32> to vector<8x1111xf32>
    %59 = vector.extract_strided_slice %54 {offsets = [0, 37], sizes = [8, 1111], strides = [1, 1]} : vector<8x1148xf32> to vector<8x1111xf32>
    %60 = arith.maximumf %58, %59 : vector<8x1111xf32>
    %61 = arith.maximumf %57, %60 : vector<8x1111xf32>
    %c0_32 = arith.constant 0 : index
    %c0_33 = arith.constant 0 : index
    %62 = vector.load %arg3[%c0_32, %c0_33] : memref<8x1xf32, #tpu.memory_space<vmem>>, vector<8x1xf32>
    %63 = vector.broadcast %62 : vector<8x1xf32> to vector<8x1111xf32>
    %64 = arith.addf %61, %63 : vector<8x1111xf32>
    %cst_34 = arith.constant 0.000000e+00 : f32
    %65 = vector.broadcast %cst_34 : f32 to vector<8x1111xf32>
    %66 = arith.maximumf %64, %65 : vector<8x1111xf32>
    %67 = arith.truncf %66 : vector<8x1111xf32> to vector<8x1111xbf16>
    %c0_35 = arith.constant 0 : index
    %c0_36 = arith.constant 0 : index
    %68 = vector.load %arg4[%c0_35, %c0_36] : memref<1111x400xbf16, #tpu.memory_space<vmem>>, vector<1111x400xbf16>
    %cst_37 = arith.constant dense<0.000000e+00> : vector<8x400xf32>
    %69 = tpu.matmul %67, %68, %cst_37 {dimension_numbers = #tpu.dot_dimension_numbers<[1], [0], [0], [1], [0, 0, 1, 1], [], []>} : vector<8x1111xbf16>, vector<1111x400xbf16>, vector<8x400xf32> -> vector<8x400xf32>
    %70 = arith.truncf %69 : vector<8x400xf32> to vector<8x400xbf16>
    %71 = vector.extract_strided_slice %70 {offsets = [0, 0], sizes = [8, 316], strides = [1, 1]} : vector<8x400xbf16> to vector<8x316xbf16>
    %c0_38 = arith.constant 0 : index
    %c0_39 = arith.constant 0 : index
    %72 = vector.load %arg20[%c0_38, %c0_39] : memref<200x316xbf16, #tpu.memory_space<vmem>>, vector<8x316xbf16>
    tpu.vector_store %arg20[%c0_38, %c0_39], %71 {strides = array<i32>} : memref<200x316xbf16, #tpu.memory_space<vmem>>, vector<8x316xbf16>,
    %73 = vector.extract_strided_slice %70 {offsets = [0, 1], sizes = [8, 316], strides = [1, 1]} : vector<8x400xbf16> to vector<8x316xbf16>
    %c8_40 = arith.constant 8 : index
    %c0_41 = arith.constant 0 : index
    %74 = vector.load %arg20[%c8_40, %c0_41] : memref<200x316xbf16, #tpu.memory_space<vmem>>, vector<8x316xbf16>
    tpu.vector_store %arg20[%c8_40, %c0_41], %73 {strides = array<i32>} : memref<200x316xbf16, #tpu.memory_space<vmem>>, vector<8x316xbf16>,
    %75 = vector.extract_strided_slice %70 {offsets = [0, 2], sizes = [8, 316], strides = [1, 1]} : vector<8x400xbf16> to vector<8x316xbf16>
    %c16_42 = arith.constant 16 : index
    %c0_43 = arith.constant 0 : index
    %76 = vector.load %arg20[%c16_42, %c0_43] : memref<200x316xbf16, #tpu.memory_space<vmem>>, vector<8x316xbf16>
    tpu.vector_store %arg20[%c16_42, %c0_43], %75 {strides = array<i32>} : memref<200x316xbf16, #tpu.memory_space<vmem>>, vector<8x316xbf16>,
    %77 = vector.extract_strided_slice %70 {offsets = [0, 3], sizes = [8, 316], strides = [1, 1]} : vector<8x400xbf16> to vector<8x316xbf16>
    %c24_44 = arith.constant 24 : index
    %c0_45 = arith.constant 0 : index
    %78 = vector.load %arg20[%c24_44, %c0_45] : memref<200x316xbf16, #tpu.memory_space<vmem>>, vector<8x316xbf16>
    tpu.vector_store %arg20[%c24_44, %c0_45], %77 {strides = array<i32>} : memref<200x316xbf16, #tpu.memory_space<vmem>>, vector<8x316xbf16>,
    %79 = vector.extract_strided_slice %70 {offsets = [0, 4], sizes = [8, 316], strides = [1, 1]} : vector<8x400xbf16> to vector<8x316xbf16>
    %c32_46 = arith.constant 32 : index
    %c0_47 = arith.constant 0 : index
    %80 = vector.load %arg20[%c32_46, %c0_47] : memref<200x316xbf16, #tpu.memory_space<vmem>>, vector<8x316xbf16>
    tpu.vector_store %arg20[%c32_46, %c0_47], %79 {strides = array<i32>} : memref<200x316xbf16, #tpu.memory_space<vmem>>, vector<8x316xbf16>,
    %81 = vector.extract_strided_slice %70 {offsets = [0, 20], sizes = [8, 316], strides = [1, 1]} : vector<8x400xbf16> to vector<8x316xbf16>
    %c40_48 = arith.constant 40 : index
    %c0_49 = arith.constant 0 : index
    %82 = vector.load %arg20[%c40_48, %c0_49] : memref<200x316xbf16, #tpu.memory_space<vmem>>, vector<8x316xbf16>
    tpu.vector_store %arg20[%c40_48, %c0_49], %81 {strides = array<i32>} : memref<200x316xbf16, #tpu.memory_space<vmem>>, vector<8x316xbf16>,
    %83 = vector.extract_strided_slice %70 {offsets = [0, 21], sizes = [8, 316], strides = [1, 1]} : vector<8x400xbf16> to vector<8x316xbf16>
    %c48_50 = arith.constant 48 : index
    %c0_51 = arith.constant 0 : index
    %84 = vector.load %arg20[%c48_50, %c0_51] : memref<200x316xbf16, #tpu.memory_space<vmem>>, vector<8x316xbf16>
    tpu.vector_store %arg20[%c48_50, %c0_51], %83 {strides = array<i32>} : memref<200x316xbf16, #tpu.memory_space<vmem>>, vector<8x316xbf16>,
    %85 = vector.extract_strided_slice %70 {offsets = [0, 22], sizes = [8, 316], strides = [1, 1]} : vector<8x400xbf16> to vector<8x316xbf16>
    %c56_52 = arith.constant 56 : index
    %c0_53 = arith.constant 0 : index
    %86 = vector.load %arg20[%c56_52, %c0_53] : memref<200x316xbf16, #tpu.memory_space<vmem>>, vector<8x316xbf16>
    tpu.vector_store %arg20[%c56_52, %c0_53], %85 {strides = array<i32>} : memref<200x316xbf16, #tpu.memory_space<vmem>>, vector<8x316xbf16>,
    %87 = vector.extract_strided_slice %70 {offsets = [0, 23], sizes = [8, 316], strides = [1, 1]} : vector<8x400xbf16> to vector<8x316xbf16>
    %c64_54 = arith.constant 64 : index
    %c0_55 = arith.constant 0 : index
    %88 = vector.load %arg20[%c64_54, %c0_55] : memref<200x316xbf16, #tpu.memory_space<vmem>>, vector<8x316xbf16>
    tpu.vector_store %arg20[%c64_54, %c0_55], %87 {strides = array<i32>} : memref<200x316xbf16, #tpu.memory_space<vmem>>, vector<8x316xbf16>,
    %89 = vector.extract_strided_slice %70 {offsets = [0, 24], sizes = [8, 316], strides = [1, 1]} : vector<8x400xbf16> to vector<8x316xbf16>
    %c72_56 = arith.constant 72 : index
    %c0_57 = arith.constant 0 : index
    %90 = vector.load %arg20[%c72_56, %c0_57] : memref<200x316xbf16, #tpu.memory_space<vmem>>, vector<8x316xbf16>
    tpu.vector_store %arg20[%c72_56, %c0_57], %89 {strides = array<i32>} : memref<200x316xbf16, #tpu.memory_space<vmem>>, vector<8x316xbf16>,
    %91 = vector.extract_strided_slice %70 {offsets = [0, 40], sizes = [8, 316], strides = [1, 1]} : vector<8x400xbf16> to vector<8x316xbf16>
    %c80_58 = arith.constant 80 : index
    %c0_59 = arith.constant 0 : index
    %92 = vector.load %arg20[%c80_58, %c0_59] : memref<200x316xbf16, #tpu.memory_space<vmem>>, vector<8x316xbf16>
    tpu.vector_store %arg20[%c80_58, %c0_59], %91 {strides = array<i32>} : memref<200x316xbf16, #tpu.memory_space<vmem>>, vector<8x316xbf16>,
    %93 = vector.extract_strided_slice %70 {offsets = [0, 41], sizes = [8, 316], strides = [1, 1]} : vector<8x400xbf16> to vector<8x316xbf16>
    %c88_60 = arith.constant 88 : index
    %c0_61 = arith.constant 0 : index
    %94 = vector.load %arg20[%c88_60, %c0_61] : memref<200x316xbf16, #tpu.memory_space<vmem>>, vector<8x316xbf16>
    tpu.vector_store %arg20[%c88_60, %c0_61], %93 {strides = array<i32>} : memref<200x316xbf16, #tpu.memory_space<vmem>>, vector<8x316xbf16>,
    %95 = vector.extract_strided_slice %70 {offsets = [0, 42], sizes = [8, 316], strides = [1, 1]} : vector<8x400xbf16> to vector<8x316xbf16>
    %c96_62 = arith.constant 96 : index
    %c0_63 = arith.constant 0 : index
    %96 = vector.load %arg20[%c96_62, %c0_63] : memref<200x316xbf16, #tpu.memory_space<vmem>>, vector<8x316xbf16>
    tpu.vector_store %arg20[%c96_62, %c0_63], %95 {strides = array<i32>} : memref<200x316xbf16, #tpu.memory_space<vmem>>, vector<8x316xbf16>,
    %97 = vector.extract_strided_slice %70 {offsets = [0, 43], sizes = [8, 316], strides = [1, 1]} : vector<8x400xbf16> to vector<8x316xbf16>
    %c104_64 = arith.constant 104 : index
    %c0_65 = arith.constant 0 : index
    %98 = vector.load %arg20[%c104_64, %c0_65] : memref<200x316xbf16, #tpu.memory_space<vmem>>, vector<8x316xbf16>
    tpu.vector_store %arg20[%c104_64, %c0_65], %97 {strides = array<i32>} : memref<200x316xbf16, #tpu.memory_space<vmem>>, vector<8x316xbf16>,
    %99 = vector.extract_strided_slice %70 {offsets = [0, 44], sizes = [8, 316], strides = [1, 1]} : vector<8x400xbf16> to vector<8x316xbf16>
    %c112_66 = arith.constant 112 : index
    %c0_67 = arith.constant 0 : index
    %100 = vector.load %arg20[%c112_66, %c0_67] : memref<200x316xbf16, #tpu.memory_space<vmem>>, vector<8x316xbf16>
    tpu.vector_store %arg20[%c112_66, %c0_67], %99 {strides = array<i32>} : memref<200x316xbf16, #tpu.memory_space<vmem>>, vector<8x316xbf16>,
    %101 = vector.extract_strided_slice %70 {offsets = [0, 60], sizes = [8, 316], strides = [1, 1]} : vector<8x400xbf16> to vector<8x316xbf16>
    %c120_68 = arith.constant 120 : index
    %c0_69 = arith.constant 0 : index
    %102 = vector.load %arg20[%c120_68, %c0_69] : memref<200x316xbf16, #tpu.memory_space<vmem>>, vector<8x316xbf16>
    tpu.vector_store %arg20[%c120_68, %c0_69], %101 {strides = array<i32>} : memref<200x316xbf16, #tpu.memory_space<vmem>>, vector<8x316xbf16>,
    %103 = vector.extract_strided_slice %70 {offsets = [0, 61], sizes = [8, 316], strides = [1, 1]} : vector<8x400xbf16> to vector<8x316xbf16>
    %c128_70 = arith.constant 128 : index
    %c0_71 = arith.constant 0 : index
    %104 = vector.load %arg20[%c128_70, %c0_71] : memref<200x316xbf16, #tpu.memory_space<vmem>>, vector<8x316xbf16>
    tpu.vector_store %arg20[%c128_70, %c0_71], %103 {strides = array<i32>} : memref<200x316xbf16, #tpu.memory_space<vmem>>, vector<8x316xbf16>,
    %105 = vector.extract_strided_slice %70 {offsets = [0, 62], sizes = [8, 316], strides = [1, 1]} : vector<8x400xbf16> to vector<8x316xbf16>
    %c136_72 = arith.constant 136 : index
    %c0_73 = arith.constant 0 : index
    %106 = vector.load %arg20[%c136_72, %c0_73] : memref<200x316xbf16, #tpu.memory_space<vmem>>, vector<8x316xbf16>
    tpu.vector_store %arg20[%c136_72, %c0_73], %105 {strides = array<i32>} : memref<200x316xbf16, #tpu.memory_space<vmem>>, vector<8x316xbf16>,
    %107 = vector.extract_strided_slice %70 {offsets = [0, 63], sizes = [8, 316], strides = [1, 1]} : vector<8x400xbf16> to vector<8x316xbf16>
    %c144_74 = arith.constant 144 : index
    %c0_75 = arith.constant 0 : index
    %108 = vector.load %arg20[%c144_74, %c0_75] : memref<200x316xbf16, #tpu.memory_space<vmem>>, vector<8x316xbf16>
    tpu.vector_store %arg20[%c144_74, %c0_75], %107 {strides = array<i32>} : memref<200x316xbf16, #tpu.memory_space<vmem>>, vector<8x316xbf16>,
    %109 = vector.extract_strided_slice %70 {offsets = [0, 64], sizes = [8, 316], strides = [1, 1]} : vector<8x400xbf16> to vector<8x316xbf16>
    %c152_76 = arith.constant 152 : index
    %c0_77 = arith.constant 0 : index
    %110 = vector.load %arg20[%c152_76, %c0_77] : memref<200x316xbf16, #tpu.memory_space<vmem>>, vector<8x316xbf16>
    tpu.vector_store %arg20[%c152_76, %c0_77], %109 {strides = array<i32>} : memref<200x316xbf16, #tpu.memory_space<vmem>>, vector<8x316xbf16>,
    %111 = vector.extract_strided_slice %70 {offsets = [0, 80], sizes = [8, 316], strides = [1, 1]} : vector<8x400xbf16> to vector<8x316xbf16>
    %c160_78 = arith.constant 160 : index
    %c0_79 = arith.constant 0 : index
    %112 = vector.load %arg20[%c160_78, %c0_79] : memref<200x316xbf16, #tpu.memory_space<vmem>>, vector<8x316xbf16>
    tpu.vector_store %arg20[%c160_78, %c0_79], %111 {strides = array<i32>} : memref<200x316xbf16, #tpu.memory_space<vmem>>, vector<8x316xbf16>,
    %113 = vector.extract_strided_slice %70 {offsets = [0, 81], sizes = [8, 316], strides = [1, 1]} : vector<8x400xbf16> to vector<8x316xbf16>
    %c168_80 = arith.constant 168 : index
    %c0_81 = arith.constant 0 : index
    %114 = vector.load %arg20[%c168_80, %c0_81] : memref<200x316xbf16, #tpu.memory_space<vmem>>, vector<8x316xbf16>
    tpu.vector_store %arg20[%c168_80, %c0_81], %113 {strides = array<i32>} : memref<200x316xbf16, #tpu.memory_space<vmem>>, vector<8x316xbf16>,
    %115 = vector.extract_strided_slice %70 {offsets = [0, 82], sizes = [8, 316], strides = [1, 1]} : vector<8x400xbf16> to vector<8x316xbf16>
    %c176_82 = arith.constant 176 : index
    %c0_83 = arith.constant 0 : index
    %116 = vector.load %arg20[%c176_82, %c0_83] : memref<200x316xbf16, #tpu.memory_space<vmem>>, vector<8x316xbf16>
    tpu.vector_store %arg20[%c176_82, %c0_83], %115 {strides = array<i32>} : memref<200x316xbf16, #tpu.memory_space<vmem>>, vector<8x316xbf16>,
    %117 = vector.extract_strided_slice %70 {offsets = [0, 83], sizes = [8, 316], strides = [1, 1]} : vector<8x400xbf16> to vector<8x316xbf16>
    %c184_84 = arith.constant 184 : index
    %c0_85 = arith.constant 0 : index
    %118 = vector.load %arg20[%c184_84, %c0_85] : memref<200x316xbf16, #tpu.memory_space<vmem>>, vector<8x316xbf16>
    tpu.vector_store %arg20[%c184_84, %c0_85], %117 {strides = array<i32>} : memref<200x316xbf16, #tpu.memory_space<vmem>>, vector<8x316xbf16>,
    %119 = vector.extract_strided_slice %70 {offsets = [0, 84], sizes = [8, 316], strides = [1, 1]} : vector<8x400xbf16> to vector<8x316xbf16>
    %c192_86 = arith.constant 192 : index
    %c0_87 = arith.constant 0 : index
    %120 = vector.load %arg20[%c192_86, %c0_87] : memref<200x316xbf16, #tpu.memory_space<vmem>>, vector<8x316xbf16>
    tpu.vector_store %arg20[%c192_86, %c0_87], %119 {strides = array<i32>} : memref<200x316xbf16, #tpu.memory_space<vmem>>, vector<8x316xbf16>,
    %c0_88 = arith.constant 0 : index
    %c0_89 = arith.constant 0 : index
    %121 = vector.load %arg5[%c0_88, %c0_89] : memref<16x200xbf16, #tpu.memory_space<vmem>>, vector<16x200xbf16>
    %c0_90 = arith.constant 0 : index
    %c0_91 = arith.constant 0 : index
    %122 = vector.load %arg20[%c0_90, %c0_91] : memref<200x316xbf16, #tpu.memory_space<vmem>>, vector<200x316xbf16>
    %cst_92 = arith.constant dense<0.000000e+00> : vector<16x316xf32>
    %123 = tpu.matmul %121, %122, %cst_92 {dimension_numbers = #tpu.dot_dimension_numbers<[1], [0], [0], [1], [0, 0, 1, 1], [], []>} : vector<16x200xbf16>, vector<200x316xbf16>, vector<16x316xf32> -> vector<16x316xf32>
    %c0_93 = arith.constant 0 : index
    %c0_94 = arith.constant 0 : index
    %124 = vector.load %arg6[%c0_93, %c0_94] : memref<16x1xf32, #tpu.memory_space<vmem>>, vector<16x1xf32>
    %125 = vector.broadcast %124 : vector<16x1xf32> to vector<16x316xf32>
    %126 = arith.addf %123, %125 : vector<16x316xf32>
    %cst_95 = arith.constant 0.000000e+00 : f32
    %127 = vector.broadcast %cst_95 : f32 to vector<16x316xf32>
    %128 = arith.maximumf %126, %127 : vector<16x316xf32>
    %129 = arith.truncf %128 : vector<16x316xf32> to vector<16x316xbf16>
    %c0_96 = arith.constant 0 : index
    %c0_97 = arith.constant 0 : index
    %130 = vector.load %arg7[%c0_96, %c0_97] : memref<316x144xbf16, #tpu.memory_space<vmem>>, vector<316x144xbf16>
    %cst_98 = arith.constant dense<0.000000e+00> : vector<16x144xf32>
    %131 = tpu.matmul %129, %130, %cst_98 {dimension_numbers = #tpu.dot_dimension_numbers<[1], [0], [0], [1], [0, 0, 1, 1], [], []>} : vector<16x316xbf16>, vector<316x144xbf16>, vector<16x144xf32> -> vector<16x144xf32>
    %132 = arith.truncf %131 : vector<16x144xf32> to vector<16x144xbf16>
    %133 = vector.extract_strided_slice %132 {offsets = [0, 0], sizes = [16, 92], strides = [1, 1]} : vector<16x144xbf16> to vector<16x92xbf16>
    %c0_99 = arith.constant 0 : index
    %c0_100 = arith.constant 0 : index
    %134 = vector.load %arg21[%c0_99, %c0_100] : memref<400x92xbf16, #tpu.memory_space<vmem>>, vector<16x92xbf16>
    tpu.vector_store %arg21[%c0_99, %c0_100], %133 {strides = array<i32>} : memref<400x92xbf16, #tpu.memory_space<vmem>>, vector<16x92xbf16>,
    %135 = vector.extract_strided_slice %132 {offsets = [0, 1], sizes = [16, 92], strides = [1, 1]} : vector<16x144xbf16> to vector<16x92xbf16>
    %c16_101 = arith.constant 16 : index
    %c0_102 = arith.constant 0 : index
    %136 = vector.load %arg21[%c16_101, %c0_102] : memref<400x92xbf16, #tpu.memory_space<vmem>>, vector<16x92xbf16>
    tpu.vector_store %arg21[%c16_101, %c0_102], %135 {strides = array<i32>} : memref<400x92xbf16, #tpu.memory_space<vmem>>, vector<16x92xbf16>,
    %137 = vector.extract_strided_slice %132 {offsets = [0, 2], sizes = [16, 92], strides = [1, 1]} : vector<16x144xbf16> to vector<16x92xbf16>
    %c32_103 = arith.constant 32 : index
    %c0_104 = arith.constant 0 : index
    %138 = vector.load %arg21[%c32_103, %c0_104] : memref<400x92xbf16, #tpu.memory_space<vmem>>, vector<16x92xbf16>
    tpu.vector_store %arg21[%c32_103, %c0_104], %137 {strides = array<i32>} : memref<400x92xbf16, #tpu.memory_space<vmem>>, vector<16x92xbf16>,
    %139 = vector.extract_strided_slice %132 {offsets = [0, 3], sizes = [16, 92], strides = [1, 1]} : vector<16x144xbf16> to vector<16x92xbf16>
    %c48_105 = arith.constant 48 : index
    %c0_106 = arith.constant 0 : index
    %140 = vector.load %arg21[%c48_105, %c0_106] : memref<400x92xbf16, #tpu.memory_space<vmem>>, vector<16x92xbf16>
    tpu.vector_store %arg21[%c48_105, %c0_106], %139 {strides = array<i32>} : memref<400x92xbf16, #tpu.memory_space<vmem>>, vector<16x92xbf16>,
    %141 = vector.extract_strided_slice %132 {offsets = [0, 4], sizes = [16, 92], strides = [1, 1]} : vector<16x144xbf16> to vector<16x92xbf16>
    %c64_107 = arith.constant 64 : index
    %c0_108 = arith.constant 0 : index
    %142 = vector.load %arg21[%c64_107, %c0_108] : memref<400x92xbf16, #tpu.memory_space<vmem>>, vector<16x92xbf16>
    tpu.vector_store %arg21[%c64_107, %c0_108], %141 {strides = array<i32>} : memref<400x92xbf16, #tpu.memory_space<vmem>>, vector<16x92xbf16>,
    %143 = vector.extract_strided_slice %132 {offsets = [0, 12], sizes = [16, 92], strides = [1, 1]} : vector<16x144xbf16> to vector<16x92xbf16>
    %c80_109 = arith.constant 80 : index
    %c0_110 = arith.constant 0 : index
    %144 = vector.load %arg21[%c80_109, %c0_110] : memref<400x92xbf16, #tpu.memory_space<vmem>>, vector<16x92xbf16>
    tpu.vector_store %arg21[%c80_109, %c0_110], %143 {strides = array<i32>} : memref<400x92xbf16, #tpu.memory_space<vmem>>, vector<16x92xbf16>,
    %145 = vector.extract_strided_slice %132 {offsets = [0, 13], sizes = [16, 92], strides = [1, 1]} : vector<16x144xbf16> to vector<16x92xbf16>
    %c96_111 = arith.constant 96 : index
    %c0_112 = arith.constant 0 : index
    %146 = vector.load %arg21[%c96_111, %c0_112] : memref<400x92xbf16, #tpu.memory_space<vmem>>, vector<16x92xbf16>
    tpu.vector_store %arg21[%c96_111, %c0_112], %145 {strides = array<i32>} : memref<400x92xbf16, #tpu.memory_space<vmem>>, vector<16x92xbf16>,
    %147 = vector.extract_strided_slice %132 {offsets = [0, 14], sizes = [16, 92], strides = [1, 1]} : vector<16x144xbf16> to vector<16x92xbf16>
    %c112_113 = arith.constant 112 : index
    %c0_114 = arith.constant 0 : index
    %148 = vector.load %arg21[%c112_113, %c0_114] : memref<400x92xbf16, #tpu.memory_space<vmem>>, vector<16x92xbf16>
    tpu.vector_store %arg21[%c112_113, %c0_114], %147 {strides = array<i32>} : memref<400x92xbf16, #tpu.memory_space<vmem>>, vector<16x92xbf16>,
    %149 = vector.extract_strided_slice %132 {offsets = [0, 15], sizes = [16, 92], strides = [1, 1]} : vector<16x144xbf16> to vector<16x92xbf16>
    %c128_115 = arith.constant 128 : index
    %c0_116 = arith.constant 0 : index
    %150 = vector.load %arg21[%c128_115, %c0_116] : memref<400x92xbf16, #tpu.memory_space<vmem>>, vector<16x92xbf16>
    tpu.vector_store %arg21[%c128_115, %c0_116], %149 {strides = array<i32>} : memref<400x92xbf16, #tpu.memory_space<vmem>>, vector<16x92xbf16>,
    %151 = vector.extract_strided_slice %132 {offsets = [0, 16], sizes = [16, 92], strides = [1, 1]} : vector<16x144xbf16> to vector<16x92xbf16>
    %c144_117 = arith.constant 144 : index
    %c0_118 = arith.constant 0 : index
    %152 = vector.load %arg21[%c144_117, %c0_118] : memref<400x92xbf16, #tpu.memory_space<vmem>>, vector<16x92xbf16>
    tpu.vector_store %arg21[%c144_117, %c0_118], %151 {strides = array<i32>} : memref<400x92xbf16, #tpu.memory_space<vmem>>, vector<16x92xbf16>,
    %153 = vector.extract_strided_slice %132 {offsets = [0, 24], sizes = [16, 92], strides = [1, 1]} : vector<16x144xbf16> to vector<16x92xbf16>
    %c160_119 = arith.constant 160 : index
    %c0_120 = arith.constant 0 : index
    %154 = vector.load %arg21[%c160_119, %c0_120] : memref<400x92xbf16, #tpu.memory_space<vmem>>, vector<16x92xbf16>
    tpu.vector_store %arg21[%c160_119, %c0_120], %153 {strides = array<i32>} : memref<400x92xbf16, #tpu.memory_space<vmem>>, vector<16x92xbf16>,
    %155 = vector.extract_strided_slice %132 {offsets = [0, 25], sizes = [16, 92], strides = [1, 1]} : vector<16x144xbf16> to vector<16x92xbf16>
    %c176_121 = arith.constant 176 : index
    %c0_122 = arith.constant 0 : index
    %156 = vector.load %arg21[%c176_121, %c0_122] : memref<400x92xbf16, #tpu.memory_space<vmem>>, vector<16x92xbf16>
    tpu.vector_store %arg21[%c176_121, %c0_122], %155 {strides = array<i32>} : memref<400x92xbf16, #tpu.memory_space<vmem>>, vector<16x92xbf16>,
    %157 = vector.extract_strided_slice %132 {offsets = [0, 26], sizes = [16, 92], strides = [1, 1]} : vector<16x144xbf16> to vector<16x92xbf16>
    %c192_123 = arith.constant 192 : index
    %c0_124 = arith.constant 0 : index
    %158 = vector.load %arg21[%c192_123, %c0_124] : memref<400x92xbf16, #tpu.memory_space<vmem>>, vector<16x92xbf16>
    tpu.vector_store %arg21[%c192_123, %c0_124], %157 {strides = array<i32>} : memref<400x92xbf16, #tpu.memory_space<vmem>>, vector<16x92xbf16>,
    %159 = vector.extract_strided_slice %132 {offsets = [0, 27], sizes = [16, 92], strides = [1, 1]} : vector<16x144xbf16> to vector<16x92xbf16>
    %c208 = arith.constant 208 : index
    %c0_125 = arith.constant 0 : index
    %160 = vector.load %arg21[%c208, %c0_125] : memref<400x92xbf16, #tpu.memory_space<vmem>>, vector<16x92xbf16>
    tpu.vector_store %arg21[%c208, %c0_125], %159 {strides = array<i32>} : memref<400x92xbf16, #tpu.memory_space<vmem>>, vector<16x92xbf16>,
    %161 = vector.extract_strided_slice %132 {offsets = [0, 28], sizes = [16, 92], strides = [1, 1]} : vector<16x144xbf16> to vector<16x92xbf16>
    %c224 = arith.constant 224 : index
    %c0_126 = arith.constant 0 : index
    %162 = vector.load %arg21[%c224, %c0_126] : memref<400x92xbf16, #tpu.memory_space<vmem>>, vector<16x92xbf16>
    tpu.vector_store %arg21[%c224, %c0_126], %161 {strides = array<i32>} : memref<400x92xbf16, #tpu.memory_space<vmem>>, vector<16x92xbf16>,
    %163 = vector.extract_strided_slice %132 {offsets = [0, 36], sizes = [16, 92], strides = [1, 1]} : vector<16x144xbf16> to vector<16x92xbf16>
    %c240 = arith.constant 240 : index
    %c0_127 = arith.constant 0 : index
    %164 = vector.load %arg21[%c240, %c0_127] : memref<400x92xbf16, #tpu.memory_space<vmem>>, vector<16x92xbf16>
    tpu.vector_store %arg21[%c240, %c0_127], %163 {strides = array<i32>} : memref<400x92xbf16, #tpu.memory_space<vmem>>, vector<16x92xbf16>,
    %165 = vector.extract_strided_slice %132 {offsets = [0, 37], sizes = [16, 92], strides = [1, 1]} : vector<16x144xbf16> to vector<16x92xbf16>
    %c256 = arith.constant 256 : index
    %c0_128 = arith.constant 0 : index
    %166 = vector.load %arg21[%c256, %c0_128] : memref<400x92xbf16, #tpu.memory_space<vmem>>, vector<16x92xbf16>
    tpu.vector_store %arg21[%c256, %c0_128], %165 {strides = array<i32>} : memref<400x92xbf16, #tpu.memory_space<vmem>>, vector<16x92xbf16>,
    %167 = vector.extract_strided_slice %132 {offsets = [0, 38], sizes = [16, 92], strides = [1, 1]} : vector<16x144xbf16> to vector<16x92xbf16>
    %c272 = arith.constant 272 : index
    %c0_129 = arith.constant 0 : index
    %168 = vector.load %arg21[%c272, %c0_129] : memref<400x92xbf16, #tpu.memory_space<vmem>>, vector<16x92xbf16>
    tpu.vector_store %arg21[%c272, %c0_129], %167 {strides = array<i32>} : memref<400x92xbf16, #tpu.memory_space<vmem>>, vector<16x92xbf16>,
    %169 = vector.extract_strided_slice %132 {offsets = [0, 39], sizes = [16, 92], strides = [1, 1]} : vector<16x144xbf16> to vector<16x92xbf16>
    %c288 = arith.constant 288 : index
    %c0_130 = arith.constant 0 : index
    %170 = vector.load %arg21[%c288, %c0_130] : memref<400x92xbf16, #tpu.memory_space<vmem>>, vector<16x92xbf16>
    tpu.vector_store %arg21[%c288, %c0_130], %169 {strides = array<i32>} : memref<400x92xbf16, #tpu.memory_space<vmem>>, vector<16x92xbf16>,
    %171 = vector.extract_strided_slice %132 {offsets = [0, 40], sizes = [16, 92], strides = [1, 1]} : vector<16x144xbf16> to vector<16x92xbf16>
    %c304 = arith.constant 304 : index
    %c0_131 = arith.constant 0 : index
    %172 = vector.load %arg21[%c304, %c0_131] : memref<400x92xbf16, #tpu.memory_space<vmem>>, vector<16x92xbf16>
    tpu.vector_store %arg21[%c304, %c0_131], %171 {strides = array<i32>} : memref<400x92xbf16, #tpu.memory_space<vmem>>, vector<16x92xbf16>,
    %173 = vector.extract_strided_slice %132 {offsets = [0, 48], sizes = [16, 92], strides = [1, 1]} : vector<16x144xbf16> to vector<16x92xbf16>
    %c320 = arith.constant 320 : index
    %c0_132 = arith.constant 0 : index
    %174 = vector.load %arg21[%c320, %c0_132] : memref<400x92xbf16, #tpu.memory_space<vmem>>, vector<16x92xbf16>
    tpu.vector_store %arg21[%c320, %c0_132], %173 {strides = array<i32>} : memref<400x92xbf16, #tpu.memory_space<vmem>>, vector<16x92xbf16>,
    %175 = vector.extract_strided_slice %132 {offsets = [0, 49], sizes = [16, 92], strides = [1, 1]} : vector<16x144xbf16> to vector<16x92xbf16>
    %c336 = arith.constant 336 : index
    %c0_133 = arith.constant 0 : index
    %176 = vector.load %arg21[%c336, %c0_133] : memref<400x92xbf16, #tpu.memory_space<vmem>>, vector<16x92xbf16>
    tpu.vector_store %arg21[%c336, %c0_133], %175 {strides = array<i32>} : memref<400x92xbf16, #tpu.memory_space<vmem>>, vector<16x92xbf16>,
    %177 = vector.extract_strided_slice %132 {offsets = [0, 50], sizes = [16, 92], strides = [1, 1]} : vector<16x144xbf16> to vector<16x92xbf16>
    %c352 = arith.constant 352 : index
    %c0_134 = arith.constant 0 : index
    %178 = vector.load %arg21[%c352, %c0_134] : memref<400x92xbf16, #tpu.memory_space<vmem>>, vector<16x92xbf16>
    tpu.vector_store %arg21[%c352, %c0_134], %177 {strides = array<i32>} : memref<400x92xbf16, #tpu.memory_space<vmem>>, vector<16x92xbf16>,
    %179 = vector.extract_strided_slice %132 {offsets = [0, 51], sizes = [16, 92], strides = [1, 1]} : vector<16x144xbf16> to vector<16x92xbf16>
    %c368 = arith.constant 368 : index
    %c0_135 = arith.constant 0 : index
    %180 = vector.load %arg21[%c368, %c0_135] : memref<400x92xbf16, #tpu.memory_space<vmem>>, vector<16x92xbf16>
    tpu.vector_store %arg21[%c368, %c0_135], %179 {strides = array<i32>} : memref<400x92xbf16, #tpu.memory_space<vmem>>, vector<16x92xbf16>,
    %181 = vector.extract_strided_slice %132 {offsets = [0, 52], sizes = [16, 92], strides = [1, 1]} : vector<16x144xbf16> to vector<16x92xbf16>
    %c384 = arith.constant 384 : index
    %c0_136 = arith.constant 0 : index
    %182 = vector.load %arg21[%c384, %c0_136] : memref<400x92xbf16, #tpu.memory_space<vmem>>, vector<16x92xbf16>
    tpu.vector_store %arg21[%c384, %c0_136], %181 {strides = array<i32>} : memref<400x92xbf16, #tpu.memory_space<vmem>>, vector<16x92xbf16>,
    %c0_137 = arith.constant 0 : index
    %c0_138 = arith.constant 0 : index
    %183 = vector.load %arg8[%c0_137, %c0_138] : memref<16x400xbf16, #tpu.memory_space<vmem>>, vector<16x400xbf16>
    %c0_139 = arith.constant 0 : index
    %c0_140 = arith.constant 0 : index
    %184 = vector.load %arg21[%c0_139, %c0_140] : memref<400x92xbf16, #tpu.memory_space<vmem>>, vector<400x92xbf16>
    %cst_141 = arith.constant dense<0.000000e+00> : vector<16x92xf32>
    %185 = tpu.matmul %183, %184, %cst_141 {dimension_numbers = #tpu.dot_dimension_numbers<[1], [0], [0], [1], [0, 0, 1, 1], [], []>} : vector<16x400xbf16>, vector<400x92xbf16>, vector<16x92xf32> -> vector<16x92xf32>
    %c0_142 = arith.constant 0 : index
    %c0_143 = arith.constant 0 : index
    %186 = vector.load %arg9[%c0_142, %c0_143] : memref<16x1xf32, #tpu.memory_space<vmem>>, vector<16x1xf32>
    %187 = vector.broadcast %186 : vector<16x1xf32> to vector<16x92xf32>
    %188 = arith.addf %185, %187 : vector<16x92xf32>
    %cst_144 = arith.constant 0.000000e+00 : f32
    %189 = vector.broadcast %cst_144 : f32 to vector<16x92xf32>
    %190 = arith.maximumf %188, %189 : vector<16x92xf32>
    %191 = arith.truncf %190 : vector<16x92xf32> to vector<16x92xbf16>
    %c0_145 = arith.constant 0 : index
    %c0_146 = arith.constant 0 : index
    %192 = vector.load %arg10[%c0_145, %c0_146] : memref<92x256xbf16, #tpu.memory_space<vmem>>, vector<92x256xbf16>
    %cst_147 = arith.constant dense<0.000000e+00> : vector<16x256xf32>
    %193 = tpu.matmul %191, %192, %cst_147 {dimension_numbers = #tpu.dot_dimension_numbers<[1], [0], [0], [1], [0, 0, 1, 1], [], []>} : vector<16x92xbf16>, vector<92x256xbf16>, vector<16x256xf32> -> vector<16x256xf32>
    %c0_148 = arith.constant 0 : index
    %c0_149 = arith.constant 0 : index
    %194 = vector.load %arg11[%c0_148, %c0_149] : memref<16x256xf32, #tpu.memory_space<vmem>>, vector<16x256xf32>
    %195 = arith.mulf %193, %194 : vector<16x256xf32>
    %cst_150 = arith.constant dense<0.000000e+00> : vector<256xf32>
    %196 = vector.multi_reduction <add>, %195, %cst_150 [0] : vector<16x256xf32> to vector<256xf32>
    %197 = vector.shape_cast %196 : vector<256xf32> to vector<1x256xf32>
    %198 = arith.truncf %197 : vector<1x256xf32> to vector<1x256xbf16>
    %c0_151 = arith.constant 0 : index
    %c0_152 = arith.constant 0 : index
    %199 = vector.load %arg12[%c0_151, %c0_152] : memref<256x120xbf16, #tpu.memory_space<vmem>>, vector<256x120xbf16>
    %cst_153 = arith.constant dense<0.000000e+00> : vector<1x120xf32>
    %200 = tpu.matmul %198, %199, %cst_153 {dimension_numbers = #tpu.dot_dimension_numbers<[1], [0], [0], [1], [0, 0, 1, 1], [], []>} : vector<1x256xbf16>, vector<256x120xbf16>, vector<1x120xf32> -> vector<1x120xf32>
    %c0_154 = arith.constant 0 : index
    %c0_155 = arith.constant 0 : index
    %201 = vector.load %arg13[%c0_154, %c0_155] : memref<1x120xf32, #tpu.memory_space<vmem>>, vector<1x120xf32>
    %202 = arith.addf %200, %201 : vector<1x120xf32>
    %cst_156 = arith.constant 0.000000e+00 : f32
    %203 = vector.broadcast %cst_156 : f32 to vector<1x120xf32>
    %204 = arith.maximumf %202, %203 : vector<1x120xf32>
    %205 = arith.truncf %204 : vector<1x120xf32> to vector<1x120xbf16>
    %c0_157 = arith.constant 0 : index
    %c0_158 = arith.constant 0 : index
    %206 = vector.load %arg14[%c0_157, %c0_158] : memref<120x84xbf16, #tpu.memory_space<vmem>>, vector<120x84xbf16>
    %cst_159 = arith.constant dense<0.000000e+00> : vector<1x84xf32>
    %207 = tpu.matmul %205, %206, %cst_159 {dimension_numbers = #tpu.dot_dimension_numbers<[1], [0], [0], [1], [0, 0, 1, 1], [], []>} : vector<1x120xbf16>, vector<120x84xbf16>, vector<1x84xf32> -> vector<1x84xf32>
    %c0_160 = arith.constant 0 : index
    %c0_161 = arith.constant 0 : index
    %208 = vector.load %arg15[%c0_160, %c0_161] : memref<1x84xf32, #tpu.memory_space<vmem>>, vector<1x84xf32>
    %209 = arith.addf %207, %208 : vector<1x84xf32>
    %cst_162 = arith.constant 0.000000e+00 : f32
    %210 = vector.broadcast %cst_162 : f32 to vector<1x84xf32>
    %211 = arith.maximumf %209, %210 : vector<1x84xf32>
    %212 = arith.truncf %211 : vector<1x84xf32> to vector<1x84xbf16>
    %c0_163 = arith.constant 0 : index
    %c0_164 = arith.constant 0 : index
    %213 = vector.load %arg16[%c0_163, %c0_164] : memref<84x10xbf16, #tpu.memory_space<vmem>>, vector<84x10xbf16>
    %cst_165 = arith.constant dense<0.000000e+00> : vector<1x10xf32>
    %214 = tpu.matmul %212, %213, %cst_165 {dimension_numbers = #tpu.dot_dimension_numbers<[1], [0], [0], [1], [0, 0, 1, 1], [], []>} : vector<1x84xbf16>, vector<84x10xbf16>, vector<1x10xf32> -> vector<1x10xf32>
    %c0_166 = arith.constant 0 : index
    %c0_167 = arith.constant 0 : index
    %215 = vector.load %arg17[%c0_166, %c0_167] : memref<1x10xf32, #tpu.memory_space<vmem>>, vector<1x10xf32>
    %216 = arith.addf %214, %215 : vector<1x10xf32>
    %c0_168 = arith.constant 0 : index
    %c0_169 = arith.constant 0 : index
    %c0_170 = arith.constant 0 : index
    %217 = vector.load %arg18[%c0_168, %c0_169, %c0_170] : memref<1x1x10xf32, #tpu.memory_space<vmem>>, vector<1x1x10xf32>
    %218 = vector.shape_cast %217 : vector<1x1x10xf32> to vector<1x10xf32>
    %219 = vector.shape_cast %216 : vector<1x10xf32> to vector<1x1x10xf32>
    tpu.vector_store %arg18[%c0_168, %c0_169, %c0_170], %219 {strides = array<i32>} : memref<1x1x10xf32, #tpu.memory_space<vmem>>, vector<1x1x10xf32>,
    return
  }
  func.func @transform_0(%arg0: i32) -> (i32, i32, i32) {
    %c0_i32 = arith.constant 0 : i32
    %c0_i32_0 = arith.constant 0 : i32
    %c0_i32_1 = arith.constant 0 : i32
    return %arg0, %c0_i32, %c0_i32_0 : i32, i32, i32
  }
  func.func @transform_1(%arg0: i32) -> (i32, i32) {
    %c0_i32 = arith.constant 0 : i32
    %c0_i32_0 = arith.constant 0 : i32
    %c0_i32_1 = arith.constant 0 : i32
    return %c0_i32, %c0_i32_0 : i32, i32
  }
  func.func @transform_2(%arg0: i32) -> (i32, i32) {
    %c0_i32 = arith.constant 0 : i32
    %c0_i32_0 = arith.constant 0 : i32
    %c0_i32_1 = arith.constant 0 : i32
    return %c0_i32, %c0_i32_0 : i32, i32
  }
  func.func @transform_3(%arg0: i32) -> (i32, i32) {
    %c0_i32 = arith.constant 0 : i32
    %c0_i32_0 = arith.constant 0 : i32
    %c0_i32_1 = arith.constant 0 : i32
    return %c0_i32, %c0_i32_0 : i32, i32
  }
  func.func @transform_4(%arg0: i32) -> (i32, i32) {
    %c0_i32 = arith.constant 0 : i32
    %c0_i32_0 = arith.constant 0 : i32
    %c0_i32_1 = arith.constant 0 : i32
    return %c0_i32, %c0_i32_0 : i32, i32
  }
  func.func @transform_5(%arg0: i32) -> (i32, i32) {
    %c0_i32 = arith.constant 0 : i32
    %c0_i32_0 = arith.constant 0 : i32
    %c0_i32_1 = arith.constant 0 : i32
    return %c0_i32, %c0_i32_0 : i32, i32
  }
  func.func @transform_6(%arg0: i32) -> (i32, i32) {
    %c0_i32 = arith.constant 0 : i32
    %c0_i32_0 = arith.constant 0 : i32
    %c0_i32_1 = arith.constant 0 : i32
    return %c0_i32, %c0_i32_0 : i32, i32
  }
  func.func @transform_7(%arg0: i32) -> (i32, i32) {
    %c0_i32 = arith.constant 0 : i32
    %c0_i32_0 = arith.constant 0 : i32
    %c0_i32_1 = arith.constant 0 : i32
    return %c0_i32, %c0_i32_0 : i32, i32
  }
  func.func @transform_8(%arg0: i32) -> (i32, i32) {
    %c0_i32 = arith.constant 0 : i32
    %c0_i32_0 = arith.constant 0 : i32
    %c0_i32_1 = arith.constant 0 : i32
    return %c0_i32, %c0_i32_0 : i32, i32
  }
  func.func @transform_9(%arg0: i32) -> (i32, i32) {
    %c0_i32 = arith.constant 0 : i32
    %c0_i32_0 = arith.constant 0 : i32
    %c0_i32_1 = arith.constant 0 : i32
    return %c0_i32, %c0_i32_0 : i32, i32
  }
  func.func @transform_10(%arg0: i32) -> (i32, i32) {
    %c0_i32 = arith.constant 0 : i32
    %c0_i32_0 = arith.constant 0 : i32
    %c0_i32_1 = arith.constant 0 : i32
    return %c0_i32, %c0_i32_0 : i32, i32
  }
  func.func @transform_11(%arg0: i32) -> (i32, i32) {
    %c0_i32 = arith.constant 0 : i32
    %c0_i32_0 = arith.constant 0 : i32
    %c0_i32_1 = arith.constant 0 : i32
    return %c0_i32, %c0_i32_0 : i32, i32
  }
  func.func @transform_12(%arg0: i32) -> (i32, i32) {
    %c0_i32 = arith.constant 0 : i32
    %c0_i32_0 = arith.constant 0 : i32
    %c0_i32_1 = arith.constant 0 : i32
    return %c0_i32, %c0_i32_0 : i32, i32
  }
  func.func @transform_13(%arg0: i32) -> (i32, i32) {
    %c0_i32 = arith.constant 0 : i32
    %c0_i32_0 = arith.constant 0 : i32
    %c0_i32_1 = arith.constant 0 : i32
    return %c0_i32, %c0_i32_0 : i32, i32
  }
  func.func @transform_14(%arg0: i32) -> (i32, i32) {
    %c0_i32 = arith.constant 0 : i32
    %c0_i32_0 = arith.constant 0 : i32
    %c0_i32_1 = arith.constant 0 : i32
    return %c0_i32, %c0_i32_0 : i32, i32
  }
  func.func @transform_15(%arg0: i32) -> (i32, i32) {
    %c0_i32 = arith.constant 0 : i32
    %c0_i32_0 = arith.constant 0 : i32
    %c0_i32_1 = arith.constant 0 : i32
    return %c0_i32, %c0_i32_0 : i32, i32
  }
  func.func @transform_16(%arg0: i32) -> (i32, i32) {
    %c0_i32 = arith.constant 0 : i32
    %c0_i32_0 = arith.constant 0 : i32
    %c0_i32_1 = arith.constant 0 : i32
    return %c0_i32, %c0_i32_0 : i32, i32
  }
  func.func @transform_17(%arg0: i32) -> (i32, i32, i32) {
    %c0_i32 = arith.constant 0 : i32
    %c0_i32_0 = arith.constant 0 : i32
    %c0_i32_1 = arith.constant 0 : i32
    return %arg0, %c0_i32, %c0_i32_0 : i32, i32, i32
  }
}

</mosaic_0001>

<llo_original>
// kernel: net_forward.1
$region0: #{net_forward.1}
  #allocation0 [shape = 'u32[]', space=smem, size = 0x4, offset = 0x4, fixed_abs, tag = 'smem constant byte address 0x4 - core index']
  #allocation1 [shape = 'u32[144,128]{1,0:T(1,128)}', space=vmem, size = 0x12000, scoped, tag = 'internal scratch']
  #allocation2 [shape = 'bf16[200,1148]{1,0:T(8,128)(2,1)}', space=vmem, size = 0x70800, scoped, tag = 'scratch operand']
  #allocation3 [shape = 'bf16[200,316]{1,0:T(8,128)(2,1)}', space=vmem, size = 0x25800, scoped, tag = 'scratch operand']
  #allocation4 [shape = 'bf16[400,92]{1,0:T(16,128)(2,1)}', space=vmem, size = 0x19000, scoped, tag = 'scratch operand']
  %s0 = inlined_call_operand.vmem [shape: bf16[2,8,1296], index: 0, kind: input, shape index: {}]
  %s1 = inlined_call_operand.vmem [shape: bf16[8,200], index: 1, kind: input, shape index: {}]
  %s2 = inlined_call_operand.vmem [shape: f32[8,1], index: 2, kind: input, shape index: {}]
  %s3 = inlined_call_operand.vmem [shape: bf16[1111,400], index: 3, kind: input, shape index: {}]
  %s4 = inlined_call_operand.vmem [shape: bf16[16,200], index: 4, kind: input, shape index: {}]
  %s5 = inlined_call_operand.vmem [shape: f32[16,1], index: 5, kind: input, shape index: {}]
  %s6 = inlined_call_operand.vmem [shape: bf16[316,144], index: 6, kind: input, shape index: {}]
  %s7 = inlined_call_operand.vmem [shape: bf16[16,400], index: 7, kind: input, shape index: {}]
  %s8 = inlined_call_operand.vmem [shape: f32[16,1], index: 8, kind: input, shape index: {}]
  %s9 = inlined_call_operand.vmem [shape: bf16[92,256], index: 9, kind: input, shape index: {}]
  %s10 = inlined_call_operand.vmem [shape: f32[16,256], index: 10, kind: input, shape index: {}]
  %s11 = inlined_call_operand.vmem [shape: bf16[256,120], index: 11, kind: input, shape index: {}]
  %s12 = inlined_call_operand.vmem [shape: f32[1,120], index: 12, kind: input, shape index: {}]
  %s13 = inlined_call_operand.vmem [shape: bf16[120,84], index: 13, kind: input, shape index: {}]
  %s14 = inlined_call_operand.vmem [shape: f32[1,84], index: 14, kind: input, shape index: {}]
  %s15 = inlined_call_operand.vmem [shape: bf16[84,10], index: 15, kind: input, shape index: {}]
  %s16 = inlined_call_operand.vmem [shape: f32[1,10], index: 16, kind: input, shape index: {}]
  %s17 = inlined_call_operand.hbm [shape: f32[2,1,10], index: 17, kind: output, shape index: {}]
  %s18 = sld [smem:[#allocation0]]
  $region101: #{net_forward.1} parent=0
    _
  %s20 = ssub.s32 1, %s18
  %s21 = scalar_select 0, %s20, %s18
  $region1: #{net_forward.1} parent=0
    #allocation5 [shape = 'u8[1024]{0}', space=vmem, size = 0x400, scoped, tag = 'output window, operand 0']
    #allocation6 [shape = 's32[2]{0}', space=sflag, size = 0x8, scoped, tag = 'scoped memory for net_forward.1']
    %22 = vsyncpa [#allocation6], 0
    %s23 = scalar_lea.sflag [#allocation6], 1
    %24 = vsyncpa %s23, 0
    loop: start=0, step=1, limit=4
    $region2: #{net_forward.1} parent=1 // loop_pre_header
      _
    $region3: #{net_forward.1} parent=1 // loop_header
      %s26 = sphi 0, %s30
      %p27 = scmp.ge.s32.totalorder %s26, 4
      %s36 = sphi 0, %s38
      %s39 = sphi 0, %s36
      %s40 = sphi 0, %s39
      %s56 = sphi 0, %s40
      %s60 = sphi 0, %s60
      %s62 = sphi 0, %s60
      %s63 = sphi 0, %s62
      %s77 = sphi 0, %s63
      %s81 = sphi 0, %s81
      %s83 = sphi 0, %s81
      %s84 = sphi 0, %s83
      %s98 = sphi 0, %s84
      %s102 = sphi 0, %s102
      %s104 = sphi 0, %s102
      %s105 = sphi 0, %s104
      %s119 = sphi 0, %s105
      %s123 = sphi 0, %s123
      %s125 = sphi 0, %s123
      %s126 = sphi 0, %s125
      %s140 = sphi 0, %s126
      %s144 = sphi 0, %s144
      %s146 = sphi 0, %s144
      %s147 = sphi 0, %s146
      %s161 = sphi 0, %s147
      %s165 = sphi 0, %s165
      %s167 = sphi 0, %s165
      %s168 = sphi 0, %s167
      %s182 = sphi 0, %s168
      %s186 = sphi 0, %s186
      %s188 = sphi 0, %s186
      %s189 = sphi 0, %s188
      %s203 = sphi 0, %s189
      %s207 = sphi 0, %s207
      %s209 = sphi 0, %s207
      %s210 = sphi 0, %s209
      %s224 = sphi 0, %s210
      %s228 = sphi 0, %s228
      %s230 = sphi 0, %s228
      %s231 = sphi 0, %s230
      %s245 = sphi 0, %s231
      %s249 = sphi 0, %s249
      %s251 = sphi 0, %s249
      %s252 = sphi 0, %s251
      %s266 = sphi 0, %s252
      %s270 = sphi 0, %s270
      %s272 = sphi 0, %s270
      %s273 = sphi 0, %s272
      %s287 = sphi 0, %s273
      %s291 = sphi 0, %s291
      %s293 = sphi 0, %s291
      %s294 = sphi 0, %s293
      %s308 = sphi 0, %s294
      %s312 = sphi 0, %s312
      %s314 = sphi 0, %s312
      %s315 = sphi 0, %s314
      %s329 = sphi 0, %s315
      %s333 = sphi 0, %s333
      %s335 = sphi 0, %s333
      %s336 = sphi 0, %s335
      %s350 = sphi 0, %s336
      %s354 = sphi 0, %s354
      %s356 = sphi 0, %s354
      %s357 = sphi 0, %s356
      %s371 = sphi 0, %s357
      %s375 = sphi 0, %s375
      %s377 = sphi 0, %s375
      %s378 = sphi 0, %s377
      %s392 = sphi 0, %s378
      %s398 = sphi 0, %s400
      %s401 = sphi 0, %s398
      %s402 = sphi 0, %s401
      %s418 = sphi 0, %s402
    $region4: #{net_forward.1} parent=1 // loop_header_branch
      %29 = sbr.rel (%p27) target = $region8
    $region5: #{net_forward.1} parent=1 // loop_body
      %s31 = ssub.s32 %s26, 1
      %s32 = ssub.s32 %s26, 2
      %s33 = sadd.s32 %s26, 1
      %s34 = ssub.s32 %s26, %s33
      %p35 = scmp.eq.s32.totalorder %s34, 0
      %s37 = sadd.s32 %s36, 1
      %s38 = scalar_select %p35, %s36, %s37
      %p41 = pneg %p35
      %p42 = scmp.eq.s32.totalorder %s26, 1
      %p43 = por %p41, %p42
      %p44 = scmp.ne.s32.totalorder %s36, %s39
      %p45 = scmp.eq.s32.totalorder %s26, 0
      %p46 = por %p44, %p45
      %p47 = scmp.ne.s32.totalorder %s36, %s39
      %p48 = scmp.eq.s32.totalorder %s31, 1
      %p49 = por %p47, %p48
      %p50 = scmp.ne.s32.totalorder %s39, %s40
      %p51 = scmp.eq.s32.totalorder %s31, 0
      %p52 = por %p50, %p51
      %p53 = scmp.ne.s32.totalorder %s39, %s40
      %p54 = scmp.eq.s32.totalorder %s32, 1
      %p55 = por %p53, %p54
      %p57 = scmp.ne.s32.totalorder %s40, %s56
      %p58 = scmp.eq.s32.totalorder %s32, 0
      %p59 = por %p57, %p58
      %s61 = sadd.s32 %s60, 1
      %p64 = scmp.eq.s32.totalorder %s26, 1
      %p65 = scmp.ne.s32.totalorder %s60, %s62
      %p66 = scmp.eq.s32.totalorder %s26, 0
      %p67 = por %p65, %p66
      %p68 = scmp.ne.s32.totalorder %s60, %s62
      %p69 = scmp.eq.s32.totalorder %s31, 1
      %p70 = por %p68, %p69
      %p71 = scmp.ne.s32.totalorder %s62, %s63
      %p72 = scmp.eq.s32.totalorder %s31, 0
      %p73 = por %p71, %p72
      %p74 = scmp.ne.s32.totalorder %s62, %s63
      %p75 = scmp.eq.s32.totalorder %s32, 1
      %p76 = por %p74, %p75
      %p78 = scmp.ne.s32.totalorder %s63, %s77
      %p79 = scmp.eq.s32.totalorder %s32, 0
      %p80 = por %p78, %p79
      %s82 = sadd.s32 %s81, 1
      %p85 = scmp.eq.s32.totalorder %s26, 1
      %p86 = scmp.ne.s32.totalorder %s81, %s83
      %p87 = scmp.eq.s32.totalorder %s26, 0
      %p88 = por %p86, %p87
      %p89 = scmp.ne.s32.totalorder %s81, %s83
      %p90 = scmp.eq.s32.totalorder %s31, 1
      %p91 = por %p89, %p90
      %p92 = scmp.ne.s32.totalorder %s83, %s84
      %p93 = scmp.eq.s32.totalorder %s31, 0
      %p94 = por %p92, %p93
      %p95 = scmp.ne.s32.totalorder %s83, %s84
      %p96 = scmp.eq.s32.totalorder %s32, 1
      %p97 = por %p95, %p96
      %p99 = scmp.ne.s32.totalorder %s84, %s98
      %p100 = scmp.eq.s32.totalorder %s32, 0
      %p101 = por %p99, %p100
      %s103 = sadd.s32 %s102, 1
      %p106 = scmp.eq.s32.totalorder %s26, 1
      %p107 = scmp.ne.s32.totalorder %s102, %s104
      %p108 = scmp.eq.s32.totalorder %s26, 0
      %p109 = por %p107, %p108
      %p110 = scmp.ne.s32.totalorder %s102, %s104
      %p111 = scmp.eq.s32.totalorder %s31, 1
      %p112 = por %p110, %p111
      %p113 = scmp.ne.s32.totalorder %s104, %s105
      %p114 = scmp.eq.s32.totalorder %s31, 0
      %p115 = por %p113, %p114
      %p116 = scmp.ne.s32.totalorder %s104, %s105
      %p117 = scmp.eq.s32.totalorder %s32, 1
      %p118 = por %p116, %p117
      %p120 = scmp.ne.s32.totalorder %s105, %s119
      %p121 = scmp.eq.s32.totalorder %s32, 0
      %p122 = por %p120, %p121
      %s124 = sadd.s32 %s123, 1
      %p127 = scmp.eq.s32.totalorder %s26, 1
      %p128 = scmp.ne.s32.totalorder %s123, %s125
      %p129 = scmp.eq.s32.totalorder %s26, 0
      %p130 = por %p128, %p129
      %p131 = scmp.ne.s32.totalorder %s123, %s125
      %p132 = scmp.eq.s32.totalorder %s31, 1
      %p133 = por %p131, %p132
      %p134 = scmp.ne.s32.totalorder %s125, %s126
      %p135 = scmp.eq.s32.totalorder %s31, 0
      %p136 = por %p134, %p135
      %p137 = scmp.ne.s32.totalorder %s125, %s126
      %p138 = scmp.eq.s32.totalorder %s32, 1
      %p139 = por %p137, %p138
      %p141 = scmp.ne.s32.totalorder %s126, %s140
      %p142 = scmp.eq.s32.totalorder %s32, 0
      %p143 = por %p141, %p142
      %s145 = sadd.s32 %s144, 1
      %p148 = scmp.eq.s32.totalorder %s26, 1
      %p149 = scmp.ne.s32.totalorder %s144, %s146
      %p150 = scmp.eq.s32.totalorder %s26, 0
      %p151 = por %p149, %p150
      %p152 = scmp.ne.s32.totalorder %s144, %s146
      %p153 = scmp.eq.s32.totalorder %s31, 1
      %p154 = por %p152, %p153
      %p155 = scmp.ne.s32.totalorder %s146, %s147
      %p156 = scmp.eq.s32.totalorder %s31, 0
      %p157 = por %p155, %p156
      %p158 = scmp.ne.s32.totalorder %s146, %s147
      %p159 = scmp.eq.s32.totalorder %s32, 1
      %p160 = por %p158, %p159
      %p162 = scmp.ne.s32.totalorder %s147, %s161
      %p163 = scmp.eq.s32.totalorder %s32, 0
      %p164 = por %p162, %p163
      %s166 = sadd.s32 %s165, 1
      %p169 = scmp.eq.s32.totalorder %s26, 1
      %p170 = scmp.ne.s32.totalorder %s165, %s167
      %p171 = scmp.eq.s32.totalorder %s26, 0
      %p172 = por %p170, %p171
      %p173 = scmp.ne.s32.totalorder %s165, %s167
      %p174 = scmp.eq.s32.totalorder %s31, 1
      %p175 = por %p173, %p174
      %p176 = scmp.ne.s32.totalorder %s167, %s168
      %p177 = scmp.eq.s32.totalorder %s31, 0
      %p178 = por %p176, %p177
      %p179 = scmp.ne.s32.totalorder %s167, %s168
      %p180 = scmp.eq.s32.totalorder %s32, 1
      %p181 = por %p179, %p180
      %p183 = scmp.ne.s32.totalorder %s168, %s182
      %p184 = scmp.eq.s32.totalorder %s32, 0
      %p185 = por %p183, %p184
      %s187 = sadd.s32 %s186, 1
      %p190 = scmp.eq.s32.totalorder %s26, 1
      %p191 = scmp.ne.s32.totalorder %s186, %s188
      %p192 = scmp.eq.s32.totalorder %s26, 0
      %p193 = por %p191, %p192
      %p194 = scmp.ne.s32.totalorder %s186, %s188
      %p195 = scmp.eq.s32.totalorder %s31, 1
      %p196 = por %p194, %p195
      %p197 = scmp.ne.s32.totalorder %s188, %s189
      %p198 = scmp.eq.s32.totalorder %s31, 0
      %p199 = por %p197, %p198
      %p200 = scmp.ne.s32.totalorder %s188, %s189
      %p201 = scmp.eq.s32.totalorder %s32, 1
      %p202 = por %p200, %p201
      %p204 = scmp.ne.s32.totalorder %s189, %s203
      %p205 = scmp.eq.s32.totalorder %s32, 0
      %p206 = por %p204, %p205
      %s208 = sadd.s32 %s207, 1
      %p211 = scmp.eq.s32.totalorder %s26, 1
      %p212 = scmp.ne.s32.totalorder %s207, %s209
      %p213 = scmp.eq.s32.totalorder %s26, 0
      %p214 = por %p212, %p213
      %p215 = scmp.ne.s32.totalorder %s207, %s209
      %p216 = scmp.eq.s32.totalorder %s31, 1
      %p217 = por %p215, %p216
      %p218 = scmp.ne.s32.totalorder %s209, %s210
      %p219 = scmp.eq.s32.totalorder %s31, 0
      %p220 = por %p218, %p219
      %p221 = scmp.ne.s32.totalorder %s209, %s210
      %p222 = scmp.eq.s32.totalorder %s32, 1
      %p223 = por %p221, %p222
      %p225 = scmp.ne.s32.totalorder %s210, %s224
      %p226 = scmp.eq.s32.totalorder %s32, 0
      %p227 = por %p225, %p226
      %s229 = sadd.s32 %s228, 1
      %p232 = scmp.eq.s32.totalorder %s26, 1
      %p233 = scmp.ne.s32.totalorder %s228, %s230
      %p234 = scmp.eq.s32.totalorder %s26, 0
      %p235 = por %p233, %p234
      %p236 = scmp.ne.s32.totalorder %s228, %s230
      %p237 = scmp.eq.s32.totalorder %s31, 1
      %p238 = por %p236, %p237
      %p239 = scmp.ne.s32.totalorder %s230, %s231
      %p240 = scmp.eq.s32.totalorder %s31, 0
      %p241 = por %p239, %p240
      %p242 = scmp.ne.s32.totalorder %s230, %s231
      %p243 = scmp.eq.s32.totalorder %s32, 1
      %p244 = por %p242, %p243
      %p246 = scmp.ne.s32.totalorder %s231, %s245
      %p247 = scmp.eq.s32.totalorder %s32, 0
      %p248 = por %p246, %p247
      %s250 = sadd.s32 %s249, 1
      %p253 = scmp.eq.s32.totalorder %s26, 1
      %p254 = scmp.ne.s32.totalorder %s249, %s251
      %p255 = scmp.eq.s32.totalorder %s26, 0
      %p256 = por %p254, %p255
      %p257 = scmp.ne.s32.totalorder %s249, %s251
      %p258 = scmp.eq.s32.totalorder %s31, 1
      %p259 = por %p257, %p258
      %p260 = scmp.ne.s32.totalorder %s251, %s252
      %p261 = scmp.eq.s32.totalorder %s31, 0
      %p262 = por %p260, %p261
      %p263 = scmp.ne.s32.totalorder %s251, %s252
      %p264 = scmp.eq.s32.totalorder %s32, 1
      %p265 = por %p263, %p264
      %p267 = scmp.ne.s32.totalorder %s252, %s266
      %p268 = scmp.eq.s32.totalorder %s32, 0
      %p269 = por %p267, %p268
      %s271 = sadd.s32 %s270, 1
      %p274 = scmp.eq.s32.totalorder %s26, 1
      %p275 = scmp.ne.s32.totalorder %s270, %s272
      %p276 = scmp.eq.s32.totalorder %s26, 0
      %p277 = por %p275, %p276
      %p278 = scmp.ne.s32.totalorder %s270, %s272
      %p279 = scmp.eq.s32.totalorder %s31, 1
      %p280 = por %p278, %p279
      %p281 = scmp.ne.s32.totalorder %s272, %s273
      %p282 = scmp.eq.s32.totalorder %s31, 0
      %p283 = por %p281, %p282
      %p284 = scmp.ne.s32.totalorder %s272, %s273
      %p285 = scmp.eq.s32.totalorder %s32, 1
      %p286 = por %p284, %p285
      %p288 = scmp.ne.s32.totalorder %s273, %s287
      %p289 = scmp.eq.s32.totalorder %s32, 0
      %p290 = por %p288, %p289
      %s292 = sadd.s32 %s291, 1
      %p295 = scmp.eq.s32.totalorder %s26, 1
      %p296 = scmp.ne.s32.totalorder %s291, %s293
      %p297 = scmp.eq.s32.totalorder %s26, 0
      %p298 = por %p296, %p297
      %p299 = scmp.ne.s32.totalorder %s291, %s293
      %p300 = scmp.eq.s32.totalorder %s31, 1
      %p301 = por %p299, %p300
      %p302 = scmp.ne.s32.totalorder %s293, %s294
      %p303 = scmp.eq.s32.totalorder %s31, 0
      %p304 = por %p302, %p303
      %p305 = scmp.ne.s32.totalorder %s293, %s294
      %p306 = scmp.eq.s32.totalorder %s32, 1
      %p307 = por %p305, %p306
      %p309 = scmp.ne.s32.totalorder %s294, %s308
      %p310 = scmp.eq.s32.totalorder %s32, 0
      %p311 = por %p309, %p310
      %s313 = sadd.s32 %s312, 1
      %p316 = scmp.eq.s32.totalorder %s26, 1
      %p317 = scmp.ne.s32.totalorder %s312, %s314
      %p318 = scmp.eq.s32.totalorder %s26, 0
      %p319 = por %p317, %p318
      %p320 = scmp.ne.s32.totalorder %s312, %s314
      %p321 = scmp.eq.s32.totalorder %s31, 1
      %p322 = por %p320, %p321
      %p323 = scmp.ne.s32.totalorder %s314, %s315
      %p324 = scmp.eq.s32.totalorder %s31, 0
      %p325 = por %p323, %p324
      %p326 = scmp.ne.s32.totalorder %s314, %s315
      %p327 = scmp.eq.s32.totalorder %s32, 1
      %p328 = por %p326, %p327
      %p330 = scmp.ne.s32.totalorder %s315, %s329
      %p331 = scmp.eq.s32.totalorder %s32, 0
      %p332 = por %p330, %p331
      %s334 = sadd.s32 %s333, 1
      %p337 = scmp.eq.s32.totalorder %s26, 1
      %p338 = scmp.ne.s32.totalorder %s333, %s335
      %p339 = scmp.eq.s32.totalorder %s26, 0
      %p340 = por %p338, %p339
      %p341 = scmp.ne.s32.totalorder %s333, %s335
      %p342 = scmp.eq.s32.totalorder %s31, 1
      %p343 = por %p341, %p342
      %p344 = scmp.ne.s32.totalorder %s335, %s336
      %p345 = scmp.eq.s32.totalorder %s31, 0
      %p346 = por %p344, %p345
      %p347 = scmp.ne.s32.totalorder %s335, %s336
      %p348 = scmp.eq.s32.totalorder %s32, 1
      %p349 = por %p347, %p348
      %p351 = scmp.ne.s32.totalorder %s336, %s350
      %p352 = scmp.eq.s32.totalorder %s32, 0
      %p353 = por %p351, %p352
      %s355 = sadd.s32 %s354, 1
      %p358 = scmp.eq.s32.totalorder %s26, 1
      %p359 = scmp.ne.s32.totalorder %s354, %s356
      %p360 = scmp.eq.s32.totalorder %s26, 0
      %p361 = por %p359, %p360
      %p362 = scmp.ne.s32.totalorder %s354, %s356
      %p363 = scmp.eq.s32.totalorder %s31, 1
      %p364 = por %p362, %p363
      %p365 = scmp.ne.s32.totalorder %s356, %s357
      %p366 = scmp.eq.s32.totalorder %s31, 0
      %p367 = por %p365, %p366
      %p368 = scmp.ne.s32.totalorder %s356, %s357
      %p369 = scmp.eq.s32.totalorder %s32, 1
      %p370 = por %p368, %p369
      %p372 = scmp.ne.s32.totalorder %s357, %s371
      %p373 = scmp.eq.s32.totalorder %s32, 0
      %p374 = por %p372, %p373
      %s376 = sadd.s32 %s375, 1
      %p379 = scmp.eq.s32.totalorder %s26, 1
      %p380 = scmp.ne.s32.totalorder %s375, %s377
      %p381 = scmp.eq.s32.totalorder %s26, 0
      %p382 = por %p380, %p381
      %p383 = scmp.ne.s32.totalorder %s375, %s377
      %p384 = scmp.eq.s32.totalorder %s31, 1
      %p385 = por %p383, %p384
      %p386 = scmp.ne.s32.totalorder %s377, %s378
      %p387 = scmp.eq.s32.totalorder %s31, 0
      %p388 = por %p386, %p387
      %p389 = scmp.ne.s32.totalorder %s377, %s378
      %p390 = scmp.eq.s32.totalorder %s32, 1
      %p391 = por %p389, %p390
      %p393 = scmp.ne.s32.totalorder %s378, %s392
      %p394 = scmp.eq.s32.totalorder %s32, 0
      %p395 = por %p393, %p394
      %s396 = ssub.s32 %s26, %s33
      %p397 = scmp.eq.s32.totalorder %s396, 0
      %s399 = sadd.s32 %s398, 1
      %s400 = scalar_select %p397, %s398, %s399
      %p403 = pneg %p397
      %p404 = scmp.eq.s32.totalorder %s26, 1
      %p405 = por %p403, %p404
      %p406 = scmp.ne.s32.totalorder %s398, %s401
      %p407 = scmp.eq.s32.totalorder %s26, 0
      %p408 = por %p406, %p407
      %p409 = scmp.ne.s32.totalorder %s398, %s401
      %p410 = scmp.eq.s32.totalorder %s31, 1
      %p411 = por %p409, %p410
      %p412 = scmp.ne.s32.totalorder %s401, %s402
      %p413 = scmp.eq.s32.totalorder %s31, 0
      %p414 = por %p412, %p413
      %p415 = scmp.ne.s32.totalorder %s401, %s402
      %p416 = scmp.eq.s32.totalorder %s32, 1
      %p417 = por %p415, %p416
      %p419 = scmp.ne.s32.totalorder %s402, %s418
      %p420 = scmp.eq.s32.totalorder %s32, 0
      %p421 = por %p419, %p420
      %p422 = scmp.le.s32.totalorder 1, %s26
      %p423 = scmp.lt.s32.totalorder %s26, 3
      %p424 = pnand %p422, %p423
      %p425 = pneg %p424
      // Predicated region
      $region9: #{net_forward.1} parent=5 // pred_check
        _
      $region10: #{net_forward.1} parent=5 // pred_check_branch
        %427 = sbr.rel (%p424) target = $region12
      $region11: #{net_forward.1} parent=5 // pred_region
        %s428 = ssub.s32 %s26, 1
        // Predicated region
        $region13: #{net_forward.1} parent=11 // pred_check
          %p429 = pneg %p73
        $region14: #{net_forward.1} parent=11 // pred_check_branch
          %431 = sbr.rel (%p429) target = $region16
        $region15: #{net_forward.1} parent=11 // pred_region
          _
        $region16: #{net_forward.1} parent=11 // pred_fallthru
          _
        // Predicated region
        $region17: #{net_forward.1} parent=11 // pred_check
          %p432 = pneg %p94
        $region18: #{net_forward.1} parent=11 // pred_check_branch
          %434 = sbr.rel (%p432) target = $region20
        $region19: #{net_forward.1} parent=11 // pred_region
          _
        $region20: #{net_forward.1} parent=11 // pred_fallthru
          _
        // Predicated region
        $region21: #{net_forward.1} parent=11 // pred_check
          %p435 = pneg %p115
        $region22: #{net_forward.1} parent=11 // pred_check_branch
          %437 = sbr.rel (%p435) target = $region24
        $region23: #{net_forward.1} parent=11 // pred_region
          _
        $region24: #{net_forward.1} parent=11 // pred_fallthru
          _
        // Predicated region
        $region25: #{net_forward.1} parent=11 // pred_check
          %p438 = pneg %p136
        $region26: #{net_forward.1} parent=11 // pred_check_branch
          %440 = sbr.rel (%p438) target = $region28
        $region27: #{net_forward.1} parent=11 // pred_region
          _
        $region28: #{net_forward.1} parent=11 // pred_fallthru
          _
        // Predicated region
        $region29: #{net_forward.1} parent=11 // pred_check
          %p441 = pneg %p157
        $region30: #{net_forward.1} parent=11 // pred_check_branch
          %443 = sbr.rel (%p441) target = $region32
        $region31: #{net_forward.1} parent=11 // pred_region
          _
        $region32: #{net_forward.1} parent=11 // pred_fallthru
          _
        // Predicated region
        $region33: #{net_forward.1} parent=11 // pred_check
          %p444 = pneg %p178
        $region34: #{net_forward.1} parent=11 // pred_check_branch
          %446 = sbr.rel (%p444) target = $region36
        $region35: #{net_forward.1} parent=11 // pred_region
          _
        $region36: #{net_forward.1} parent=11 // pred_fallthru
          _
        // Predicated region
        $region37: #{net_forward.1} parent=11 // pred_check
          %p447 = pneg %p199
        $region38: #{net_forward.1} parent=11 // pred_check_branch
          %449 = sbr.rel (%p447) target = $region40
        $region39: #{net_forward.1} parent=11 // pred_region
          _
        $region40: #{net_forward.1} parent=11 // pred_fallthru
          _
        // Predicated region
        $region41: #{net_forward.1} parent=11 // pred_check
          %p450 = pneg %p220
        $region42: #{net_forward.1} parent=11 // pred_check_branch
          %452 = sbr.rel (%p450) target = $region44
        $region43: #{net_forward.1} parent=11 // pred_region
          _
        $region44: #{net_forward.1} parent=11 // pred_fallthru
          _
        // Predicated region
        $region45: #{net_forward.1} parent=11 // pred_check
          %p453 = pneg %p241
        $region46: #{net_forward.1} parent=11 // pred_check_branch
          %455 = sbr.rel (%p453) target = $region48
        $region47: #{net_forward.1} parent=11 // pred_region
          _
        $region48: #{net_forward.1} parent=11 // pred_fallthru
          _
        // Predicated region
        $region49: #{net_forward.1} parent=11 // pred_check
          %p456 = pneg %p262
        $region50: #{net_forward.1} parent=11 // pred_check_branch
          %458 = sbr.rel (%p456) target = $region52
        $region51: #{net_forward.1} parent=11 // pred_region
          _
        $region52: #{net_forward.1} parent=11 // pred_fallthru
          _
        // Predicated region
        $region53: #{net_forward.1} parent=11 // pred_check
          %p459 = pneg %p283
        $region54: #{net_forward.1} parent=11 // pred_check_branch
          %461 = sbr.rel (%p459) target = $region56
        $region55: #{net_forward.1} parent=11 // pred_region
          _
        $region56: #{net_forward.1} parent=11 // pred_fallthru
          _
        // Predicated region
        $region57: #{net_forward.1} parent=11 // pred_check
          %p462 = pneg %p304
        $region58: #{net_forward.1} parent=11 // pred_check_branch
          %464 = sbr.rel (%p462) target = $region60
        $region59: #{net_forward.1} parent=11 // pred_region
          _
        $region60: #{net_forward.1} parent=11 // pred_fallthru
          _
        // Predicated region
        $region61: #{net_forward.1} parent=11 // pred_check
          %p465 = pneg %p325
        $region62: #{net_forward.1} parent=11 // pred_check_branch
          %467 = sbr.rel (%p465) target = $region64
        $region63: #{net_forward.1} parent=11 // pred_region
          _
        $region64: #{net_forward.1} parent=11 // pred_fallthru
          _
        // Predicated region
        $region65: #{net_forward.1} parent=11 // pred_check
          %p468 = pneg %p346
        $region66: #{net_forward.1} parent=11 // pred_check_branch
          %470 = sbr.rel (%p468) target = $region68
        $region67: #{net_forward.1} parent=11 // pred_region
          _
        $region68: #{net_forward.1} parent=11 // pred_fallthru
          _
        // Predicated region
        $region69: #{net_forward.1} parent=11 // pred_check
          %p471 = pneg %p367
        $region70: #{net_forward.1} parent=11 // pred_check_branch
          %473 = sbr.rel (%p471) target = $region72
        $region71: #{net_forward.1} parent=11 // pred_region
          _
        $region72: #{net_forward.1} parent=11 // pred_fallthru
          _
        // Predicated region
        $region73: #{net_forward.1} parent=11 // pred_check
          %p474 = pneg %p388
        $region74: #{net_forward.1} parent=11 // pred_check_branch
          %476 = sbr.rel (%p474) target = $region76
        $region75: #{net_forward.1} parent=11 // pred_region
          _
        $region76: #{net_forward.1} parent=11 // pred_fallthru
          _
      $region12: #{net_forward.1} parent=5 // pred_fallthru
        _
      %p477 = scmp.lt.s32.totalorder %s26, 2
      // Predicated region
      $region77: #{net_forward.1} parent=5 // pred_check
        %p478 = pneg %p477
      $region78: #{net_forward.1} parent=5 // pred_check_branch
        %480 = sbr.rel (%p478) target = $region80
      $region79: #{net_forward.1} parent=5 // pred_region
        // Predicated region
        $region81: #{net_forward.1} parent=79 // pred_check
          %p481 = pneg %p46
        $region82: #{net_forward.1} parent=79 // pred_check_branch
          %483 = sbr.rel (%p481) target = $region84
        $region83: #{net_forward.1} parent=79 // pred_region
          %p484 = scmp.lt.s32.totalorder %s26, 1
          %s485 = scalar_select %p484, %s26, 1
          %s486 = smul.addr %s485, 11
          %s487 = smul.addr %s486, 4
          %s488 = scalar_lea.vmem %s0, %s487
        $region84: #{net_forward.1} parent=79 // pred_fallthru
          _
      $region80: #{net_forward.1} parent=5 // pred_fallthru
        _
      %p489 = scmp.le.s32.totalorder 1, %s26
      %p490 = scmp.lt.s32.totalorder %s26, 3
      %p491 = pnand %p489, %p490
      %p492 = pneg %p491
      // Predicated region
      $region85: #{net_forward.1} parent=5 // pred_check
        _
      $region86: #{net_forward.1} parent=5 // pred_check_branch
        %494 = sbr.rel (%p491) target = $region88
      $region87: #{net_forward.1} parent=5 // pred_region
        %s495 = ssub.s32 %s26, 1
        %p496 = scmp.lt.s32.totalorder %s31, 1
        %s497 = scalar_select %p496, %s31, 1
        %s498 = smul.addr %s497, 11
        %s499 = smul.addr %s498, 4
        %s500 = scalar_lea.vmem %s0, %s499
        %p501 = pneg %p52
        %p502 = pneg %p49
        %p503 = pneg %p73
        %p504 = pneg %p70
        %p505 = pneg %p94
        %p506 = pneg %p91
        %p507 = pneg %p115
        %p508 = pneg %p112
        %p509 = pneg %p136
        %p510 = pneg %p133
        %p511 = pneg %p157
        %p512 = pneg %p154
        %p513 = pneg %p178
        %p514 = pneg %p175
        %p515 = pneg %p199
        %p516 = pneg %p196
        %p517 = pneg %p220
        %p518 = pneg %p217
        %p519 = pneg %p241
        %p520 = pneg %p238
        %p521 = pneg %p262
        %p522 = pneg %p259
        %p523 = pneg %p283
        %p524 = pneg %p280
        %p525 = pneg %p304
        %p526 = pneg %p301
        %p527 = pneg %p325
        %p528 = pneg %p322
        %p529 = pneg %p346
        %p530 = pneg %p343
        %p531 = pneg %p367
        %p532 = pneg %p364
        %p533 = pneg %p388
        %p534 = pneg %p385
        %p535 = pneg %p414
        %p536 = pneg %p411
        %s537 = sand.u32 %s401, 1
        %s538 = scalar_lea.sflag [#allocation6], %s537
        %s539 = sand.u32 %s401, 1
        %s540 = scalar_lea.vmem [#allocation5], %s539
        %p541 = scmp.lt.s32.totalorder %s31, 1
        %s542 = scalar_select %p541, %s31, 1
        %s543 = smul.addr %s542, 11
        %s544 = smul.addr %s543, 4
        %s545 = scalar_lea.vmem %s0, %s544
        %v547 = vld [vmem:[%s545] sm:$0xff]
        %v548 = vld [vmem:[%s545 + $0x8] sm:$0xff]
        %v549 = vld [vmem:[%s545 + $0x10] sm:$0xff]
        %v550 = vld [vmem:[%s545 + $0x18] sm:$0xff]
        %v551 = vld [vmem:[%s545 + $0x20] sm:$0xff]
        %v552 = vld [vmem:[%s545 + $0x28] sm:$0xf]
        %553 = vst [vmem:[#allocation2] sm:$0xff] %v547
        %554 = vst [vmem:[#allocation2 + $0x8] sm:$0xff] %v548
        %555 = vst [vmem:[#allocation2 + $0x10] sm:$0xff] %v549
        %556 = vst [vmem:[#allocation2 + $0x18] sm:$0xff] %v550
        %vm557 = vcmask 1010688
        %558 = vst.msk [vmem:[#allocation2 + $0x20] sm:$0xf] %vm557, %v551
        %564 = vrot.lane.b32.xlu0 %v547, 127
        %v565 = vpop.permute.xlu0 %564
        %566 = vrot.lane.b32.xlu0 %v548, 127
        %v567 = vpop.permute.xlu0 %566
        %568 = vrot.lane.b32.xlu0 %v549, 127
        %v569 = vpop.permute.xlu0 %568
        %570 = vrot.lane.b32.xlu0 %v550, 127
        %v571 = vpop.permute.xlu0 %570
        %572 = vrot.lane.b32.xlu0 %v551, 127
        %v573 = vpop.permute.xlu0 %572
        %v574 = vrot.slane %v565, 4
        %v575 = vrot.slane %v567, 4
        %v576 = vrot.slane %v569, 4
        %v577 = vrot.slane %v571, 4
        %v578 = vrot.slane %v573, 4
        %vm579 = vcmask 1043456
        %v580 = vsel %vm579, %v574, %v575
        %vm581 = vcmask 1039360
        %v582 = vsel %vm581, %v565, %v580
        %v583 = vsel %vm579, %v575, %v576
        %v584 = vsel %vm581, %v567, %v583
        %v585 = vsel %vm579, %v576, %v577
        %v586 = vsel %vm581, %v569, %v585
        %v587 = vsel %vm579, %v577, %v578
        %v588 = vsel %vm581, %v571, %v587
        %594 = vst [vmem:[#allocation2 + $0x24] sm:$0xff] %v582
        %595 = vst [vmem:[#allocation2 + $0x2c] sm:$0xff] %v584
        %596 = vst [vmem:[#allocation2 + $0x34] sm:$0xff] %v586
        %597 = vst [vmem:[#allocation2 + $0x3c] sm:$0xff] %v588
        %598 = vst.msk [vmem:[#allocation2 + $0x44] sm:$0xf] %vm557, %v573
        %599 = vrot.lane.b32.xlu0 %v547, 126
        %v600 = vpop.permute.xlu0 %599
        %601 = vrot.lane.b32.xlu0 %v548, 126
        %v602 = vpop.permute.xlu0 %601
        %603 = vrot.lane.b32.xlu0 %v549, 126
        %v604 = vpop.permute.xlu0 %603
        %605 = vrot.lane.b32.xlu0 %v550, 126
        %v606 = vpop.permute.xlu0 %605
        %607 = vrot.lane.b32.xlu0 %v551, 126
        %v608 = vpop.permute.xlu0 %607
        %v609 = vrot.slane %v600, 4
        %v610 = vrot.slane %v602, 4
        %v611 = vrot.slane %v604, 4
        %v612 = vrot.slane %v606, 4
        %v613 = vrot.slane %v608, 4
        %v614 = vsel %vm579, %v609, %v610
        %vm615 = vcmask 1031168
        %v616 = vsel %vm615, %v600, %v614
        %v617 = vsel %vm579, %v610, %v611
        %v618 = vsel %vm615, %v602, %v617
        %v619 = vsel %vm579, %v611, %v612
        %v620 = vsel %vm615, %v604, %v619
        %v621 = vsel %vm579, %v612, %v613
        %v622 = vsel %vm615, %v606, %v621
        %628 = vst [vmem:[#allocation2 + $0x48] sm:$0xff] %v616
        %629 = vst [vmem:[#allocation2 + $0x50] sm:$0xff] %v618
        %630 = vst [vmem:[#allocation2 + $0x58] sm:$0xff] %v620
        %631 = vst [vmem:[#allocation2 + $0x60] sm:$0xff] %v622
        %632 = vst.msk [vmem:[#allocation2 + $0x68] sm:$0xf] %vm557, %v608
        %633 = vrot.lane.b32.xlu0 %v547, 125
        %v634 = vpop.permute.xlu0 %633
        %635 = vrot.lane.b32.xlu0 %v548, 125
        %v636 = vpop.permute.xlu0 %635
        %637 = vrot.lane.b32.xlu0 %v549, 125
        %v638 = vpop.permute.xlu0 %637
        %639 = vrot.lane.b32.xlu0 %v550, 125
        %v640 = vpop.permute.xlu0 %639
        %641 = vrot.lane.b32.xlu0 %v551, 125
        %v642 = vpop.permute.xlu0 %641
        %v643 = vrot.slane %v634, 4
        %v644 = vrot.slane %v636, 4
        %v645 = vrot.slane %v638, 4
        %v646 = vrot.slane %v640, 4
        %v647 = vrot.slane %v642, 4
        %v648 = vsel %vm579, %v643, %v644
        %vm649 = vcmask 1022976
        %v650 = vsel %vm649, %v634, %v648
        %v651 = vsel %vm579, %v644, %v645
        %v652 = vsel %vm649, %v636, %v651
        %v653 = vsel %vm579, %v645, %v646
        %v654 = vsel %vm649, %v638, %v653
        %v655 = vsel %vm579, %v646, %v647
        %v656 = vsel %vm649, %v640, %v655
        %662 = vst [vmem:[#allocation2 + $0x6c] sm:$0xff] %v650
        %663 = vst [vmem:[#allocation2 + $0x74] sm:$0xff] %v652
        %664 = vst [vmem:[#allocation2 + $0x7c] sm:$0xff] %v654
        %665 = vst [vmem:[#allocation2 + $0x84] sm:$0xff] %v656
        %666 = vst.msk [vmem:[#allocation2 + $0x8c] sm:$0xf] %vm557, %v642
        %667 = vrot.lane.b32.xlu0 %v547, 124
        %v668 = vpop.permute.xlu0 %667
        %669 = vrot.lane.b32.xlu0 %v548, 124
        %v670 = vpop.permute.xlu0 %669
        %671 = vrot.lane.b32.xlu0 %v549, 124
        %v672 = vpop.permute.xlu0 %671
        %673 = vrot.lane.b32.xlu0 %v550, 124
        %v674 = vpop.permute.xlu0 %673
        %675 = vrot.lane.b32.xlu0 %v551, 124
        %v676 = vpop.permute.xlu0 %675
        %v677 = vrot.slane %v668, 4
        %v678 = vrot.slane %v670, 4
        %v679 = vrot.slane %v672, 4
        %v680 = vrot.slane %v674, 4
        %v681 = vrot.slane %v676, 4
        %v682 = vsel %vm579, %v677, %v678
        %vm683 = vcmask 1014784
        %v684 = vsel %vm683, %v668, %v682
        %v685 = vsel %vm579, %v678, %v679
        %v686 = vsel %vm683, %v670, %v685
        %v687 = vsel %vm579, %v679, %v680
        %v688 = vsel %vm683, %v672, %v687
        %v689 = vsel %vm579, %v680, %v681
        %v690 = vsel %vm683, %v674, %v689
        %696 = vst [vmem:[#allocation2 + $0x90] sm:$0xff] %v684
        %697 = vst [vmem:[#allocation2 + $0x98] sm:$0xff] %v686
        %698 = vst [vmem:[#allocation2 + $0xa0] sm:$0xff] %v688
        %699 = vst [vmem:[#allocation2 + $0xa8] sm:$0xff] %v690
        %700 = vst.msk [vmem:[#allocation2 + $0xb0] sm:$0xf] %vm557, %v676
        %701 = vrot.lane.b32.xlu0 %v547, 92
        %v702 = vpop.permute.xlu0 %701
        %703 = vrot.lane.b32.xlu0 %v548, 92
        %v704 = vpop.permute.xlu0 %703
        %705 = vrot.lane.b32.xlu0 %v549, 92
        %v706 = vpop.permute.xlu0 %705
        %707 = vrot.lane.b32.xlu0 %v550, 92
        %v708 = vpop.permute.xlu0 %707
        %709 = vrot.lane.b32.xlu0 %v551, 92
        %v710 = vpop.permute.xlu0 %709
        %v711 = vrot.slane %v702, 4
        %v712 = vrot.slane %v704, 4
        %v713 = vrot.slane %v706, 4
        %v714 = vrot.slane %v708, 4
        %v715 = vrot.slane %v710, 4
        %v716 = vsel %vm579, %v711, %v712
        %vm717 = vcmask 752640
        %v718 = vsel %vm717, %v702, %v716
        %v719 = vsel %vm579, %v712, %v713
        %v720 = vsel %vm717, %v704, %v719
        %v721 = vsel %vm579, %v713, %v714
        %v722 = vsel %vm717, %v706, %v721
        %v723 = vsel %vm579, %v714, %v715
        %v724 = vsel %vm717, %v708, %v723
        %v725 = vsel %vm717, %v710, %v715
        %731 = vst [vmem:[#allocation2 + $0xb4] sm:$0xff] %v718
        %732 = vst [vmem:[#allocation2 + $0xbc] sm:$0xff] %v720
        %733 = vst [vmem:[#allocation2 + $0xc4] sm:$0xff] %v722
        %734 = vst [vmem:[#allocation2 + $0xcc] sm:$0xff] %v724
        %735 = vst.msk [vmem:[#allocation2 + $0xd4] sm:$0xf] %vm557, %v725
        %736 = vrot.lane.b32.xlu0 %v547, 91
        %v737 = vpop.permute.xlu0 %736
        %738 = vrot.lane.b32.xlu0 %v548, 91
        %v739 = vpop.permute.xlu0 %738
        %740 = vrot.lane.b32.xlu0 %v549, 91
        %v741 = vpop.permute.xlu0 %740
        %742 = vrot.lane.b32.xlu0 %v550, 91
        %v743 = vpop.permute.xlu0 %742
        %744 = vrot.lane.b32.xlu0 %v551, 91
        %v745 = vpop.permute.xlu0 %744
        %v746 = vrot.slane %v737, 4
        %v747 = vrot.slane %v739, 4
        %v748 = vrot.slane %v741, 4
        %v749 = vrot.slane %v743, 4
        %v750 = vrot.slane %v745, 4
        %v751 = vsel %vm579, %v746, %v747
        %vm752 = vcmask 744448
        %v753 = vsel %vm752, %v737, %v751
        %v754 = vsel %vm579, %v747, %v748
        %v755 = vsel %vm752, %v739, %v754
        %v756 = vsel %vm579, %v748, %v749
        %v757 = vsel %vm752, %v741, %v756
        %v758 = vsel %vm579, %v749, %v750
        %v759 = vsel %vm752, %v743, %v758
        %v760 = vsel %vm752, %v745, %v750
        %766 = vst [vmem:[#allocation2 + $0xd8] sm:$0xff] %v753
        %767 = vst [vmem:[#allocation2 + $0xe0] sm:$0xff] %v755
        %768 = vst [vmem:[#allocation2 + $0xe8] sm:$0xff] %v757
        %769 = vst [vmem:[#allocation2 + $0xf0] sm:$0xff] %v759
        %770 = vst.msk [vmem:[#allocation2 + $0xf8] sm:$0xf] %vm557, %v760
        %771 = vrot.lane.b32.xlu0 %v547, 90
        %v772 = vpop.permute.xlu0 %771
        %773 = vrot.lane.b32.xlu0 %v548, 90
        %v774 = vpop.permute.xlu0 %773
        %775 = vrot.lane.b32.xlu0 %v549, 90
        %v776 = vpop.permute.xlu0 %775
        %777 = vrot.lane.b32.xlu0 %v550, 90
        %v778 = vpop.permute.xlu0 %777
        %779 = vrot.lane.b32.xlu0 %v551, 90
        %v780 = vpop.permute.xlu0 %779
        %v781 = vrot.slane %v772, 4
        %v782 = vrot.slane %v774, 4
        %v783 = vrot.slane %v776, 4
        %v784 = vrot.slane %v778, 4
        %v785 = vrot.slane %v780, 4
        %v786 = vsel %vm579, %v781, %v782
        %vm787 = vcmask 736256
        %v788 = vsel %vm787, %v772, %v786
        %v789 = vsel %vm579, %v782, %v783
        %v790 = vsel %vm787, %v774, %v789
        %v791 = vsel %vm579, %v783, %v784
        %v792 = vsel %vm787, %v776, %v791
        %v793 = vsel %vm579, %v784, %v785
        %v794 = vsel %vm787, %v778, %v793
        %v795 = vsel %vm787, %v780, %v785
        %801 = vst [vmem:[#allocation2 + $0xfc] sm:$0xff] %v788
        %802 = vst [vmem:[#allocation2 + $0x104] sm:$0xff] %v790
        %803 = vst [vmem:[#allocation2 + $0x10c] sm:$0xff] %v792
        %804 = vst [vmem:[#allocation2 + $0x114] sm:$0xff] %v794
        %805 = vst.msk [vmem:[#allocation2 + $0x11c] sm:$0xf] %vm557, %v795
        %806 = vrot.lane.b32.xlu0 %v547, 89
        %v807 = vpop.permute.xlu0 %806
        %808 = vrot.lane.b32.xlu0 %v548, 89
        %v809 = vpop.permute.xlu0 %808
        %810 = vrot.lane.b32.xlu0 %v549, 89
        %v811 = vpop.permute.xlu0 %810
        %812 = vrot.lane.b32.xlu0 %v550, 89
        %v813 = vpop.permute.xlu0 %812
        %814 = vrot.lane.b32.xlu0 %v551, 89
        %v815 = vpop.permute.xlu0 %814
        %v816 = vrot.slane %v807, 4
        %v817 = vrot.slane %v809, 4
        %v818 = vrot.slane %v811, 4
        %v819 = vrot.slane %v813, 4
        %v820 = vrot.slane %v815, 4
        %v821 = vsel %vm579, %v816, %v817
        %vm822 = vcmask 728064
        %v823 = vsel %vm822, %v807, %v821
        %v824 = vsel %vm579, %v817, %v818
        %v825 = vsel %vm822, %v809, %v824
        %v826 = vsel %vm579, %v818, %v819
        %v827 = vsel %vm822, %v811, %v826
        %v828 = vsel %vm579, %v819, %v820
        %v829 = vsel %vm822, %v813, %v828
        %v830 = vsel %vm822, %v815, %v820
        %836 = vst [vmem:[#allocation2 + $0x120] sm:$0xff] %v823
        %837 = vst [vmem:[#allocation2 + $0x128] sm:$0xff] %v825
        %838 = vst [vmem:[#allocation2 + $0x130] sm:$0xff] %v827
        %839 = vst [vmem:[#allocation2 + $0x138] sm:$0xff] %v829
        %840 = vst.msk [vmem:[#allocation2 + $0x140] sm:$0xf] %vm557, %v830
        %841 = vrot.lane.b32.xlu0 %v547, 88
        %v842 = vpop.permute.xlu0 %841
        %843 = vrot.lane.b32.xlu0 %v548, 88
        %v844 = vpop.permute.xlu0 %843
        %845 = vrot.lane.b32.xlu0 %v549, 88
        %v846 = vpop.permute.xlu0 %845
        %847 = vrot.lane.b32.xlu0 %v550, 88
        %v848 = vpop.permute.xlu0 %847
        %849 = vrot.lane.b32.xlu0 %v551, 88
        %v850 = vpop.permute.xlu0 %849
        %v851 = vrot.slane %v842, 4
        %v852 = vrot.slane %v844, 4
        %v853 = vrot.slane %v846, 4
        %v854 = vrot.slane %v848, 4
        %v855 = vrot.slane %v850, 4
        %v856 = vsel %vm579, %v851, %v852
        %vm857 = vcmask 719872
        %v858 = vsel %vm857, %v842, %v856
        %v859 = vsel %vm579, %v852, %v853
        %v860 = vsel %vm857, %v844, %v859
        %v861 = vsel %vm579, %v853, %v854
        %v862 = vsel %vm857, %v846, %v861
        %v863 = vsel %vm579, %v854, %v855
        %v864 = vsel %vm857, %v848, %v863
        %v865 = vsel %vm857, %v850, %v855
        %871 = vst [vmem:[#allocation2 + $0x144] sm:$0xff] %v858
        %872 = vst [vmem:[#allocation2 + $0x14c] sm:$0xff] %v860
        %873 = vst [vmem:[#allocation2 + $0x154] sm:$0xff] %v862
        %874 = vst [vmem:[#allocation2 + $0x15c] sm:$0xff] %v864
        %875 = vst.msk [vmem:[#allocation2 + $0x164] sm:$0xf] %vm557, %v865
        %876 = vrot.lane.b32.xlu0 %v547, 56
        %v877 = vpop.permute.xlu0 %876
        %878 = vrot.lane.b32.xlu0 %v548, 56
        %v879 = vpop.permute.xlu0 %878
        %880 = vrot.lane.b32.xlu0 %v549, 56
        %v881 = vpop.permute.xlu0 %880
        %882 = vrot.lane.b32.xlu0 %v550, 56
        %v883 = vpop.permute.xlu0 %882
        %884 = vrot.lane.b32.xlu0 %v551, 56
        %v885 = vpop.permute.xlu0 %884
        %v886 = vrot.slane %v877, 4
        %v887 = vrot.slane %v879, 4
        %v888 = vrot.slane %v881, 4
        %v889 = vrot.slane %v883, 4
        %v890 = vrot.slane %v885, 4
        %v891 = vsel %vm579, %v886, %v887
        %vm892 = vcmask 457728
        %v893 = vsel %vm892, %v877, %v891
        %v894 = vsel %vm579, %v887, %v888
        %v895 = vsel %vm892, %v879, %v894
        %v896 = vsel %vm579, %v888, %v889
        %v897 = vsel %vm892, %v881, %v896
        %v898 = vsel %vm579, %v889, %v890
        %v899 = vsel %vm892, %v883, %v898
        %v900 = vsel %vm892, %v885, %v890
        %906 = vst [vmem:[#allocation2 + $0x168] sm:$0xff] %v893
        %907 = vst [vmem:[#allocation2 + $0x170] sm:$0xff] %v895
        %908 = vst [vmem:[#allocation2 + $0x178] sm:$0xff] %v897
        %909 = vst [vmem:[#allocation2 + $0x180] sm:$0xff] %v899
        %910 = vst.msk [vmem:[#allocation2 + $0x188] sm:$0xf] %vm557, %v900
        %911 = vrot.lane.b32.xlu0 %v547, 55
        %v912 = vpop.permute.xlu0 %911
        %913 = vrot.lane.b32.xlu0 %v548, 55
        %v914 = vpop.permute.xlu0 %913
        %915 = vrot.lane.b32.xlu0 %v549, 55
        %v916 = vpop.permute.xlu0 %915
        %917 = vrot.lane.b32.xlu0 %v550, 55
        %v918 = vpop.permute.xlu0 %917
        %919 = vrot.lane.b32.xlu0 %v551, 55
        %v920 = vpop.permute.xlu0 %919
        %v921 = vrot.slane %v912, 4
        %v922 = vrot.slane %v914, 4
        %v923 = vrot.slane %v916, 4
        %v924 = vrot.slane %v918, 4
        %v925 = vrot.slane %v920, 4
        %v926 = vsel %vm579, %v921, %v922
        %vm927 = vcmask 449536
        %v928 = vsel %vm927, %v912, %v926
        %v929 = vsel %vm579, %v922, %v923
        %v930 = vsel %vm927, %v914, %v929
        %v931 = vsel %vm579, %v923, %v924
        %v932 = vsel %vm927, %v916, %v931
        %v933 = vsel %vm579, %v924, %v925
        %v934 = vsel %vm927, %v918, %v933
        %v935 = vsel %vm927, %v920, %v925
        %941 = vst [vmem:[#allocation2 + $0x18c] sm:$0xff] %v928
        %942 = vst [vmem:[#allocation2 + $0x194] sm:$0xff] %v930
        %943 = vst [vmem:[#allocation2 + $0x19c] sm:$0xff] %v932
        %944 = vst [vmem:[#allocation2 + $0x1a4] sm:$0xff] %v934
        %945 = vst.msk [vmem:[#allocation2 + $0x1ac] sm:$0xf] %vm557, %v935
        %946 = vrot.lane.b32.xlu0 %v547, 54
        %v947 = vpop.permute.xlu0 %946
        %948 = vrot.lane.b32.xlu0 %v548, 54
        %v949 = vpop.permute.xlu0 %948
        %950 = vrot.lane.b32.xlu0 %v549, 54
        %v951 = vpop.permute.xlu0 %950
        %952 = vrot.lane.b32.xlu0 %v550, 54
        %v953 = vpop.permute.xlu0 %952
        %954 = vrot.lane.b32.xlu0 %v551, 54
        %v955 = vpop.permute.xlu0 %954
        %v956 = vrot.slane %v947, 4
        %v957 = vrot.slane %v949, 4
        %v958 = vrot.slane %v951, 4
        %v959 = vrot.slane %v953, 4
        %v960 = vrot.slane %v955, 4
        %v961 = vsel %vm579, %v956, %v957
        %vm962 = vcmask 441344
        %v963 = vsel %vm962, %v947, %v961
        %v964 = vsel %vm579, %v957, %v958
        %v965 = vsel %vm962, %v949, %v964
        %v966 = vsel %vm579, %v958, %v959
        %v967 = vsel %vm962, %v951, %v966
        %v968 = vsel %vm579, %v959, %v960
        %v969 = vsel %vm962, %v953, %v968
        %v970 = vsel %vm962, %v955, %v960
        %976 = vst [vmem:[#allocation2 + $0x1b0] sm:$0xff] %v963
        %977 = vst [vmem:[#allocation2 + $0x1b8] sm:$0xff] %v965
        %978 = vst [vmem:[#allocation2 + $0x1c0] sm:$0xff] %v967
        %979 = vst [vmem:[#allocation2 + $0x1c8] sm:$0xff] %v969
        %980 = vst.msk [vmem:[#allocation2 + $0x1d0] sm:$0xf] %vm557, %v970
        %981 = vrot.lane.b32.xlu0 %v547, 53
        %v982 = vpop.permute.xlu0 %981
        %983 = vrot.lane.b32.xlu0 %v548, 53
        %v984 = vpop.permute.xlu0 %983
        %985 = vrot.lane.b32.xlu0 %v549, 53
        %v986 = vpop.permute.xlu0 %985
        %987 = vrot.lane.b32.xlu0 %v550, 53
        %v988 = vpop.permute.xlu0 %987
        %989 = vrot.lane.b32.xlu0 %v551, 53
        %v990 = vpop.permute.xlu0 %989
        %v991 = vrot.slane %v982, 4
        %v992 = vrot.slane %v984, 4
        %v993 = vrot.slane %v986, 4
        %v994 = vrot.slane %v988, 4
        %v995 = vrot.slane %v990, 4
        %v996 = vsel %vm579, %v991, %v992
        %vm997 = vcmask 433152
        %v998 = vsel %vm997, %v982, %v996
        %v999 = vsel %vm579, %v992, %v993
        %v1000 = vsel %vm997, %v984, %v999
        %v1001 = vsel %vm579, %v993, %v994
        %v1002 = vsel %vm997, %v986, %v1001
        %v1003 = vsel %vm579, %v994, %v995
        %v1004 = vsel %vm997, %v988, %v1003
        %v1005 = vsel %vm997, %v990, %v995
        %1011 = vst [vmem:[#allocation2 + $0x1d4] sm:$0xff] %v998
        %1012 = vst [vmem:[#allocation2 + $0x1dc] sm:$0xff] %v1000
        %1013 = vst [vmem:[#allocation2 + $0x1e4] sm:$0xff] %v1002
        %1014 = vst [vmem:[#allocation2 + $0x1ec] sm:$0xff] %v1004
        %1015 = vst.msk [vmem:[#allocation2 + $0x1f4] sm:$0xf] %vm557, %v1005
        %1016 = vrot.lane.b32.xlu0 %v547, 52
        %v1017 = vpop.permute.xlu0 %1016
        %1018 = vrot.lane.b32.xlu0 %v548, 52
        %v1019 = vpop.permute.xlu0 %1018
        %1020 = vrot.lane.b32.xlu0 %v549, 52
        %v1021 = vpop.permute.xlu0 %1020
        %1022 = vrot.lane.b32.xlu0 %v550, 52
        %v1023 = vpop.permute.xlu0 %1022
        %1024 = vrot.lane.b32.xlu0 %v551, 52
        %v1025 = vpop.permute.xlu0 %1024
        %v1026 = vrot.slane %v1017, 4
        %v1027 = vrot.slane %v1019, 4
        %v1028 = vrot.slane %v1021, 4
        %v1029 = vrot.slane %v1023, 4
        %v1030 = vrot.slane %v1025, 4
        %v1031 = vsel %vm579, %v1026, %v1027
        %vm1032 = vcmask 424960
        %v1033 = vsel %vm1032, %v1017, %v1031
        %v1034 = vsel %vm579, %v1027, %v1028
        %v1035 = vsel %vm1032, %v1019, %v1034
        %v1036 = vsel %vm579, %v1028, %v1029
        %v1037 = vsel %vm1032, %v1021, %v1036
        %v1038 = vsel %vm579, %v1029, %v1030
        %v1039 = vsel %vm1032, %v1023, %v1038
        %v1040 = vsel %vm1032, %v1025, %v1030
        %1046 = vst [vmem:[#allocation2 + $0x1f8] sm:$0xff] %v1033
        %1047 = vst [vmem:[#allocation2 + $0x200] sm:$0xff] %v1035
        %1048 = vst [vmem:[#allocation2 + $0x208] sm:$0xff] %v1037
        %1049 = vst [vmem:[#allocation2 + $0x210] sm:$0xff] %v1039
        %1050 = vst.msk [vmem:[#allocation2 + $0x218] sm:$0xf] %vm557, %v1040
        %1051 = vrot.lane.b32.xlu0 %v547, 20
        %v1052 = vpop.permute.xlu0 %1051
        %1053 = vrot.lane.b32.xlu0 %v548, 20
        %v1054 = vpop.permute.xlu0 %1053
        %1055 = vrot.lane.b32.xlu0 %v549, 20
        %v1056 = vpop.permute.xlu0 %1055
        %1057 = vrot.lane.b32.xlu0 %v550, 20
        %v1058 = vpop.permute.xlu0 %1057
        %1059 = vrot.lane.b32.xlu0 %v551, 20
        %v1060 = vpop.permute.xlu0 %1059
        %v1061 = vrot.slane %v1052, 4
        %v1062 = vrot.slane %v1054, 4
        %v1063 = vrot.slane %v1056, 4
        %v1064 = vrot.slane %v1058, 4
        %v1065 = vrot.slane %v1060, 4
        %v1066 = vsel %vm579, %v1061, %v1062
        %vm1067 = vcmask 162816
        %v1068 = vsel %vm1067, %v1052, %v1066
        %v1069 = vsel %vm579, %v1062, %v1063
        %v1070 = vsel %vm1067, %v1054, %v1069
        %v1071 = vsel %vm579, %v1063, %v1064
        %v1072 = vsel %vm1067, %v1056, %v1071
        %v1073 = vsel %vm579, %v1064, %v1065
        %v1074 = vsel %vm1067, %v1058, %v1073
        %v1075 = vsel %vm1067, %v1060, %v1065
        %1081 = vst [vmem:[#allocation2 + $0x21c] sm:$0xff] %v1068
        %1082 = vst [vmem:[#allocation2 + $0x224] sm:$0xff] %v1070
        %1083 = vst [vmem:[#allocation2 + $0x22c] sm:$0xff] %v1072
        %1084 = vst [vmem:[#allocation2 + $0x234] sm:$0xff] %v1074
        %1085 = vst.msk [vmem:[#allocation2 + $0x23c] sm:$0xf] %vm557, %v1075
        %1086 = vrot.lane.b32.xlu0 %v547, 19
        %v1087 = vpop.permute.xlu0 %1086
        %1088 = vrot.lane.b32.xlu0 %v548, 19
        %v1089 = vpop.permute.xlu0 %1088
        %1090 = vrot.lane.b32.xlu0 %v549, 19
        %v1091 = vpop.permute.xlu0 %1090
        %1092 = vrot.lane.b32.xlu0 %v550, 19
        %v1093 = vpop.permute.xlu0 %1092
        %1094 = vrot.lane.b32.xlu0 %v551, 19
        %v1095 = vpop.permute.xlu0 %1094
        %v1096 = vrot.slane %v1087, 4
        %v1097 = vrot.slane %v1089, 4
        %v1098 = vrot.slane %v1091, 4
        %v1099 = vrot.slane %v1093, 4
        %v1100 = vrot.slane %v1095, 4
        %v1101 = vsel %vm579, %v1096, %v1097
        %vm1102 = vcmask 154624
        %v1103 = vsel %vm1102, %v1087, %v1101
        %v1104 = vsel %vm579, %v1097, %v1098
        %v1105 = vsel %vm1102, %v1089, %v1104
        %v1106 = vsel %vm579, %v1098, %v1099
        %v1107 = vsel %vm1102, %v1091, %v1106
        %v1108 = vsel %vm579, %v1099, %v1100
        %v1109 = vsel %vm1102, %v1093, %v1108
        %v1110 = vsel %vm1102, %v1095, %v1100
        %1116 = vst [vmem:[#allocation2 + $0x240] sm:$0xff] %v1103
        %1117 = vst [vmem:[#allocation2 + $0x248] sm:$0xff] %v1105
        %1118 = vst [vmem:[#allocation2 + $0x250] sm:$0xff] %v1107
        %1119 = vst [vmem:[#allocation2 + $0x258] sm:$0xff] %v1109
        %1120 = vst.msk [vmem:[#allocation2 + $0x260] sm:$0xf] %vm557, %v1110
        %1121 = vrot.lane.b32.xlu0 %v547, 18
        %v1122 = vpop.permute.xlu0 %1121
        %1123 = vrot.lane.b32.xlu0 %v548, 18
        %v1124 = vpop.permute.xlu0 %1123
        %1125 = vrot.lane.b32.xlu0 %v549, 18
        %v1126 = vpop.permute.xlu0 %1125
        %1127 = vrot.lane.b32.xlu0 %v550, 18
        %v1128 = vpop.permute.xlu0 %1127
        %1129 = vrot.lane.b32.xlu0 %v551, 18
        %v1130 = vpop.permute.xlu0 %1129
        %v1131 = vrot.slane %v1122, 4
        %v1132 = vrot.slane %v1124, 4
        %v1133 = vrot.slane %v1126, 4
        %v1134 = vrot.slane %v1128, 4
        %v1135 = vrot.slane %v1130, 4
        %v1136 = vsel %vm579, %v1131, %v1132
        %vm1137 = vcmask 146432
        %v1138 = vsel %vm1137, %v1122, %v1136
        %v1139 = vsel %vm579, %v1132, %v1133
        %v1140 = vsel %vm1137, %v1124, %v1139
        %v1141 = vsel %vm579, %v1133, %v1134
        %v1142 = vsel %vm1137, %v1126, %v1141
        %v1143 = vsel %vm579, %v1134, %v1135
        %v1144 = vsel %vm1137, %v1128, %v1143
        %v1145 = vsel %vm1137, %v1130, %v1135
        %1151 = vst [vmem:[#allocation2 + $0x264] sm:$0xff] %v1138
        %1152 = vst [vmem:[#allocation2 + $0x26c] sm:$0xff] %v1140
        %1153 = vst [vmem:[#allocation2 + $0x274] sm:$0xff] %v1142
        %1154 = vst [vmem:[#allocation2 + $0x27c] sm:$0xff] %v1144
        %1155 = vst.msk [vmem:[#allocation2 + $0x284] sm:$0xf] %vm557, %v1145
        %1156 = vrot.lane.b32.xlu0 %v547, 17
        %v1157 = vpop.permute.xlu0 %1156
        %1158 = vrot.lane.b32.xlu0 %v548, 17
        %v1159 = vpop.permute.xlu0 %1158
        %1160 = vrot.lane.b32.xlu0 %v549, 17
        %v1161 = vpop.permute.xlu0 %1160
        %1162 = vrot.lane.b32.xlu0 %v550, 17
        %v1163 = vpop.permute.xlu0 %1162
        %1164 = vrot.lane.b32.xlu0 %v551, 17
        %v1165 = vpop.permute.xlu0 %1164
        %v1166 = vrot.slane %v1157, 4
        %v1167 = vrot.slane %v1159, 4
        %v1168 = vrot.slane %v1161, 4
        %v1169 = vrot.slane %v1163, 4
        %v1170 = vrot.slane %v1165, 4
        %v1171 = vsel %vm579, %v1166, %v1167
        %vm1172 = vcmask 138240
        %v1173 = vsel %vm1172, %v1157, %v1171
        %v1174 = vsel %vm579, %v1167, %v1168
        %v1175 = vsel %vm1172, %v1159, %v1174
        %v1176 = vsel %vm579, %v1168, %v1169
        %v1177 = vsel %vm1172, %v1161, %v1176
        %v1178 = vsel %vm579, %v1169, %v1170
        %v1179 = vsel %vm1172, %v1163, %v1178
        %v1180 = vsel %vm1172, %v1165, %v1170
        %1186 = vst [vmem:[#allocation2 + $0x288] sm:$0xff] %v1173
        %1187 = vst [vmem:[#allocation2 + $0x290] sm:$0xff] %v1175
        %1188 = vst [vmem:[#allocation2 + $0x298] sm:$0xff] %v1177
        %1189 = vst [vmem:[#allocation2 + $0x2a0] sm:$0xff] %v1179
        %1190 = vst.msk [vmem:[#allocation2 + $0x2a8] sm:$0xf] %vm557, %v1180
        %1191 = vrot.lane.b32.xlu0 %v547, 16
        %v1192 = vpop.permute.xlu0 %1191
        %1193 = vrot.lane.b32.xlu0 %v548, 16
        %v1194 = vpop.permute.xlu0 %1193
        %1195 = vrot.lane.b32.xlu0 %v549, 16
        %v1196 = vpop.permute.xlu0 %1195
        %1197 = vrot.lane.b32.xlu0 %v550, 16
        %v1198 = vpop.permute.xlu0 %1197
        %1199 = vrot.lane.b32.xlu0 %v551, 16
        %v1200 = vpop.permute.xlu0 %1199
        %v1201 = vrot.slane %v1192, 4
        %v1202 = vrot.slane %v1194, 4
        %v1203 = vrot.slane %v1196, 4
        %v1204 = vrot.slane %v1198, 4
        %v1205 = vrot.slane %v1200, 4
        %v1206 = vsel %vm579, %v1201, %v1202
        %vm1207 = vcmask 130048
        %v1208 = vsel %vm1207, %v1192, %v1206
        %v1209 = vsel %vm579, %v1202, %v1203
        %v1210 = vsel %vm1207, %v1194, %v1209
        %v1211 = vsel %vm579, %v1203, %v1204
        %v1212 = vsel %vm1207, %v1196, %v1211
        %v1213 = vsel %vm579, %v1204, %v1205
        %v1214 = vsel %vm1207, %v1198, %v1213
        %v1215 = vsel %vm1207, %v1200, %v1205
        %1221 = vst [vmem:[#allocation2 + $0x2ac] sm:$0xff] %v1208
        %1222 = vst [vmem:[#allocation2 + $0x2b4] sm:$0xff] %v1210
        %1223 = vst [vmem:[#allocation2 + $0x2bc] sm:$0xff] %v1212
        %1224 = vst [vmem:[#allocation2 + $0x2c4] sm:$0xff] %v1214
        %1225 = vst.msk [vmem:[#allocation2 + $0x2cc] sm:$0xf] %vm557, %v1215
        %1227 = vrot.lane.b32.xlu0 %v547, 112
        %v1228 = vpop.permute.xlu0 %1227
        %1229 = vrot.lane.b32.xlu0 %v548, 112
        %v1230 = vpop.permute.xlu0 %1229
        %1231 = vrot.lane.b32.xlu0 %v549, 112
        %v1232 = vpop.permute.xlu0 %1231
        %1233 = vrot.lane.b32.xlu0 %v550, 112
        %v1234 = vpop.permute.xlu0 %1233
        %1235 = vrot.lane.b32.xlu0 %v551, 112
        %v1236 = vpop.permute.xlu0 %1235
        %1237 = vrot.lane.b32.xlu0 %v552, 112
        %v1238 = vpop.permute.xlu0 %1237
        %v1239 = vrot.slane %v1228, 4
        %v1240 = vrot.slane %v1230, 4
        %v1241 = vrot.slane %v1232, 4
        %v1242 = vrot.slane %v1234, 4
        %v1243 = vrot.slane %v1236, 4
        %v1244 = vsel %vm579, %v1239, %v1240
        %vm1245 = vcmask 916480
        %v1246 = vsel %vm1245, %v1244, %v1230
        %v1247 = vsel %vm579, %v1240, %v1241
        %v1248 = vsel %vm1245, %v1247, %v1232
        %v1249 = vsel %vm579, %v1241, %v1242
        %v1250 = vsel %vm1245, %v1249, %v1234
        %v1251 = vsel %vm579, %v1242, %v1243
        %v1252 = vsel %vm1245, %v1251, %v1236
        %v1253 = vsel %vm1245, %v1243, %v1238
        %1259 = vst [vmem:[#allocation2 + $0x2d0] sm:$0xff] %v1246
        %1260 = vst [vmem:[#allocation2 + $0x2d8] sm:$0xff] %v1248
        %1261 = vst [vmem:[#allocation2 + $0x2e0] sm:$0xff] %v1250
        %1262 = vst [vmem:[#allocation2 + $0x2e8] sm:$0xff] %v1252
        %1263 = vst.msk [vmem:[#allocation2 + $0x2f0] sm:$0xf] %vm557, %v1253
        %1264 = vrot.lane.b32.xlu0 %v547, 111
        %v1265 = vpop.permute.xlu0 %1264
        %1266 = vrot.lane.b32.xlu0 %v548, 111
        %v1267 = vpop.permute.xlu0 %1266
        %1268 = vrot.lane.b32.xlu0 %v549, 111
        %v1269 = vpop.permute.xlu0 %1268
        %1270 = vrot.lane.b32.xlu0 %v550, 111
        %v1271 = vpop.permute.xlu0 %1270
        %1272 = vrot.lane.b32.xlu0 %v551, 111
        %v1273 = vpop.permute.xlu0 %1272
        %1274 = vrot.lane.b32.xlu0 %v552, 111
        %v1275 = vpop.permute.xlu0 %1274
        %v1276 = vrot.slane %v1265, 4
        %v1277 = vrot.slane %v1267, 4
        %v1278 = vrot.slane %v1269, 4
        %v1279 = vrot.slane %v1271, 4
        %v1280 = vrot.slane %v1273, 4
        %v1281 = vsel %vm579, %v1276, %v1277
        %vm1282 = vcmask 908288
        %v1283 = vsel %vm1282, %v1281, %v1267
        %v1284 = vsel %vm579, %v1277, %v1278
        %v1285 = vsel %vm1282, %v1284, %v1269
        %v1286 = vsel %vm579, %v1278, %v1279
        %v1287 = vsel %vm1282, %v1286, %v1271
        %v1288 = vsel %vm579, %v1279, %v1280
        %v1289 = vsel %vm1282, %v1288, %v1273
        %v1290 = vsel %vm1282, %v1280, %v1275
        %1296 = vst [vmem:[#allocation2 + $0x2f4] sm:$0xff] %v1283
        %1297 = vst [vmem:[#allocation2 + $0x2fc] sm:$0xff] %v1285
        %1298 = vst [vmem:[#allocation2 + $0x304] sm:$0xff] %v1287
        %1299 = vst [vmem:[#allocation2 + $0x30c] sm:$0xff] %v1289
        %1300 = vst.msk [vmem:[#allocation2 + $0x314] sm:$0xf] %vm557, %v1290
        %1301 = vrot.lane.b32.xlu0 %v547, 110
        %v1302 = vpop.permute.xlu0 %1301
        %1303 = vrot.lane.b32.xlu0 %v548, 110
        %v1304 = vpop.permute.xlu0 %1303
        %1305 = vrot.lane.b32.xlu0 %v549, 110
        %v1306 = vpop.permute.xlu0 %1305
        %1307 = vrot.lane.b32.xlu0 %v550, 110
        %v1308 = vpop.permute.xlu0 %1307
        %1309 = vrot.lane.b32.xlu0 %v551, 110
        %v1310 = vpop.permute.xlu0 %1309
        %1311 = vrot.lane.b32.xlu0 %v552, 110
        %v1312 = vpop.permute.xlu0 %1311
        %v1313 = vrot.slane %v1302, 4
        %v1314 = vrot.slane %v1304, 4
        %v1315 = vrot.slane %v1306, 4
        %v1316 = vrot.slane %v1308, 4
        %v1317 = vrot.slane %v1310, 4
        %v1318 = vsel %vm579, %v1313, %v1314
        %vm1319 = vcmask 900096
        %v1320 = vsel %vm1319, %v1318, %v1304
        %v1321 = vsel %vm579, %v1314, %v1315
        %v1322 = vsel %vm1319, %v1321, %v1306
        %v1323 = vsel %vm579, %v1315, %v1316
        %v1324 = vsel %vm1319, %v1323, %v1308
        %v1325 = vsel %vm579, %v1316, %v1317
        %v1326 = vsel %vm1319, %v1325, %v1310
        %v1327 = vsel %vm1319, %v1317, %v1312
        %1333 = vst [vmem:[#allocation2 + $0x318] sm:$0xff] %v1320
        %1334 = vst [vmem:[#allocation2 + $0x320] sm:$0xff] %v1322
        %1335 = vst [vmem:[#allocation2 + $0x328] sm:$0xff] %v1324
        %1336 = vst [vmem:[#allocation2 + $0x330] sm:$0xff] %v1326
        %1337 = vst.msk [vmem:[#allocation2 + $0x338] sm:$0xf] %vm557, %v1327
        %1338 = vrot.lane.b32.xlu0 %v547, 109
        %v1339 = vpop.permute.xlu0 %1338
        %1340 = vrot.lane.b32.xlu0 %v548, 109
        %v1341 = vpop.permute.xlu0 %1340
        %1342 = vrot.lane.b32.xlu0 %v549, 109
        %v1343 = vpop.permute.xlu0 %1342
        %1344 = vrot.lane.b32.xlu0 %v550, 109
        %v1345 = vpop.permute.xlu0 %1344
        %1346 = vrot.lane.b32.xlu0 %v551, 109
        %v1347 = vpop.permute.xlu0 %1346
        %1348 = vrot.lane.b32.xlu0 %v552, 109
        %v1349 = vpop.permute.xlu0 %1348
        %v1350 = vrot.slane %v1339, 4
        %v1351 = vrot.slane %v1341, 4
        %v1352 = vrot.slane %v1343, 4
        %v1353 = vrot.slane %v1345, 4
        %v1354 = vrot.slane %v1347, 4
        %v1355 = vsel %vm579, %v1350, %v1351
        %vm1356 = vcmask 891904
        %v1357 = vsel %vm1356, %v1355, %v1341
        %v1358 = vsel %vm579, %v1351, %v1352
        %v1359 = vsel %vm1356, %v1358, %v1343
        %v1360 = vsel %vm579, %v1352, %v1353
        %v1361 = vsel %vm1356, %v1360, %v1345
        %v1362 = vsel %vm579, %v1353, %v1354
        %v1363 = vsel %vm1356, %v1362, %v1347
        %v1364 = vsel %vm1356, %v1354, %v1349
        %1370 = vst [vmem:[#allocation2 + $0x33c] sm:$0xff] %v1357
        %1371 = vst [vmem:[#allocation2 + $0x344] sm:$0xff] %v1359
        %1372 = vst [vmem:[#allocation2 + $0x34c] sm:$0xff] %v1361
        %1373 = vst [vmem:[#allocation2 + $0x354] sm:$0xff] %v1363
        %1374 = vst.msk [vmem:[#allocation2 + $0x35c] sm:$0xf] %vm557, %v1364
        %1375 = vrot.lane.b32.xlu0 %v547, 108
        %v1376 = vpop.permute.xlu0 %1375
        %1377 = vrot.lane.b32.xlu0 %v548, 108
        %v1378 = vpop.permute.xlu0 %1377
        %1379 = vrot.lane.b32.xlu0 %v549, 108
        %v1380 = vpop.permute.xlu0 %1379
        %1381 = vrot.lane.b32.xlu0 %v550, 108
        %v1382 = vpop.permute.xlu0 %1381
        %1383 = vrot.lane.b32.xlu0 %v551, 108
        %v1384 = vpop.permute.xlu0 %1383
        %1385 = vrot.lane.b32.xlu0 %v552, 108
        %v1386 = vpop.permute.xlu0 %1385
        %v1387 = vrot.slane %v1376, 4
        %v1388 = vrot.slane %v1378, 4
        %v1389 = vrot.slane %v1380, 4
        %v1390 = vrot.slane %v1382, 4
        %v1391 = vrot.slane %v1384, 4
        %v1392 = vsel %vm579, %v1387, %v1388
        %vm1393 = vcmask 883712
        %v1394 = vsel %vm1393, %v1392, %v1378
        %v1395 = vsel %vm579, %v1388, %v1389
        %v1396 = vsel %vm1393, %v1395, %v1380
        %v1397 = vsel %vm579, %v1389, %v1390
        %v1398 = vsel %vm1393, %v1397, %v1382
        %v1399 = vsel %vm579, %v1390, %v1391
        %v1400 = vsel %vm1393, %v1399, %v1384
        %v1401 = vsel %vm1393, %v1391, %v1386
        %1407 = vst [vmem:[#allocation2 + $0x360] sm:$0xff] %v1394
        %1408 = vst [vmem:[#allocation2 + $0x368] sm:$0xff] %v1396
        %1409 = vst [vmem:[#allocation2 + $0x370] sm:$0xff] %v1398
        %1410 = vst [vmem:[#allocation2 + $0x378] sm:$0xff] %v1400
        %1411 = vst.msk [vmem:[#allocation2 + $0x380] sm:$0xf] %vm557, %v1401
        %v1412 = vld [vmem:[%s1] sm:$0xff]
        %v1413 = vld [vmem:[#allocation2] sm:$0xff]
        %v1414 = vld [vmem:[#allocation2 + $0x8] sm:$0xff]
        %v1415 = vld [vmem:[#allocation2 + $0x10] sm:$0xff]
        %v1416 = vld [vmem:[#allocation2 + $0x18] sm:$0xff]
        %v1417 = vld [vmem:[#allocation2 + $0x20] sm:$0xf]
        %v1418 = vld [vmem:[#allocation2 + $0x24] sm:$0xff]
        %v1419 = vld [vmem:[#allocation2 + $0x2c] sm:$0xff]
        %v1420 = vld [vmem:[#allocation2 + $0x34] sm:$0xff]
        %v1421 = vld [vmem:[#allocation2 + $0x3c] sm:$0xff]
        %v1422 = vld [vmem:[#allocation2 + $0x44] sm:$0xf]
        %v1423 = vld [vmem:[#allocation2 + $0x48] sm:$0xff]
        %v1424 = vld [vmem:[#allocation2 + $0x50] sm:$0xff]
        %v1425 = vld [vmem:[#allocation2 + $0x58] sm:$0xff]
        %v1426 = vld [vmem:[#allocation2 + $0x60] sm:$0xff]
        %v1427 = vld [vmem:[#allocation2 + $0x68] sm:$0xf]
        %v1428 = vld [vmem:[#allocation2 + $0x6c] sm:$0xff]
        %v1429 = vld [vmem:[#allocation2 + $0x74] sm:$0xff]
        %v1430 = vld [vmem:[#allocation2 + $0x7c] sm:$0xff]
        %v1431 = vld [vmem:[#allocation2 + $0x84] sm:$0xff]
        %v1432 = vld [vmem:[#allocation2 + $0x8c] sm:$0xf]
        %v1433 = vld [vmem:[#allocation2 + $0x90] sm:$0xff]
        %v1434 = vld [vmem:[#allocation2 + $0x98] sm:$0xff]
        %v1435 = vld [vmem:[#allocation2 + $0xa0] sm:$0xff]
        %v1436 = vld [vmem:[#allocation2 + $0xa8] sm:$0xff]
        %v1437 = vld [vmem:[#allocation2 + $0xb0] sm:$0xf]
        %v1438 = vld [vmem:[#allocation2 + $0xb4] sm:$0xff]
        %v1439 = vld [vmem:[#allocation2 + $0xbc] sm:$0xff]
        %v1440 = vld [vmem:[#allocation2 + $0xc4] sm:$0xff]
        %v1441 = vld [vmem:[#allocation2 + $0xcc] sm:$0xff]
        %v1442 = vld [vmem:[#allocation2 + $0xd4] sm:$0xf]
        %v1443 = vld [vmem:[#allocation2 + $0xd8] sm:$0xff]
        %v1444 = vld [vmem:[#allocation2 + $0xe0] sm:$0xff]
        %v1445 = vld [vmem:[#allocation2 + $0xe8] sm:$0xff]
        %v1446 = vld [vmem:[#allocation2 + $0xf0] sm:$0xff]
        %v1447 = vld [vmem:[#allocation2 + $0xf8] sm:$0xf]
        %v1448 = vld [vmem:[#allocation2 + $0xfc] sm:$0xff]
        %v1449 = vld [vmem:[#allocation2 + $0x104] sm:$0xff]
        %v1450 = vld [vmem:[#allocation2 + $0x10c] sm:$0xff]
        %v1451 = vld [vmem:[#allocation2 + $0x114] sm:$0xff]
        %v1452 = vld [vmem:[#allocation2 + $0x11c] sm:$0xf]
        %v1453 = vld [vmem:[#allocation2 + $0x120] sm:$0xff]
        %v1454 = vld [vmem:[#allocation2 + $0x128] sm:$0xff]
        %v1455 = vld [vmem:[#allocation2 + $0x130] sm:$0xff]
        %v1456 = vld [vmem:[#allocation2 + $0x138] sm:$0xff]
        %v1457 = vld [vmem:[#allocation2 + $0x140] sm:$0xf]
        %v1458 = vld [vmem:[#allocation2 + $0x144] sm:$0xff]
        %v1459 = vld [vmem:[#allocation2 + $0x14c] sm:$0xff]
        %v1460 = vld [vmem:[#allocation2 + $0x154] sm:$0xff]
        %v1461 = vld [vmem:[#allocation2 + $0x15c] sm:$0xff]
        %v1462 = vld [vmem:[#allocation2 + $0x164] sm:$0xf]
        %v1463 = vld [vmem:[#allocation2 + $0x168] sm:$0xff]
        %v1464 = vld [vmem:[#allocation2 + $0x170] sm:$0xff]
        %v1465 = vld [vmem:[#allocation2 + $0x178] sm:$0xff]
        %v1466 = vld [vmem:[#allocation2 + $0x180] sm:$0xff]
        %v1467 = vld [vmem:[#allocation2 + $0x188] sm:$0xf]
        %v1468 = vld [vmem:[#allocation2 + $0x18c] sm:$0xff]
        %v1469 = vld [vmem:[#allocation2 + $0x194] sm:$0xff]
        %v1470 = vld [vmem:[#allocation2 + $0x19c] sm:$0xff]
        %v1471 = vld [vmem:[#allocation2 + $0x1a4] sm:$0xff]
        %v1472 = vld [vmem:[#allocation2 + $0x1ac] sm:$0xf]
        %v1473 = vld [vmem:[#allocation2 + $0x1b0] sm:$0xff]
        %v1474 = vld [vmem:[#allocation2 + $0x1b8] sm:$0xff]
        %v1475 = vld [vmem:[#allocation2 + $0x1c0] sm:$0xff]
        %v1476 = vld [vmem:[#allocation2 + $0x1c8] sm:$0xff]
        %v1477 = vld [vmem:[#allocation2 + $0x1d0] sm:$0xf]
        %v1478 = vld [vmem:[#allocation2 + $0x1d4] sm:$0xff]
        %v1479 = vld [vmem:[#allocation2 + $0x1dc] sm:$0xff]
        %v1480 = vld [vmem:[#allocation2 + $0x1e4] sm:$0xff]
        %v1481 = vld [vmem:[#allocation2 + $0x1ec] sm:$0xff]
        %v1482 = vld [vmem:[#allocation2 + $0x1f4] sm:$0xf]
        %v1483 = vld [vmem:[#allocation2 + $0x1f8] sm:$0xff]
        %v1484 = vld [vmem:[#allocation2 + $0x200] sm:$0xff]
        %v1485 = vld [vmem:[#allocation2 + $0x208] sm:$0xff]
        %v1486 = vld [vmem:[#allocation2 + $0x210] sm:$0xff]
        %v1487 = vld [vmem:[#allocation2 + $0x218] sm:$0xf]
        %v1488 = vld [vmem:[#allocation2 + $0x21c] sm:$0xff]
        %v1489 = vld [vmem:[#allocation2 + $0x224] sm:$0xff]
        %v1490 = vld [vmem:[#allocation2 + $0x22c] sm:$0xff]
        %v1491 = vld [vmem:[#allocation2 + $0x234] sm:$0xff]
        %v1492 = vld [vmem:[#allocation2 + $0x23c] sm:$0xf]
        %v1493 = vld [vmem:[#allocation2 + $0x240] sm:$0xff]
        %v1494 = vld [vmem:[#allocation2 + $0x248] sm:$0xff]
        %v1495 = vld [vmem:[#allocation2 + $0x250] sm:$0xff]
        %v1496 = vld [vmem:[#allocation2 + $0x258] sm:$0xff]
        %v1497 = vld [vmem:[#allocation2 + $0x260] sm:$0xf]
        %v1498 = vld [vmem:[#allocation2 + $0x264] sm:$0xff]
        %v1499 = vld [vmem:[#allocation2 + $0x26c] sm:$0xff]
        %v1500 = vld [vmem:[#allocation2 + $0x274] sm:$0xff]
        %v1501 = vld [vmem:[#allocation2 + $0x27c] sm:$0xff]
        %v1502 = vld [vmem:[#allocation2 + $0x284] sm:$0xf]
        %v1503 = vld [vmem:[#allocation2 + $0x288] sm:$0xff]
        %v1504 = vld [vmem:[#allocation2 + $0x290] sm:$0xff]
        %v1505 = vld [vmem:[#allocation2 + $0x298] sm:$0xff]
        %v1506 = vld [vmem:[#allocation2 + $0x2a0] sm:$0xff]
        %v1507 = vld [vmem:[#allocation2 + $0x2a8] sm:$0xf]
        %v1508 = vld [vmem:[#allocation2 + $0x2ac] sm:$0xff]
        %v1509 = vld [vmem:[#allocation2 + $0x2b4] sm:$0xff]
        %v1510 = vld [vmem:[#allocation2 + $0x2bc] sm:$0xff]
        %v1511 = vld [vmem:[#allocation2 + $0x2c4] sm:$0xff]
        %v1512 = vld [vmem:[#allocation2 + $0x2cc] sm:$0xf]
        %v1513 = vld [vmem:[#allocation2 + $0x2d0] sm:$0xff]
        %v1514 = vld [vmem:[#allocation2 + $0x2d8] sm:$0xff]
        %v1515 = vld [vmem:[#allocation2 + $0x2e0] sm:$0xff]
        %v1516 = vld [vmem:[#allocation2 + $0x2e8] sm:$0xff]
        %v1517 = vld [vmem:[#allocation2 + $0x2f0] sm:$0xf]
        %v1518 = vld [vmem:[#allocation2 + $0x2f4] sm:$0xff]
        %v1519 = vld [vmem:[#allocation2 + $0x2fc] sm:$0xff]
        %v1520 = vld [vmem:[#allocation2 + $0x304] sm:$0xff]
        %v1521 = vld [vmem:[#allocation2 + $0x30c] sm:$0xff]
        %v1522 = vld [vmem:[#allocation2 + $0x314] sm:$0xf]
        %v1523 = vld [vmem:[#allocation2 + $0x318] sm:$0xff]
        %v1524 = vld [vmem:[#allocation2 + $0x320] sm:$0xff]
        %v1525 = vld [vmem:[#allocation2 + $0x328] sm:$0xff]
        %v1526 = vld [vmem:[#allocation2 + $0x330] sm:$0xff]
        %v1527 = vld [vmem:[#allocation2 + $0x338] sm:$0xf]
        %v1528 = vld [vmem:[#allocation2 + $0x33c] sm:$0xff]
        %v1529 = vld [vmem:[#allocation2 + $0x344] sm:$0xff]
        %v1530 = vld [vmem:[#allocation2 + $0x34c] sm:$0xff]
        %v1531 = vld [vmem:[#allocation2 + $0x354] sm:$0xff]
        %v1532 = vld [vmem:[#allocation2 + $0x35c] sm:$0xf]
        %v1533 = vld [vmem:[#allocation2 + $0x360] sm:$0xff]
        %v1534 = vld [vmem:[#allocation2 + $0x368] sm:$0xff]
        %v1535 = vld [vmem:[#allocation2 + $0x370] sm:$0xff]
        %v1536 = vld [vmem:[#allocation2 + $0x378] sm:$0xff]
        %v1537 = vld [vmem:[#allocation2 + $0x380] sm:$0xf]
        %v1539 = vunpack.c.l.b16 %v1412
        %v1540 = vunpack.c.h.b16 %v1412
        %v1541 = vpack.c.b16 %v1539, %v1539
        %v1542 = vpack.c.b16 %v1540, %v1540
        %v1669 = vunpack.c.l.b16 %v1413
        %v1670 = vunpack.c.h.b16 %v1413
        %v1671 = vunpack.c.l.b16 %v1414
        %v1672 = vunpack.c.h.b16 %v1414
        %v1673 = vunpack.c.l.b16 %v1415
        %v1674 = vunpack.c.h.b16 %v1415
        %v1675 = vunpack.c.l.b16 %v1416
        %v1676 = vunpack.c.h.b16 %v1416
        %v1677 = vunpack.c.l.b16 %v1417
        %v1678 = vunpack.c.l.b16 %v1418
        %v1679 = vunpack.c.h.b16 %v1418
        %v1680 = vunpack.c.l.b16 %v1419
        %v1681 = vunpack.c.h.b16 %v1419
        %v1682 = vunpack.c.l.b16 %v1420
        %v1683 = vunpack.c.h.b16 %v1420
        %v1684 = vunpack.c.l.b16 %v1421
        %v1685 = vunpack.c.h.b16 %v1421
        %v1686 = vunpack.c.l.b16 %v1422
        %v1687 = vunpack.c.l.b16 %v1423
        %v1688 = vunpack.c.h.b16 %v1423
        %v1689 = vunpack.c.l.b16 %v1424
        %v1690 = vunpack.c.h.b16 %v1424
        %v1691 = vunpack.c.l.b16 %v1425
        %v1692 = vunpack.c.h.b16 %v1425
        %v1693 = vunpack.c.l.b16 %v1426
        %v1694 = vunpack.c.h.b16 %v1426
        %v1695 = vunpack.c.l.b16 %v1427
        %v1696 = vunpack.c.l.b16 %v1428
        %v1697 = vunpack.c.h.b16 %v1428
        %v1698 = vunpack.c.l.b16 %v1429
        %v1699 = vunpack.c.h.b16 %v1429
        %v1700 = vunpack.c.l.b16 %v1430
        %v1701 = vunpack.c.h.b16 %v1430
        %v1702 = vunpack.c.l.b16 %v1431
        %v1703 = vunpack.c.h.b16 %v1431
        %v1704 = vunpack.c.l.b16 %v1432
        %v1705 = vunpack.c.l.b16 %v1433
        %v1706 = vunpack.c.h.b16 %v1433
        %v1707 = vunpack.c.l.b16 %v1434
        %v1708 = vunpack.c.h.b16 %v1434
        %v1709 = vunpack.c.l.b16 %v1435
        %v1710 = vunpack.c.h.b16 %v1435
        %v1711 = vunpack.c.l.b16 %v1436
        %v1712 = vunpack.c.h.b16 %v1436
        %v1713 = vunpack.c.l.b16 %v1437
        %v1714 = vunpack.c.l.b16 %v1438
        %v1715 = vunpack.c.h.b16 %v1438
        %v1716 = vunpack.c.l.b16 %v1439
        %v1717 = vunpack.c.h.b16 %v1439
        %v1718 = vunpack.c.l.b16 %v1440
        %v1719 = vunpack.c.h.b16 %v1440
        %v1720 = vunpack.c.l.b16 %v1441
        %v1721 = vunpack.c.h.b16 %v1441
        %v1722 = vunpack.c.l.b16 %v1442
        %v1723 = vunpack.c.l.b16 %v1443
        %v1724 = vunpack.c.h.b16 %v1443
        %v1725 = vunpack.c.l.b16 %v1444
        %v1726 = vunpack.c.h.b16 %v1444
        %v1727 = vunpack.c.l.b16 %v1445
        %v1728 = vunpack.c.h.b16 %v1445
        %v1729 = vunpack.c.l.b16 %v1446
        %v1730 = vunpack.c.h.b16 %v1446
        %v1731 = vunpack.c.l.b16 %v1447
        %v1732 = vunpack.c.l.b16 %v1448
        %v1733 = vunpack.c.h.b16 %v1448
        %v1734 = vunpack.c.l.b16 %v1449
        %v1735 = vunpack.c.h.b16 %v1449
        %v1736 = vunpack.c.l.b16 %v1450
        %v1737 = vunpack.c.h.b16 %v1450
        %v1738 = vunpack.c.l.b16 %v1451
        %v1739 = vunpack.c.h.b16 %v1451
        %v1740 = vunpack.c.l.b16 %v1452
        %v1741 = vunpack.c.l.b16 %v1453
        %v1742 = vunpack.c.h.b16 %v1453
        %v1743 = vunpack.c.l.b16 %v1454
        %v1744 = vunpack.c.h.b16 %v1454
        %v1745 = vunpack.c.l.b16 %v1455
        %v1746 = vunpack.c.h.b16 %v1455
        %v1747 = vunpack.c.l.b16 %v1456
        %v1748 = vunpack.c.h.b16 %v1456
        %v1749 = vunpack.c.l.b16 %v1457
        %v1750 = vunpack.c.l.b16 %v1458
        %v1751 = vunpack.c.h.b16 %v1458
        %v1752 = vunpack.c.l.b16 %v1459
        %v1753 = vunpack.c.h.b16 %v1459
        %v1754 = vunpack.c.l.b16 %v1460
        %v1755 = vunpack.c.h.b16 %v1460
        %v1756 = vunpack.c.l.b16 %v1461
        %v1757 = vunpack.c.h.b16 %v1461
        %v1758 = vunpack.c.l.b16 %v1462
        %v1759 = vunpack.c.l.b16 %v1463
        %v1760 = vunpack.c.h.b16 %v1463
        %v1761 = vunpack.c.l.b16 %v1464
        %v1762 = vunpack.c.h.b16 %v1464
        %v1763 = vunpack.c.l.b16 %v1465
        %v1764 = vunpack.c.h.b16 %v1465
        %v1765 = vunpack.c.l.b16 %v1466
        %v1766 = vunpack.c.h.b16 %v1466
        %v1767 = vunpack.c.l.b16 %v1467
        %v1768 = vunpack.c.l.b16 %v1468
        %v1769 = vunpack.c.h.b16 %v1468
        %v1770 = vunpack.c.l.b16 %v1469
        %v1771 = vunpack.c.h.b16 %v1469
        %v1772 = vunpack.c.l.b16 %v1470
        %v1773 = vunpack.c.h.b16 %v1470
        %v1774 = vunpack.c.l.b16 %v1471
        %v1775 = vunpack.c.h.b16 %v1471
        %v1776 = vunpack.c.l.b16 %v1472
        %v1777 = vunpack.c.l.b16 %v1473
        %v1778 = vunpack.c.h.b16 %v1473
        %v1779 = vunpack.c.l.b16 %v1474
        %v1780 = vunpack.c.h.b16 %v1474
        %v1781 = vunpack.c.l.b16 %v1475
        %v1782 = vunpack.c.h.b16 %v1475
        %v1783 = vunpack.c.l.b16 %v1476
        %v1784 = vunpack.c.h.b16 %v1476
        %v1785 = vunpack.c.l.b16 %v1477
        %v1786 = vunpack.c.l.b16 %v1478
        %v1787 = vunpack.c.h.b16 %v1478
        %v1788 = vunpack.c.l.b16 %v1479
        %v1789 = vunpack.c.h.b16 %v1479
        %v1790 = vunpack.c.l.b16 %v1480
        %v1791 = vunpack.c.h.b16 %v1480
        %v1792 = vunpack.c.l.b16 %v1481
        %v1793 = vunpack.c.h.b16 %v1481
        %v1794 = vunpack.c.l.b16 %v1482
        %v1795 = vunpack.c.l.b16 %v1483
        %v1796 = vunpack.c.h.b16 %v1483
        %v1797 = vunpack.c.l.b16 %v1484
        %v1798 = vunpack.c.h.b16 %v1484
        %v1799 = vunpack.c.l.b16 %v1485
        %v1800 = vunpack.c.h.b16 %v1485
        %v1801 = vunpack.c.l.b16 %v1486
        %v1802 = vunpack.c.h.b16 %v1486
        %v1803 = vunpack.c.l.b16 %v1487
        %v1804 = vunpack.c.l.b16 %v1488
        %v1805 = vunpack.c.h.b16 %v1488
        %v1806 = vunpack.c.l.b16 %v1489
        %v1807 = vunpack.c.h.b16 %v1489
        %v1808 = vunpack.c.l.b16 %v1490
        %v1809 = vunpack.c.h.b16 %v1490
        %v1810 = vunpack.c.l.b16 %v1491
        %v1811 = vunpack.c.h.b16 %v1491
        %v1812 = vunpack.c.l.b16 %v1492
        %v1813 = vunpack.c.l.b16 %v1493
        %v1814 = vunpack.c.h.b16 %v1493
        %v1815 = vunpack.c.l.b16 %v1494
        %v1816 = vunpack.c.h.b16 %v1494
        %v1817 = vunpack.c.l.b16 %v1495
        %v1818 = vunpack.c.h.b16 %v1495
        %v1819 = vunpack.c.l.b16 %v1496
        %v1820 = vunpack.c.h.b16 %v1496
        %v1821 = vunpack.c.l.b16 %v1497
        %v1822 = vunpack.c.l.b16 %v1498
        %v1823 = vunpack.c.h.b16 %v1498
        %v1824 = vunpack.c.l.b16 %v1499
        %v1825 = vunpack.c.h.b16 %v1499
        %v1826 = vunpack.c.l.b16 %v1500
        %v1827 = vunpack.c.h.b16 %v1500
        %v1828 = vunpack.c.l.b16 %v1501
        %v1829 = vunpack.c.h.b16 %v1501
        %v1830 = vunpack.c.l.b16 %v1502
        %v1831 = vunpack.c.l.b16 %v1503
        %v1832 = vunpack.c.h.b16 %v1503
        %v1833 = vunpack.c.l.b16 %v1504
        %v1834 = vunpack.c.h.b16 %v1504
        %v1835 = vunpack.c.l.b16 %v1505
        %v1836 = vunpack.c.h.b16 %v1505
        %v1837 = vunpack.c.l.b16 %v1506
        %v1838 = vunpack.c.h.b16 %v1506
        %v1839 = vunpack.c.l.b16 %v1507
        %v1840 = vunpack.c.l.b16 %v1508
        %v1841 = vunpack.c.h.b16 %v1508
        %v1842 = vunpack.c.l.b16 %v1509
        %v1843 = vunpack.c.h.b16 %v1509
        %v1844 = vunpack.c.l.b16 %v1510
        %v1845 = vunpack.c.h.b16 %v1510
        %v1846 = vunpack.c.l.b16 %v1511
        %v1847 = vunpack.c.h.b16 %v1511
        %v1848 = vunpack.c.l.b16 %v1512
        %v1849 = vunpack.c.l.b16 %v1513
        %v1850 = vunpack.c.h.b16 %v1513
        %v1851 = vunpack.c.l.b16 %v1514
        %v1852 = vunpack.c.h.b16 %v1514
        %v1853 = vunpack.c.l.b16 %v1515
        %v1854 = vunpack.c.h.b16 %v1515
        %v1855 = vunpack.c.l.b16 %v1516
        %v1856 = vunpack.c.h.b16 %v1516
        %v1857 = vunpack.c.l.b16 %v1517
        %v1858 = vunpack.c.l.b16 %v1518
        %v1859 = vunpack.c.h.b16 %v1518
        %v1860 = vunpack.c.l.b16 %v1519
        %v1861 = vunpack.c.h.b16 %v1519
        %v1862 = vunpack.c.l.b16 %v1520
        %v1863 = vunpack.c.h.b16 %v1520
        %v1864 = vunpack.c.l.b16 %v1521
        %v1865 = vunpack.c.h.b16 %v1521
        %v1866 = vunpack.c.l.b16 %v1522
        %v1867 = vunpack.c.l.b16 %v1523
        %v1868 = vunpack.c.h.b16 %v1523
        %v1869 = vunpack.c.l.b16 %v1524
        %v1870 = vunpack.c.h.b16 %v1524
        %v1871 = vunpack.c.l.b16 %v1525
        %v1872 = vunpack.c.h.b16 %v1525
        %v1873 = vunpack.c.l.b16 %v1526
        %v1874 = vunpack.c.h.b16 %v1526
        %v1875 = vunpack.c.l.b16 %v1527
        %v1876 = vunpack.c.l.b16 %v1528
        %v1877 = vunpack.c.h.b16 %v1528
        %v1878 = vunpack.c.l.b16 %v1529
        %v1879 = vunpack.c.h.b16 %v1529
        %v1880 = vunpack.c.l.b16 %v1530
        %v1881 = vunpack.c.h.b16 %v1530
        %v1882 = vunpack.c.l.b16 %v1531
        %v1883 = vunpack.c.h.b16 %v1531
        %v1884 = vunpack.c.l.b16 %v1532
        %v1885 = vunpack.c.l.b16 %v1533
        %v1886 = vunpack.c.h.b16 %v1533
        %v1887 = vunpack.c.l.b16 %v1534
        %v1888 = vunpack.c.h.b16 %v1534
        %v1889 = vunpack.c.l.b16 %v1535
        %v1890 = vunpack.c.h.b16 %v1535
        %v1891 = vunpack.c.l.b16 %v1536
        %v1892 = vunpack.c.h.b16 %v1536
        %v1893 = vunpack.c.l.b16 %v1537
        %v1894 = vpack.c.b16 %v1678, %v1669
        %v1895 = vpack.c.b16 %v1679, %v1670
        %v1896 = vpack.c.b16 %v1680, %v1671
        %v1897 = vpack.c.b16 %v1681, %v1672
        %v1898 = vpack.c.b16 %v1682, %v1673
        %v1899 = vpack.c.b16 %v1683, %v1674
        %v1900 = vpack.c.b16 %v1684, %v1675
        %v1901 = vpack.c.b16 %v1685, %v1676
        %v1902 = vpack.c.b16 %v1686, %v1677
        %v1903 = vpack.c.b16 %v1696, %v1687
        %v1904 = vpack.c.b16 %v1697, %v1688
        %v1905 = vpack.c.b16 %v1698, %v1689
        %v1906 = vpack.c.b16 %v1699, %v1690
        %v1907 = vpack.c.b16 %v1700, %v1691
        %v1908 = vpack.c.b16 %v1701, %v1692
        %v1909 = vpack.c.b16 %v1702, %v1693
        %v1910 = vpack.c.b16 %v1703, %v1694
        %v1911 = vpack.c.b16 %v1704, %v1695
        %v1912 = vpack.c.b16 %v1714, %v1705
        %v1913 = vpack.c.b16 %v1715, %v1706
        %v1914 = vpack.c.b16 %v1716, %v1707
        %v1915 = vpack.c.b16 %v1717, %v1708
        %v1916 = vpack.c.b16 %v1718, %v1709
        %v1917 = vpack.c.b16 %v1719, %v1710
        %v1918 = vpack.c.b16 %v1720, %v1711
        %v1919 = vpack.c.b16 %v1721, %v1712
        %v1920 = vpack.c.b16 %v1722, %v1713
        %v1921 = vpack.c.b16 %v1732, %v1723
        %v1922 = vpack.c.b16 %v1733, %v1724
        %v1923 = vpack.c.b16 %v1734, %v1725
        %v1924 = vpack.c.b16 %v1735, %v1726
        %v1925 = vpack.c.b16 %v1736, %v1727
        %v1926 = vpack.c.b16 %v1737, %v1728
        %v1927 = vpack.c.b16 %v1738, %v1729
        %v1928 = vpack.c.b16 %v1739, %v1730
        %v1929 = vpack.c.b16 %v1740, %v1731
        %v1930 = vpack.c.b16 %v1750, %v1741
        %v1931 = vpack.c.b16 %v1751, %v1742
        %v1932 = vpack.c.b16 %v1752, %v1743
        %v1933 = vpack.c.b16 %v1753, %v1744
        %v1934 = vpack.c.b16 %v1754, %v1745
        %v1935 = vpack.c.b16 %v1755, %v1746
        %v1936 = vpack.c.b16 %v1756, %v1747
        %v1937 = vpack.c.b16 %v1757, %v1748
        %v1938 = vpack.c.b16 %v1758, %v1749
        %v1939 = vpack.c.b16 %v1768, %v1759
        %v1940 = vpack.c.b16 %v1769, %v1760
        %v1941 = vpack.c.b16 %v1770, %v1761
        %v1942 = vpack.c.b16 %v1771, %v1762
        %v1943 = vpack.c.b16 %v1772, %v1763
        %v1944 = vpack.c.b16 %v1773, %v1764
        %v1945 = vpack.c.b16 %v1774, %v1765
        %v1946 = vpack.c.b16 %v1775, %v1766
        %v1947 = vpack.c.b16 %v1776, %v1767
        %v1948 = vpack.c.b16 %v1786, %v1777
        %v1949 = vpack.c.b16 %v1787, %v1778
        %v1950 = vpack.c.b16 %v1788, %v1779
        %v1951 = vpack.c.b16 %v1789, %v1780
        %v1952 = vpack.c.b16 %v1790, %v1781
        %v1953 = vpack.c.b16 %v1791, %v1782
        %v1954 = vpack.c.b16 %v1792, %v1783
        %v1955 = vpack.c.b16 %v1793, %v1784
        %v1956 = vpack.c.b16 %v1794, %v1785
        %v1957 = vpack.c.b16 %v1804, %v1795
        %v1958 = vpack.c.b16 %v1805, %v1796
        %v1959 = vpack.c.b16 %v1806, %v1797
        %v1960 = vpack.c.b16 %v1807, %v1798
        %v1961 = vpack.c.b16 %v1808, %v1799
        %v1962 = vpack.c.b16 %v1809, %v1800
        %v1963 = vpack.c.b16 %v1810, %v1801
        %v1964 = vpack.c.b16 %v1811, %v1802
        %v1965 = vpack.c.b16 %v1812, %v1803
        %v1966 = vpack.c.b16 %v1822, %v1813
        %v1967 = vpack.c.b16 %v1823, %v1814
        %v1968 = vpack.c.b16 %v1824, %v1815
        %v1969 = vpack.c.b16 %v1825, %v1816
        %v1970 = vpack.c.b16 %v1826, %v1817
        %v1971 = vpack.c.b16 %v1827, %v1818
        %v1972 = vpack.c.b16 %v1828, %v1819
        %v1973 = vpack.c.b16 %v1829, %v1820
        %v1974 = vpack.c.b16 %v1830, %v1821
        %v1975 = vpack.c.b16 %v1840, %v1831
        %v1976 = vpack.c.b16 %v1841, %v1832
        %v1977 = vpack.c.b16 %v1842, %v1833
        %v1978 = vpack.c.b16 %v1843, %v1834
        %v1979 = vpack.c.b16 %v1844, %v1835
        %v1980 = vpack.c.b16 %v1845, %v1836
        %v1981 = vpack.c.b16 %v1846, %v1837
        %v1982 = vpack.c.b16 %v1847, %v1838
        %v1983 = vpack.c.b16 %v1848, %v1839
        %v1984 = vpack.c.b16 %v1858, %v1849
        %v1985 = vpack.c.b16 %v1859, %v1850
        %v1986 = vpack.c.b16 %v1860, %v1851
        %v1987 = vpack.c.b16 %v1861, %v1852
        %v1988 = vpack.c.b16 %v1862, %v1853
        %v1989 = vpack.c.b16 %v1863, %v1854
        %v1990 = vpack.c.b16 %v1864, %v1855
        %v1991 = vpack.c.b16 %v1865, %v1856
        %v1992 = vpack.c.b16 %v1866, %v1857
        %v1993 = vpack.c.b16 %v1876, %v1867
        %v1994 = vpack.c.b16 %v1877, %v1868
        %v1995 = vpack.c.b16 %v1878, %v1869
        %v1996 = vpack.c.b16 %v1879, %v1870
        %v1997 = vpack.c.b16 %v1880, %v1871
        %v1998 = vpack.c.b16 %v1881, %v1872
        %v1999 = vpack.c.b16 %v1882, %v1873
        %v2000 = vpack.c.b16 %v1883, %v1874
        %v2001 = vpack.c.b16 %v1884, %v1875
        %v2002 = vpack.c.b16 %v1885, %v1885
        %v2003 = vpack.c.b16 %v1886, %v1886
        %v2004 = vpack.c.b16 %v1887, %v1887
        %v2005 = vpack.c.b16 %v1888, %v1888
        %v2006 = vpack.c.b16 %v1889, %v1889
        %v2007 = vpack.c.b16 %v1890, %v1890
        %v2008 = vpack.c.b16 %v1891, %v1891
        %v2009 = vpack.c.b16 %v1892, %v1892
        %v2010 = vpack.c.b16 %v1893, %v1893
        %vm2119 = vcmask 588800
        %v2121 = vsel %vm2119, %v1542, 0
        %vm2123 = vcmask 1043456
        %v2125 = vsel %vm2123, %v2002, 0
        %v2128 = vsel %vm2123, %v2003, 0
        %v2131 = vsel %vm2123, %v2004, 0
        %v2134 = vsel %vm2123, %v2005, 0
        %v2137 = vsel %vm2123, %v2006, 0
        %v2140 = vsel %vm2123, %v2007, 0
        %v2143 = vsel %vm2123, %v2008, 0
        %v2146 = vsel %vm2123, %v2009, 0
        %v2149 = vsel %vm2123, %v2010, 0
        %2151 = vmatprep.subr.bf16.mxu0 %v1895
        %2152 = vmatpush1.bf16.msra.mxu0 %v1894
        %2153 = vmatprep.subr.bf16.mxu0 %v1904
        %2154 = vmatpush1.bf16.msra.mxu0 %v1903
        %2155 = vmatprep.subr.bf16.mxu0 %v1913
        %2156 = vmatpush1.bf16.msra.mxu0 %v1912
        %2157 = vmatprep.subr.bf16.mxu0 %v1922
        %2158 = vmatpush1.bf16.msra.mxu0 %v1921
        %2159 = vmatprep.subr.bf16.mxu0 %v1931
        %2160 = vmatpush1.bf16.msra.mxu0 %v1930
        %2161 = vmatprep.subr.bf16.mxu0 %v1940
        %2162 = vmatpush1.bf16.msra.mxu0 %v1939
        %2163 = vmatprep.subr.bf16.mxu0 %v1949
        %2164 = vmatpush1.bf16.msra.mxu0 %v1948
        %2165 = vmatprep.subr.bf16.mxu0 %v1958
        %2166 = vmatpush1.bf16.msra.mxu0 %v1957
        %2167 = vmatprep.subr.bf16.mxu0 %v1967
        %2168 = vmatpush1.bf16.msra.mxu0 %v1966
        %2169 = vmatprep.subr.bf16.mxu0 %v1976
        %2170 = vmatpush1.bf16.msra.mxu0 %v1975
        %2171 = vmatprep.subr.bf16.mxu0 %v1985
        %2172 = vmatpush1.bf16.msra.mxu0 %v1984
        %2173 = vmatprep.subr.bf16.mxu0 %v1994
        %2174 = vmatpush1.bf16.msra.mxu0 %v1993
        %2175 = vmatprep.subr.bf16.mxu0 %v2128
        %2176 = vmatpush1.bf16.msra.mxu0 %v2125
        %2177 = vmatprep.subr.bf16.mxu0 0
        %2178 = vmatpush1.bf16.msra.mxu0 0
        %2179 = vmatprep.subr.bf16.mxu0 0
        %2180 = vmatpush1.bf16.msra.mxu0 0
        %2181 = vmatprep.subr.bf16.mxu0 0
        %2182 = vmatpush1.bf16.msra.mxu0 0
        %2183 = vmatprep.mubr.bf16.mxu0 %v2121
        %2184 = vmatmul.mubr.bf16.gmra.mrb[0].mxu0 %v1541
        %v2185 = vpop.f32.mrb[0].mxu0
        %v2186 = vadd.f32 0.0, %v2185
        %v2187 = vpop.f32.mrb[0].mxu0
        %v2188 = vadd.f32 0.0, %v2187
        %v2189 = vpop.f32.mrb[0].mxu0
        %v2190 = vpop.f32.mrb[0].mxu0
        %2191 = vdwg.mxu0
        %2192 = vmatprep.subr.bf16.mxu0 %v1897
        %2193 = vmatpush1.bf16.msra.mxu0 %v1896
        %2194 = vmatprep.subr.bf16.mxu0 %v1906
        %2195 = vmatpush1.bf16.msra.mxu0 %v1905
        %2196 = vmatprep.subr.bf16.mxu0 %v1915
        %2197 = vmatpush1.bf16.msra.mxu0 %v1914
        %2198 = vmatprep.subr.bf16.mxu0 %v1924
        %2199 = vmatpush1.bf16.msra.mxu0 %v1923
        %2200 = vmatprep.subr.bf16.mxu0 %v1933
        %2201 = vmatpush1.bf16.msra.mxu0 %v1932
        %2202 = vmatprep.subr.bf16.mxu0 %v1942
        %2203 = vmatpush1.bf16.msra.mxu0 %v1941
        %2204 = vmatprep.subr.bf16.mxu0 %v1951
        %2205 = vmatpush1.bf16.msra.mxu0 %v1950
        %2206 = vmatprep.subr.bf16.mxu0 %v1960
        %2207 = vmatpush1.bf16.msra.mxu0 %v1959
        %2208 = vmatprep.subr.bf16.mxu0 %v1969
        %2209 = vmatpush1.bf16.msra.mxu0 %v1968
        %2210 = vmatprep.subr.bf16.mxu0 %v1978
        %2211 = vmatpush1.bf16.msra.mxu0 %v1977
        %2212 = vmatprep.subr.bf16.mxu0 %v1987
        %2213 = vmatpush1.bf16.msra.mxu0 %v1986
        %2214 = vmatprep.subr.bf16.mxu0 %v1996
        %2215 = vmatpush1.bf16.msra.mxu0 %v1995
        %2216 = vmatprep.subr.bf16.mxu0 %v2134
        %2217 = vmatpush1.bf16.msra.mxu0 %v2131
        %2218 = vmatprep.subr.bf16.mxu0 0
        %2219 = vmatpush1.bf16.msra.mxu0 0
        %2220 = vmatprep.subr.bf16.mxu0 0
        %2221 = vmatpush1.bf16.msra.mxu0 0
        %2222 = vmatprep.subr.bf16.mxu0 0
        %2223 = vmatpush1.bf16.msra.mxu0 0
        %2224 = vmatprep.mubr.bf16.mxu0 %v2121
        %2225 = vmatmul.mubr.bf16.gmra.mrb[0].mxu0 %v1541
        %v2226 = vpop.f32.mrb[0].mxu0
        %v2227 = vadd.f32 0.0, %v2226
        %v2228 = vpop.f32.mrb[0].mxu0
        %v2229 = vadd.f32 0.0, %v2228
        %v2230 = vpop.f32.mrb[0].mxu0
        %v2231 = vpop.f32.mrb[0].mxu0
        %2232 = vdwg.mxu0
        %2233 = vmatprep.subr.bf16.mxu0 %v1899
        %2234 = vmatpush1.bf16.msra.mxu0 %v1898
        %2235 = vmatprep.subr.bf16.mxu0 %v1908
        %2236 = vmatpush1.bf16.msra.mxu0 %v1907
        %2237 = vmatprep.subr.bf16.mxu0 %v1917
        %2238 = vmatpush1.bf16.msra.mxu0 %v1916
        %2239 = vmatprep.subr.bf16.mxu0 %v1926
        %2240 = vmatpush1.bf16.msra.mxu0 %v1925
        %2241 = vmatprep.subr.bf16.mxu0 %v1935
        %2242 = vmatpush1.bf16.msra.mxu0 %v1934
        %2243 = vmatprep.subr.bf16.mxu0 %v1944
        %2244 = vmatpush1.bf16.msra.mxu0 %v1943
        %2245 = vmatprep.subr.bf16.mxu0 %v1953
        %2246 = vmatpush1.bf16.msra.mxu0 %v1952
        %2247 = vmatprep.subr.bf16.mxu0 %v1962
        %2248 = vmatpush1.bf16.msra.mxu0 %v1961
        %2249 = vmatprep.subr.bf16.mxu0 %v1971
        %2250 = vmatpush1.bf16.msra.mxu0 %v1970
        %2251 = vmatprep.subr.bf16.mxu0 %v1980
        %2252 = vmatpush1.bf16.msra.mxu0 %v1979
        %2253 = vmatprep.subr.bf16.mxu0 %v1989
        %2254 = vmatpush1.bf16.msra.mxu0 %v1988
        %2255 = vmatprep.subr.bf16.mxu0 %v1998
        %2256 = vmatpush1.bf16.msra.mxu0 %v1997
        %2257 = vmatprep.subr.bf16.mxu0 %v2140
        %2258 = vmatpush1.bf16.msra.mxu0 %v2137
        %2259 = vmatprep.subr.bf16.mxu0 0
        %2260 = vmatpush1.bf16.msra.mxu0 0
        %2261 = vmatprep.subr.bf16.mxu0 0
        %2262 = vmatpush1.bf16.msra.mxu0 0
        %2263 = vmatprep.subr.bf16.mxu0 0
        %2264 = vmatpush1.bf16.msra.mxu0 0
        %2265 = vmatprep.mubr.bf16.mxu0 %v2121
        %2266 = vmatmul.mubr.bf16.gmra.mrb[0].mxu0 %v1541
        %v2267 = vpop.f32.mrb[0].mxu0
        %v2268 = vadd.f32 0.0, %v2267
        %v2269 = vpop.f32.mrb[0].mxu0
        %v2270 = vadd.f32 0.0, %v2269
        %v2271 = vpop.f32.mrb[0].mxu0
        %v2272 = vpop.f32.mrb[0].mxu0
        %2273 = vdwg.mxu0
        %2274 = vmatprep.subr.bf16.mxu0 %v1901
        %2275 = vmatpush1.bf16.msra.mxu0 %v1900
        %2276 = vmatprep.subr.bf16.mxu0 %v1910
        %2277 = vmatpush1.bf16.msra.mxu0 %v1909
        %2278 = vmatprep.subr.bf16.mxu0 %v1919
        %2279 = vmatpush1.bf16.msra.mxu0 %v1918
        %2280 = vmatprep.subr.bf16.mxu0 %v1928
        %2281 = vmatpush1.bf16.msra.mxu0 %v1927
        %2282 = vmatprep.subr.bf16.mxu0 %v1937
        %2283 = vmatpush1.bf16.msra.mxu0 %v1936
        %2284 = vmatprep.subr.bf16.mxu0 %v1946
        %2285 = vmatpush1.bf16.msra.mxu0 %v1945
        %2286 = vmatprep.subr.bf16.mxu0 %v1955
        %2287 = vmatpush1.bf16.msra.mxu0 %v1954
        %2288 = vmatprep.subr.bf16.mxu0 %v1964
        %2289 = vmatpush1.bf16.msra.mxu0 %v1963
        %2290 = vmatprep.subr.bf16.mxu0 %v1973
        %2291 = vmatpush1.bf16.msra.mxu0 %v1972
        %2292 = vmatprep.subr.bf16.mxu0 %v1982
        %2293 = vmatpush1.bf16.msra.mxu0 %v1981
        %2294 = vmatprep.subr.bf16.mxu0 %v1991
        %2295 = vmatpush1.bf16.msra.mxu0 %v1990
        %2296 = vmatprep.subr.bf16.mxu0 %v2000
        %2297 = vmatpush1.bf16.msra.mxu0 %v1999
        %2298 = vmatprep.subr.bf16.mxu0 %v2146
        %2299 = vmatpush1.bf16.msra.mxu0 %v2143
        %2300 = vmatprep.subr.bf16.mxu0 0
        %2301 = vmatpush1.bf16.msra.mxu0 0
        %2302 = vmatprep.subr.bf16.mxu0 0
        %2303 = vmatpush1.bf16.msra.mxu0 0
        %2304 = vmatprep.subr.bf16.mxu0 0
        %2305 = vmatpush1.bf16.msra.mxu0 0
        %2306 = vmatprep.mubr.bf16.mxu0 %v2121
        %2307 = vmatmul.mubr.bf16.gmra.mrb[0].mxu0 %v1541
        %v2308 = vpop.f32.mrb[0].mxu0
        %v2309 = vadd.f32 0.0, %v2308
        %v2310 = vpop.f32.mrb[0].mxu0
        %v2311 = vadd.f32 0.0, %v2310
        %v2312 = vpop.f32.mrb[0].mxu0
        %v2313 = vpop.f32.mrb[0].mxu0
        %2314 = vdwg.mxu0
        %2315 = vmatprep.subr.bf16.mxu0 0
        %2316 = vmatpush1.bf16.msra.mxu0 %v1902
        %2317 = vmatprep.subr.bf16.mxu0 0
        %2318 = vmatpush1.bf16.msra.mxu0 %v1911
        %2319 = vmatprep.subr.bf16.mxu0 0
        %2320 = vmatpush1.bf16.msra.mxu0 %v1920
        %2321 = vmatprep.subr.bf16.mxu0 0
        %2322 = vmatpush1.bf16.msra.mxu0 %v1929
        %2323 = vmatprep.subr.bf16.mxu0 0
        %2324 = vmatpush1.bf16.msra.mxu0 %v1938
        %2325 = vmatprep.subr.bf16.mxu0 0
        %2326 = vmatpush1.bf16.msra.mxu0 %v1947
        %2327 = vmatprep.subr.bf16.mxu0 0
        %2328 = vmatpush1.bf16.msra.mxu0 %v1956
        %2329 = vmatprep.subr.bf16.mxu0 0
        %2330 = vmatpush1.bf16.msra.mxu0 %v1965
        %2331 = vmatprep.subr.bf16.mxu0 0
        %2332 = vmatpush1.bf16.msra.mxu0 %v1974
        %2333 = vmatprep.subr.bf16.mxu0 0
        %2334 = vmatpush1.bf16.msra.mxu0 %v1983
        %2335 = vmatprep.subr.bf16.mxu0 0
        %2336 = vmatpush1.bf16.msra.mxu0 %v1992
        %2337 = vmatprep.subr.bf16.mxu0 0
        %2338 = vmatpush1.bf16.msra.mxu0 %v2001
        %2339 = vmatprep.subr.bf16.mxu0 0
        %2340 = vmatpush1.bf16.msra.mxu0 %v2149
        %2341 = vmatprep.subr.bf16.mxu0 0
        %2342 = vmatpush1.bf16.msra.mxu0 0
        %2343 = vmatprep.subr.bf16.mxu0 0
        %2344 = vmatpush1.bf16.msra.mxu0 0
        %2345 = vmatprep.subr.bf16.mxu0 0
        %2346 = vmatpush1.bf16.msra.mxu0 0
        %2347 = vmatprep.mubr.bf16.mxu0 %v2121
        %2348 = vmatmul.mubr.bf16.gmra.mrb[0].mxu0 %v1541
        %v2349 = vpop.f32.mrb[0].mxu0
        %v2350 = vadd.f32 0.0, %v2349
        %v2351 = vpop.f32.mrb[0].mxu0
        %v2352 = vpop.f32.mrb[0].mxu0
        %v2353 = vpop.f32.mrb[0].mxu0
        %2354 = vdwg.mxu0
        %2364 = vrot.lane.b32.xlu0 %v2186, 127
        %v2365 = vpop.permute.xlu0 %2364
        %2366 = vrot.lane.b32.xlu0 %v2188, 127
        %v2367 = vpop.permute.xlu0 %2366
        %2368 = vrot.lane.b32.xlu0 %v2227, 127
        %v2369 = vpop.permute.xlu0 %2368
        %2370 = vrot.lane.b32.xlu0 %v2229, 127
        %v2371 = vpop.permute.xlu0 %2370
        %2372 = vrot.lane.b32.xlu0 %v2268, 127
        %v2373 = vpop.permute.xlu0 %2372
        %2374 = vrot.lane.b32.xlu0 %v2270, 127
        %v2375 = vpop.permute.xlu0 %2374
        %2376 = vrot.lane.b32.xlu0 %v2309, 127
        %v2377 = vpop.permute.xlu0 %2376
        %2378 = vrot.lane.b32.xlu0 %v2311, 127
        %v2379 = vpop.permute.xlu0 %2378
        %2380 = vrot.lane.b32.xlu0 %v2350, 127
        %v2381 = vpop.permute.xlu0 %2380
        %vm2382 = vcmask 1039360
        %v2383 = vsel %vm2382, %v2365, %v2367
        %v2384 = vsel %vm2382, %v2367, %v2369
        %v2385 = vsel %vm2382, %v2369, %v2371
        %v2386 = vsel %vm2382, %v2371, %v2373
        %v2387 = vsel %vm2382, %v2373, %v2375
        %v2388 = vsel %vm2382, %v2375, %v2377
        %v2389 = vsel %vm2382, %v2377, %v2379
        %v2390 = vsel %vm2382, %v2379, %v2381
        %v2400 = vmax.f32 %v2186, %v2383
        %v2401 = vmax.f32 %v2188, %v2384
        %v2402 = vmax.f32 %v2227, %v2385
        %v2403 = vmax.f32 %v2229, %v2386
        %v2404 = vmax.f32 %v2268, %v2387
        %v2405 = vmax.f32 %v2270, %v2388
        %v2406 = vmax.f32 %v2309, %v2389
        %v2407 = vmax.f32 %v2311, %v2390
        %v2408 = vmax.f32 %v2350, %v2381
        %2418 = vrot.lane.b32.xlu0 %v2400, 92
        %v2419 = vpop.permute.xlu0 %2418
        %2420 = vrot.lane.b32.xlu0 %v2401, 92
        %v2421 = vpop.permute.xlu0 %2420
        %2422 = vrot.lane.b32.xlu0 %v2402, 92
        %v2423 = vpop.permute.xlu0 %2422
        %2424 = vrot.lane.b32.xlu0 %v2403, 92
        %v2425 = vpop.permute.xlu0 %2424
        %2426 = vrot.lane.b32.xlu0 %v2404, 92
        %v2427 = vpop.permute.xlu0 %2426
        %2428 = vrot.lane.b32.xlu0 %v2405, 92
        %v2429 = vpop.permute.xlu0 %2428
        %2430 = vrot.lane.b32.xlu0 %v2406, 92
        %v2431 = vpop.permute.xlu0 %2430
        %2432 = vrot.lane.b32.xlu0 %v2407, 92
        %v2433 = vpop.permute.xlu0 %2432
        %2434 = vrot.lane.b32.xlu0 %v2408, 92
        %v2435 = vpop.permute.xlu0 %2434
        %vm2436 = vcmask 752640
        %v2437 = vsel %vm2436, %v2419, %v2421
        %v2438 = vsel %vm2436, %v2421, %v2423
        %v2439 = vsel %vm2436, %v2423, %v2425
        %v2440 = vsel %vm2436, %v2425, %v2427
        %v2441 = vsel %vm2436, %v2427, %v2429
        %v2442 = vsel %vm2436, %v2429, %v2431
        %v2443 = vsel %vm2436, %v2431, %v2433
        %v2444 = vsel %vm2436, %v2433, %v2435
        %v2454 = vmax.f32 %v2400, %v2437
        %v2455 = vmax.f32 %v2401, %v2438
        %v2456 = vmax.f32 %v2402, %v2439
        %v2457 = vmax.f32 %v2403, %v2440
        %v2458 = vmax.f32 %v2404, %v2441
        %v2459 = vmax.f32 %v2405, %v2442
        %v2460 = vmax.f32 %v2406, %v2443
        %v2461 = vmax.f32 %v2407, %v2444
        %v2462 = vmax.f32 %v2408, %v2435
        %v2463 = vld [vmem:[%s2] sm:$0xff]
        %2465 = vset.pattern.permute.xlu0 0
        %2466 = vperm.xlu0 %2465, %v2463
        %v2467 = vpop.permute.xlu0 %2466
        %v2469 = vadd.f32 %v2454, %v2467
        %v2470 = vadd.f32 %v2455, %v2467
        %v2471 = vadd.f32 %v2456, %v2467
        %v2472 = vadd.f32 %v2457, %v2467
        %v2473 = vadd.f32 %v2458, %v2467
        %v2474 = vadd.f32 %v2459, %v2467
        %v2475 = vadd.f32 %v2460, %v2467
        %v2476 = vadd.f32 %v2461, %v2467
        %v2477 = vadd.f32 %v2462, %v2467
        %v2478 = vmax.f32 %v2469, 0.0
        %v2479 = vmax.f32 %v2470, 0.0
        %v2480 = vmax.f32 %v2471, 0.0
        %v2481 = vmax.f32 %v2472, 0.0
        %v2482 = vmax.f32 %v2473, 0.0
        %v2483 = vmax.f32 %v2474, 0.0
        %v2484 = vmax.f32 %v2475, 0.0
        %v2485 = vmax.f32 %v2476, 0.0
        %v2486 = vmax.f32 %v2477, 0.0
        %v2487 = vpack.c.bf16 %v2478, %v2478
        %v2488 = vpack.c.bf16 %v2479, %v2479
        %v2489 = vpack.c.bf16 %v2480, %v2480
        %v2490 = vpack.c.bf16 %v2481, %v2481
        %v2491 = vpack.c.bf16 %v2482, %v2482
        %v2492 = vpack.c.bf16 %v2483, %v2483
        %v2493 = vpack.c.bf16 %v2484, %v2484
        %v2494 = vpack.c.bf16 %v2485, %v2485
        %v2495 = vpack.c.bf16 %v2486, %v2486
        %v2496 = vld [vmem:[%s3] sm:$0xff]
        %v2497 = vld [vmem:[%s3 + $0x8] sm:$0xff]
        %v2498 = vld [vmem:[%s3 + $0x10] sm:$0xff]
        %v2499 = vld [vmem:[%s3 + $0x18] sm:$0xff]
        %v2500 = vld [vmem:[%s3 + $0x20] sm:$0xff]
        %v2501 = vld [vmem:[%s3 + $0x28] sm:$0xff]
        %v2502 = vld [vmem:[%s3 + $0x30] sm:$0xff]
        %v2503 = vld [vmem:[%s3 + $0x38] sm:$0xff]
        %v2504 = vld [vmem:[%s3 + $0x40] sm:$0xff]
        %v2505 = vld [vmem:[%s3 + $0x48] sm:$0xff]
        %v2506 = vld [vmem:[%s3 + $0x50] sm:$0xff]
        %v2507 = vld [vmem:[%s3 + $0x58] sm:$0xff]
        %v2508 = vld [vmem:[%s3 + $0x60] sm:$0xff]
        %v2509 = vld [vmem:[%s3 + $0x68] sm:$0xff]
        %v2510 = vld [vmem:[%s3 + $0x70] sm:$0xff]
        %v2511 = vld [vmem:[%s3 + $0x78] sm:$0xff]
        %v2512 = vld [vmem:[%s3 + $0x80] sm:$0xff]
        %v2513 = vld [vmem:[%s3 + $0x88] sm:$0xff]
        %v2514 = vld [vmem:[%s3 + $0x90] sm:$0xff]
        %v2515 = vld [vmem:[%s3 + $0x98] sm:$0xff]
        %v2516 = vld [vmem:[%s3 + $0xa0] sm:$0xff]
        %v2517 = vld [vmem:[%s3 + $0xa8] sm:$0xff]
        %v2518 = vld [vmem:[%s3 + $0xb0] sm:$0xff]
        %v2519 = vld [vmem:[%s3 + $0xb8] sm:$0xff]
        %v2520 = vld [vmem:[%s3 + $0xc0] sm:$0xff]
        %v2521 = vld [vmem:[%s3 + $0xc8] sm:$0xff]
        %v2522 = vld [vmem:[%s3 + $0xd0] sm:$0xff]
        %v2523 = vld [vmem:[%s3 + $0xd8] sm:$0xff]
        %v2524 = vld [vmem:[%s3 + $0xe0] sm:$0xff]
        %v2525 = vld [vmem:[%s3 + $0xe8] sm:$0xff]
        %v2526 = vld [vmem:[%s3 + $0xf0] sm:$0xff]
        %v2527 = vld [vmem:[%s3 + $0xf8] sm:$0xff]
        %v2528 = vld [vmem:[%s3 + $0x100] sm:$0xff]
        %v2529 = vld [vmem:[%s3 + $0x108] sm:$0xff]
        %v2530 = vld [vmem:[%s3 + $0x110] sm:$0xff]
        %v2531 = vld [vmem:[%s3 + $0x118] sm:$0xff]
        %v2532 = vld [vmem:[%s3 + $0x120] sm:$0xff]
        %v2533 = vld [vmem:[%s3 + $0x128] sm:$0xff]
        %v2534 = vld [vmem:[%s3 + $0x130] sm:$0xff]
        %v2535 = vld [vmem:[%s3 + $0x138] sm:$0xff]
        %v2536 = vld [vmem:[%s3 + $0x140] sm:$0xff]
        %v2537 = vld [vmem:[%s3 + $0x148] sm:$0xff]
        %v2538 = vld [vmem:[%s3 + $0x150] sm:$0xff]
        %v2539 = vld [vmem:[%s3 + $0x158] sm:$0xff]
        %v2540 = vld [vmem:[%s3 + $0x160] sm:$0xff]
        %v2541 = vld [vmem:[%s3 + $0x168] sm:$0xff]
        %v2542 = vld [vmem:[%s3 + $0x170] sm:$0xff]
        %v2543 = vld [vmem:[%s3 + $0x178] sm:$0xff]
        %v2544 = vld [vmem:[%s3 + $0x180] sm:$0xff]
        %v2545 = vld [vmem:[%s3 + $0x188] sm:$0xff]
        %v2546 = vld [vmem:[%s3 + $0x190] sm:$0xff]
        %v2547 = vld [vmem:[%s3 + $0x198] sm:$0xff]
        %v2548 = vld [vmem:[%s3 + $0x1a0] sm:$0xff]
        %v2549 = vld [vmem:[%s3 + $0x1a8] sm:$0xff]
        %v2550 = vld [vmem:[%s3 + $0x1b0] sm:$0xff]
        %v2551 = vld [vmem:[%s3 + $0x1b8] sm:$0xff]
        %v2552 = vld [vmem:[%s3 + $0x1c0] sm:$0xff]
        %v2553 = vld [vmem:[%s3 + $0x1c8] sm:$0xff]
        %v2554 = vld [vmem:[%s3 + $0x1d0] sm:$0xff]
        %v2555 = vld [vmem:[%s3 + $0x1d8] sm:$0xff]
        %v2556 = vld [vmem:[%s3 + $0x1e0] sm:$0xff]
        %v2557 = vld [vmem:[%s3 + $0x1e8] sm:$0xff]
        %v2558 = vld [vmem:[%s3 + $0x1f0] sm:$0xff]
        %v2559 = vld [vmem:[%s3 + $0x1f8] sm:$0xff]
        %v2560 = vld [vmem:[%s3 + $0x200] sm:$0xff]
        %v2561 = vld [vmem:[%s3 + $0x208] sm:$0xff]
        %v2562 = vld [vmem:[%s3 + $0x210] sm:$0xff]
        %v2563 = vld [vmem:[%s3 + $0x218] sm:$0xff]
        %v2564 = vld [vmem:[%s3 + $0x220] sm:$0xff]
        %v2565 = vld [vmem:[%s3 + $0x228] sm:$0xff]
        %v2566 = vld [vmem:[%s3 + $0x230] sm:$0xff]
        %v2567 = vld [vmem:[%s3 + $0x238] sm:$0xff]
        %v2568 = vld [vmem:[%s3 + $0x240] sm:$0xff]
        %v2569 = vld [vmem:[%s3 + $0x248] sm:$0xff]
        %v2570 = vld [vmem:[%s3 + $0x250] sm:$0xff]
        %v2571 = vld [vmem:[%s3 + $0x258] sm:$0xff]
        %v2572 = vld [vmem:[%s3 + $0x260] sm:$0xff]
        %v2573 = vld [vmem:[%s3 + $0x268] sm:$0xff]
        %v2574 = vld [vmem:[%s3 + $0x270] sm:$0xff]
        %v2575 = vld [vmem:[%s3 + $0x278] sm:$0xff]
        %v2576 = vld [vmem:[%s3 + $0x280] sm:$0xff]
        %v2577 = vld [vmem:[%s3 + $0x288] sm:$0xff]
        %v2578 = vld [vmem:[%s3 + $0x290] sm:$0xff]
        %v2579 = vld [vmem:[%s3 + $0x298] sm:$0xff]
        %v2580 = vld [vmem:[%s3 + $0x2a0] sm:$0xff]
        %v2581 = vld [vmem:[%s3 + $0x2a8] sm:$0xff]
        %v2582 = vld [vmem:[%s3 + $0x2b0] sm:$0xff]
        %v2583 = vld [vmem:[%s3 + $0x2b8] sm:$0xff]
        %v2584 = vld [vmem:[%s3 + $0x2c0] sm:$0xff]
        %v2585 = vld [vmem:[%s3 + $0x2c8] sm:$0xff]
        %v2586 = vld [vmem:[%s3 + $0x2d0] sm:$0xff]
        %v2587 = vld [vmem:[%s3 + $0x2d8] sm:$0xff]
        %v2588 = vld [vmem:[%s3 + $0x2e0] sm:$0xff]
        %v2589 = vld [vmem:[%s3 + $0x2e8] sm:$0xff]
        %v2590 = vld [vmem:[%s3 + $0x2f0] sm:$0xff]
        %v2591 = vld [vmem:[%s3 + $0x2f8] sm:$0xff]
        %v2592 = vld [vmem:[%s3 + $0x300] sm:$0xff]
        %v2593 = vld [vmem:[%s3 + $0x308] sm:$0xff]
        %v2594 = vld [vmem:[%s3 + $0x310] sm:$0xff]
        %v2595 = vld [vmem:[%s3 + $0x318] sm:$0xff]
        %v2596 = vld [vmem:[%s3 + $0x320] sm:$0xff]
        %v2597 = vld [vmem:[%s3 + $0x328] sm:$0xff]
        %v2598 = vld [vmem:[%s3 + $0x330] sm:$0xff]
        %v2599 = vld [vmem:[%s3 + $0x338] sm:$0xff]
        %v2600 = vld [vmem:[%s3 + $0x340] sm:$0xff]
        %v2601 = vld [vmem:[%s3 + $0x348] sm:$0xff]
        %v2602 = vld [vmem:[%s3 + $0x350] sm:$0xff]
        %v2603 = vld [vmem:[%s3 + $0x358] sm:$0xff]
        %v2604 = vld [vmem:[%s3 + $0x360] sm:$0xff]
        %v2605 = vld [vmem:[%s3 + $0x368] sm:$0xff]
        %v2606 = vld [vmem:[%s3 + $0x370] sm:$0xff]
        %v2607 = vld [vmem:[%s3 + $0x378] sm:$0xff]
        %v2608 = vld [vmem:[%s3 + $0x380] sm:$0xff]
        %v2609 = vld [vmem:[%s3 + $0x388] sm:$0xff]
        %v2610 = vld [vmem:[%s3 + $0x390] sm:$0xff]
        %v2611 = vld [vmem:[%s3 + $0x398] sm:$0xff]
        %v2612 = vld [vmem:[%s3 + $0x3a0] sm:$0xff]
        %v2613 = vld [vmem:[%s3 + $0x3a8] sm:$0xff]
        %v2614 = vld [vmem:[%s3 + $0x3b0] sm:$0xff]
        %v2615 = vld [vmem:[%s3 + $0x3b8] sm:$0xff]
        %v2616 = vld [vmem:[%s3 + $0x3c0] sm:$0xff]
        %v2617 = vld [vmem:[%s3 + $0x3c8] sm:$0xff]
        %v2618 = vld [vmem:[%s3 + $0x3d0] sm:$0xff]
        %v2619 = vld [vmem:[%s3 + $0x3d8] sm:$0xff]
        %v2620 = vld [vmem:[%s3 + $0x3e0] sm:$0xff]
        %v2621 = vld [vmem:[%s3 + $0x3e8] sm:$0xff]
        %v2622 = vld [vmem:[%s3 + $0x3f0] sm:$0xff]
        %v2623 = vld [vmem:[%s3 + $0x3f8] sm:$0xff]
        %v2624 = vld [vmem:[%s3 + $0x400] sm:$0xff]
        %v2625 = vld [vmem:[%s3 + $0x408] sm:$0xff]
        %v2626 = vld [vmem:[%s3 + $0x410] sm:$0xff]
        %v2627 = vld [vmem:[%s3 + $0x418] sm:$0xff]
        %v2628 = vld [vmem:[%s3 + $0x420] sm:$0xff]
        %v2629 = vld [vmem:[%s3 + $0x428] sm:$0xff]
        %v2630 = vld [vmem:[%s3 + $0x430] sm:$0xff]
        %v2631 = vld [vmem:[%s3 + $0x438] sm:$0xff]
        %v2632 = vld [vmem:[%s3 + $0x440] sm:$0xff]
        %v2633 = vld [vmem:[%s3 + $0x448] sm:$0xff]
        %v2634 = vld [vmem:[%s3 + $0x450] sm:$0xff]
        %v2635 = vld [vmem:[%s3 + $0x458] sm:$0xff]
        %v2636 = vld [vmem:[%s3 + $0x460] sm:$0xff]
        %v2637 = vld [vmem:[%s3 + $0x468] sm:$0xff]
        %v2638 = vld [vmem:[%s3 + $0x470] sm:$0xff]
        %v2639 = vld [vmem:[%s3 + $0x478] sm:$0xff]
        %v2640 = vld [vmem:[%s3 + $0x480] sm:$0xff]
        %v2641 = vld [vmem:[%s3 + $0x488] sm:$0xff]
        %v2642 = vld [vmem:[%s3 + $0x490] sm:$0xff]
        %v2643 = vld [vmem:[%s3 + $0x498] sm:$0xff]
        %v2644 = vld [vmem:[%s3 + $0x4a0] sm:$0xff]
        %v2645 = vld [vmem:[%s3 + $0x4a8] sm:$0xff]
        %v2646 = vld [vmem:[%s3 + $0x4b0] sm:$0xff]
        %v2647 = vld [vmem:[%s3 + $0x4b8] sm:$0xff]
        %v2648 = vld [vmem:[%s3 + $0x4c0] sm:$0xff]
        %v2649 = vld [vmem:[%s3 + $0x4c8] sm:$0xff]
        %v2650 = vld [vmem:[%s3 + $0x4d0] sm:$0xff]
        %v2651 = vld [vmem:[%s3 + $0x4d8] sm:$0xff]
        %v2652 = vld [vmem:[%s3 + $0x4e0] sm:$0xff]
        %v2653 = vld [vmem:[%s3 + $0x4e8] sm:$0xff]
        %v2654 = vld [vmem:[%s3 + $0x4f0] sm:$0xff]
        %v2655 = vld [vmem:[%s3 + $0x4f8] sm:$0xff]
        %v2656 = vld [vmem:[%s3 + $0x500] sm:$0xff]
        %v2657 = vld [vmem:[%s3 + $0x508] sm:$0xff]
        %v2658 = vld [vmem:[%s3 + $0x510] sm:$0xff]
        %v2659 = vld [vmem:[%s3 + $0x518] sm:$0xff]
        %v2660 = vld [vmem:[%s3 + $0x520] sm:$0xff]
        %v2661 = vld [vmem:[%s3 + $0x528] sm:$0xff]
        %v2662 = vld [vmem:[%s3 + $0x530] sm:$0xff]
        %v2663 = vld [vmem:[%s3 + $0x538] sm:$0xff]
        %v2664 = vld [vmem:[%s3 + $0x540] sm:$0xff]
        %v2665 = vld [vmem:[%s3 + $0x548] sm:$0xff]
        %v2666 = vld [vmem:[%s3 + $0x550] sm:$0xff]
        %v2667 = vld [vmem:[%s3 + $0x558] sm:$0xff]
        %v2668 = vld [vmem:[%s3 + $0x560] sm:$0xff]
        %v2669 = vld [vmem:[%s3 + $0x568] sm:$0xff]
        %v2670 = vld [vmem:[%s3 + $0x570] sm:$0xff]
        %v2671 = vld [vmem:[%s3 + $0x578] sm:$0xff]
        %v2672 = vld [vmem:[%s3 + $0x580] sm:$0xff]
        %v2673 = vld [vmem:[%s3 + $0x588] sm:$0xff]
        %v2674 = vld [vmem:[%s3 + $0x590] sm:$0xff]
        %v2675 = vld [vmem:[%s3 + $0x598] sm:$0xff]
        %v2676 = vld [vmem:[%s3 + $0x5a0] sm:$0xff]
        %v2677 = vld [vmem:[%s3 + $0x5a8] sm:$0xff]
        %v2678 = vld [vmem:[%s3 + $0x5b0] sm:$0xff]
        %v2679 = vld [vmem:[%s3 + $0x5b8] sm:$0xff]
        %v2680 = vld [vmem:[%s3 + $0x5c0] sm:$0xff]
        %v2681 = vld [vmem:[%s3 + $0x5c8] sm:$0xff]
        %v2682 = vld [vmem:[%s3 + $0x5d0] sm:$0xff]
        %v2683 = vld [vmem:[%s3 + $0x5d8] sm:$0xff]
        %v2684 = vld [vmem:[%s3 + $0x5e0] sm:$0xff]
        %v2685 = vld [vmem:[%s3 + $0x5e8] sm:$0xff]
        %v2686 = vld [vmem:[%s3 + $0x5f0] sm:$0xff]
        %v2687 = vld [vmem:[%s3 + $0x5f8] sm:$0xff]
        %v2688 = vld [vmem:[%s3 + $0x600] sm:$0xff]
        %v2689 = vld [vmem:[%s3 + $0x608] sm:$0xff]
        %v2690 = vld [vmem:[%s3 + $0x610] sm:$0xff]
        %v2691 = vld [vmem:[%s3 + $0x618] sm:$0xff]
        %v2692 = vld [vmem:[%s3 + $0x620] sm:$0xff]
        %v2693 = vld [vmem:[%s3 + $0x628] sm:$0xff]
        %v2694 = vld [vmem:[%s3 + $0x630] sm:$0xff]
        %v2695 = vld [vmem:[%s3 + $0x638] sm:$0xff]
        %v2696 = vld [vmem:[%s3 + $0x640] sm:$0xff]
        %v2697 = vld [vmem:[%s3 + $0x648] sm:$0xff]
        %v2698 = vld [vmem:[%s3 + $0x650] sm:$0xff]
        %v2699 = vld [vmem:[%s3 + $0x658] sm:$0xff]
        %v2700 = vld [vmem:[%s3 + $0x660] sm:$0xff]
        %v2701 = vld [vmem:[%s3 + $0x668] sm:$0xff]
        %v2702 = vld [vmem:[%s3 + $0x670] sm:$0xff]
        %v2703 = vld [vmem:[%s3 + $0x678] sm:$0xff]
        %v2704 = vld [vmem:[%s3 + $0x680] sm:$0xff]
        %v2705 = vld [vmem:[%s3 + $0x688] sm:$0xff]
        %v2706 = vld [vmem:[%s3 + $0x690] sm:$0xff]
        %v2707 = vld [vmem:[%s3 + $0x698] sm:$0xff]
        %v2708 = vld [vmem:[%s3 + $0x6a0] sm:$0xff]
        %v2709 = vld [vmem:[%s3 + $0x6a8] sm:$0xff]
        %v2710 = vld [vmem:[%s3 + $0x6b0] sm:$0xff]
        %v2711 = vld [vmem:[%s3 + $0x6b8] sm:$0xff]
        %v2712 = vld [vmem:[%s3 + $0x6c0] sm:$0xff]
        %v2713 = vld [vmem:[%s3 + $0x6c8] sm:$0xff]
        %v2714 = vld [vmem:[%s3 + $0x6d0] sm:$0xff]
        %v2715 = vld [vmem:[%s3 + $0x6d8] sm:$0xff]
        %v2716 = vld [vmem:[%s3 + $0x6e0] sm:$0xff]
        %v2717 = vld [vmem:[%s3 + $0x6e8] sm:$0xff]
        %v2718 = vld [vmem:[%s3 + $0x6f0] sm:$0xff]
        %v2719 = vld [vmem:[%s3 + $0x6f8] sm:$0xff]
        %v2720 = vld [vmem:[%s3 + $0x700] sm:$0xff]
        %v2721 = vld [vmem:[%s3 + $0x708] sm:$0xff]
        %v2722 = vld [vmem:[%s3 + $0x710] sm:$0xff]
        %v2723 = vld [vmem:[%s3 + $0x718] sm:$0xff]
        %v2724 = vld [vmem:[%s3 + $0x720] sm:$0xff]
        %v2725 = vld [vmem:[%s3 + $0x728] sm:$0xff]
        %v2726 = vld [vmem:[%s3 + $0x730] sm:$0xff]
        %v2727 = vld [vmem:[%s3 + $0x738] sm:$0xff]
        %v2728 = vld [vmem:[%s3 + $0x740] sm:$0xff]
        %v2729 = vld [vmem:[%s3 + $0x748] sm:$0xff]
        %v2730 = vld [vmem:[%s3 + $0x750] sm:$0xff]
        %v2731 = vld [vmem:[%s3 + $0x758] sm:$0xff]
        %v2732 = vld [vmem:[%s3 + $0x760] sm:$0xff]
        %v2733 = vld [vmem:[%s3 + $0x768] sm:$0xff]
        %v2734 = vld [vmem:[%s3 + $0x770] sm:$0xff]
        %v2735 = vld [vmem:[%s3 + $0x778] sm:$0xff]
        %v2736 = vld [vmem:[%s3 + $0x780] sm:$0xff]
        %v2737 = vld [vmem:[%s3 + $0x788] sm:$0xff]
        %v2738 = vld [vmem:[%s3 + $0x790] sm:$0xff]
        %v2739 = vld [vmem:[%s3 + $0x798] sm:$0xff]
        %v2740 = vld [vmem:[%s3 + $0x7a0] sm:$0xff]
        %v2741 = vld [vmem:[%s3 + $0x7a8] sm:$0xff]
        %v2742 = vld [vmem:[%s3 + $0x7b0] sm:$0xff]
        %v2743 = vld [vmem:[%s3 + $0x7b8] sm:$0xff]
        %v2744 = vld [vmem:[%s3 + $0x7c0] sm:$0xff]
        %v2745 = vld [vmem:[%s3 + $0x7c8] sm:$0xff]
        %v2746 = vld [vmem:[%s3 + $0x7d0] sm:$0xff]
        %v2747 = vld [vmem:[%s3 + $0x7d8] sm:$0xff]
        %v2748 = vld [vmem:[%s3 + $0x7e0] sm:$0xff]
        %v2749 = vld [vmem:[%s3 + $0x7e8] sm:$0xff]
        %v2750 = vld [vmem:[%s3 + $0x7f0] sm:$0xff]
        %v2751 = vld [vmem:[%s3 + $0x7f8] sm:$0xff]
        %v2752 = vld [vmem:[%s3 + $0x800] sm:$0xff]
        %v2753 = vld [vmem:[%s3 + $0x808] sm:$0xff]
        %v2754 = vld [vmem:[%s3 + $0x810] sm:$0xff]
        %v2755 = vld [vmem:[%s3 + $0x818] sm:$0xff]
        %v2756 = vld [vmem:[%s3 + $0x820] sm:$0xff]
        %v2757 = vld [vmem:[%s3 + $0x828] sm:$0xff]
        %v2758 = vld [vmem:[%s3 + $0x830] sm:$0xff]
        %v2759 = vld [vmem:[%s3 + $0x838] sm:$0xff]
        %v2760 = vld [vmem:[%s3 + $0x840] sm:$0xff]
        %v2761 = vld [vmem:[%s3 + $0x848] sm:$0xff]
        %v2762 = vld [vmem:[%s3 + $0x850] sm:$0xff]
        %v2763 = vld [vmem:[%s3 + $0x858] sm:$0xff]
        %v2764 = vld [vmem:[%s3 + $0x860] sm:$0xff]
        %v2765 = vld [vmem:[%s3 + $0x868] sm:$0xff]
        %v2766 = vld [vmem:[%s3 + $0x870] sm:$0xff]
        %v2767 = vld [vmem:[%s3 + $0x878] sm:$0xff]
        %v2768 = vld [vmem:[%s3 + $0x880] sm:$0xff]
        %v2769 = vld [vmem:[%s3 + $0x888] sm:$0xff]
        %v2770 = vld [vmem:[%s3 + $0x890] sm:$0xff]
        %v2771 = vld [vmem:[%s3 + $0x898] sm:$0xff]
        %v2772 = vld [vmem:[%s3 + $0x8a0] sm:$0xff]
        %v2773 = vld [vmem:[%s3 + $0x8a8] sm:$0xff]
        %v3052 = vunpack.c.l.b16 %v2496
        %v3053 = vunpack.c.h.b16 %v2496
        %v3054 = vunpack.c.l.b16 %v2497
        %v3055 = vunpack.c.h.b16 %v2497
        %v3056 = vunpack.c.l.b16 %v2498
        %v3057 = vunpack.c.h.b16 %v2498
        %v3058 = vunpack.c.l.b16 %v2499
        %v3059 = vunpack.c.h.b16 %v2499
        %v3060 = vunpack.c.l.b16 %v2500
        %v3061 = vunpack.c.h.b16 %v2500
        %v3062 = vunpack.c.l.b16 %v2501
        %v3063 = vunpack.c.h.b16 %v2501
        %v3064 = vunpack.c.l.b16 %v2502
        %v3065 = vunpack.c.h.b16 %v2502
        %v3066 = vunpack.c.l.b16 %v2503
        %v3067 = vunpack.c.h.b16 %v2503
        %v3068 = vunpack.c.l.b16 %v2504
        %v3069 = vunpack.c.h.b16 %v2504
        %v3070 = vunpack.c.l.b16 %v2505
        %v3071 = vunpack.c.h.b16 %v2505
        %v3072 = vunpack.c.l.b16 %v2506
        %v3073 = vunpack.c.h.b16 %v2506
        %v3074 = vunpack.c.l.b16 %v2507
        %v3075 = vunpack.c.h.b16 %v2507
        %v3076 = vunpack.c.l.b16 %v2508
        %v3077 = vunpack.c.h.b16 %v2508
        %v3078 = vunpack.c.l.b16 %v2509
        %v3079 = vunpack.c.h.b16 %v2509
        %v3080 = vunpack.c.l.b16 %v2510
        %v3081 = vunpack.c.h.b16 %v2510
        %v3082 = vunpack.c.l.b16 %v2511
        %v3083 = vunpack.c.h.b16 %v2511
        %v3084 = vunpack.c.l.b16 %v2512
        %v3085 = vunpack.c.h.b16 %v2512
        %v3086 = vunpack.c.l.b16 %v2513
        %v3087 = vunpack.c.h.b16 %v2513
        %v3088 = vunpack.c.l.b16 %v2514
        %v3089 = vunpack.c.h.b16 %v2514
        %v3090 = vunpack.c.l.b16 %v2515
        %v3091 = vunpack.c.h.b16 %v2515
        %v3092 = vunpack.c.l.b16 %v2516
        %v3093 = vunpack.c.h.b16 %v2516
        %v3094 = vunpack.c.l.b16 %v2517
        %v3095 = vunpack.c.h.b16 %v2517
        %v3096 = vunpack.c.l.b16 %v2518
        %v3097 = vunpack.c.h.b16 %v2518
        %v3098 = vunpack.c.l.b16 %v2519
        %v3099 = vunpack.c.h.b16 %v2519
        %v3100 = vunpack.c.l.b16 %v2520
        %v3101 = vunpack.c.h.b16 %v2520
        %v3102 = vunpack.c.l.b16 %v2521
        %v3103 = vunpack.c.h.b16 %v2521
        %v3104 = vunpack.c.l.b16 %v2522
        %v3105 = vunpack.c.h.b16 %v2522
        %v3106 = vunpack.c.l.b16 %v2523
        %v3107 = vunpack.c.h.b16 %v2523
        %v3108 = vunpack.c.l.b16 %v2524
        %v3109 = vunpack.c.h.b16 %v2524
        %v3110 = vunpack.c.l.b16 %v2525
        %v3111 = vunpack.c.h.b16 %v2525
        %v3112 = vunpack.c.l.b16 %v2526
        %v3113 = vunpack.c.h.b16 %v2526
        %v3114 = vunpack.c.l.b16 %v2527
        %v3115 = vunpack.c.h.b16 %v2527
        %v3116 = vunpack.c.l.b16 %v2528
        %v3117 = vunpack.c.h.b16 %v2528
        %v3118 = vunpack.c.l.b16 %v2529
        %v3119 = vunpack.c.h.b16 %v2529
        %v3120 = vunpack.c.l.b16 %v2530
        %v3121 = vunpack.c.h.b16 %v2530
        %v3122 = vunpack.c.l.b16 %v2531
        %v3123 = vunpack.c.h.b16 %v2531
        %v3124 = vunpack.c.l.b16 %v2532
        %v3125 = vunpack.c.h.b16 %v2532
        %v3126 = vunpack.c.l.b16 %v2533
        %v3127 = vunpack.c.h.b16 %v2533
        %v3128 = vunpack.c.l.b16 %v2534
        %v3129 = vunpack.c.h.b16 %v2534
        %v3130 = vunpack.c.l.b16 %v2535
        %v3131 = vunpack.c.h.b16 %v2535
        %v3132 = vunpack.c.l.b16 %v2536
        %v3133 = vunpack.c.h.b16 %v2536
        %v3134 = vunpack.c.l.b16 %v2537
        %v3135 = vunpack.c.h.b16 %v2537
        %v3136 = vunpack.c.l.b16 %v2538
        %v3137 = vunpack.c.h.b16 %v2538
        %v3138 = vunpack.c.l.b16 %v2539
        %v3139 = vunpack.c.h.b16 %v2539
        %v3140 = vunpack.c.l.b16 %v2540
        %v3141 = vunpack.c.h.b16 %v2540
        %v3142 = vunpack.c.l.b16 %v2541
        %v3143 = vunpack.c.h.b16 %v2541
        %v3144 = vunpack.c.l.b16 %v2542
        %v3145 = vunpack.c.h.b16 %v2542
        %v3146 = vunpack.c.l.b16 %v2543
        %v3147 = vunpack.c.h.b16 %v2543
        %v3148 = vunpack.c.l.b16 %v2544
        %v3149 = vunpack.c.h.b16 %v2544
        %v3150 = vunpack.c.l.b16 %v2545
        %v3151 = vunpack.c.h.b16 %v2545
        %v3152 = vunpack.c.l.b16 %v2546
        %v3153 = vunpack.c.h.b16 %v2546
        %v3154 = vunpack.c.l.b16 %v2547
        %v3155 = vunpack.c.h.b16 %v2547
        %v3156 = vunpack.c.l.b16 %v2548
        %v3157 = vunpack.c.h.b16 %v2548
        %v3158 = vunpack.c.l.b16 %v2549
        %v3159 = vunpack.c.h.b16 %v2549
        %v3160 = vunpack.c.l.b16 %v2550
        %v3161 = vunpack.c.h.b16 %v2550
        %v3162 = vunpack.c.l.b16 %v2551
        %v3163 = vunpack.c.h.b16 %v2551
        %v3164 = vunpack.c.l.b16 %v2552
        %v3165 = vunpack.c.h.b16 %v2552
        %v3166 = vunpack.c.l.b16 %v2553
        %v3167 = vunpack.c.h.b16 %v2553
        %v3168 = vunpack.c.l.b16 %v2554
        %v3169 = vunpack.c.h.b16 %v2554
        %v3170 = vunpack.c.l.b16 %v2555
        %v3171 = vunpack.c.h.b16 %v2555
        %v3172 = vunpack.c.l.b16 %v2556
        %v3173 = vunpack.c.h.b16 %v2556
        %v3174 = vunpack.c.l.b16 %v2557
        %v3175 = vunpack.c.h.b16 %v2557
        %v3176 = vunpack.c.l.b16 %v2558
        %v3177 = vunpack.c.h.b16 %v2558
        %v3178 = vunpack.c.l.b16 %v2559
        %v3179 = vunpack.c.h.b16 %v2559
        %v3180 = vunpack.c.l.b16 %v2560
        %v3181 = vunpack.c.h.b16 %v2560
        %v3182 = vunpack.c.l.b16 %v2561
        %v3183 = vunpack.c.h.b16 %v2561
        %v3184 = vunpack.c.l.b16 %v2562
        %v3185 = vunpack.c.h.b16 %v2562
        %v3186 = vunpack.c.l.b16 %v2563
        %v3187 = vunpack.c.h.b16 %v2563
        %v3188 = vunpack.c.l.b16 %v2564
        %v3189 = vunpack.c.h.b16 %v2564
        %v3190 = vunpack.c.l.b16 %v2565
        %v3191 = vunpack.c.h.b16 %v2565
        %v3192 = vunpack.c.l.b16 %v2566
        %v3193 = vunpack.c.h.b16 %v2566
        %v3194 = vunpack.c.l.b16 %v2567
        %v3195 = vunpack.c.h.b16 %v2567
        %v3196 = vunpack.c.l.b16 %v2568
        %v3197 = vunpack.c.h.b16 %v2568
        %v3198 = vunpack.c.l.b16 %v2569
        %v3199 = vunpack.c.h.b16 %v2569
        %v3200 = vunpack.c.l.b16 %v2570
        %v3201 = vunpack.c.h.b16 %v2570
        %v3202 = vunpack.c.l.b16 %v2571
        %v3203 = vunpack.c.h.b16 %v2571
        %v3204 = vunpack.c.l.b16 %v2572
        %v3205 = vunpack.c.h.b16 %v2572
        %v3206 = vunpack.c.l.b16 %v2573
        %v3207 = vunpack.c.h.b16 %v2573
        %v3208 = vunpack.c.l.b16 %v2574
        %v3209 = vunpack.c.h.b16 %v2574
        %v3210 = vunpack.c.l.b16 %v2575
        %v3211 = vunpack.c.h.b16 %v2575
        %v3212 = vunpack.c.l.b16 %v2576
        %v3213 = vunpack.c.h.b16 %v2576
        %v3214 = vunpack.c.l.b16 %v2577
        %v3215 = vunpack.c.h.b16 %v2577
        %v3216 = vunpack.c.l.b16 %v2578
        %v3217 = vunpack.c.h.b16 %v2578
        %v3218 = vunpack.c.l.b16 %v2579
        %v3219 = vunpack.c.h.b16 %v2579
        %v3220 = vunpack.c.l.b16 %v2580
        %v3221 = vunpack.c.h.b16 %v2580
        %v3222 = vunpack.c.l.b16 %v2581
        %v3223 = vunpack.c.h.b16 %v2581
        %v3224 = vunpack.c.l.b16 %v2582
        %v3225 = vunpack.c.h.b16 %v2582
        %v3226 = vunpack.c.l.b16 %v2583
        %v3227 = vunpack.c.h.b16 %v2583
        %v3228 = vunpack.c.l.b16 %v2584
        %v3229 = vunpack.c.h.b16 %v2584
        %v3230 = vunpack.c.l.b16 %v2585
        %v3231 = vunpack.c.h.b16 %v2585
        %v3232 = vunpack.c.l.b16 %v2586
        %v3233 = vunpack.c.h.b16 %v2586
        %v3234 = vunpack.c.l.b16 %v2587
        %v3235 = vunpack.c.h.b16 %v2587
        %v3236 = vunpack.c.l.b16 %v2588
        %v3237 = vunpack.c.h.b16 %v2588
        %v3238 = vunpack.c.l.b16 %v2589
        %v3239 = vunpack.c.h.b16 %v2589
        %v3240 = vunpack.c.l.b16 %v2590
        %v3241 = vunpack.c.h.b16 %v2590
        %v3242 = vunpack.c.l.b16 %v2591
        %v3243 = vunpack.c.h.b16 %v2591
        %v3244 = vunpack.c.l.b16 %v2592
        %v3245 = vunpack.c.h.b16 %v2592
        %v3246 = vunpack.c.l.b16 %v2593
        %v3247 = vunpack.c.h.b16 %v2593
        %v3248 = vunpack.c.l.b16 %v2594
        %v3249 = vunpack.c.h.b16 %v2594
        %v3250 = vunpack.c.l.b16 %v2595
        %v3251 = vunpack.c.h.b16 %v2595
        %v3252 = vunpack.c.l.b16 %v2596
        %v3253 = vunpack.c.h.b16 %v2596
        %v3254 = vunpack.c.l.b16 %v2597
        %v3255 = vunpack.c.h.b16 %v2597
        %v3256 = vunpack.c.l.b16 %v2598
        %v3257 = vunpack.c.h.b16 %v2598
        %v3258 = vunpack.c.l.b16 %v2599
        %v3259 = vunpack.c.h.b16 %v2599
        %v3260 = vunpack.c.l.b16 %v2600
        %v3261 = vunpack.c.h.b16 %v2600
        %v3262 = vunpack.c.l.b16 %v2601
        %v3263 = vunpack.c.h.b16 %v2601
        %v3264 = vunpack.c.l.b16 %v2602
        %v3265 = vunpack.c.h.b16 %v2602
        %v3266 = vunpack.c.l.b16 %v2603
        %v3267 = vunpack.c.h.b16 %v2603
        %v3268 = vunpack.c.l.b16 %v2604
        %v3269 = vunpack.c.h.b16 %v2604
        %v3270 = vunpack.c.l.b16 %v2605
        %v3271 = vunpack.c.h.b16 %v2605
        %v3272 = vunpack.c.l.b16 %v2606
        %v3273 = vunpack.c.h.b16 %v2606
        %v3274 = vunpack.c.l.b16 %v2607
        %v3275 = vunpack.c.h.b16 %v2607
        %v3276 = vunpack.c.l.b16 %v2608
        %v3277 = vunpack.c.h.b16 %v2608
        %v3278 = vunpack.c.l.b16 %v2609
        %v3279 = vunpack.c.h.b16 %v2609
        %v3280 = vunpack.c.l.b16 %v2610
        %v3281 = vunpack.c.h.b16 %v2610
        %v3282 = vunpack.c.l.b16 %v2611
        %v3283 = vunpack.c.h.b16 %v2611
        %v3284 = vunpack.c.l.b16 %v2612
        %v3285 = vunpack.c.h.b16 %v2612
        %v3286 = vunpack.c.l.b16 %v2613
        %v3287 = vunpack.c.h.b16 %v2613
        %v3288 = vunpack.c.l.b16 %v2614
        %v3289 = vunpack.c.h.b16 %v2614
        %v3290 = vunpack.c.l.b16 %v2615
        %v3291 = vunpack.c.h.b16 %v2615
        %v3292 = vunpack.c.l.b16 %v2616
        %v3293 = vunpack.c.h.b16 %v2616
        %v3294 = vunpack.c.l.b16 %v2617
        %v3295 = vunpack.c.h.b16 %v2617
        %v3296 = vunpack.c.l.b16 %v2618
        %v3297 = vunpack.c.h.b16 %v2618
        %v3298 = vunpack.c.l.b16 %v2619
        %v3299 = vunpack.c.h.b16 %v2619
        %v3300 = vunpack.c.l.b16 %v2620
        %v3301 = vunpack.c.h.b16 %v2620
        %v3302 = vunpack.c.l.b16 %v2621
        %v3303 = vunpack.c.h.b16 %v2621
        %v3304 = vunpack.c.l.b16 %v2622
        %v3305 = vunpack.c.h.b16 %v2622
        %v3306 = vunpack.c.l.b16 %v2623
        %v3307 = vunpack.c.h.b16 %v2623
        %v3308 = vunpack.c.l.b16 %v2624
        %v3309 = vunpack.c.h.b16 %v2624
        %v3310 = vunpack.c.l.b16 %v2625
        %v3311 = vunpack.c.h.b16 %v2625
        %v3312 = vunpack.c.l.b16 %v2626
        %v3313 = vunpack.c.h.b16 %v2626
        %v3314 = vunpack.c.l.b16 %v2627
        %v3315 = vunpack.c.h.b16 %v2627
        %v3316 = vunpack.c.l.b16 %v2628
        %v3317 = vunpack.c.h.b16 %v2628
        %v3318 = vunpack.c.l.b16 %v2629
        %v3319 = vunpack.c.h.b16 %v2629
        %v3320 = vunpack.c.l.b16 %v2630
        %v3321 = vunpack.c.h.b16 %v2630
        %v3322 = vunpack.c.l.b16 %v2631
        %v3323 = vunpack.c.h.b16 %v2631
        %v3324 = vunpack.c.l.b16 %v2632
        %v3325 = vunpack.c.h.b16 %v2632
        %v3326 = vunpack.c.l.b16 %v2633
        %v3327 = vunpack.c.h.b16 %v2633
        %v3328 = vunpack.c.l.b16 %v2634
        %v3329 = vunpack.c.h.b16 %v2634
        %v3330 = vunpack.c.l.b16 %v2635
        %v3331 = vunpack.c.h.b16 %v2635
        %v3332 = vunpack.c.l.b16 %v2636
        %v3333 = vunpack.c.h.b16 %v2636
        %v3334 = vunpack.c.l.b16 %v2637
        %v3335 = vunpack.c.h.b16 %v2637
        %v3336 = vunpack.c.l.b16 %v2638
        %v3337 = vunpack.c.h.b16 %v2638
        %v3338 = vunpack.c.l.b16 %v2639
        %v3339 = vunpack.c.h.b16 %v2639
        %v3340 = vunpack.c.l.b16 %v2640
        %v3341 = vunpack.c.h.b16 %v2640
        %v3342 = vunpack.c.l.b16 %v2641
        %v3343 = vunpack.c.h.b16 %v2641
        %v3344 = vunpack.c.l.b16 %v2642
        %v3345 = vunpack.c.h.b16 %v2642
        %v3346 = vunpack.c.l.b16 %v2643
        %v3347 = vunpack.c.h.b16 %v2643
        %v3348 = vunpack.c.l.b16 %v2644
        %v3349 = vunpack.c.h.b16 %v2644
        %v3350 = vunpack.c.l.b16 %v2645
        %v3351 = vunpack.c.h.b16 %v2645
        %v3352 = vunpack.c.l.b16 %v2646
        %v3353 = vunpack.c.h.b16 %v2646
        %v3354 = vunpack.c.l.b16 %v2647
        %v3355 = vunpack.c.h.b16 %v2647
        %v3356 = vunpack.c.l.b16 %v2648
        %v3357 = vunpack.c.h.b16 %v2648
        %v3358 = vunpack.c.l.b16 %v2649
        %v3359 = vunpack.c.h.b16 %v2649
        %v3360 = vunpack.c.l.b16 %v2650
        %v3361 = vunpack.c.h.b16 %v2650
        %v3362 = vunpack.c.l.b16 %v2651
        %v3363 = vunpack.c.h.b16 %v2651
        %v3364 = vunpack.c.l.b16 %v2652
        %v3365 = vunpack.c.h.b16 %v2652
        %v3366 = vunpack.c.l.b16 %v2653
        %v3367 = vunpack.c.h.b16 %v2653
        %v3368 = vunpack.c.l.b16 %v2654
        %v3369 = vunpack.c.h.b16 %v2654
        %v3370 = vunpack.c.l.b16 %v2655
        %v3371 = vunpack.c.h.b16 %v2655
        %v3372 = vunpack.c.l.b16 %v2656
        %v3373 = vunpack.c.h.b16 %v2656
        %v3374 = vunpack.c.l.b16 %v2657
        %v3375 = vunpack.c.h.b16 %v2657
        %v3376 = vunpack.c.l.b16 %v2658
        %v3377 = vunpack.c.h.b16 %v2658
        %v3378 = vunpack.c.l.b16 %v2659
        %v3379 = vunpack.c.h.b16 %v2659
        %v3380 = vunpack.c.l.b16 %v2660
        %v3381 = vunpack.c.h.b16 %v2660
        %v3382 = vunpack.c.l.b16 %v2661
        %v3383 = vunpack.c.h.b16 %v2661
        %v3384 = vunpack.c.l.b16 %v2662
        %v3385 = vunpack.c.h.b16 %v2662
        %v3386 = vunpack.c.l.b16 %v2663
        %v3387 = vunpack.c.h.b16 %v2663
        %v3388 = vunpack.c.l.b16 %v2664
        %v3389 = vunpack.c.h.b16 %v2664
        %v3390 = vunpack.c.l.b16 %v2665
        %v3391 = vunpack.c.h.b16 %v2665
        %v3392 = vunpack.c.l.b16 %v2666
        %v3393 = vunpack.c.h.b16 %v2666
        %v3394 = vunpack.c.l.b16 %v2667
        %v3395 = vunpack.c.h.b16 %v2667
        %v3396 = vunpack.c.l.b16 %v2668
        %v3397 = vunpack.c.h.b16 %v2668
        %v3398 = vunpack.c.l.b16 %v2669
        %v3399 = vunpack.c.h.b16 %v2669
        %v3400 = vunpack.c.l.b16 %v2670
        %v3401 = vunpack.c.h.b16 %v2670
        %v3402 = vunpack.c.l.b16 %v2671
        %v3403 = vunpack.c.h.b16 %v2671
        %v3404 = vunpack.c.l.b16 %v2672
        %v3405 = vunpack.c.h.b16 %v2672
        %v3406 = vunpack.c.l.b16 %v2673
        %v3407 = vunpack.c.h.b16 %v2673
        %v3408 = vunpack.c.l.b16 %v2674
        %v3409 = vunpack.c.h.b16 %v2674
        %v3410 = vunpack.c.l.b16 %v2675
        %v3411 = vunpack.c.h.b16 %v2675
        %v3412 = vunpack.c.l.b16 %v2676
        %v3413 = vunpack.c.h.b16 %v2676
        %v3414 = vunpack.c.l.b16 %v2677
        %v3415 = vunpack.c.h.b16 %v2677
        %v3416 = vunpack.c.l.b16 %v2678
        %v3417 = vunpack.c.h.b16 %v2678
        %v3418 = vunpack.c.l.b16 %v2679
        %v3419 = vunpack.c.h.b16 %v2679
        %v3420 = vunpack.c.l.b16 %v2680
        %v3421 = vunpack.c.h.b16 %v2680
        %v3422 = vunpack.c.l.b16 %v2681
        %v3423 = vunpack.c.h.b16 %v2681
        %v3424 = vunpack.c.l.b16 %v2682
        %v3425 = vunpack.c.h.b16 %v2682
        %v3426 = vunpack.c.l.b16 %v2683
        %v3427 = vunpack.c.h.b16 %v2683
        %v3428 = vunpack.c.l.b16 %v2684
        %v3429 = vunpack.c.h.b16 %v2684
        %v3430 = vunpack.c.l.b16 %v2685
        %v3431 = vunpack.c.h.b16 %v2685
        %v3432 = vunpack.c.l.b16 %v2686
        %v3433 = vunpack.c.h.b16 %v2686
        %v3434 = vunpack.c.l.b16 %v2687
        %v3435 = vunpack.c.h.b16 %v2687
        %v3436 = vunpack.c.l.b16 %v2688
        %v3437 = vunpack.c.h.b16 %v2688
        %v3438 = vunpack.c.l.b16 %v2689
        %v3439 = vunpack.c.h.b16 %v2689
        %v3440 = vunpack.c.l.b16 %v2690
        %v3441 = vunpack.c.h.b16 %v2690
        %v3442 = vunpack.c.l.b16 %v2691
        %v3443 = vunpack.c.h.b16 %v2691
        %v3444 = vunpack.c.l.b16 %v2692
        %v3445 = vunpack.c.h.b16 %v2692
        %v3446 = vunpack.c.l.b16 %v2693
        %v3447 = vunpack.c.h.b16 %v2693
        %v3448 = vunpack.c.l.b16 %v2694
        %v3449 = vunpack.c.h.b16 %v2694
        %v3450 = vunpack.c.l.b16 %v2695
        %v3451 = vunpack.c.h.b16 %v2695
        %v3452 = vunpack.c.l.b16 %v2696
        %v3453 = vunpack.c.h.b16 %v2696
        %v3454 = vunpack.c.l.b16 %v2697
        %v3455 = vunpack.c.h.b16 %v2697
        %v3456 = vunpack.c.l.b16 %v2698
        %v3457 = vunpack.c.h.b16 %v2698
        %v3458 = vunpack.c.l.b16 %v2699
        %v3459 = vunpack.c.h.b16 %v2699
        %v3460 = vunpack.c.l.b16 %v2700
        %v3461 = vunpack.c.h.b16 %v2700
        %v3462 = vunpack.c.l.b16 %v2701
        %v3463 = vunpack.c.h.b16 %v2701
        %v3464 = vunpack.c.l.b16 %v2702
        %v3465 = vunpack.c.h.b16 %v2702
        %v3466 = vunpack.c.l.b16 %v2703
        %v3467 = vunpack.c.h.b16 %v2703
        %v3468 = vunpack.c.l.b16 %v2704
        %v3469 = vunpack.c.h.b16 %v2704
        %v3470 = vunpack.c.l.b16 %v2705
        %v3471 = vunpack.c.h.b16 %v2705
        %v3472 = vunpack.c.l.b16 %v2706
        %v3473 = vunpack.c.h.b16 %v2706
        %v3474 = vunpack.c.l.b16 %v2707
        %v3475 = vunpack.c.h.b16 %v2707
        %v3476 = vunpack.c.l.b16 %v2708
        %v3477 = vunpack.c.h.b16 %v2708
        %v3478 = vunpack.c.l.b16 %v2709
        %v3479 = vunpack.c.h.b16 %v2709
        %v3480 = vunpack.c.l.b16 %v2710
        %v3481 = vunpack.c.h.b16 %v2710
        %v3482 = vunpack.c.l.b16 %v2711
        %v3483 = vunpack.c.h.b16 %v2711
        %v3484 = vunpack.c.l.b16 %v2712
        %v3485 = vunpack.c.h.b16 %v2712
        %v3486 = vunpack.c.l.b16 %v2713
        %v3487 = vunpack.c.h.b16 %v2713
        %v3488 = vunpack.c.l.b16 %v2714
        %v3489 = vunpack.c.h.b16 %v2714
        %v3490 = vunpack.c.l.b16 %v2715
        %v3491 = vunpack.c.h.b16 %v2715
        %v3492 = vunpack.c.l.b16 %v2716
        %v3493 = vunpack.c.h.b16 %v2716
        %v3494 = vunpack.c.l.b16 %v2717
        %v3495 = vunpack.c.h.b16 %v2717
        %v3496 = vunpack.c.l.b16 %v2718
        %v3497 = vunpack.c.h.b16 %v2718
        %v3498 = vunpack.c.l.b16 %v2719
        %v3499 = vunpack.c.h.b16 %v2719
        %v3500 = vunpack.c.l.b16 %v2720
        %v3501 = vunpack.c.h.b16 %v2720
        %v3502 = vunpack.c.l.b16 %v2721
        %v3503 = vunpack.c.h.b16 %v2721
        %v3504 = vunpack.c.l.b16 %v2722
        %v3505 = vunpack.c.h.b16 %v2722
        %v3506 = vunpack.c.l.b16 %v2723
        %v3507 = vunpack.c.h.b16 %v2723
        %v3508 = vunpack.c.l.b16 %v2724
        %v3509 = vunpack.c.h.b16 %v2724
        %v3510 = vunpack.c.l.b16 %v2725
        %v3511 = vunpack.c.h.b16 %v2725
        %v3512 = vunpack.c.l.b16 %v2726
        %v3513 = vunpack.c.h.b16 %v2726
        %v3514 = vunpack.c.l.b16 %v2727
        %v3515 = vunpack.c.h.b16 %v2727
        %v3516 = vunpack.c.l.b16 %v2728
        %v3517 = vunpack.c.h.b16 %v2728
        %v3518 = vunpack.c.l.b16 %v2729
        %v3519 = vunpack.c.h.b16 %v2729
        %v3520 = vunpack.c.l.b16 %v2730
        %v3521 = vunpack.c.h.b16 %v2730
        %v3522 = vunpack.c.l.b16 %v2731
        %v3523 = vunpack.c.h.b16 %v2731
        %v3524 = vunpack.c.l.b16 %v2732
        %v3525 = vunpack.c.h.b16 %v2732
        %v3526 = vunpack.c.l.b16 %v2733
        %v3527 = vunpack.c.h.b16 %v2733
        %v3528 = vunpack.c.l.b16 %v2734
        %v3529 = vunpack.c.h.b16 %v2734
        %v3530 = vunpack.c.l.b16 %v2735
        %v3531 = vunpack.c.h.b16 %v2735
        %v3532 = vunpack.c.l.b16 %v2736
        %v3533 = vunpack.c.h.b16 %v2736
        %v3534 = vunpack.c.l.b16 %v2737
        %v3535 = vunpack.c.h.b16 %v2737
        %v3536 = vunpack.c.l.b16 %v2738
        %v3537 = vunpack.c.h.b16 %v2738
        %v3538 = vunpack.c.l.b16 %v2739
        %v3539 = vunpack.c.h.b16 %v2739
        %v3540 = vunpack.c.l.b16 %v2740
        %v3541 = vunpack.c.h.b16 %v2740
        %v3542 = vunpack.c.l.b16 %v2741
        %v3543 = vunpack.c.h.b16 %v2741
        %v3544 = vunpack.c.l.b16 %v2742
        %v3545 = vunpack.c.h.b16 %v2742
        %v3546 = vunpack.c.l.b16 %v2743
        %v3547 = vunpack.c.h.b16 %v2743
        %v3548 = vunpack.c.l.b16 %v2744
        %v3549 = vunpack.c.h.b16 %v2744
        %v3550 = vunpack.c.l.b16 %v2745
        %v3551 = vunpack.c.h.b16 %v2745
        %v3552 = vunpack.c.l.b16 %v2746
        %v3553 = vunpack.c.h.b16 %v2746
        %v3554 = vunpack.c.l.b16 %v2747
        %v3555 = vunpack.c.h.b16 %v2747
        %v3556 = vunpack.c.l.b16 %v2748
        %v3557 = vunpack.c.h.b16 %v2748
        %v3558 = vunpack.c.l.b16 %v2749
        %v3559 = vunpack.c.h.b16 %v2749
        %v3560 = vunpack.c.l.b16 %v2750
        %v3561 = vunpack.c.h.b16 %v2750
        %v3562 = vunpack.c.l.b16 %v2751
        %v3563 = vunpack.c.h.b16 %v2751
        %v3564 = vunpack.c.l.b16 %v2752
        %v3565 = vunpack.c.h.b16 %v2752
        %v3566 = vunpack.c.l.b16 %v2753
        %v3567 = vunpack.c.h.b16 %v2753
        %v3568 = vunpack.c.l.b16 %v2754
        %v3569 = vunpack.c.h.b16 %v2754
        %v3570 = vunpack.c.l.b16 %v2755
        %v3571 = vunpack.c.h.b16 %v2755
        %v3572 = vunpack.c.l.b16 %v2756
        %v3573 = vunpack.c.h.b16 %v2756
        %v3574 = vunpack.c.l.b16 %v2757
        %v3575 = vunpack.c.h.b16 %v2757
        %v3576 = vunpack.c.l.b16 %v2758
        %v3577 = vunpack.c.h.b16 %v2758
        %v3578 = vunpack.c.l.b16 %v2759
        %v3579 = vunpack.c.h.b16 %v2759
        %v3580 = vunpack.c.l.b16 %v2760
        %v3581 = vunpack.c.h.b16 %v2760
        %v3582 = vunpack.c.l.b16 %v2761
        %v3583 = vunpack.c.h.b16 %v2761
        %v3584 = vunpack.c.l.b16 %v2762
        %v3585 = vunpack.c.h.b16 %v2762
        %v3586 = vunpack.c.l.b16 %v2763
        %v3587 = vunpack.c.h.b16 %v2763
        %v3588 = vunpack.c.l.b16 %v2764
        %v3589 = vunpack.c.h.b16 %v2764
        %v3590 = vunpack.c.l.b16 %v2765
        %v3591 = vunpack.c.h.b16 %v2765
        %v3592 = vunpack.c.l.b16 %v2766
        %v3593 = vunpack.c.h.b16 %v2766
        %v3594 = vunpack.c.l.b16 %v2767
        %v3595 = vunpack.c.h.b16 %v2767
        %v3596 = vunpack.c.l.b16 %v2768
        %v3597 = vunpack.c.h.b16 %v2768
        %v3598 = vunpack.c.l.b16 %v2769
        %v3599 = vunpack.c.h.b16 %v2769
        %v3600 = vunpack.c.l.b16 %v2770
        %v3601 = vunpack.c.h.b16 %v2770
        %v3602 = vunpack.c.l.b16 %v2771
        %v3603 = vunpack.c.h.b16 %v2771
        %v3604 = vunpack.c.l.b16 %v2772
        %v3605 = vunpack.c.h.b16 %v2772
        %v3606 = vunpack.c.l.b16 %v2773
        %v3607 = vunpack.c.h.b16 %v2773
        %v3608 = vpack.c.b16 %v3056, %v3052
        %v3609 = vpack.c.b16 %v3057, %v3053
        %v3610 = vpack.c.b16 %v3058, %v3054
        %v3611 = vpack.c.b16 %v3059, %v3055
        %v3612 = vpack.c.b16 %v3064, %v3060
        %v3613 = vpack.c.b16 %v3065, %v3061
        %v3614 = vpack.c.b16 %v3066, %v3062
        %v3615 = vpack.c.b16 %v3067, %v3063
        %v3616 = vpack.c.b16 %v3072, %v3068
        %v3617 = vpack.c.b16 %v3073, %v3069
        %v3618 = vpack.c.b16 %v3074, %v3070
        %v3619 = vpack.c.b16 %v3075, %v3071
        %v3620 = vpack.c.b16 %v3080, %v3076
        %v3621 = vpack.c.b16 %v3081, %v3077
        %v3622 = vpack.c.b16 %v3082, %v3078
        %v3623 = vpack.c.b16 %v3083, %v3079
        %v3624 = vpack.c.b16 %v3088, %v3084
        %v3625 = vpack.c.b16 %v3089, %v3085
        %v3626 = vpack.c.b16 %v3090, %v3086
        %v3627 = vpack.c.b16 %v3091, %v3087
        %v3628 = vpack.c.b16 %v3096, %v3092
        %v3629 = vpack.c.b16 %v3097, %v3093
        %v3630 = vpack.c.b16 %v3098, %v3094
        %v3631 = vpack.c.b16 %v3099, %v3095
        %v3632 = vpack.c.b16 %v3104, %v3100
        %v3633 = vpack.c.b16 %v3105, %v3101
        %v3634 = vpack.c.b16 %v3106, %v3102
        %v3635 = vpack.c.b16 %v3107, %v3103
        %v3636 = vpack.c.b16 %v3112, %v3108
        %v3637 = vpack.c.b16 %v3113, %v3109
        %v3638 = vpack.c.b16 %v3114, %v3110
        %v3639 = vpack.c.b16 %v3115, %v3111
        %v3640 = vpack.c.b16 %v3120, %v3116
        %v3641 = vpack.c.b16 %v3121, %v3117
        %v3642 = vpack.c.b16 %v3122, %v3118
        %v3643 = vpack.c.b16 %v3123, %v3119
        %v3644 = vpack.c.b16 %v3128, %v3124
        %v3645 = vpack.c.b16 %v3129, %v3125
        %v3646 = vpack.c.b16 %v3130, %v3126
        %v3647 = vpack.c.b16 %v3131, %v3127
        %v3648 = vpack.c.b16 %v3136, %v3132
        %v3649 = vpack.c.b16 %v3137, %v3133
        %v3650 = vpack.c.b16 %v3138, %v3134
        %v3651 = vpack.c.b16 %v3139, %v3135
        %v3652 = vpack.c.b16 %v3144, %v3140
        %v3653 = vpack.c.b16 %v3145, %v3141
        %v3654 = vpack.c.b16 %v3146, %v3142
        %v3655 = vpack.c.b16 %v3147, %v3143
        %v3656 = vpack.c.b16 %v3152, %v3148
        %v3657 = vpack.c.b16 %v3153, %v3149
        %v3658 = vpack.c.b16 %v3154, %v3150
        %v3659 = vpack.c.b16 %v3155, %v3151
        %v3660 = vpack.c.b16 %v3160, %v3156
        %v3661 = vpack.c.b16 %v3161, %v3157
        %v3662 = vpack.c.b16 %v3162, %v3158
        %v3663 = vpack.c.b16 %v3163, %v3159
        %v3664 = vpack.c.b16 %v3168, %v3164
        %v3665 = vpack.c.b16 %v3169, %v3165
        %v3666 = vpack.c.b16 %v3170, %v3166
        %v3667 = vpack.c.b16 %v3171, %v3167
        %v3668 = vpack.c.b16 %v3176, %v3172
        %v3669 = vpack.c.b16 %v3177, %v3173
        %v3670 = vpack.c.b16 %v3178, %v3174
        %v3671 = vpack.c.b16 %v3179, %v3175
        %v3672 = vpack.c.b16 %v3184, %v3180
        %v3673 = vpack.c.b16 %v3185, %v3181
        %v3674 = vpack.c.b16 %v3186, %v3182
        %v3675 = vpack.c.b16 %v3187, %v3183
        %v3676 = vpack.c.b16 %v3192, %v3188
        %v3677 = vpack.c.b16 %v3193, %v3189
        %v3678 = vpack.c.b16 %v3194, %v3190
        %v3679 = vpack.c.b16 %v3195, %v3191
        %v3680 = vpack.c.b16 %v3200, %v3196
        %v3681 = vpack.c.b16 %v3201, %v3197
        %v3682 = vpack.c.b16 %v3202, %v3198
        %v3683 = vpack.c.b16 %v3203, %v3199
        %v3684 = vpack.c.b16 %v3208, %v3204
        %v3685 = vpack.c.b16 %v3209, %v3205
        %v3686 = vpack.c.b16 %v3210, %v3206
        %v3687 = vpack.c.b16 %v3211, %v3207
        %v3688 = vpack.c.b16 %v3216, %v3212
        %v3689 = vpack.c.b16 %v3217, %v3213
        %v3690 = vpack.c.b16 %v3218, %v3214
        %v3691 = vpack.c.b16 %v3219, %v3215
        %v3692 = vpack.c.b16 %v3224, %v3220
        %v3693 = vpack.c.b16 %v3225, %v3221
        %v3694 = vpack.c.b16 %v3226, %v3222
        %v3695 = vpack.c.b16 %v3227, %v3223
        %v3696 = vpack.c.b16 %v3232, %v3228
        %v3697 = vpack.c.b16 %v3233, %v3229
        %v3698 = vpack.c.b16 %v3234, %v3230
        %v3699 = vpack.c.b16 %v3235, %v3231
        %v3700 = vpack.c.b16 %v3240, %v3236
        %v3701 = vpack.c.b16 %v3241, %v3237
        %v3702 = vpack.c.b16 %v3242, %v3238
        %v3703 = vpack.c.b16 %v3243, %v3239
        %v3704 = vpack.c.b16 %v3248, %v3244
        %v3705 = vpack.c.b16 %v3249, %v3245
        %v3706 = vpack.c.b16 %v3250, %v3246
        %v3707 = vpack.c.b16 %v3251, %v3247
        %v3708 = vpack.c.b16 %v3256, %v3252
        %v3709 = vpack.c.b16 %v3257, %v3253
        %v3710 = vpack.c.b16 %v3258, %v3254
        %v3711 = vpack.c.b16 %v3259, %v3255
        %v3712 = vpack.c.b16 %v3264, %v3260
        %v3713 = vpack.c.b16 %v3265, %v3261
        %v3714 = vpack.c.b16 %v3266, %v3262
        %v3715 = vpack.c.b16 %v3267, %v3263
        %v3716 = vpack.c.b16 %v3272, %v3268
        %v3717 = vpack.c.b16 %v3273, %v3269
        %v3718 = vpack.c.b16 %v3274, %v3270
        %v3719 = vpack.c.b16 %v3275, %v3271
        %v3720 = vpack.c.b16 %v3280, %v3276
        %v3721 = vpack.c.b16 %v3281, %v3277
        %v3722 = vpack.c.b16 %v3282, %v3278
        %v3723 = vpack.c.b16 %v3283, %v3279
        %v3724 = vpack.c.b16 %v3288, %v3284
        %v3725 = vpack.c.b16 %v3289, %v3285
        %v3726 = vpack.c.b16 %v3290, %v3286
        %v3727 = vpack.c.b16 %v3291, %v3287
        %v3728 = vpack.c.b16 %v3296, %v3292
        %v3729 = vpack.c.b16 %v3297, %v3293
        %v3730 = vpack.c.b16 %v3298, %v3294
        %v3731 = vpack.c.b16 %v3299, %v3295
        %v3732 = vpack.c.b16 %v3304, %v3300
        %v3733 = vpack.c.b16 %v3305, %v3301
        %v3734 = vpack.c.b16 %v3306, %v3302
        %v3735 = vpack.c.b16 %v3307, %v3303
        %v3736 = vpack.c.b16 %v3312, %v3308
        %v3737 = vpack.c.b16 %v3313, %v3309
        %v3738 = vpack.c.b16 %v3314, %v3310
        %v3739 = vpack.c.b16 %v3315, %v3311
        %v3740 = vpack.c.b16 %v3320, %v3316
        %v3741 = vpack.c.b16 %v3321, %v3317
        %v3742 = vpack.c.b16 %v3322, %v3318
        %v3743 = vpack.c.b16 %v3323, %v3319
        %v3744 = vpack.c.b16 %v3328, %v3324
        %v3745 = vpack.c.b16 %v3329, %v3325
        %v3746 = vpack.c.b16 %v3330, %v3326
        %v3747 = vpack.c.b16 %v3331, %v3327
        %v3748 = vpack.c.b16 %v3336, %v3332
        %v3749 = vpack.c.b16 %v3337, %v3333
        %v3750 = vpack.c.b16 %v3338, %v3334
        %v3751 = vpack.c.b16 %v3339, %v3335
        %v3752 = vpack.c.b16 %v3344, %v3340
        %v3753 = vpack.c.b16 %v3345, %v3341
        %v3754 = vpack.c.b16 %v3346, %v3342
        %v3755 = vpack.c.b16 %v3347, %v3343
        %v3756 = vpack.c.b16 %v3352, %v3348
        %v3757 = vpack.c.b16 %v3353, %v3349
        %v3758 = vpack.c.b16 %v3354, %v3350
        %v3759 = vpack.c.b16 %v3355, %v3351
        %v3760 = vpack.c.b16 %v3360, %v3356
        %v3761 = vpack.c.b16 %v3361, %v3357
        %v3762 = vpack.c.b16 %v3362, %v3358
        %v3763 = vpack.c.b16 %v3363, %v3359
        %v3764 = vpack.c.b16 %v3368, %v3364
        %v3765 = vpack.c.b16 %v3369, %v3365
        %v3766 = vpack.c.b16 %v3370, %v3366
        %v3767 = vpack.c.b16 %v3371, %v3367
        %v3768 = vpack.c.b16 %v3376, %v3372
        %v3769 = vpack.c.b16 %v3377, %v3373
        %v3770 = vpack.c.b16 %v3378, %v3374
        %v3771 = vpack.c.b16 %v3379, %v3375
        %v3772 = vpack.c.b16 %v3384, %v3380
        %v3773 = vpack.c.b16 %v3385, %v3381
        %v3774 = vpack.c.b16 %v3386, %v3382
        %v3775 = vpack.c.b16 %v3387, %v3383
        %v3776 = vpack.c.b16 %v3392, %v3388
        %v3777 = vpack.c.b16 %v3393, %v3389
        %v3778 = vpack.c.b16 %v3394, %v3390
        %v3779 = vpack.c.b16 %v3395, %v3391
        %v3780 = vpack.c.b16 %v3400, %v3396
        %v3781 = vpack.c.b16 %v3401, %v3397
        %v3782 = vpack.c.b16 %v3402, %v3398
        %v3783 = vpack.c.b16 %v3403, %v3399
        %v3784 = vpack.c.b16 %v3408, %v3404
        %v3785 = vpack.c.b16 %v3409, %v3405
        %v3786 = vpack.c.b16 %v3410, %v3406
        %v3787 = vpack.c.b16 %v3411, %v3407
        %v3788 = vpack.c.b16 %v3416, %v3412
        %v3789 = vpack.c.b16 %v3417, %v3413
        %v3790 = vpack.c.b16 %v3418, %v3414
        %v3791 = vpack.c.b16 %v3419, %v3415
        %v3792 = vpack.c.b16 %v3424, %v3420
        %v3793 = vpack.c.b16 %v3425, %v3421
        %v3794 = vpack.c.b16 %v3426, %v3422
        %v3795 = vpack.c.b16 %v3427, %v3423
        %v3796 = vpack.c.b16 %v3432, %v3428
        %v3797 = vpack.c.b16 %v3433, %v3429
        %v3798 = vpack.c.b16 %v3434, %v3430
        %v3799 = vpack.c.b16 %v3435, %v3431
        %v3800 = vpack.c.b16 %v3440, %v3436
        %v3801 = vpack.c.b16 %v3441, %v3437
        %v3802 = vpack.c.b16 %v3442, %v3438
        %v3803 = vpack.c.b16 %v3443, %v3439
        %v3804 = vpack.c.b16 %v3448, %v3444
        %v3805 = vpack.c.b16 %v3449, %v3445
        %v3806 = vpack.c.b16 %v3450, %v3446
        %v3807 = vpack.c.b16 %v3451, %v3447
        %v3808 = vpack.c.b16 %v3456, %v3452
        %v3809 = vpack.c.b16 %v3457, %v3453
        %v3810 = vpack.c.b16 %v3458, %v3454
        %v3811 = vpack.c.b16 %v3459, %v3455
        %v3812 = vpack.c.b16 %v3464, %v3460
        %v3813 = vpack.c.b16 %v3465, %v3461
        %v3814 = vpack.c.b16 %v3466, %v3462
        %v3815 = vpack.c.b16 %v3467, %v3463
        %v3816 = vpack.c.b16 %v3472, %v3468
        %v3817 = vpack.c.b16 %v3473, %v3469
        %v3818 = vpack.c.b16 %v3474, %v3470
        %v3819 = vpack.c.b16 %v3475, %v3471
        %v3820 = vpack.c.b16 %v3480, %v3476
        %v3821 = vpack.c.b16 %v3481, %v3477
        %v3822 = vpack.c.b16 %v3482, %v3478
        %v3823 = vpack.c.b16 %v3483, %v3479
        %v3824 = vpack.c.b16 %v3488, %v3484
        %v3825 = vpack.c.b16 %v3489, %v3485
        %v3826 = vpack.c.b16 %v3490, %v3486
        %v3827 = vpack.c.b16 %v3491, %v3487
        %v3828 = vpack.c.b16 %v3496, %v3492
        %v3829 = vpack.c.b16 %v3497, %v3493
        %v3830 = vpack.c.b16 %v3498, %v3494
        %v3831 = vpack.c.b16 %v3499, %v3495
        %v3832 = vpack.c.b16 %v3504, %v3500
        %v3833 = vpack.c.b16 %v3505, %v3501
        %v3834 = vpack.c.b16 %v3506, %v3502
        %v3835 = vpack.c.b16 %v3507, %v3503
        %v3836 = vpack.c.b16 %v3512, %v3508
        %v3837 = vpack.c.b16 %v3513, %v3509
        %v3838 = vpack.c.b16 %v3514, %v3510
        %v3839 = vpack.c.b16 %v3515, %v3511
        %v3840 = vpack.c.b16 %v3520, %v3516
        %v3841 = vpack.c.b16 %v3521, %v3517
        %v3842 = vpack.c.b16 %v3522, %v3518
        %v3843 = vpack.c.b16 %v3523, %v3519
        %v3844 = vpack.c.b16 %v3528, %v3524
        %v3845 = vpack.c.b16 %v3529, %v3525
        %v3846 = vpack.c.b16 %v3530, %v3526
        %v3847 = vpack.c.b16 %v3531, %v3527
        %v3848 = vpack.c.b16 %v3536, %v3532
        %v3849 = vpack.c.b16 %v3537, %v3533
        %v3850 = vpack.c.b16 %v3538, %v3534
        %v3851 = vpack.c.b16 %v3539, %v3535
        %v3852 = vpack.c.b16 %v3544, %v3540
        %v3853 = vpack.c.b16 %v3545, %v3541
        %v3854 = vpack.c.b16 %v3546, %v3542
        %v3855 = vpack.c.b16 %v3547, %v3543
        %v3856 = vpack.c.b16 %v3552, %v3548
        %v3857 = vpack.c.b16 %v3553, %v3549
        %v3858 = vpack.c.b16 %v3554, %v3550
        %v3859 = vpack.c.b16 %v3555, %v3551
        %v3860 = vpack.c.b16 %v3560, %v3556
        %v3861 = vpack.c.b16 %v3561, %v3557
        %v3862 = vpack.c.b16 %v3562, %v3558
        %v3863 = vpack.c.b16 %v3563, %v3559
        %v3864 = vpack.c.b16 %v3568, %v3564
        %v3865 = vpack.c.b16 %v3569, %v3565
        %v3866 = vpack.c.b16 %v3570, %v3566
        %v3867 = vpack.c.b16 %v3571, %v3567
        %v3868 = vpack.c.b16 %v3576, %v3572
        %v3869 = vpack.c.b16 %v3577, %v3573
        %v3870 = vpack.c.b16 %v3578, %v3574
        %v3871 = vpack.c.b16 %v3579, %v3575
        %v3872 = vpack.c.b16 %v3584, %v3580
        %v3873 = vpack.c.b16 %v3585, %v3581
        %v3874 = vpack.c.b16 %v3586, %v3582
        %v3875 = vpack.c.b16 %v3587, %v3583
        %v3876 = vpack.c.b16 %v3592, %v3588
        %v3877 = vpack.c.b16 %v3593, %v3589
        %v3878 = vpack.c.b16 %v3594, %v3590
        %v3879 = vpack.c.b16 %v3595, %v3591
        %v3880 = vpack.c.b16 %v3600, %v3596
        %v3881 = vpack.c.b16 %v3601, %v3597
        %v3882 = vpack.c.b16 %v3602, %v3598
        %v3883 = vpack.c.b16 %v3603, %v3599
        %v3884 = vpack.c.b16 %v3604, %v3604
        %v3885 = vpack.c.b16 %v3605, %v3605
        %v3886 = vpack.c.b16 %v3606, %v3606
        %v3887 = vpack.c.b16 %v3607, %v3607
        %vm4164 = vcmask 711680
        %v4166 = vsel %vm4164, %v2495, 0
        %vm4168 = vcmask 1042432
        %v4169 = vsel %vm4168, 4294967295, 65535
        %v4170 = vsel %vm2123, %v4169, 0
        %v4172 = vand.u32 %v3884, %v4170
        %v4175 = vand.u32 %v3885, %v4170
        %v4178 = vand.u32 %v3886, %v4170
        %v4181 = vand.u32 %v3887, %v4170
        %4183 = vmatprep.subr.bf16.mxu0 %v3609
        %4184 = vmatpush1.bf16.msra.mxu0 %v3608
        %4185 = vmatprep.subr.bf16.mxu0 %v3613
        %4186 = vmatpush1.bf16.msra.mxu0 %v3612
        %4187 = vmatprep.subr.bf16.mxu0 %v3617
        %4188 = vmatpush1.bf16.msra.mxu0 %v3616
        %4189 = vmatprep.subr.bf16.mxu0 %v3621
        %4190 = vmatpush1.bf16.msra.mxu0 %v3620
        %4191 = vmatprep.subr.bf16.mxu0 %v3625
        %4192 = vmatpush1.bf16.msra.mxu0 %v3624
        %4193 = vmatprep.subr.bf16.mxu0 %v3629
        %4194 = vmatpush1.bf16.msra.mxu0 %v3628
        %4195 = vmatprep.subr.bf16.mxu0 %v3633
        %4196 = vmatpush1.bf16.msra.mxu0 %v3632
        %4197 = vmatprep.subr.bf16.mxu0 %v3637
        %4198 = vmatpush1.bf16.msra.mxu0 %v3636
        %4199 = vmatprep.subr.bf16.mxu0 %v3641
        %4200 = vmatpush1.bf16.msra.mxu0 %v3640
        %4201 = vmatprep.subr.bf16.mxu0 %v3645
        %4202 = vmatpush1.bf16.msra.mxu0 %v3644
        %4203 = vmatprep.subr.bf16.mxu0 %v3649
        %4204 = vmatpush1.bf16.msra.mxu0 %v3648
        %4205 = vmatprep.subr.bf16.mxu0 %v3653
        %4206 = vmatpush1.bf16.msra.mxu0 %v3652
        %4207 = vmatprep.subr.bf16.mxu0 %v3657
        %4208 = vmatpush1.bf16.msra.mxu0 %v3656
        %4209 = vmatprep.subr.bf16.mxu0 %v3661
        %4210 = vmatpush1.bf16.msra.mxu0 %v3660
        %4211 = vmatprep.subr.bf16.mxu0 %v3665
        %4212 = vmatpush1.bf16.msra.mxu0 %v3664
        %4213 = vmatprep.subr.bf16.mxu0 %v3669
        %4214 = vmatpush1.bf16.msra.mxu0 %v3668
        %4215 = vmatprep.mubr.bf16.mxu0 %v2488
        %4216 = vmatmul.mubr.bf16.gmra.mrb[0].mxu0 %v2487
        %v4217 = vpop.f32.mrb[0].mxu0
        %v4218 = vadd.f32 0.0, %v4217
        %v4219 = vpop.f32.mrb[0].mxu0
        %v4220 = vadd.f32 0.0, %v4219
        %v4221 = vpop.f32.mrb[0].mxu0
        %v4222 = vpop.f32.mrb[0].mxu0
        %4223 = vdwg.mxu0
        %4224 = vmatprep.subr.bf16.mxu0 %v3673
        %4225 = vmatpush1.bf16.msra.mxu0 %v3672
        %4226 = vmatprep.subr.bf16.mxu0 %v3677
        %4227 = vmatpush1.bf16.msra.mxu0 %v3676
        %4228 = vmatprep.subr.bf16.mxu0 %v3681
        %4229 = vmatpush1.bf16.msra.mxu0 %v3680
        %4230 = vmatprep.subr.bf16.mxu0 %v3685
        %4231 = vmatpush1.bf16.msra.mxu0 %v3684
        %4232 = vmatprep.subr.bf16.mxu0 %v3689
        %4233 = vmatpush1.bf16.msra.mxu0 %v3688
        %4234 = vmatprep.subr.bf16.mxu0 %v3693
        %4235 = vmatpush1.bf16.msra.mxu0 %v3692
        %4236 = vmatprep.subr.bf16.mxu0 %v3697
        %4237 = vmatpush1.bf16.msra.mxu0 %v3696
        %4238 = vmatprep.subr.bf16.mxu0 %v3701
        %4239 = vmatpush1.bf16.msra.mxu0 %v3700
        %4240 = vmatprep.subr.bf16.mxu0 %v3705
        %4241 = vmatpush1.bf16.msra.mxu0 %v3704
        %4242 = vmatprep.subr.bf16.mxu0 %v3709
        %4243 = vmatpush1.bf16.msra.mxu0 %v3708
        %4244 = vmatprep.subr.bf16.mxu0 %v3713
        %4245 = vmatpush1.bf16.msra.mxu0 %v3712
        %4246 = vmatprep.subr.bf16.mxu0 %v3717
        %4247 = vmatpush1.bf16.msra.mxu0 %v3716
        %4248 = vmatprep.subr.bf16.mxu0 %v3721
        %4249 = vmatpush1.bf16.msra.mxu0 %v3720
        %4250 = vmatprep.subr.bf16.mxu0 %v3725
        %4251 = vmatpush1.bf16.msra.mxu0 %v3724
        %4252 = vmatprep.subr.bf16.mxu0 %v3729
        %4253 = vmatpush1.bf16.msra.mxu0 %v3728
        %4254 = vmatprep.subr.bf16.mxu0 %v3733
        %4255 = vmatpush1.bf16.msra.mxu0 %v3732
        %4256 = vmatprep.mubr.bf16.mxu0 %v2490
        %4257 = vmatmul.mubr.bf16.gmra.mrb[0].mxu0 %v2489
        %v4258 = vpop.f32.mrb[0].mxu0
        %v4259 = vadd.f32 %v4218, %v4258
        %v4260 = vpop.f32.mrb[0].mxu0
        %v4261 = vadd.f32 %v4220, %v4260
        %v4262 = vpop.f32.mrb[0].mxu0
        %v4263 = vpop.f32.mrb[0].mxu0
        %4264 = vdwg.mxu0
        %4265 = vmatprep.subr.bf16.mxu0 %v3737
        %4266 = vmatpush1.bf16.msra.mxu0 %v3736
        %4267 = vmatprep.subr.bf16.mxu0 %v3741
        %4268 = vmatpush1.bf16.msra.mxu0 %v3740
        %4269 = vmatprep.subr.bf16.mxu0 %v3745
        %4270 = vmatpush1.bf16.msra.mxu0 %v3744
        %4271 = vmatprep.subr.bf16.mxu0 %v3749
        %4272 = vmatpush1.bf16.msra.mxu0 %v3748
        %4273 = vmatprep.subr.bf16.mxu0 %v3753
        %4274 = vmatpush1.bf16.msra.mxu0 %v3752
        %4275 = vmatprep.subr.bf16.mxu0 %v3757
        %4276 = vmatpush1.bf16.msra.mxu0 %v3756
        %4277 = vmatprep.subr.bf16.mxu0 %v3761
        %4278 = vmatpush1.bf16.msra.mxu0 %v3760
        %4279 = vmatprep.subr.bf16.mxu0 %v3765
        %4280 = vmatpush1.bf16.msra.mxu0 %v3764
        %4281 = vmatprep.subr.bf16.mxu0 %v3769
        %4282 = vmatpush1.bf16.msra.mxu0 %v3768
        %4283 = vmatprep.subr.bf16.mxu0 %v3773
        %4284 = vmatpush1.bf16.msra.mxu0 %v3772
        %4285 = vmatprep.subr.bf16.mxu0 %v3777
        %4286 = vmatpush1.bf16.msra.mxu0 %v3776
        %4287 = vmatprep.subr.bf16.mxu0 %v3781
        %4288 = vmatpush1.bf16.msra.mxu0 %v3780
        %4289 = vmatprep.subr.bf16.mxu0 %v3785
        %4290 = vmatpush1.bf16.msra.mxu0 %v3784
        %4291 = vmatprep.subr.bf16.mxu0 %v3789
        %4292 = vmatpush1.bf16.msra.mxu0 %v3788
        %4293 = vmatprep.subr.bf16.mxu0 %v3793
        %4294 = vmatpush1.bf16.msra.mxu0 %v3792
        %4295 = vmatprep.subr.bf16.mxu0 %v3797
        %4296 = vmatpush1.bf16.msra.mxu0 %v3796
        %4297 = vmatprep.mubr.bf16.mxu0 %v2492
        %4298 = vmatmul.mubr.bf16.gmra.mrb[0].mxu0 %v2491
        %v4299 = vpop.f32.mrb[0].mxu0
        %v4300 = vadd.f32 %v4259, %v4299
        %v4301 = vpop.f32.mrb[0].mxu0
        %v4302 = vadd.f32 %v4261, %v4301
        %v4303 = vpop.f32.mrb[0].mxu0
        %v4304 = vpop.f32.mrb[0].mxu0
        %4305 = vdwg.mxu0
        %4306 = vmatprep.subr.bf16.mxu0 %v3801
        %4307 = vmatpush1.bf16.msra.mxu0 %v3800
        %4308 = vmatprep.subr.bf16.mxu0 %v3805
        %4309 = vmatpush1.bf16.msra.mxu0 %v3804
        %4310 = vmatprep.subr.bf16.mxu0 %v3809
        %4311 = vmatpush1.bf16.msra.mxu0 %v3808
        %4312 = vmatprep.subr.bf16.mxu0 %v3813
        %4313 = vmatpush1.bf16.msra.mxu0 %v3812
        %4314 = vmatprep.subr.bf16.mxu0 %v3817
        %4315 = vmatpush1.bf16.msra.mxu0 %v3816
        %4316 = vmatprep.subr.bf16.mxu0 %v3821
        %4317 = vmatpush1.bf16.msra.mxu0 %v3820
        %4318 = vmatprep.subr.bf16.mxu0 %v3825
        %4319 = vmatpush1.bf16.msra.mxu0 %v3824
        %4320 = vmatprep.subr.bf16.mxu0 %v3829
        %4321 = vmatpush1.bf16.msra.mxu0 %v3828
        %4322 = vmatprep.subr.bf16.mxu0 %v3833
        %4323 = vmatpush1.bf16.msra.mxu0 %v3832
        %4324 = vmatprep.subr.bf16.mxu0 %v3837
        %4325 = vmatpush1.bf16.msra.mxu0 %v3836
        %4326 = vmatprep.subr.bf16.mxu0 %v3841
        %4327 = vmatpush1.bf16.msra.mxu0 %v3840
        %4328 = vmatprep.subr.bf16.mxu0 %v3845
        %4329 = vmatpush1.bf16.msra.mxu0 %v3844
        %4330 = vmatprep.subr.bf16.mxu0 %v3849
        %4331 = vmatpush1.bf16.msra.mxu0 %v3848
        %4332 = vmatprep.subr.bf16.mxu0 %v3853
        %4333 = vmatpush1.bf16.msra.mxu0 %v3852
        %4334 = vmatprep.subr.bf16.mxu0 %v3857
        %4335 = vmatpush1.bf16.msra.mxu0 %v3856
        %4336 = vmatprep.subr.bf16.mxu0 %v3861
        %4337 = vmatpush1.bf16.msra.mxu0 %v3860
        %4338 = vmatprep.mubr.bf16.mxu0 %v2494
        %4339 = vmatmul.mubr.bf16.gmra.mrb[0].mxu0 %v2493
        %v4340 = vpop.f32.mrb[0].mxu0
        %v4341 = vadd.f32 %v4300, %v4340
        %v4342 = vpop.f32.mrb[0].mxu0
        %v4343 = vadd.f32 %v4302, %v4342
        %v4344 = vpop.f32.mrb[0].mxu0
        %v4345 = vpop.f32.mrb[0].mxu0
        %4346 = vdwg.mxu0
        %4347 = vmatprep.subr.bf16.mxu0 %v3865
        %4348 = vmatpush1.bf16.msra.mxu0 %v3864
        %4349 = vmatprep.subr.bf16.mxu0 %v3869
        %4350 = vmatpush1.bf16.msra.mxu0 %v3868
        %4351 = vmatprep.subr.bf16.mxu0 %v3873
        %4352 = vmatpush1.bf16.msra.mxu0 %v3872
        %4353 = vmatprep.subr.bf16.mxu0 %v3877
        %4354 = vmatpush1.bf16.msra.mxu0 %v3876
        %4355 = vmatprep.subr.bf16.mxu0 %v3881
        %4356 = vmatpush1.bf16.msra.mxu0 %v3880
        %4357 = vmatprep.subr.bf16.mxu0 %v4175
        %4358 = vmatpush1.bf16.msra.mxu0 %v4172
        %4359 = vmatprep.subr.bf16.mxu0 0
        %4360 = vmatpush1.bf16.msra.mxu0 0
        %4361 = vmatprep.subr.bf16.mxu0 0
        %4362 = vmatpush1.bf16.msra.mxu0 0
        %4363 = vmatprep.subr.bf16.mxu0 0
        %4364 = vmatpush1.bf16.msra.mxu0 0
        %4365 = vmatprep.subr.bf16.mxu0 0
        %4366 = vmatpush1.bf16.msra.mxu0 0
        %4367 = vmatprep.subr.bf16.mxu0 0
        %4368 = vmatpush1.bf16.msra.mxu0 0
        %4369 = vmatprep.subr.bf16.mxu0 0
        %4370 = vmatpush1.bf16.msra.mxu0 0
        %4371 = vmatprep.subr.bf16.mxu0 0
        %4372 = vmatpush1.bf16.msra.mxu0 0
        %4373 = vmatprep.subr.bf16.mxu0 0
        %4374 = vmatpush1.bf16.msra.mxu0 0
        %4375 = vmatprep.subr.bf16.mxu0 0
        %4376 = vmatpush1.bf16.msra.mxu0 0
        %4377 = vmatprep.subr.bf16.mxu0 0
        %4378 = vmatpush1.bf16.msra.mxu0 0
        %4379 = vmatprep.mubr.bf16.mxu0 0
        %4380 = vmatmul.mubr.bf16.gmra.mrb[0].mxu0 %v4166
        %v4381 = vpop.f32.mrb[0].mxu0
        %v4382 = vadd.f32 %v4341, %v4381
        %v4383 = vpop.f32.mrb[0].mxu0
        %v4384 = vadd.f32 %v4343, %v4383
        %v4385 = vpop.f32.mrb[0].mxu0
        %v4386 = vpop.f32.mrb[0].mxu0
        %4387 = vdwg.mxu0
        %4388 = vmatprep.subr.bf16.mxu0 %v3611
        %4389 = vmatpush1.bf16.msra.mxu0 %v3610
        %4390 = vmatprep.subr.bf16.mxu0 %v3615
        %4391 = vmatpush1.bf16.msra.mxu0 %v3614
        %4392 = vmatprep.subr.bf16.mxu0 %v3619
        %4393 = vmatpush1.bf16.msra.mxu0 %v3618
        %4394 = vmatprep.subr.bf16.mxu0 %v3623
        %4395 = vmatpush1.bf16.msra.mxu0 %v3622
        %4396 = vmatprep.subr.bf16.mxu0 %v3627
        %4397 = vmatpush1.bf16.msra.mxu0 %v3626
        %4398 = vmatprep.subr.bf16.mxu0 %v3631
        %4399 = vmatpush1.bf16.msra.mxu0 %v3630
        %4400 = vmatprep.subr.bf16.mxu0 %v3635
        %4401 = vmatpush1.bf16.msra.mxu0 %v3634
        %4402 = vmatprep.subr.bf16.mxu0 %v3639
        %4403 = vmatpush1.bf16.msra.mxu0 %v3638
        %4404 = vmatprep.subr.bf16.mxu0 %v3643
        %4405 = vmatpush1.bf16.msra.mxu0 %v3642
        %4406 = vmatprep.subr.bf16.mxu0 %v3647
        %4407 = vmatpush1.bf16.msra.mxu0 %v3646
        %4408 = vmatprep.subr.bf16.mxu0 %v3651
        %4409 = vmatpush1.bf16.msra.mxu0 %v3650
        %4410 = vmatprep.subr.bf16.mxu0 %v3655
        %4411 = vmatpush1.bf16.msra.mxu0 %v3654
        %4412 = vmatprep.subr.bf16.mxu0 %v3659
        %4413 = vmatpush1.bf16.msra.mxu0 %v3658
        %4414 = vmatprep.subr.bf16.mxu0 %v3663
        %4415 = vmatpush1.bf16.msra.mxu0 %v3662
        %4416 = vmatprep.subr.bf16.mxu0 %v3667
        %4417 = vmatpush1.bf16.msra.mxu0 %v3666
        %4418 = vmatprep.subr.bf16.mxu0 %v3671
        %4419 = vmatpush1.bf16.msra.mxu0 %v3670
        %4420 = vmatprep.mubr.bf16.mxu0 %v2488
        %4421 = vmatmul.mubr.bf16.gmra.mrb[0].mxu0 %v2487
        %v4422 = vpop.f32.mrb[0].mxu0
        %v4423 = vadd.f32 0.0, %v4422
        %v4424 = vpop.f32.mrb[0].mxu0
        %v4425 = vadd.f32 0.0, %v4424
        %v4426 = vpop.f32.mrb[0].mxu0
        %v4427 = vpop.f32.mrb[0].mxu0
        %4428 = vdwg.mxu0
        %4429 = vmatprep.subr.bf16.mxu0 %v3675
        %4430 = vmatpush1.bf16.msra.mxu0 %v3674
        %4431 = vmatprep.subr.bf16.mxu0 %v3679
        %4432 = vmatpush1.bf16.msra.mxu0 %v3678
        %4433 = vmatprep.subr.bf16.mxu0 %v3683
        %4434 = vmatpush1.bf16.msra.mxu0 %v3682
        %4435 = vmatprep.subr.bf16.mxu0 %v3687
        %4436 = vmatpush1.bf16.msra.mxu0 %v3686
        %4437 = vmatprep.subr.bf16.mxu0 %v3691
        %4438 = vmatpush1.bf16.msra.mxu0 %v3690
        %4439 = vmatprep.subr.bf16.mxu0 %v3695
        %4440 = vmatpush1.bf16.msra.mxu0 %v3694
        %4441 = vmatprep.subr.bf16.mxu0 %v3699
        %4442 = vmatpush1.bf16.msra.mxu0 %v3698
        %4443 = vmatprep.subr.bf16.mxu0 %v3703
        %4444 = vmatpush1.bf16.msra.mxu0 %v3702
        %4445 = vmatprep.subr.bf16.mxu0 %v3707
        %4446 = vmatpush1.bf16.msra.mxu0 %v3706
        %4447 = vmatprep.subr.bf16.mxu0 %v3711
        %4448 = vmatpush1.bf16.msra.mxu0 %v3710
        %4449 = vmatprep.subr.bf16.mxu0 %v3715
        %4450 = vmatpush1.bf16.msra.mxu0 %v3714
        %4451 = vmatprep.subr.bf16.mxu0 %v3719
        %4452 = vmatpush1.bf16.msra.mxu0 %v3718
        %4453 = vmatprep.subr.bf16.mxu0 %v3723
        %4454 = vmatpush1.bf16.msra.mxu0 %v3722
        %4455 = vmatprep.subr.bf16.mxu0 %v3727
        %4456 = vmatpush1.bf16.msra.mxu0 %v3726
        %4457 = vmatprep.subr.bf16.mxu0 %v3731
        %4458 = vmatpush1.bf16.msra.mxu0 %v3730
        %4459 = vmatprep.subr.bf16.mxu0 %v3735
        %4460 = vmatpush1.bf16.msra.mxu0 %v3734
        %4461 = vmatprep.mubr.bf16.mxu0 %v2490
        %4462 = vmatmul.mubr.bf16.gmra.mrb[0].mxu0 %v2489
        %v4463 = vpop.f32.mrb[0].mxu0
        %v4464 = vadd.f32 %v4423, %v4463
        %v4465 = vpop.f32.mrb[0].mxu0
        %v4466 = vadd.f32 %v4425, %v4465
        %v4467 = vpop.f32.mrb[0].mxu0
        %v4468 = vpop.f32.mrb[0].mxu0
        %4469 = vdwg.mxu0
        %4470 = vmatprep.subr.bf16.mxu0 %v3739
        %4471 = vmatpush1.bf16.msra.mxu0 %v3738
        %4472 = vmatprep.subr.bf16.mxu0 %v3743
        %4473 = vmatpush1.bf16.msra.mxu0 %v3742
        %4474 = vmatprep.subr.bf16.mxu0 %v3747
        %4475 = vmatpush1.bf16.msra.mxu0 %v3746
        %4476 = vmatprep.subr.bf16.mxu0 %v3751
        %4477 = vmatpush1.bf16.msra.mxu0 %v3750
        %4478 = vmatprep.subr.bf16.mxu0 %v3755
        %4479 = vmatpush1.bf16.msra.mxu0 %v3754
        %4480 = vmatprep.subr.bf16.mxu0 %v3759
        %4481 = vmatpush1.bf16.msra.mxu0 %v3758
        %4482 = vmatprep.subr.bf16.mxu0 %v3763
        %4483 = vmatpush1.bf16.msra.mxu0 %v3762
        %4484 = vmatprep.subr.bf16.mxu0 %v3767
        %4485 = vmatpush1.bf16.msra.mxu0 %v3766
        %4486 = vmatprep.subr.bf16.mxu0 %v3771
        %4487 = vmatpush1.bf16.msra.mxu0 %v3770
        %4488 = vmatprep.subr.bf16.mxu0 %v3775
        %4489 = vmatpush1.bf16.msra.mxu0 %v3774
        %4490 = vmatprep.subr.bf16.mxu0 %v3779
        %4491 = vmatpush1.bf16.msra.mxu0 %v3778
        %4492 = vmatprep.subr.bf16.mxu0 %v3783
        %4493 = vmatpush1.bf16.msra.mxu0 %v3782
        %4494 = vmatprep.subr.bf16.mxu0 %v3787
        %4495 = vmatpush1.bf16.msra.mxu0 %v3786
        %4496 = vmatprep.subr.bf16.mxu0 %v3791
        %4497 = vmatpush1.bf16.msra.mxu0 %v3790
        %4498 = vmatprep.subr.bf16.mxu0 %v3795
        %4499 = vmatpush1.bf16.msra.mxu0 %v3794
        %4500 = vmatprep.subr.bf16.mxu0 %v3799
        %4501 = vmatpush1.bf16.msra.mxu0 %v3798
        %4502 = vmatprep.mubr.bf16.mxu0 %v2492
        %4503 = vmatmul.mubr.bf16.gmra.mrb[0].mxu0 %v2491
        %v4504 = vpop.f32.mrb[0].mxu0
        %v4505 = vadd.f32 %v4464, %v4504
        %v4506 = vpop.f32.mrb[0].mxu0
        %v4507 = vadd.f32 %v4466, %v4506
        %v4508 = vpop.f32.mrb[0].mxu0
        %v4509 = vpop.f32.mrb[0].mxu0
        %4510 = vdwg.mxu0
        %4511 = vmatprep.subr.bf16.mxu0 %v3803
        %4512 = vmatpush1.bf16.msra.mxu0 %v3802
        %4513 = vmatprep.subr.bf16.mxu0 %v3807
        %4514 = vmatpush1.bf16.msra.mxu0 %v3806
        %4515 = vmatprep.subr.bf16.mxu0 %v3811
        %4516 = vmatpush1.bf16.msra.mxu0 %v3810
        %4517 = vmatprep.subr.bf16.mxu0 %v3815
        %4518 = vmatpush1.bf16.msra.mxu0 %v3814
        %4519 = vmatprep.subr.bf16.mxu0 %v3819
        %4520 = vmatpush1.bf16.msra.mxu0 %v3818
        %4521 = vmatprep.subr.bf16.mxu0 %v3823
        %4522 = vmatpush1.bf16.msra.mxu0 %v3822
        %4523 = vmatprep.subr.bf16.mxu0 %v3827
        %4524 = vmatpush1.bf16.msra.mxu0 %v3826
        %4525 = vmatprep.subr.bf16.mxu0 %v3831
        %4526 = vmatpush1.bf16.msra.mxu0 %v3830
        %4527 = vmatprep.subr.bf16.mxu0 %v3835
        %4528 = vmatpush1.bf16.msra.mxu0 %v3834
        %4529 = vmatprep.subr.bf16.mxu0 %v3839
        %4530 = vmatpush1.bf16.msra.mxu0 %v3838
        %4531 = vmatprep.subr.bf16.mxu0 %v3843
        %4532 = vmatpush1.bf16.msra.mxu0 %v3842
        %4533 = vmatprep.subr.bf16.mxu0 %v3847
        %4534 = vmatpush1.bf16.msra.mxu0 %v3846
        %4535 = vmatprep.subr.bf16.mxu0 %v3851
        %4536 = vmatpush1.bf16.msra.mxu0 %v3850
        %4537 = vmatprep.subr.bf16.mxu0 %v3855
        %4538 = vmatpush1.bf16.msra.mxu0 %v3854
        %4539 = vmatprep.subr.bf16.mxu0 %v3859
        %4540 = vmatpush1.bf16.msra.mxu0 %v3858
        %4541 = vmatprep.subr.bf16.mxu0 %v3863
        %4542 = vmatpush1.bf16.msra.mxu0 %v3862
        %4543 = vmatprep.mubr.bf16.mxu0 %v2494
        %4544 = vmatmul.mubr.bf16.gmra.mrb[0].mxu0 %v2493
        %v4545 = vpop.f32.mrb[0].mxu0
        %v4546 = vadd.f32 %v4505, %v4545
        %v4547 = vpop.f32.mrb[0].mxu0
        %v4548 = vadd.f32 %v4507, %v4547
        %v4549 = vpop.f32.mrb[0].mxu0
        %v4550 = vpop.f32.mrb[0].mxu0
        %4551 = vdwg.mxu0
        %4552 = vmatprep.subr.bf16.mxu0 %v3867
        %4553 = vmatpush1.bf16.msra.mxu0 %v3866
        %4554 = vmatprep.subr.bf16.mxu0 %v3871
        %4555 = vmatpush1.bf16.msra.mxu0 %v3870
        %4556 = vmatprep.subr.bf16.mxu0 %v3875
        %4557 = vmatpush1.bf16.msra.mxu0 %v3874
        %4558 = vmatprep.subr.bf16.mxu0 %v3879
        %4559 = vmatpush1.bf16.msra.mxu0 %v3878
        %4560 = vmatprep.subr.bf16.mxu0 %v3883
        %4561 = vmatpush1.bf16.msra.mxu0 %v3882
        %4562 = vmatprep.subr.bf16.mxu0 %v4181
        %4563 = vmatpush1.bf16.msra.mxu0 %v4178
        %4564 = vmatprep.subr.bf16.mxu0 0
        %4565 = vmatpush1.bf16.msra.mxu0 0
        %4566 = vmatprep.subr.bf16.mxu0 0
        %4567 = vmatpush1.bf16.msra.mxu0 0
        %4568 = vmatprep.subr.bf16.mxu0 0
        %4569 = vmatpush1.bf16.msra.mxu0 0
        %4570 = vmatprep.subr.bf16.mxu0 0
        %4571 = vmatpush1.bf16.msra.mxu0 0
        %4572 = vmatprep.subr.bf16.mxu0 0
        %4573 = vmatpush1.bf16.msra.mxu0 0
        %4574 = vmatprep.subr.bf16.mxu0 0
        %4575 = vmatpush1.bf16.msra.mxu0 0
        %4576 = vmatprep.subr.bf16.mxu0 0
        %4577 = vmatpush1.bf16.msra.mxu0 0
        %4578 = vmatprep.subr.bf16.mxu0 0
        %4579 = vmatpush1.bf16.msra.mxu0 0
        %4580 = vmatprep.subr.bf16.mxu0 0
        %4581 = vmatpush1.bf16.msra.mxu0 0
        %4582 = vmatprep.subr.bf16.mxu0 0
        %4583 = vmatpush1.bf16.msra.mxu0 0
        %4584 = vmatprep.mubr.bf16.mxu0 0
        %4585 = vmatmul.mubr.bf16.gmra.mrb[0].mxu0 %v4166
        %v4586 = vpop.f32.mrb[0].mxu0
        %v4587 = vadd.f32 %v4546, %v4586
        %v4588 = vpop.f32.mrb[0].mxu0
        %v4589 = vadd.f32 %v4548, %v4588
        %v4590 = vpop.f32.mrb[0].mxu0
        %v4591 = vpop.f32.mrb[0].mxu0
        %4592 = vdwg.mxu0
        %v4593 = vpack.c.bf16 %v4382, %v4382
        %v4594 = vpack.c.bf16 %v4384, %v4384
        %v4595 = vpack.c.bf16 %v4587, %v4587
        %v4596 = vpack.c.bf16 %v4589, %v4589
        %v4600 = vunpack.c.l.b16 %v4593
        %v4601 = vunpack.c.l.b16 %v4594
        %v4602 = vunpack.c.l.b16 %v4595
        %v4603 = vpack.c.b16 %v4601, %v4600
        %v4604 = vpack.c.b16 %v4602, %v4602
        %4607 = vst [vmem:[#allocation3] sm:$0xff] %v4603
        %vm4608 = vcmask 486400
        %4609 = vst.msk [vmem:[#allocation3 + $0x8] sm:$0xf] %vm4608, %v4604
        %4610 = vrot.lane.b32.xlu0 %v4603, 127
        %v4611 = vpop.permute.xlu0 %4610
        %4612 = vrot.lane.b32.xlu0 %v4604, 127
        %v4613 = vpop.permute.xlu0 %4612
        %v4614 = vrot.slane %v4611, 4
        %v4615 = vrot.slane %v4613, 4
        %v4616 = vsel %vm579, %v4614, %v4615
        %v4617 = vsel %vm581, %v4611, %v4616
        %4620 = vst [vmem:[#allocation3 + $0xc] sm:$0xff] %v4617
        %4621 = vst.msk [vmem:[#allocation3 + $0x14] sm:$0xf] %vm4608, %v4613
        %4622 = vrot.lane.b32.xlu0 %v4603, 126
        %v4623 = vpop.permute.xlu0 %4622
        %4624 = vrot.lane.b32.xlu0 %v4604, 126
        %v4625 = vpop.permute.xlu0 %4624
        %v4626 = vrot.slane %v4623, 4
        %v4627 = vrot.slane %v4625, 4
        %v4628 = vsel %vm579, %v4626, %v4627
        %v4629 = vsel %vm615, %v4623, %v4628
        %4632 = vst [vmem:[#allocation3 + $0x18] sm:$0xff] %v4629
        %4633 = vst.msk [vmem:[#allocation3 + $0x20] sm:$0xf] %vm4608, %v4625
        %4634 = vrot.lane.b32.xlu0 %v4603, 125
        %v4635 = vpop.permute.xlu0 %4634
        %4636 = vrot.lane.b32.xlu0 %v4604, 125
        %v4637 = vpop.permute.xlu0 %4636
        %v4638 = vrot.slane %v4635, 4
        %v4639 = vrot.slane %v4637, 4
        %v4640 = vsel %vm579, %v4638, %v4639
        %v4641 = vsel %vm649, %v4635, %v4640
        %4644 = vst [vmem:[#allocation3 + $0x24] sm:$0xff] %v4641
        %4645 = vst.msk [vmem:[#allocation3 + $0x2c] sm:$0xf] %vm4608, %v4637
        %4646 = vrot.lane.b32.xlu0 %v4603, 124
        %v4647 = vpop.permute.xlu0 %4646
        %4648 = vrot.lane.b32.xlu0 %v4604, 124
        %v4649 = vpop.permute.xlu0 %4648
        %v4650 = vrot.slane %v4647, 4
        %v4651 = vrot.slane %v4649, 4
        %v4652 = vsel %vm579, %v4650, %v4651
        %v4653 = vsel %vm683, %v4647, %v4652
        %4656 = vst [vmem:[#allocation3 + $0x30] sm:$0xff] %v4653
        %4657 = vst.msk [vmem:[#allocation3 + $0x38] sm:$0xf] %vm4608, %v4649
        %4658 = vrot.lane.b32.xlu0 %v4603, 108
        %v4659 = vpop.permute.xlu0 %4658
        %4660 = vrot.lane.b32.xlu0 %v4604, 108
        %v4661 = vpop.permute.xlu0 %4660
        %v4662 = vrot.slane %v4659, 4
        %v4663 = vrot.slane %v4661, 4
        %v4664 = vsel %vm579, %v4662, %v4663
        %v4665 = vsel %vm1393, %v4659, %v4664
        %4668 = vst [vmem:[#allocation3 + $0x3c] sm:$0xff] %v4665
        %4669 = vst.msk [vmem:[#allocation3 + $0x44] sm:$0xf] %vm4608, %v4661
        %4670 = vrot.lane.b32.xlu0 %v4603, 107
        %v4671 = vpop.permute.xlu0 %4670
        %4672 = vrot.lane.b32.xlu0 %v4604, 107
        %v4673 = vpop.permute.xlu0 %4672
        %v4674 = vrot.slane %v4671, 4
        %v4675 = vrot.slane %v4673, 4
        %v4676 = vsel %vm579, %v4674, %v4675
        %vm4677 = vcmask 875520
        %v4678 = vsel %vm4677, %v4671, %v4676
        %4681 = vst [vmem:[#allocation3 + $0x48] sm:$0xff] %v4678
        %4682 = vst.msk [vmem:[#allocation3 + $0x50] sm:$0xf] %vm4608, %v4673
        %4683 = vrot.lane.b32.xlu0 %v4603, 106
        %v4684 = vpop.permute.xlu0 %4683
        %4685 = vrot.lane.b32.xlu0 %v4604, 106
        %v4686 = vpop.permute.xlu0 %4685
        %v4687 = vrot.slane %v4684, 4
        %v4688 = vrot.slane %v4686, 4
        %v4689 = vsel %vm579, %v4687, %v4688
        %vm4690 = vcmask 867328
        %v4691 = vsel %vm4690, %v4684, %v4689
        %4694 = vst [vmem:[#allocation3 + $0x54] sm:$0xff] %v4691
        %4695 = vst.msk [vmem:[#allocation3 + $0x5c] sm:$0xf] %vm4608, %v4686
        %4696 = vrot.lane.b32.xlu0 %v4603, 105
        %v4697 = vpop.permute.xlu0 %4696
        %4698 = vrot.lane.b32.xlu0 %v4604, 105
        %v4699 = vpop.permute.xlu0 %4698
        %v4700 = vrot.slane %v4697, 4
        %v4701 = vrot.slane %v4699, 4
        %v4702 = vsel %vm579, %v4700, %v4701
        %vm4703 = vcmask 859136
        %v4704 = vsel %vm4703, %v4697, %v4702
        %4707 = vst [vmem:[#allocation3 + $0x60] sm:$0xff] %v4704
        %4708 = vst.msk [vmem:[#allocation3 + $0x68] sm:$0xf] %vm4608, %v4699
        %4709 = vrot.lane.b32.xlu0 %v4603, 104
        %v4710 = vpop.permute.xlu0 %4709
        %4711 = vrot.lane.b32.xlu0 %v4604, 104
        %v4712 = vpop.permute.xlu0 %4711
        %v4713 = vrot.slane %v4710, 4
        %v4714 = vrot.slane %v4712, 4
        %v4715 = vsel %vm579, %v4713, %v4714
        %vm4716 = vcmask 850944
        %v4717 = vsel %vm4716, %v4710, %v4715
        %4720 = vst [vmem:[#allocation3 + $0x6c] sm:$0xff] %v4717
        %4721 = vst.msk [vmem:[#allocation3 + $0x74] sm:$0xf] %vm4608, %v4712
        %4722 = vrot.lane.b32.xlu0 %v4603, 88
        %v4723 = vpop.permute.xlu0 %4722
        %4724 = vrot.lane.b32.xlu0 %v4604, 88
        %v4725 = vpop.permute.xlu0 %4724
        %v4726 = vrot.slane %v4723, 4
        %v4727 = vrot.slane %v4725, 4
        %v4728 = vsel %vm579, %v4726, %v4727
        %v4729 = vsel %vm857, %v4723, %v4728
        %4732 = vst [vmem:[#allocation3 + $0x78] sm:$0xff] %v4729
        %4733 = vst.msk [vmem:[#allocation3 + $0x80] sm:$0xf] %vm4608, %v4725
        %4734 = vrot.lane.b32.xlu0 %v4603, 87
        %v4735 = vpop.permute.xlu0 %4734
        %4736 = vrot.lane.b32.xlu0 %v4604, 87
        %v4737 = vpop.permute.xlu0 %4736
        %v4738 = vrot.slane %v4735, 4
        %v4739 = vrot.slane %v4737, 4
        %v4740 = vsel %vm579, %v4738, %v4739
        %vm4741 = vcmask 711680
        %v4742 = vsel %vm4741, %v4735, %v4740
        %4745 = vst [vmem:[#allocation3 + $0x84] sm:$0xff] %v4742
        %4746 = vst.msk [vmem:[#allocation3 + $0x8c] sm:$0xf] %vm4608, %v4737
        %4747 = vrot.lane.b32.xlu0 %v4603, 86
        %v4748 = vpop.permute.xlu0 %4747
        %4749 = vrot.lane.b32.xlu0 %v4604, 86
        %v4750 = vpop.permute.xlu0 %4749
        %v4751 = vrot.slane %v4748, 4
        %v4752 = vrot.slane %v4750, 4
        %v4753 = vsel %vm579, %v4751, %v4752
        %vm4754 = vcmask 703488
        %v4755 = vsel %vm4754, %v4748, %v4753
        %4758 = vst [vmem:[#allocation3 + $0x90] sm:$0xff] %v4755
        %4759 = vst.msk [vmem:[#allocation3 + $0x98] sm:$0xf] %vm4608, %v4750
        %4760 = vrot.lane.b32.xlu0 %v4603, 85
        %v4761 = vpop.permute.xlu0 %4760
        %4762 = vrot.lane.b32.xlu0 %v4604, 85
        %v4763 = vpop.permute.xlu0 %4762
        %v4764 = vrot.slane %v4761, 4
        %v4765 = vrot.slane %v4763, 4
        %v4766 = vsel %vm579, %v4764, %v4765
        %vm4767 = vcmask 695296
        %v4768 = vsel %vm4767, %v4761, %v4766
        %4771 = vst [vmem:[#allocation3 + $0x9c] sm:$0xff] %v4768
        %4772 = vst.msk [vmem:[#allocation3 + $0xa4] sm:$0xf] %vm4608, %v4763
        %4773 = vrot.lane.b32.xlu0 %v4603, 84
        %v4774 = vpop.permute.xlu0 %4773
        %4775 = vrot.lane.b32.xlu0 %v4604, 84
        %v4776 = vpop.permute.xlu0 %4775
        %v4777 = vrot.slane %v4774, 4
        %v4778 = vrot.slane %v4776, 4
        %v4779 = vsel %vm579, %v4777, %v4778
        %vm4780 = vcmask 687104
        %v4781 = vsel %vm4780, %v4774, %v4779
        %4784 = vst [vmem:[#allocation3 + $0xa8] sm:$0xff] %v4781
        %4785 = vst.msk [vmem:[#allocation3 + $0xb0] sm:$0xf] %vm4608, %v4776
        %4786 = vrot.lane.b32.xlu0 %v4603, 68
        %v4787 = vpop.permute.xlu0 %4786
        %4788 = vrot.lane.b32.xlu0 %v4604, 68
        %v4789 = vpop.permute.xlu0 %4788
        %v4790 = vrot.slane %v4787, 4
        %v4791 = vrot.slane %v4789, 4
        %v4792 = vsel %vm579, %v4790, %v4791
        %vm4793 = vcmask 556032
        %v4794 = vsel %vm4793, %v4787, %v4792
        %4797 = vst [vmem:[#allocation3 + $0xb4] sm:$0xff] %v4794
        %4798 = vst.msk [vmem:[#allocation3 + $0xbc] sm:$0xf] %vm4608, %v4789
        %4799 = vrot.lane.b32.xlu0 %v4603, 67
        %v4800 = vpop.permute.xlu0 %4799
        %4801 = vrot.lane.b32.xlu0 %v4604, 67
        %v4802 = vpop.permute.xlu0 %4801
        %v4803 = vrot.slane %v4800, 4
        %v4804 = vrot.slane %v4802, 4
        %v4805 = vsel %vm579, %v4803, %v4804
        %vm4806 = vcmask 547840
        %v4807 = vsel %vm4806, %v4800, %v4805
        %4810 = vst [vmem:[#allocation3 + $0xc0] sm:$0xff] %v4807
        %4811 = vst.msk [vmem:[#allocation3 + $0xc8] sm:$0xf] %vm4608, %v4802
        %4812 = vrot.lane.b32.xlu0 %v4603, 66
        %v4813 = vpop.permute.xlu0 %4812
        %4814 = vrot.lane.b32.xlu0 %v4604, 66
        %v4815 = vpop.permute.xlu0 %4814
        %v4816 = vrot.slane %v4813, 4
        %v4817 = vrot.slane %v4815, 4
        %v4818 = vsel %vm579, %v4816, %v4817
        %vm4819 = vcmask 539648
        %v4820 = vsel %vm4819, %v4813, %v4818
        %4823 = vst [vmem:[#allocation3 + $0xcc] sm:$0xff] %v4820
        %4824 = vst.msk [vmem:[#allocation3 + $0xd4] sm:$0xf] %vm4608, %v4815
        %4825 = vrot.lane.b32.xlu0 %v4603, 65
        %v4826 = vpop.permute.xlu0 %4825
        %4827 = vrot.lane.b32.xlu0 %v4604, 65
        %v4828 = vpop.permute.xlu0 %4827
        %v4829 = vrot.slane %v4826, 4
        %v4830 = vrot.slane %v4828, 4
        %v4831 = vsel %vm579, %v4829, %v4830
        %vm4832 = vcmask 531456
        %v4833 = vsel %vm4832, %v4826, %v4831
        %4836 = vst [vmem:[#allocation3 + $0xd8] sm:$0xff] %v4833
        %4837 = vst.msk [vmem:[#allocation3 + $0xe0] sm:$0xf] %vm4608, %v4828
        %4838 = vrot.lane.b32.xlu0 %v4603, 64
        %v4839 = vpop.permute.xlu0 %4838
        %4840 = vrot.lane.b32.xlu0 %v4604, 64
        %v4841 = vpop.permute.xlu0 %4840
        %v4842 = vrot.slane %v4839, 4
        %v4843 = vrot.slane %v4841, 4
        %v4844 = vsel %vm579, %v4842, %v4843
        %vm4845 = vcmask 523264
        %v4846 = vsel %vm4845, %v4839, %v4844
        %4849 = vst [vmem:[#allocation3 + $0xe4] sm:$0xff] %v4846
        %4850 = vst.msk [vmem:[#allocation3 + $0xec] sm:$0xf] %vm4608, %v4841
        %v4852 = vunpack.c.l.b16 %v4596
        %v4853 = vpack.c.b16 %v4852, %v4602
        %4854 = vrot.lane.b32.xlu0 %v4603, 48
        %v4855 = vpop.permute.xlu0 %4854
        %4856 = vrot.lane.b32.xlu0 %v4853, 48
        %v4857 = vpop.permute.xlu0 %4856
        %v4858 = vrot.slane %v4855, 4
        %v4859 = vrot.slane %v4857, 4
        %v4860 = vsel %vm579, %v4858, %v4859
        %vm4861 = vcmask 392192
        %v4862 = vsel %vm4861, %v4855, %v4860
        %v4863 = vsel %vm4861, %v4857, %v4859
        %4866 = vst [vmem:[#allocation3 + $0xf0] sm:$0xff] %v4862
        %4867 = vst.msk [vmem:[#allocation3 + $0xf8] sm:$0xf] %vm4608, %v4863
        %4868 = vrot.lane.b32.xlu0 %v4603, 47
        %v4869 = vpop.permute.xlu0 %4868
        %4870 = vrot.lane.b32.xlu0 %v4853, 47
        %v4871 = vpop.permute.xlu0 %4870
        %v4872 = vrot.slane %v4869, 4
        %v4873 = vrot.slane %v4871, 4
        %v4874 = vsel %vm579, %v4872, %v4873
        %vm4875 = vcmask 384000
        %v4876 = vsel %vm4875, %v4869, %v4874
        %v4877 = vsel %vm4875, %v4871, %v4873
        %4880 = vst [vmem:[#allocation3 + $0xfc] sm:$0xff] %v4876
        %4881 = vst.msk [vmem:[#allocation3 + $0x104] sm:$0xf] %vm4608, %v4877
        %4882 = vrot.lane.b32.xlu0 %v4603, 46
        %v4883 = vpop.permute.xlu0 %4882
        %4884 = vrot.lane.b32.xlu0 %v4853, 46
        %v4885 = vpop.permute.xlu0 %4884
        %v4886 = vrot.slane %v4883, 4
        %v4887 = vrot.slane %v4885, 4
        %v4888 = vsel %vm579, %v4886, %v4887
        %vm4889 = vcmask 375808
        %v4890 = vsel %vm4889, %v4883, %v4888
        %v4891 = vsel %vm4889, %v4885, %v4887
        %4894 = vst [vmem:[#allocation3 + $0x108] sm:$0xff] %v4890
        %4895 = vst.msk [vmem:[#allocation3 + $0x110] sm:$0xf] %vm4608, %v4891
        %4896 = vrot.lane.b32.xlu0 %v4603, 45
        %v4897 = vpop.permute.xlu0 %4896
        %4898 = vrot.lane.b32.xlu0 %v4853, 45
        %v4899 = vpop.permute.xlu0 %4898
        %v4900 = vrot.slane %v4897, 4
        %v4901 = vrot.slane %v4899, 4
        %v4902 = vsel %vm579, %v4900, %v4901
        %vm4903 = vcmask 367616
        %v4904 = vsel %vm4903, %v4897, %v4902
        %v4905 = vsel %vm4903, %v4899, %v4901
        %4908 = vst [vmem:[#allocation3 + $0x114] sm:$0xff] %v4904
        %4909 = vst.msk [vmem:[#allocation3 + $0x11c] sm:$0xf] %vm4608, %v4905
        %4910 = vrot.lane.b32.xlu0 %v4603, 44
        %v4911 = vpop.permute.xlu0 %4910
        %4912 = vrot.lane.b32.xlu0 %v4853, 44
        %v4913 = vpop.permute.xlu0 %4912
        %v4914 = vrot.slane %v4911, 4
        %v4915 = vrot.slane %v4913, 4
        %v4916 = vsel %vm579, %v4914, %v4915
        %vm4917 = vcmask 359424
        %v4918 = vsel %vm4917, %v4911, %v4916
        %v4919 = vsel %vm4917, %v4913, %v4915
        %4922 = vst [vmem:[#allocation3 + $0x120] sm:$0xff] %v4918
        %4923 = vst.msk [vmem:[#allocation3 + $0x128] sm:$0xf] %vm4608, %v4919
        %v4924 = vld [vmem:[%s4] sm:$0xff]
        %v4925 = vld [vmem:[%s4 + $0x8] sm:$0xff]
        %v4926 = vld [vmem:[#allocation3] sm:$0xff]
        %v4927 = vld [vmem:[#allocation3 + $0x8] sm:$0xf]
        %v4928 = vld [vmem:[#allocation3 + $0xc] sm:$0xff]
        %v4929 = vld [vmem:[#allocation3 + $0x14] sm:$0xf]
        %v4930 = vld [vmem:[#allocation3 + $0x18] sm:$0xff]
        %v4931 = vld [vmem:[#allocation3 + $0x20] sm:$0xf]
        %v4932 = vld [vmem:[#allocation3 + $0x24] sm:$0xff]
        %v4933 = vld [vmem:[#allocation3 + $0x2c] sm:$0xf]
        %v4934 = vld [vmem:[#allocation3 + $0x30] sm:$0xff]
        %v4935 = vld [vmem:[#allocation3 + $0x38] sm:$0xf]
        %v4936 = vld [vmem:[#allocation3 + $0x3c] sm:$0xff]
        %v4937 = vld [vmem:[#allocation3 + $0x44] sm:$0xf]
        %v4938 = vld [vmem:[#allocation3 + $0x48] sm:$0xff]
        %v4939 = vld [vmem:[#allocation3 + $0x50] sm:$0xf]
        %v4940 = vld [vmem:[#allocation3 + $0x54] sm:$0xff]
        %v4941 = vld [vmem:[#allocation3 + $0x5c] sm:$0xf]
        %v4942 = vld [vmem:[#allocation3 + $0x60] sm:$0xff]
        %v4943 = vld [vmem:[#allocation3 + $0x68] sm:$0xf]
        %v4944 = vld [vmem:[#allocation3 + $0x6c] sm:$0xff]
        %v4945 = vld [vmem:[#allocation3 + $0x74] sm:$0xf]
        %v4946 = vld [vmem:[#allocation3 + $0x78] sm:$0xff]
        %v4947 = vld [vmem:[#allocation3 + $0x80] sm:$0xf]
        %v4948 = vld [vmem:[#allocation3 + $0x84] sm:$0xff]
        %v4949 = vld [vmem:[#allocation3 + $0x8c] sm:$0xf]
        %v4950 = vld [vmem:[#allocation3 + $0x90] sm:$0xff]
        %v4951 = vld [vmem:[#allocation3 + $0x98] sm:$0xf]
        %v4952 = vld [vmem:[#allocation3 + $0x9c] sm:$0xff]
        %v4953 = vld [vmem:[#allocation3 + $0xa4] sm:$0xf]
        %v4954 = vld [vmem:[#allocation3 + $0xa8] sm:$0xff]
        %v4955 = vld [vmem:[#allocation3 + $0xb0] sm:$0xf]
        %v4956 = vld [vmem:[#allocation3 + $0xb4] sm:$0xff]
        %v4957 = vld [vmem:[#allocation3 + $0xbc] sm:$0xf]
        %v4958 = vld [vmem:[#allocation3 + $0xc0] sm:$0xff]
        %v4959 = vld [vmem:[#allocation3 + $0xc8] sm:$0xf]
        %v4960 = vld [vmem:[#allocation3 + $0xcc] sm:$0xff]
        %v4961 = vld [vmem:[#allocation3 + $0xd4] sm:$0xf]
        %v4962 = vld [vmem:[#allocation3 + $0xd8] sm:$0xff]
        %v4963 = vld [vmem:[#allocation3 + $0xe0] sm:$0xf]
        %v4964 = vld [vmem:[#allocation3 + $0xe4] sm:$0xff]
        %v4965 = vld [vmem:[#allocation3 + $0xec] sm:$0xf]
        %v4966 = vld [vmem:[#allocation3 + $0xf0] sm:$0xff]
        %v4967 = vld [vmem:[#allocation3 + $0xf8] sm:$0xf]
        %v4968 = vld [vmem:[#allocation3 + $0xfc] sm:$0xff]
        %v4969 = vld [vmem:[#allocation3 + $0x104] sm:$0xf]
        %v4970 = vld [vmem:[#allocation3 + $0x108] sm:$0xff]
        %v4971 = vld [vmem:[#allocation3 + $0x110] sm:$0xf]
        %v4972 = vld [vmem:[#allocation3 + $0x114] sm:$0xff]
        %v4973 = vld [vmem:[#allocation3 + $0x11c] sm:$0xf]
        %v4974 = vld [vmem:[#allocation3 + $0x120] sm:$0xff]
        %v4975 = vld [vmem:[#allocation3 + $0x128] sm:$0xf]
        %v4976 = vld [vmem:[%s5] sm:$0xff]
        %v4977 = vld [vmem:[%s5 + $0x8] sm:$0xff]
        %4979 = vset.pattern.permute.xlu0 0
        %4980 = vperm.xlu0 %4979, %v4976
        %v4981 = vpop.permute.xlu0 %4980
        %4984 = vset.pattern.permute.xlu0 0
        %4985 = vperm.xlu0 %4984, %v4977
        %v4986 = vpop.permute.xlu0 %4985
        %v4990 = vunpack.c.l.b16 %v4924
        %v4991 = vunpack.c.h.b16 %v4924
        %v4992 = vunpack.c.l.b16 %v4925
        %v4993 = vunpack.c.h.b16 %v4925
        %v4994 = vpack.c.b16 %v4992, %v4990
        %v4995 = vpack.c.b16 %v4993, %v4991
        %v5047 = vunpack.c.l.b16 %v4926
        %v5048 = vunpack.c.h.b16 %v4926
        %v5049 = vunpack.c.l.b16 %v4927
        %v5050 = vunpack.c.l.b16 %v4928
        %v5051 = vunpack.c.h.b16 %v4928
        %v5052 = vunpack.c.l.b16 %v4929
        %v5053 = vunpack.c.l.b16 %v4930
        %v5054 = vunpack.c.h.b16 %v4930
        %v5055 = vunpack.c.l.b16 %v4931
        %v5056 = vunpack.c.l.b16 %v4932
        %v5057 = vunpack.c.h.b16 %v4932
        %v5058 = vunpack.c.l.b16 %v4933
        %v5059 = vunpack.c.l.b16 %v4934
        %v5060 = vunpack.c.h.b16 %v4934
        %v5061 = vunpack.c.l.b16 %v4935
        %v5062 = vunpack.c.l.b16 %v4936
        %v5063 = vunpack.c.h.b16 %v4936
        %v5064 = vunpack.c.l.b16 %v4937
        %v5065 = vunpack.c.l.b16 %v4938
        %v5066 = vunpack.c.h.b16 %v4938
        %v5067 = vunpack.c.l.b16 %v4939
        %v5068 = vunpack.c.l.b16 %v4940
        %v5069 = vunpack.c.h.b16 %v4940
        %v5070 = vunpack.c.l.b16 %v4941
        %v5071 = vunpack.c.l.b16 %v4942
        %v5072 = vunpack.c.h.b16 %v4942
        %v5073 = vunpack.c.l.b16 %v4943
        %v5074 = vunpack.c.l.b16 %v4944
        %v5075 = vunpack.c.h.b16 %v4944
        %v5076 = vunpack.c.l.b16 %v4945
        %v5077 = vunpack.c.l.b16 %v4946
        %v5078 = vunpack.c.h.b16 %v4946
        %v5079 = vunpack.c.l.b16 %v4947
        %v5080 = vunpack.c.l.b16 %v4948
        %v5081 = vunpack.c.h.b16 %v4948
        %v5082 = vunpack.c.l.b16 %v4949
        %v5083 = vunpack.c.l.b16 %v4950
        %v5084 = vunpack.c.h.b16 %v4950
        %v5085 = vunpack.c.l.b16 %v4951
        %v5086 = vunpack.c.l.b16 %v4952
        %v5087 = vunpack.c.h.b16 %v4952
        %v5088 = vunpack.c.l.b16 %v4953
        %v5089 = vunpack.c.l.b16 %v4954
        %v5090 = vunpack.c.h.b16 %v4954
        %v5091 = vunpack.c.l.b16 %v4955
        %v5092 = vunpack.c.l.b16 %v4956
        %v5093 = vunpack.c.h.b16 %v4956
        %v5094 = vunpack.c.l.b16 %v4957
        %v5095 = vunpack.c.l.b16 %v4958
        %v5096 = vunpack.c.h.b16 %v4958
        %v5097 = vunpack.c.l.b16 %v4959
        %v5098 = vunpack.c.l.b16 %v4960
        %v5099 = vunpack.c.h.b16 %v4960
        %v5100 = vunpack.c.l.b16 %v4961
        %v5101 = vunpack.c.l.b16 %v4962
        %v5102 = vunpack.c.h.b16 %v4962
        %v5103 = vunpack.c.l.b16 %v4963
        %v5104 = vunpack.c.l.b16 %v4964
        %v5105 = vunpack.c.h.b16 %v4964
        %v5106 = vunpack.c.l.b16 %v4965
        %v5107 = vunpack.c.l.b16 %v4966
        %v5108 = vunpack.c.h.b16 %v4966
        %v5109 = vunpack.c.l.b16 %v4967
        %v5110 = vunpack.c.l.b16 %v4968
        %v5111 = vunpack.c.h.b16 %v4968
        %v5112 = vunpack.c.l.b16 %v4969
        %v5113 = vunpack.c.l.b16 %v4970
        %v5114 = vunpack.c.h.b16 %v4970
        %v5115 = vunpack.c.l.b16 %v4971
        %v5116 = vunpack.c.l.b16 %v4972
        %v5117 = vunpack.c.h.b16 %v4972
        %v5118 = vunpack.c.l.b16 %v4973
        %v5119 = vunpack.c.l.b16 %v4974
        %v5120 = vunpack.c.h.b16 %v4974
        %v5121 = vunpack.c.l.b16 %v4975
        %v5122 = vpack.c.b16 %v5050, %v5047
        %v5123 = vpack.c.b16 %v5051, %v5048
        %v5124 = vpack.c.b16 %v5052, %v5049
        %v5125 = vpack.c.b16 %v5056, %v5053
        %v5126 = vpack.c.b16 %v5057, %v5054
        %v5127 = vpack.c.b16 %v5058, %v5055
        %v5128 = vpack.c.b16 %v5062, %v5059
        %v5129 = vpack.c.b16 %v5063, %v5060
        %v5130 = vpack.c.b16 %v5064, %v5061
        %v5131 = vpack.c.b16 %v5068, %v5065
        %v5132 = vpack.c.b16 %v5069, %v5066
        %v5133 = vpack.c.b16 %v5070, %v5067
        %v5134 = vpack.c.b16 %v5074, %v5071
        %v5135 = vpack.c.b16 %v5075, %v5072
        %v5136 = vpack.c.b16 %v5076, %v5073
        %v5137 = vpack.c.b16 %v5080, %v5077
        %v5138 = vpack.c.b16 %v5081, %v5078
        %v5139 = vpack.c.b16 %v5082, %v5079
        %v5140 = vpack.c.b16 %v5086, %v5083
        %v5141 = vpack.c.b16 %v5087, %v5084
        %v5142 = vpack.c.b16 %v5088, %v5085
        %v5143 = vpack.c.b16 %v5092, %v5089
        %v5144 = vpack.c.b16 %v5093, %v5090
        %v5145 = vpack.c.b16 %v5094, %v5091
        %v5146 = vpack.c.b16 %v5098, %v5095
        %v5147 = vpack.c.b16 %v5099, %v5096
        %v5148 = vpack.c.b16 %v5100, %v5097
        %v5149 = vpack.c.b16 %v5104, %v5101
        %v5150 = vpack.c.b16 %v5105, %v5102
        %v5151 = vpack.c.b16 %v5106, %v5103
        %v5152 = vpack.c.b16 %v5110, %v5107
        %v5153 = vpack.c.b16 %v5111, %v5108
        %v5154 = vpack.c.b16 %v5112, %v5109
        %v5155 = vpack.c.b16 %v5116, %v5113
        %v5156 = vpack.c.b16 %v5117, %v5114
        %v5157 = vpack.c.b16 %v5118, %v5115
        %v5158 = vpack.c.b16 %v5119, %v5119
        %v5159 = vpack.c.b16 %v5120, %v5120
        %v5160 = vpack.c.b16 %v5121, %v5121
        %v5198 = vsel %vm2119, %v4995, 0
        %v5201 = vsel %vm2123, %v5158, 0
        %v5204 = vsel %vm2123, %v5159, 0
        %v5207 = vsel %vm2123, %v5160, 0
        %5209 = vmatprep.subr.bf16.mxu0 %v5123
        %5210 = vmatpush1.bf16.msra.mxu0 %v5122
        %5211 = vmatprep.subr.bf16.mxu0 %v5126
        %5212 = vmatpush1.bf16.msra.mxu0 %v5125
        %5213 = vmatprep.subr.bf16.mxu0 %v5129
        %5214 = vmatpush1.bf16.msra.mxu0 %v5128
        %5215 = vmatprep.subr.bf16.mxu0 %v5132
        %5216 = vmatpush1.bf16.msra.mxu0 %v5131
        %5217 = vmatprep.subr.bf16.mxu0 %v5135
        %5218 = vmatpush1.bf16.msra.mxu0 %v5134
        %5219 = vmatprep.subr.bf16.mxu0 %v5138
        %5220 = vmatpush1.bf16.msra.mxu0 %v5137
        %5221 = vmatprep.subr.bf16.mxu0 %v5141
        %5222 = vmatpush1.bf16.msra.mxu0 %v5140
        %5223 = vmatprep.subr.bf16.mxu0 %v5144
        %5224 = vmatpush1.bf16.msra.mxu0 %v5143
        %5225 = vmatprep.subr.bf16.mxu0 %v5147
        %5226 = vmatpush1.bf16.msra.mxu0 %v5146
        %5227 = vmatprep.subr.bf16.mxu0 %v5150
        %5228 = vmatpush1.bf16.msra.mxu0 %v5149
        %5229 = vmatprep.subr.bf16.mxu0 %v5153
        %5230 = vmatpush1.bf16.msra.mxu0 %v5152
        %5231 = vmatprep.subr.bf16.mxu0 %v5156
        %5232 = vmatpush1.bf16.msra.mxu0 %v5155
        %5233 = vmatprep.subr.bf16.mxu0 %v5204
        %5234 = vmatpush1.bf16.msra.mxu0 %v5201
        %5235 = vmatprep.subr.bf16.mxu0 0
        %5236 = vmatpush1.bf16.msra.mxu0 0
        %5237 = vmatprep.subr.bf16.mxu0 0
        %5238 = vmatpush1.bf16.msra.mxu0 0
        %5239 = vmatprep.subr.bf16.mxu0 0
        %5240 = vmatpush1.bf16.msra.mxu0 0
        %5241 = vmatprep.mubr.bf16.mxu0 %v5198
        %5242 = vmatmul.mubr.bf16.gmra.mrb[0].mxu0 %v4994
        %v5243 = vpop.f32.mrb[0].mxu0
        %v5244 = vadd.f32 %v4981, %v5243
        %v5245 = vpop.f32.mrb[0].mxu0
        %v5246 = vadd.f32 %v4981, %v5245
        %v5247 = vpop.f32.mrb[0].mxu0
        %v5248 = vadd.f32 %v4986, %v5247
        %v5249 = vpop.f32.mrb[0].mxu0
        %v5250 = vadd.f32 %v4986, %v5249
        %5251 = vdwg.mxu0
        %5252 = vmatprep.subr.bf16.mxu0 0
        %5253 = vmatpush1.bf16.msra.mxu0 %v5124
        %5254 = vmatprep.subr.bf16.mxu0 0
        %5255 = vmatpush1.bf16.msra.mxu0 %v5127
        %5256 = vmatprep.subr.bf16.mxu0 0
        %5257 = vmatpush1.bf16.msra.mxu0 %v5130
        %5258 = vmatprep.subr.bf16.mxu0 0
        %5259 = vmatpush1.bf16.msra.mxu0 %v5133
        %5260 = vmatprep.subr.bf16.mxu0 0
        %5261 = vmatpush1.bf16.msra.mxu0 %v5136
        %5262 = vmatprep.subr.bf16.mxu0 0
        %5263 = vmatpush1.bf16.msra.mxu0 %v5139
        %5264 = vmatprep.subr.bf16.mxu0 0
        %5265 = vmatpush1.bf16.msra.mxu0 %v5142
        %5266 = vmatprep.subr.bf16.mxu0 0
        %5267 = vmatpush1.bf16.msra.mxu0 %v5145
        %5268 = vmatprep.subr.bf16.mxu0 0
        %5269 = vmatpush1.bf16.msra.mxu0 %v5148
        %5270 = vmatprep.subr.bf16.mxu0 0
        %5271 = vmatpush1.bf16.msra.mxu0 %v5151
        %5272 = vmatprep.subr.bf16.mxu0 0
        %5273 = vmatpush1.bf16.msra.mxu0 %v5154
        %5274 = vmatprep.subr.bf16.mxu0 0
        %5275 = vmatpush1.bf16.msra.mxu0 %v5157
        %5276 = vmatprep.subr.bf16.mxu0 0
        %5277 = vmatpush1.bf16.msra.mxu0 %v5207
        %5278 = vmatprep.subr.bf16.mxu0 0
        %5279 = vmatpush1.bf16.msra.mxu0 0
        %5280 = vmatprep.subr.bf16.mxu0 0
        %5281 = vmatpush1.bf16.msra.mxu0 0
        %5282 = vmatprep.subr.bf16.mxu0 0
        %5283 = vmatpush1.bf16.msra.mxu0 0
        %5284 = vmatprep.mubr.bf16.mxu0 %v5198
        %5285 = vmatmul.mubr.bf16.gmra.mrb[0].mxu0 %v4994
        %v5286 = vpop.f32.mrb[0].mxu0
        %v5287 = vadd.f32 %v4981, %v5286
        %v5288 = vpop.f32.mrb[0].mxu0
        %v5289 = vpop.f32.mrb[0].mxu0
        %v5290 = vadd.f32 %v4986, %v5289
        %v5291 = vpop.f32.mrb[0].mxu0
        %5292 = vdwg.mxu0
        %v5293 = vmax.f32 %v5244, 0.0
        %v5294 = vmax.f32 %v5246, 0.0
        %v5295 = vmax.f32 %v5287, 0.0
        %v5296 = vmax.f32 %v5248, 0.0
        %v5297 = vmax.f32 %v5250, 0.0
        %v5298 = vmax.f32 %v5290, 0.0
        %v5299 = vpack.c.bf16 %v5296, %v5293
        %v5300 = vpack.c.bf16 %v5297, %v5294
        %v5301 = vpack.c.bf16 %v5298, %v5295
        %v5302 = vld [vmem:[%s6] sm:$0xff]
        %v5303 = vld [vmem:[%s6 + $0x8] sm:$0xff]
        %v5304 = vld [vmem:[%s6 + $0x10] sm:$0xff]
        %v5305 = vld [vmem:[%s6 + $0x18] sm:$0xff]
        %v5306 = vld [vmem:[%s6 + $0x20] sm:$0xff]
        %v5307 = vld [vmem:[%s6 + $0x28] sm:$0xff]
        %v5308 = vld [vmem:[%s6 + $0x30] sm:$0xff]
        %v5309 = vld [vmem:[%s6 + $0x38] sm:$0xff]
        %v5310 = vld [vmem:[%s6 + $0x40] sm:$0xff]
        %v5311 = vld [vmem:[%s6 + $0x48] sm:$0xff]
        %v5312 = vld [vmem:[%s6 + $0x50] sm:$0xff]
        %v5313 = vld [vmem:[%s6 + $0x58] sm:$0xff]
        %v5314 = vld [vmem:[%s6 + $0x60] sm:$0xff]
        %v5315 = vld [vmem:[%s6 + $0x68] sm:$0xff]
        %v5316 = vld [vmem:[%s6 + $0x70] sm:$0xff]
        %v5317 = vld [vmem:[%s6 + $0x78] sm:$0xff]
        %v5318 = vld [vmem:[%s6 + $0x80] sm:$0xff]
        %v5319 = vld [vmem:[%s6 + $0x88] sm:$0xff]
        %v5320 = vld [vmem:[%s6 + $0x90] sm:$0xff]
        %v5321 = vld [vmem:[%s6 + $0x98] sm:$0xff]
        %v5322 = vld [vmem:[%s6 + $0xa0] sm:$0xff]
        %v5323 = vld [vmem:[%s6 + $0xa8] sm:$0xff]
        %v5324 = vld [vmem:[%s6 + $0xb0] sm:$0xff]
        %v5325 = vld [vmem:[%s6 + $0xb8] sm:$0xff]
        %v5326 = vld [vmem:[%s6 + $0xc0] sm:$0xff]
        %v5327 = vld [vmem:[%s6 + $0xc8] sm:$0xff]
        %v5328 = vld [vmem:[%s6 + $0xd0] sm:$0xff]
        %v5329 = vld [vmem:[%s6 + $0xd8] sm:$0xff]
        %v5330 = vld [vmem:[%s6 + $0xe0] sm:$0xff]
        %v5331 = vld [vmem:[%s6 + $0xe8] sm:$0xff]
        %v5332 = vld [vmem:[%s6 + $0xf0] sm:$0xff]
        %v5333 = vld [vmem:[%s6 + $0xf8] sm:$0xff]
        %v5334 = vld [vmem:[%s6 + $0x100] sm:$0xff]
        %v5335 = vld [vmem:[%s6 + $0x108] sm:$0xff]
        %v5336 = vld [vmem:[%s6 + $0x110] sm:$0xff]
        %v5337 = vld [vmem:[%s6 + $0x118] sm:$0xff]
        %v5338 = vld [vmem:[%s6 + $0x120] sm:$0xff]
        %v5339 = vld [vmem:[%s6 + $0x128] sm:$0xff]
        %v5340 = vld [vmem:[%s6 + $0x130] sm:$0xff]
        %v5341 = vld [vmem:[%s6 + $0x138] sm:$0x33]
        %v5382 = vunpack.c.l.b16 %v5302
        %v5383 = vunpack.c.h.b16 %v5302
        %v5384 = vunpack.c.l.b16 %v5303
        %v5385 = vunpack.c.h.b16 %v5303
        %v5386 = vunpack.c.l.b16 %v5304
        %v5387 = vunpack.c.h.b16 %v5304
        %v5388 = vunpack.c.l.b16 %v5305
        %v5389 = vunpack.c.h.b16 %v5305
        %v5390 = vunpack.c.l.b16 %v5306
        %v5391 = vunpack.c.h.b16 %v5306
        %v5392 = vunpack.c.l.b16 %v5307
        %v5393 = vunpack.c.h.b16 %v5307
        %v5394 = vunpack.c.l.b16 %v5308
        %v5395 = vunpack.c.h.b16 %v5308
        %v5396 = vunpack.c.l.b16 %v5309
        %v5397 = vunpack.c.h.b16 %v5309
        %v5398 = vunpack.c.l.b16 %v5310
        %v5399 = vunpack.c.h.b16 %v5310
        %v5400 = vunpack.c.l.b16 %v5311
        %v5401 = vunpack.c.h.b16 %v5311
        %v5402 = vunpack.c.l.b16 %v5312
        %v5403 = vunpack.c.h.b16 %v5312
        %v5404 = vunpack.c.l.b16 %v5313
        %v5405 = vunpack.c.h.b16 %v5313
        %v5406 = vunpack.c.l.b16 %v5314
        %v5407 = vunpack.c.h.b16 %v5314
        %v5408 = vunpack.c.l.b16 %v5315
        %v5409 = vunpack.c.h.b16 %v5315
        %v5410 = vunpack.c.l.b16 %v5316
        %v5411 = vunpack.c.h.b16 %v5316
        %v5412 = vunpack.c.l.b16 %v5317
        %v5413 = vunpack.c.h.b16 %v5317
        %v5414 = vunpack.c.l.b16 %v5318
        %v5415 = vunpack.c.h.b16 %v5318
        %v5416 = vunpack.c.l.b16 %v5319
        %v5417 = vunpack.c.h.b16 %v5319
        %v5418 = vunpack.c.l.b16 %v5320
        %v5419 = vunpack.c.h.b16 %v5320
        %v5420 = vunpack.c.l.b16 %v5321
        %v5421 = vunpack.c.h.b16 %v5321
        %v5422 = vunpack.c.l.b16 %v5322
        %v5423 = vunpack.c.h.b16 %v5322
        %v5424 = vunpack.c.l.b16 %v5323
        %v5425 = vunpack.c.h.b16 %v5323
        %v5426 = vunpack.c.l.b16 %v5324
        %v5427 = vunpack.c.h.b16 %v5324
        %v5428 = vunpack.c.l.b16 %v5325
        %v5429 = vunpack.c.h.b16 %v5325
        %v5430 = vunpack.c.l.b16 %v5326
        %v5431 = vunpack.c.h.b16 %v5326
        %v5432 = vunpack.c.l.b16 %v5327
        %v5433 = vunpack.c.h.b16 %v5327
        %v5434 = vunpack.c.l.b16 %v5328
        %v5435 = vunpack.c.h.b16 %v5328
        %v5436 = vunpack.c.l.b16 %v5329
        %v5437 = vunpack.c.h.b16 %v5329
        %v5438 = vunpack.c.l.b16 %v5330
        %v5439 = vunpack.c.h.b16 %v5330
        %v5440 = vunpack.c.l.b16 %v5331
        %v5441 = vunpack.c.h.b16 %v5331
        %v5442 = vunpack.c.l.b16 %v5332
        %v5443 = vunpack.c.h.b16 %v5332
        %v5444 = vunpack.c.l.b16 %v5333
        %v5445 = vunpack.c.h.b16 %v5333
        %v5446 = vunpack.c.l.b16 %v5334
        %v5447 = vunpack.c.h.b16 %v5334
        %v5448 = vunpack.c.l.b16 %v5335
        %v5449 = vunpack.c.h.b16 %v5335
        %v5450 = vunpack.c.l.b16 %v5336
        %v5451 = vunpack.c.h.b16 %v5336
        %v5452 = vunpack.c.l.b16 %v5337
        %v5453 = vunpack.c.h.b16 %v5337
        %v5454 = vunpack.c.l.b16 %v5338
        %v5455 = vunpack.c.h.b16 %v5338
        %v5456 = vunpack.c.l.b16 %v5339
        %v5457 = vunpack.c.h.b16 %v5339
        %v5458 = vunpack.c.l.b16 %v5340
        %v5459 = vunpack.c.h.b16 %v5340
        %v5460 = vunpack.c.l.b16 %v5341
        %v5461 = vunpack.c.h.b16 %v5341
        %v5462 = vpack.c.b16 %v5384, %v5382
        %v5463 = vpack.c.b16 %v5385, %v5383
        %v5464 = vpack.c.b16 %v5388, %v5386
        %v5465 = vpack.c.b16 %v5389, %v5387
        %v5466 = vpack.c.b16 %v5392, %v5390
        %v5467 = vpack.c.b16 %v5393, %v5391
        %v5468 = vpack.c.b16 %v5396, %v5394
        %v5469 = vpack.c.b16 %v5397, %v5395
        %v5470 = vpack.c.b16 %v5400, %v5398
        %v5471 = vpack.c.b16 %v5401, %v5399
        %v5472 = vpack.c.b16 %v5404, %v5402
        %v5473 = vpack.c.b16 %v5405, %v5403
        %v5474 = vpack.c.b16 %v5408, %v5406
        %v5475 = vpack.c.b16 %v5409, %v5407
        %v5476 = vpack.c.b16 %v5412, %v5410
        %v5477 = vpack.c.b16 %v5413, %v5411
        %v5478 = vpack.c.b16 %v5416, %v5414
        %v5479 = vpack.c.b16 %v5417, %v5415
        %v5480 = vpack.c.b16 %v5420, %v5418
        %v5481 = vpack.c.b16 %v5421, %v5419
        %v5482 = vpack.c.b16 %v5424, %v5422
        %v5483 = vpack.c.b16 %v5425, %v5423
        %v5484 = vpack.c.b16 %v5428, %v5426
        %v5485 = vpack.c.b16 %v5429, %v5427
        %v5486 = vpack.c.b16 %v5432, %v5430
        %v5487 = vpack.c.b16 %v5433, %v5431
        %v5488 = vpack.c.b16 %v5436, %v5434
        %v5489 = vpack.c.b16 %v5437, %v5435
        %v5490 = vpack.c.b16 %v5440, %v5438
        %v5491 = vpack.c.b16 %v5441, %v5439
        %v5492 = vpack.c.b16 %v5444, %v5442
        %v5493 = vpack.c.b16 %v5445, %v5443
        %v5494 = vpack.c.b16 %v5448, %v5446
        %v5495 = vpack.c.b16 %v5449, %v5447
        %v5496 = vpack.c.b16 %v5452, %v5450
        %v5497 = vpack.c.b16 %v5453, %v5451
        %v5498 = vpack.c.b16 %v5456, %v5454
        %v5499 = vpack.c.b16 %v5457, %v5455
        %v5500 = vpack.c.b16 %v5460, %v5458
        %v5501 = vpack.c.b16 %v5461, %v5459
        %vm5540 = vcmask 490496
        %v5542 = vsel %vm5540, %v5301, 0
        %vm5544 = vcmask 1045504
        %v5546 = vsel %vm5544, %v5500, 0
        %v5549 = vsel %vm5544, %v5501, 0
        %5551 = vmatprep.subr.bf16.mxu0 %v5463
        %5552 = vmatpush1.bf16.msra.mxu0 %v5462
        %5553 = vmatprep.subr.bf16.mxu0 %v5465
        %5554 = vmatpush1.bf16.msra.mxu0 %v5464
        %5555 = vmatprep.subr.bf16.mxu0 %v5467
        %5556 = vmatpush1.bf16.msra.mxu0 %v5466
        %5557 = vmatprep.subr.bf16.mxu0 %v5469
        %5558 = vmatpush1.bf16.msra.mxu0 %v5468
        %5559 = vmatprep.subr.bf16.mxu0 %v5471
        %5560 = vmatpush1.bf16.msra.mxu0 %v5470
        %5561 = vmatprep.subr.bf16.mxu0 %v5473
        %5562 = vmatpush1.bf16.msra.mxu0 %v5472
        %5563 = vmatprep.subr.bf16.mxu0 %v5475
        %5564 = vmatpush1.bf16.msra.mxu0 %v5474
        %5565 = vmatprep.subr.bf16.mxu0 %v5477
        %5566 = vmatpush1.bf16.msra.mxu0 %v5476
        %5567 = vmatprep.subr.bf16.mxu0 %v5479
        %5568 = vmatpush1.bf16.msra.mxu0 %v5478
        %5569 = vmatprep.subr.bf16.mxu0 %v5481
        %5570 = vmatpush1.bf16.msra.mxu0 %v5480
        %5571 = vmatprep.subr.bf16.mxu0 %v5483
        %5572 = vmatpush1.bf16.msra.mxu0 %v5482
        %5573 = vmatprep.subr.bf16.mxu0 %v5485
        %5574 = vmatpush1.bf16.msra.mxu0 %v5484
        %5575 = vmatprep.subr.bf16.mxu0 %v5487
        %5576 = vmatpush1.bf16.msra.mxu0 %v5486
        %5577 = vmatprep.subr.bf16.mxu0 %v5489
        %5578 = vmatpush1.bf16.msra.mxu0 %v5488
        %5579 = vmatprep.subr.bf16.mxu0 %v5491
        %5580 = vmatpush1.bf16.msra.mxu0 %v5490
        %5581 = vmatprep.subr.bf16.mxu0 %v5493
        %5582 = vmatpush1.bf16.msra.mxu0 %v5492
        %5583 = vmatprep.mubr.bf16.mxu0 %v5300
        %5584 = vmatmul.mubr.bf16.gmra.mrb[0].mxu0 %v5299
        %v5585 = vpop.f32.mrb[0].mxu0
        %v5586 = vadd.f32 0.0, %v5585
        %v5587 = vpop.f32.mrb[0].mxu0
        %v5588 = vadd.f32 0.0, %v5587
        %v5589 = vpop.f32.mrb[0].mxu0
        %v5590 = vadd.f32 0.0, %v5589
        %v5591 = vpop.f32.mrb[0].mxu0
        %v5592 = vadd.f32 0.0, %v5591
        %5593 = vdwg.mxu0
        %5594 = vmatprep.subr.bf16.mxu0 %v5495
        %5595 = vmatpush1.bf16.msra.mxu0 %v5494
        %5596 = vmatprep.subr.bf16.mxu0 %v5497
        %5597 = vmatpush1.bf16.msra.mxu0 %v5496
        %5598 = vmatprep.subr.bf16.mxu0 %v5499
        %5599 = vmatpush1.bf16.msra.mxu0 %v5498
        %5600 = vmatprep.subr.bf16.mxu0 %v5549
        %5601 = vmatpush1.bf16.msra.mxu0 %v5546
        %5602 = vmatprep.subr.bf16.mxu0 0
        %5603 = vmatpush1.bf16.msra.mxu0 0
        %5604 = vmatprep.subr.bf16.mxu0 0
        %5605 = vmatpush1.bf16.msra.mxu0 0
        %5606 = vmatprep.subr.bf16.mxu0 0
        %5607 = vmatpush1.bf16.msra.mxu0 0
        %5608 = vmatprep.subr.bf16.mxu0 0
        %5609 = vmatpush1.bf16.msra.mxu0 0
        %5610 = vmatprep.subr.bf16.mxu0 0
        %5611 = vmatpush1.bf16.msra.mxu0 0
        %5612 = vmatprep.subr.bf16.mxu0 0
        %5613 = vmatpush1.bf16.msra.mxu0 0
        %5614 = vmatprep.subr.bf16.mxu0 0
        %5615 = vmatpush1.bf16.msra.mxu0 0
        %5616 = vmatprep.subr.bf16.mxu0 0
        %5617 = vmatpush1.bf16.msra.mxu0 0
        %5618 = vmatprep.subr.bf16.mxu0 0
        %5619 = vmatpush1.bf16.msra.mxu0 0
        %5620 = vmatprep.subr.bf16.mxu0 0
        %5621 = vmatpush1.bf16.msra.mxu0 0
        %5622 = vmatprep.subr.bf16.mxu0 0
        %5623 = vmatpush1.bf16.msra.mxu0 0
        %5624 = vmatprep.subr.bf16.mxu0 0
        %5625 = vmatpush1.bf16.msra.mxu0 0
        %5626 = vmatprep.mubr.bf16.mxu0 0
        %5627 = vmatmul.mubr.bf16.gmra.mrb[0].mxu0 %v5542
        %v5628 = vpop.f32.mrb[0].mxu0
        %v5629 = vadd.f32 %v5586, %v5628
        %v5630 = vpop.f32.mrb[0].mxu0
        %v5631 = vadd.f32 %v5588, %v5630
        %v5632 = vpop.f32.mrb[0].mxu0
        %v5633 = vadd.f32 %v5590, %v5632
        %v5634 = vpop.f32.mrb[0].mxu0
        %v5635 = vadd.f32 %v5592, %v5634
        %5636 = vdwg.mxu0
        %v5637 = vpack.c.bf16 %v5633, %v5629
        %v5638 = vpack.c.bf16 %v5635, %v5631
        %5639 = vst.msk [vmem:[#allocation4] sm:$0xff] %vm2436, %v5637
        %5641 = vrot.lane.b32.xlu0 %v5637, 127
        %v5642 = vpop.permute.xlu0 %5641
        %5644 = vst.msk [vmem:[#allocation4 + $0x8] sm:$0xff] %vm2436, %v5642
        %5645 = vrot.lane.b32.xlu0 %v5637, 126
        %v5646 = vpop.permute.xlu0 %5645
        %5648 = vst.msk [vmem:[#allocation4 + $0x10] sm:$0xff] %vm2436, %v5646
        %5649 = vrot.lane.b32.xlu0 %v5637, 125
        %v5650 = vpop.permute.xlu0 %5649
        %5652 = vst.msk [vmem:[#allocation4 + $0x18] sm:$0xff] %vm2436, %v5650
        %5653 = vrot.lane.b32.xlu0 %v5637, 124
        %v5654 = vpop.permute.xlu0 %5653
        %5656 = vst.msk [vmem:[#allocation4 + $0x20] sm:$0xff] %vm2436, %v5654
        %5657 = vrot.lane.b32.xlu0 %v5637, 116
        %v5658 = vpop.permute.xlu0 %5657
        %5660 = vst.msk [vmem:[#allocation4 + $0x28] sm:$0xff] %vm2436, %v5658
        %5661 = vrot.lane.b32.xlu0 %v5637, 115
        %v5662 = vpop.permute.xlu0 %5661
        %5664 = vst.msk [vmem:[#allocation4 + $0x30] sm:$0xff] %vm2436, %v5662
        %5665 = vrot.lane.b32.xlu0 %v5637, 114
        %v5666 = vpop.permute.xlu0 %5665
        %5668 = vst.msk [vmem:[#allocation4 + $0x38] sm:$0xff] %vm2436, %v5666
        %5669 = vrot.lane.b32.xlu0 %v5637, 113
        %v5670 = vpop.permute.xlu0 %5669
        %5672 = vst.msk [vmem:[#allocation4 + $0x40] sm:$0xff] %vm2436, %v5670
        %5673 = vrot.lane.b32.xlu0 %v5637, 112
        %v5674 = vpop.permute.xlu0 %5673
        %5676 = vst.msk [vmem:[#allocation4 + $0x48] sm:$0xff] %vm2436, %v5674
        %5677 = vrot.lane.b32.xlu0 %v5637, 104
        %v5678 = vpop.permute.xlu0 %5677
        %5680 = vst.msk [vmem:[#allocation4 + $0x50] sm:$0xff] %vm2436, %v5678
        %5681 = vrot.lane.b32.xlu0 %v5637, 103
        %v5682 = vpop.permute.xlu0 %5681
        %5684 = vst.msk [vmem:[#allocation4 + $0x58] sm:$0xff] %vm2436, %v5682
        %5685 = vrot.lane.b32.xlu0 %v5637, 102
        %v5686 = vpop.permute.xlu0 %5685
        %5688 = vst.msk [vmem:[#allocation4 + $0x60] sm:$0xff] %vm2436, %v5686
        %5689 = vrot.lane.b32.xlu0 %v5637, 101
        %v5690 = vpop.permute.xlu0 %5689
        %5692 = vst.msk [vmem:[#allocation4 + $0x68] sm:$0xff] %vm2436, %v5690
        %5693 = vrot.lane.b32.xlu0 %v5637, 100
        %v5694 = vpop.permute.xlu0 %5693
        %5696 = vst.msk [vmem:[#allocation4 + $0x70] sm:$0xff] %vm2436, %v5694
        %5697 = vrot.lane.b32.xlu0 %v5637, 92
        %v5698 = vpop.permute.xlu0 %5697
        %5700 = vst.msk [vmem:[#allocation4 + $0x78] sm:$0xff] %vm2436, %v5698
        %5702 = vrot.lane.b32.xlu0 %v5637, 91
        %v5703 = vpop.permute.xlu0 %5702
        %5704 = vrot.lane.b32.xlu0 %v5638, 91
        %v5705 = vpop.permute.xlu0 %5704
        %v5706 = vsel %vm752, %v5703, %v5705
        %5708 = vst.msk [vmem:[#allocation4 + $0x80] sm:$0xff] %vm2436, %v5706
        %5709 = vrot.lane.b32.xlu0 %v5637, 90
        %v5710 = vpop.permute.xlu0 %5709
        %5711 = vrot.lane.b32.xlu0 %v5638, 90
        %v5712 = vpop.permute.xlu0 %5711
        %v5713 = vsel %vm787, %v5710, %v5712
        %5715 = vst.msk [vmem:[#allocation4 + $0x88] sm:$0xff] %vm2436, %v5713
        %5716 = vrot.lane.b32.xlu0 %v5637, 89
        %v5717 = vpop.permute.xlu0 %5716
        %5718 = vrot.lane.b32.xlu0 %v5638, 89
        %v5719 = vpop.permute.xlu0 %5718
        %v5720 = vsel %vm822, %v5717, %v5719
        %5722 = vst.msk [vmem:[#allocation4 + $0x90] sm:$0xff] %vm2436, %v5720
        %5723 = vrot.lane.b32.xlu0 %v5637, 88
        %v5724 = vpop.permute.xlu0 %5723
        %5725 = vrot.lane.b32.xlu0 %v5638, 88
        %v5726 = vpop.permute.xlu0 %5725
        %v5727 = vsel %vm857, %v5724, %v5726
        %5729 = vst.msk [vmem:[#allocation4 + $0x98] sm:$0xff] %vm2436, %v5727
        %5730 = vrot.lane.b32.xlu0 %v5637, 80
        %v5731 = vpop.permute.xlu0 %5730
        %5732 = vrot.lane.b32.xlu0 %v5638, 80
        %v5733 = vpop.permute.xlu0 %5732
        %vm5734 = vcmask 654336
        %v5735 = vsel %vm5734, %v5731, %v5733
        %5737 = vst.msk [vmem:[#allocation4 + $0xa0] sm:$0xff] %vm2436, %v5735
        %5738 = vrot.lane.b32.xlu0 %v5637, 79
        %v5739 = vpop.permute.xlu0 %5738
        %5740 = vrot.lane.b32.xlu0 %v5638, 79
        %v5741 = vpop.permute.xlu0 %5740
        %vm5742 = vcmask 646144
        %v5743 = vsel %vm5742, %v5739, %v5741
        %5745 = vst.msk [vmem:[#allocation4 + $0xa8] sm:$0xff] %vm2436, %v5743
        %5746 = vrot.lane.b32.xlu0 %v5637, 78
        %v5747 = vpop.permute.xlu0 %5746
        %5748 = vrot.lane.b32.xlu0 %v5638, 78
        %v5749 = vpop.permute.xlu0 %5748
        %vm5750 = vcmask 637952
        %v5751 = vsel %vm5750, %v5747, %v5749
        %5753 = vst.msk [vmem:[#allocation4 + $0xb0] sm:$0xff] %vm2436, %v5751
        %5754 = vrot.lane.b32.xlu0 %v5637, 77
        %v5755 = vpop.permute.xlu0 %5754
        %5756 = vrot.lane.b32.xlu0 %v5638, 77
        %v5757 = vpop.permute.xlu0 %5756
        %vm5758 = vcmask 629760
        %v5759 = vsel %vm5758, %v5755, %v5757
        %5761 = vst.msk [vmem:[#allocation4 + $0xb8] sm:$0xff] %vm2436, %v5759
        %5762 = vrot.lane.b32.xlu0 %v5637, 76
        %v5763 = vpop.permute.xlu0 %5762
        %5764 = vrot.lane.b32.xlu0 %v5638, 76
        %v5765 = vpop.permute.xlu0 %5764
        %vm5766 = vcmask 621568
        %v5767 = vsel %vm5766, %v5763, %v5765
        %5769 = vst.msk [vmem:[#allocation4 + $0xc0] sm:$0xff] %vm2436, %v5767
        %v5770 = vld [vmem:[%s7] sm:$0xff]
        %v5771 = vld [vmem:[%s7 + $0x8] sm:$0xff]
        %v5772 = vld [vmem:[%s7 + $0x10] sm:$0xff]
        %v5773 = vld [vmem:[%s7 + $0x18] sm:$0xff]
        %v5774 = vld [vmem:[#allocation4] sm:$0xff]
        %v5775 = vld [vmem:[#allocation4 + $0x8] sm:$0xff]
        %v5776 = vld [vmem:[#allocation4 + $0x10] sm:$0xff]
        %v5777 = vld [vmem:[#allocation4 + $0x18] sm:$0xff]
        %v5778 = vld [vmem:[#allocation4 + $0x20] sm:$0xff]
        %v5779 = vld [vmem:[#allocation4 + $0x28] sm:$0xff]
        %v5780 = vld [vmem:[#allocation4 + $0x30] sm:$0xff]
        %v5781 = vld [vmem:[#allocation4 + $0x38] sm:$0xff]
        %v5782 = vld [vmem:[#allocation4 + $0x40] sm:$0xff]
        %v5783 = vld [vmem:[#allocation4 + $0x48] sm:$0xff]
        %v5784 = vld [vmem:[#allocation4 + $0x50] sm:$0xff]
        %v5785 = vld [vmem:[#allocation4 + $0x58] sm:$0xff]
        %v5786 = vld [vmem:[#allocation4 + $0x60] sm:$0xff]
        %v5787 = vld [vmem:[#allocation4 + $0x68] sm:$0xff]
        %v5788 = vld [vmem:[#allocation4 + $0x70] sm:$0xff]
        %v5789 = vld [vmem:[#allocation4 + $0x78] sm:$0xff]
        %v5790 = vld [vmem:[#allocation4 + $0x80] sm:$0xff]
        %v5791 = vld [vmem:[#allocation4 + $0x88] sm:$0xff]
        %v5792 = vld [vmem:[#allocation4 + $0x90] sm:$0xff]
        %v5793 = vld [vmem:[#allocation4 + $0x98] sm:$0xff]
        %v5794 = vld [vmem:[#allocation4 + $0xa0] sm:$0xff]
        %v5795 = vld [vmem:[#allocation4 + $0xa8] sm:$0xff]
        %v5796 = vld [vmem:[#allocation4 + $0xb0] sm:$0xff]
        %v5797 = vld [vmem:[#allocation4 + $0xb8] sm:$0xff]
        %v5798 = vld [vmem:[#allocation4 + $0xc0] sm:$0xff]
        %v5799 = vld [vmem:[%s8] sm:$0xff]
        %v5800 = vld [vmem:[%s8 + $0x8] sm:$0xff]
        %5802 = vset.pattern.permute.xlu0 0
        %5803 = vperm.xlu0 %5802, %v5799
        %v5804 = vpop.permute.xlu0 %5803
        %5807 = vset.pattern.permute.xlu0 0
        %5808 = vperm.xlu0 %5807, %v5800
        %v5809 = vpop.permute.xlu0 %5808
        %v5815 = vunpack.c.l.b16 %v5770
        %v5816 = vunpack.c.h.b16 %v5770
        %v5817 = vunpack.c.l.b16 %v5771
        %v5818 = vunpack.c.h.b16 %v5771
        %v5819 = vunpack.c.l.b16 %v5772
        %v5820 = vunpack.c.h.b16 %v5772
        %v5821 = vunpack.c.l.b16 %v5773
        %v5822 = vunpack.c.h.b16 %v5773
        %v5823 = vpack.c.b16 %v5819, %v5815
        %v5824 = vpack.c.b16 %v5820, %v5816
        %v5825 = vpack.c.b16 %v5821, %v5817
        %v5826 = vpack.c.b16 %v5822, %v5818
        %vm5830 = vcmask 130048
        %v5832 = vsel %vm5830, %v5826, 0
        %5834 = vmatprep.subr.bf16.mxu0 0
        %5835 = vmatpush1.bf16.msra.mxu0 %v5774
        %5836 = vmatprep.subr.bf16.mxu0 0
        %5837 = vmatpush1.bf16.msra.mxu0 %v5775
        %5838 = vmatprep.subr.bf16.mxu0 0
        %5839 = vmatpush1.bf16.msra.mxu0 %v5776
        %5840 = vmatprep.subr.bf16.mxu0 0
        %5841 = vmatpush1.bf16.msra.mxu0 %v5777
        %5842 = vmatprep.subr.bf16.mxu0 0
        %5843 = vmatpush1.bf16.msra.mxu0 %v5778
        %5844 = vmatprep.subr.bf16.mxu0 0
        %5845 = vmatpush1.bf16.msra.mxu0 %v5779
        %5846 = vmatprep.subr.bf16.mxu0 0
        %5847 = vmatpush1.bf16.msra.mxu0 %v5780
        %5848 = vmatprep.subr.bf16.mxu0 0
        %5849 = vmatpush1.bf16.msra.mxu0 %v5781
        %5850 = vmatprep.subr.bf16.mxu0 0
        %5851 = vmatpush1.bf16.msra.mxu0 %v5782
        %5852 = vmatprep.subr.bf16.mxu0 0
        %5853 = vmatpush1.bf16.msra.mxu0 %v5783
        %5854 = vmatprep.subr.bf16.mxu0 0
        %5855 = vmatpush1.bf16.msra.mxu0 %v5784
        %5856 = vmatprep.subr.bf16.mxu0 0
        %5857 = vmatpush1.bf16.msra.mxu0 %v5785
        %5858 = vmatprep.subr.bf16.mxu0 0
        %5859 = vmatpush1.bf16.msra.mxu0 %v5786
        %5860 = vmatprep.subr.bf16.mxu0 0
        %5861 = vmatpush1.bf16.msra.mxu0 %v5787
        %5862 = vmatprep.subr.bf16.mxu0 0
        %5863 = vmatpush1.bf16.msra.mxu0 %v5788
        %5864 = vmatprep.subr.bf16.mxu0 0
        %5865 = vmatpush1.bf16.msra.mxu0 %v5789
        %5866 = vmatprep.mubr.bf16.mxu0 %v5824
        %5867 = vmatmul.mubr.bf16.gmra.mrb[0].mxu0 %v5823
        %v5868 = vpop.f32.mrb[0].mxu0
        %v5869 = vadd.f32 %v5804, %v5868
        %v5870 = vpop.f32.mrb[0].mxu0
        %v5871 = vpop.f32.mrb[0].mxu0
        %v5872 = vadd.f32 %v5809, %v5871
        %v5873 = vpop.f32.mrb[0].mxu0
        %5874 = vdwg.mxu0
        %5875 = vmatprep.subr.bf16.mxu0 0
        %5876 = vmatpush1.bf16.msra.mxu0 %v5790
        %5877 = vmatprep.subr.bf16.mxu0 0
        %5878 = vmatpush1.bf16.msra.mxu0 %v5791
        %5879 = vmatprep.subr.bf16.mxu0 0
        %5880 = vmatpush1.bf16.msra.mxu0 %v5792
        %5881 = vmatprep.subr.bf16.mxu0 0
        %5882 = vmatpush1.bf16.msra.mxu0 %v5793
        %5883 = vmatprep.subr.bf16.mxu0 0
        %5884 = vmatpush1.bf16.msra.mxu0 %v5794
        %5885 = vmatprep.subr.bf16.mxu0 0
        %5886 = vmatpush1.bf16.msra.mxu0 %v5795
        %5887 = vmatprep.subr.bf16.mxu0 0
        %5888 = vmatpush1.bf16.msra.mxu0 %v5796
        %5889 = vmatprep.subr.bf16.mxu0 0
        %5890 = vmatpush1.bf16.msra.mxu0 %v5797
        %5891 = vmatprep.subr.bf16.mxu0 0
        %5892 = vmatpush1.bf16.msra.mxu0 %v5798
        %5893 = vmatprep.subr.bf16.mxu0 0
        %5894 = vmatpush1.bf16.msra.mxu0 0
        %5895 = vmatprep.subr.bf16.mxu0 0
        %5896 = vmatpush1.bf16.msra.mxu0 0
        %5897 = vmatprep.subr.bf16.mxu0 0
        %5898 = vmatpush1.bf16.msra.mxu0 0
        %5899 = vmatprep.subr.bf16.mxu0 0
        %5900 = vmatpush1.bf16.msra.mxu0 0
        %5901 = vmatprep.subr.bf16.mxu0 0
        %5902 = vmatpush1.bf16.msra.mxu0 0
        %5903 = vmatprep.subr.bf16.mxu0 0
        %5904 = vmatpush1.bf16.msra.mxu0 0
        %5905 = vmatprep.subr.bf16.mxu0 0
        %5906 = vmatpush1.bf16.msra.mxu0 0
        %5907 = vmatprep.mubr.bf16.mxu0 %v5832
        %5908 = vmatmul.mubr.bf16.gmra.mrb[0].mxu0 %v5825
        %v5909 = vpop.f32.mrb[0].mxu0
        %v5910 = vadd.f32 %v5869, %v5909
        %v5911 = vpop.f32.mrb[0].mxu0
        %v5912 = vpop.f32.mrb[0].mxu0
        %v5913 = vadd.f32 %v5872, %v5912
        %v5914 = vpop.f32.mrb[0].mxu0
        %5915 = vdwg.mxu0
        %v5916 = vmax.f32 %v5910, 0.0
        %v5917 = vmax.f32 %v5913, 0.0
        %v5918 = vpack.c.bf16 %v5917, %v5916
        %v5919 = vld [vmem:[%s9] sm:$0xff]
        %v5920 = vld [vmem:[%s9 + $0x8] sm:$0xff]
        %v5921 = vld [vmem:[%s9 + $0x10] sm:$0xff]
        %v5922 = vld [vmem:[%s9 + $0x18] sm:$0xff]
        %v5923 = vld [vmem:[%s9 + $0x20] sm:$0xff]
        %v5924 = vld [vmem:[%s9 + $0x28] sm:$0xff]
        %v5925 = vld [vmem:[%s9 + $0x30] sm:$0xff]
        %v5926 = vld [vmem:[%s9 + $0x38] sm:$0xff]
        %v5927 = vld [vmem:[%s9 + $0x40] sm:$0xff]
        %v5928 = vld [vmem:[%s9 + $0x48] sm:$0xff]
        %v5929 = vld [vmem:[%s9 + $0x50] sm:$0xff]
        %v5930 = vld [vmem:[%s9 + $0x58] sm:$0x33]
        %v5943 = vunpack.c.l.b16 %v5919
        %v5944 = vunpack.c.h.b16 %v5919
        %v5945 = vunpack.c.l.b16 %v5920
        %v5946 = vunpack.c.h.b16 %v5920
        %v5947 = vunpack.c.l.b16 %v5921
        %v5948 = vunpack.c.h.b16 %v5921
        %v5949 = vunpack.c.l.b16 %v5922
        %v5950 = vunpack.c.h.b16 %v5922
        %v5951 = vunpack.c.l.b16 %v5923
        %v5952 = vunpack.c.h.b16 %v5923
        %v5953 = vunpack.c.l.b16 %v5924
        %v5954 = vunpack.c.h.b16 %v5924
        %v5955 = vunpack.c.l.b16 %v5925
        %v5956 = vunpack.c.h.b16 %v5925
        %v5957 = vunpack.c.l.b16 %v5926
        %v5958 = vunpack.c.h.b16 %v5926
        %v5959 = vunpack.c.l.b16 %v5927
        %v5960 = vunpack.c.h.b16 %v5927
        %v5961 = vunpack.c.l.b16 %v5928
        %v5962 = vunpack.c.h.b16 %v5928
        %v5963 = vunpack.c.l.b16 %v5929
        %v5964 = vunpack.c.h.b16 %v5929
        %v5965 = vunpack.c.l.b16 %v5930
        %v5966 = vunpack.c.h.b16 %v5930
        %v5967 = vpack.c.b16 %v5945, %v5943
        %v5968 = vpack.c.b16 %v5946, %v5944
        %v5969 = vpack.c.b16 %v5949, %v5947
        %v5970 = vpack.c.b16 %v5950, %v5948
        %v5971 = vpack.c.b16 %v5953, %v5951
        %v5972 = vpack.c.b16 %v5954, %v5952
        %v5973 = vpack.c.b16 %v5957, %v5955
        %v5974 = vpack.c.b16 %v5958, %v5956
        %v5975 = vpack.c.b16 %v5961, %v5959
        %v5976 = vpack.c.b16 %v5962, %v5960
        %v5977 = vpack.c.b16 %v5965, %v5963
        %v5978 = vpack.c.b16 %v5966, %v5964
        %v5990 = vsel %vm2436, %v5918, 0
        %v5993 = vsel %vm5544, %v5977, 0
        %v5996 = vsel %vm5544, %v5978, 0
        %5998 = vmatprep.subr.bf16.mxu0 %v5968
        %5999 = vmatpush1.bf16.msra.mxu0 %v5967
        %6000 = vmatprep.subr.bf16.mxu0 %v5970
        %6001 = vmatpush1.bf16.msra.mxu0 %v5969
        %6002 = vmatprep.subr.bf16.mxu0 %v5972
        %6003 = vmatpush1.bf16.msra.mxu0 %v5971
        %6004 = vmatprep.subr.bf16.mxu0 %v5974
        %6005 = vmatpush1.bf16.msra.mxu0 %v5973
        %6006 = vmatprep.subr.bf16.mxu0 %v5976
        %6007 = vmatpush1.bf16.msra.mxu0 %v5975
        %6008 = vmatprep.subr.bf16.mxu0 %v5996
        %6009 = vmatpush1.bf16.msra.mxu0 %v5993
        %6010 = vmatprep.subr.bf16.mxu0 0
        %6011 = vmatpush1.bf16.msra.mxu0 0
        %6012 = vmatprep.subr.bf16.mxu0 0
        %6013 = vmatpush1.bf16.msra.mxu0 0
        %6014 = vmatprep.subr.bf16.mxu0 0
        %6015 = vmatpush1.bf16.msra.mxu0 0
        %6016 = vmatprep.subr.bf16.mxu0 0
        %6017 = vmatpush1.bf16.msra.mxu0 0
        %6018 = vmatprep.subr.bf16.mxu0 0
        %6019 = vmatpush1.bf16.msra.mxu0 0
        %6020 = vmatprep.subr.bf16.mxu0 0
        %6021 = vmatpush1.bf16.msra.mxu0 0
        %6022 = vmatprep.subr.bf16.mxu0 0
        %6023 = vmatpush1.bf16.msra.mxu0 0
        %6024 = vmatprep.subr.bf16.mxu0 0
        %6025 = vmatpush1.bf16.msra.mxu0 0
        %6026 = vmatprep.subr.bf16.mxu0 0
        %6027 = vmatpush1.bf16.msra.mxu0 0
        %6028 = vmatprep.subr.bf16.mxu0 0
        %6029 = vmatpush1.bf16.msra.mxu0 0
        %6030 = vmatprep.mubr.bf16.mxu0 0
        %6031 = vmatmul.mubr.bf16.gmra.mrb[0].mxu0 %v5990
        %v6032 = vpop.f32.mrb[0].mxu0
        %v6033 = vadd.f32 0.0, %v6032
        %v6034 = vpop.f32.mrb[0].mxu0
        %v6035 = vadd.f32 0.0, %v6034
        %v6036 = vpop.f32.mrb[0].mxu0
        %v6037 = vadd.f32 0.0, %v6036
        %v6038 = vpop.f32.mrb[0].mxu0
        %v6039 = vadd.f32 0.0, %v6038
        %6040 = vdwg.mxu0
        %v6041 = vld [vmem:[%s10] sm:$0xff]
        %v6042 = vld [vmem:[%s10 + $0x8] sm:$0xff]
        %v6043 = vld [vmem:[%s10 + $0x10] sm:$0xff]
        %v6044 = vld [vmem:[%s10 + $0x18] sm:$0xff]
        %v6045 = vmul.f32 %v6033, %v6041
        %v6046 = vmul.f32 %v6035, %v6042
        %v6047 = vmul.f32 %v6037, %v6043
        %v6048 = vmul.f32 %v6039, %v6044
        %v6049 = vadd.f32 %v6045, %v6047
        %v6050 = vrot.slane %v6049, 4
        %v6051 = vadd.f32 %v6049, %v6050
        %v6052 = vrot.slane %v6051, 2
        %v6053 = vadd.f32 %v6051, %v6052
        %v6054 = vrot.slane %v6053, 1
        %v6055 = vadd.f32 %v6053, %v6054
        %v6056 = vadd.f32 %v6046, %v6048
        %v6057 = vrot.slane %v6056, 4
        %v6058 = vadd.f32 %v6056, %v6057
        %v6059 = vrot.slane %v6058, 2
        %v6060 = vadd.f32 %v6058, %v6059
        %v6061 = vrot.slane %v6060, 1
        %v6062 = vadd.f32 %v6060, %v6061
        %v6063 = vpack.c.bf16 %v6055, %v6055
        %v6064 = vpack.c.bf16 %v6062, %v6062
        %v6065 = vld [vmem:[%s11] sm:$0xf]
        %v6066 = vld [vmem:[%s11 + $0x4] sm:$0xf]
        %v6067 = vld [vmem:[%s11 + $0x8] sm:$0xf]
        %v6068 = vld [vmem:[%s11 + $0xc] sm:$0xf]
        %v6069 = vld [vmem:[%s11 + $0x10] sm:$0xf]
        %v6070 = vld [vmem:[%s11 + $0x14] sm:$0xf]
        %v6071 = vld [vmem:[%s11 + $0x18] sm:$0xf]
        %v6072 = vld [vmem:[%s11 + $0x1c] sm:$0xf]
        %v6073 = vld [vmem:[%s11 + $0x20] sm:$0xf]
        %v6074 = vld [vmem:[%s11 + $0x24] sm:$0xf]
        %v6075 = vld [vmem:[%s11 + $0x28] sm:$0xf]
        %v6076 = vld [vmem:[%s11 + $0x2c] sm:$0xf]
        %v6077 = vld [vmem:[%s11 + $0x30] sm:$0xf]
        %v6078 = vld [vmem:[%s11 + $0x34] sm:$0xf]
        %v6079 = vld [vmem:[%s11 + $0x38] sm:$0xf]
        %v6080 = vld [vmem:[%s11 + $0x3c] sm:$0xf]
        %v6081 = vld [vmem:[%s11 + $0x40] sm:$0xf]
        %v6082 = vld [vmem:[%s11 + $0x44] sm:$0xf]
        %v6083 = vld [vmem:[%s11 + $0x48] sm:$0xf]
        %v6084 = vld [vmem:[%s11 + $0x4c] sm:$0xf]
        %v6085 = vld [vmem:[%s11 + $0x50] sm:$0xf]
        %v6086 = vld [vmem:[%s11 + $0x54] sm:$0xf]
        %v6087 = vld [vmem:[%s11 + $0x58] sm:$0xf]
        %v6088 = vld [vmem:[%s11 + $0x5c] sm:$0xf]
        %v6089 = vld [vmem:[%s11 + $0x60] sm:$0xf]
        %v6090 = vld [vmem:[%s11 + $0x64] sm:$0xf]
        %v6091 = vld [vmem:[%s11 + $0x68] sm:$0xf]
        %v6092 = vld [vmem:[%s11 + $0x6c] sm:$0xf]
        %v6093 = vld [vmem:[%s11 + $0x70] sm:$0xf]
        %v6094 = vld [vmem:[%s11 + $0x74] sm:$0xf]
        %v6095 = vld [vmem:[%s11 + $0x78] sm:$0xf]
        %v6096 = vld [vmem:[%s11 + $0x7c] sm:$0xf]
        %v6097 = vld [vmem:[%s12] sm:$0x1]
        %v6130 = vunpack.c.l.b16 %v6065
        %v6131 = vunpack.c.l.b16 %v6066
        %v6132 = vunpack.c.l.b16 %v6067
        %v6133 = vunpack.c.l.b16 %v6068
        %v6134 = vunpack.c.l.b16 %v6069
        %v6135 = vunpack.c.l.b16 %v6070
        %v6136 = vunpack.c.l.b16 %v6071
        %v6137 = vunpack.c.l.b16 %v6072
        %v6138 = vunpack.c.l.b16 %v6073
        %v6139 = vunpack.c.l.b16 %v6074
        %v6140 = vunpack.c.l.b16 %v6075
        %v6141 = vunpack.c.l.b16 %v6076
        %v6142 = vunpack.c.l.b16 %v6077
        %v6143 = vunpack.c.l.b16 %v6078
        %v6144 = vunpack.c.l.b16 %v6079
        %v6145 = vunpack.c.l.b16 %v6080
        %v6146 = vunpack.c.l.b16 %v6081
        %v6147 = vunpack.c.l.b16 %v6082
        %v6148 = vunpack.c.l.b16 %v6083
        %v6149 = vunpack.c.l.b16 %v6084
        %v6150 = vunpack.c.l.b16 %v6085
        %v6151 = vunpack.c.l.b16 %v6086
        %v6152 = vunpack.c.l.b16 %v6087
        %v6153 = vunpack.c.l.b16 %v6088
        %v6154 = vunpack.c.l.b16 %v6089
        %v6155 = vunpack.c.l.b16 %v6090
        %v6156 = vunpack.c.l.b16 %v6091
        %v6157 = vunpack.c.l.b16 %v6092
        %v6158 = vunpack.c.l.b16 %v6093
        %v6159 = vunpack.c.l.b16 %v6094
        %v6160 = vunpack.c.l.b16 %v6095
        %v6161 = vunpack.c.l.b16 %v6096
        %v6162 = vpack.c.b16 %v6131, %v6130
        %v6163 = vpack.c.b16 %v6133, %v6132
        %v6164 = vpack.c.b16 %v6135, %v6134
        %v6165 = vpack.c.b16 %v6137, %v6136
        %v6166 = vpack.c.b16 %v6139, %v6138
        %v6167 = vpack.c.b16 %v6141, %v6140
        %v6168 = vpack.c.b16 %v6143, %v6142
        %v6169 = vpack.c.b16 %v6145, %v6144
        %v6170 = vpack.c.b16 %v6147, %v6146
        %v6171 = vpack.c.b16 %v6149, %v6148
        %v6172 = vpack.c.b16 %v6151, %v6150
        %v6173 = vpack.c.b16 %v6153, %v6152
        %v6174 = vpack.c.b16 %v6155, %v6154
        %v6175 = vpack.c.b16 %v6157, %v6156
        %v6176 = vpack.c.b16 %v6159, %v6158
        %v6177 = vpack.c.b16 %v6161, %v6160
        %6194 = vmatprep.subr.bf16.mxu0 0
        %6195 = vmatpush1.bf16.msra.mxu0 %v6162
        %6196 = vmatprep.subr.bf16.mxu0 0
        %6197 = vmatpush1.bf16.msra.mxu0 %v6163
        %6198 = vmatprep.subr.bf16.mxu0 0
        %6199 = vmatpush1.bf16.msra.mxu0 %v6164
        %6200 = vmatprep.subr.bf16.mxu0 0
        %6201 = vmatpush1.bf16.msra.mxu0 %v6165
        %6202 = vmatprep.subr.bf16.mxu0 0
        %6203 = vmatpush1.bf16.msra.mxu0 %v6166
        %6204 = vmatprep.subr.bf16.mxu0 0
        %6205 = vmatpush1.bf16.msra.mxu0 %v6167
        %6206 = vmatprep.subr.bf16.mxu0 0
        %6207 = vmatpush1.bf16.msra.mxu0 %v6168
        %6208 = vmatprep.subr.bf16.mxu0 0
        %6209 = vmatpush1.bf16.msra.mxu0 %v6169
        %6210 = vmatprep.subr.bf16.mxu0 0
        %6211 = vmatpush1.bf16.msra.mxu0 %v6170
        %6212 = vmatprep.subr.bf16.mxu0 0
        %6213 = vmatpush1.bf16.msra.mxu0 %v6171
        %6214 = vmatprep.subr.bf16.mxu0 0
        %6215 = vmatpush1.bf16.msra.mxu0 %v6172
        %6216 = vmatprep.subr.bf16.mxu0 0
        %6217 = vmatpush1.bf16.msra.mxu0 %v6173
        %6218 = vmatprep.subr.bf16.mxu0 0
        %6219 = vmatpush1.bf16.msra.mxu0 %v6174
        %6220 = vmatprep.subr.bf16.mxu0 0
        %6221 = vmatpush1.bf16.msra.mxu0 %v6175
        %6222 = vmatprep.subr.bf16.mxu0 0
        %6223 = vmatpush1.bf16.msra.mxu0 %v6176
        %6224 = vmatprep.subr.bf16.mxu0 0
        %6225 = vmatpush1.bf16.msra.mxu0 %v6177
        %6226 = vmatprep.mubr.bf16.mxu0 %v6064
        %6227 = vmatmul.mubr.bf16.gmra.mrb[0].mxu0 %v6063
        %v6228 = vpop.f32.mrb[0].mxu0
        %v6229 = vadd.f32 %v6097, %v6228
        %v6230 = vpop.f32.mrb[0].mxu0
        %v6231 = vpop.f32.mrb[0].mxu0
        %v6232 = vpop.f32.mrb[0].mxu0
        %6233 = vdwg.mxu0
        %v6234 = vmax.f32 %v6229, 0.0
        %v6235 = vpack.c.bf16 %v6234, %v6234
        %v6236 = vld [vmem:[%s13] sm:$0xf]
        %v6237 = vld [vmem:[%s13 + $0x4] sm:$0xf]
        %v6238 = vld [vmem:[%s13 + $0x8] sm:$0xf]
        %v6239 = vld [vmem:[%s13 + $0xc] sm:$0xf]
        %v6240 = vld [vmem:[%s13 + $0x10] sm:$0xf]
        %v6241 = vld [vmem:[%s13 + $0x14] sm:$0xf]
        %v6242 = vld [vmem:[%s13 + $0x18] sm:$0xf]
        %v6243 = vld [vmem:[%s13 + $0x1c] sm:$0xf]
        %v6244 = vld [vmem:[%s13 + $0x20] sm:$0xf]
        %v6245 = vld [vmem:[%s13 + $0x24] sm:$0xf]
        %v6246 = vld [vmem:[%s13 + $0x28] sm:$0xf]
        %v6247 = vld [vmem:[%s13 + $0x2c] sm:$0xf]
        %v6248 = vld [vmem:[%s13 + $0x30] sm:$0xf]
        %v6249 = vld [vmem:[%s13 + $0x34] sm:$0xf]
        %v6250 = vld [vmem:[%s13 + $0x38] sm:$0xf]
        %v6251 = vld [vmem:[%s14] sm:$0x1]
        %v6267 = vunpack.c.l.b16 %v6236
        %v6268 = vunpack.c.l.b16 %v6237
        %v6269 = vunpack.c.l.b16 %v6238
        %v6270 = vunpack.c.l.b16 %v6239
        %v6271 = vunpack.c.l.b16 %v6240
        %v6272 = vunpack.c.l.b16 %v6241
        %v6273 = vunpack.c.l.b16 %v6242
        %v6274 = vunpack.c.l.b16 %v6243
        %v6275 = vunpack.c.l.b16 %v6244
        %v6276 = vunpack.c.l.b16 %v6245
        %v6277 = vunpack.c.l.b16 %v6246
        %v6278 = vunpack.c.l.b16 %v6247
        %v6279 = vunpack.c.l.b16 %v6248
        %v6280 = vunpack.c.l.b16 %v6249
        %v6281 = vunpack.c.l.b16 %v6250
        %v6282 = vpack.c.b16 %v6268, %v6267
        %v6283 = vpack.c.b16 %v6270, %v6269
        %v6284 = vpack.c.b16 %v6272, %v6271
        %v6285 = vpack.c.b16 %v6274, %v6273
        %v6286 = vpack.c.b16 %v6276, %v6275
        %v6287 = vpack.c.b16 %v6278, %v6277
        %v6288 = vpack.c.b16 %v6280, %v6279
        %v6289 = vpack.c.b16 %v6281, %v6281
        %vm6297 = vcmask 982016
        %v6299 = vsel %vm6297, %v6235, 0
        %v6302 = vsel %vm2123, %v6289, 0
        %6304 = vmatprep.subr.bf16.mxu0 0
        %6305 = vmatpush1.bf16.msra.mxu0 %v6282
        %6306 = vmatprep.subr.bf16.mxu0 0
        %6307 = vmatpush1.bf16.msra.mxu0 %v6283
        %6308 = vmatprep.subr.bf16.mxu0 0
        %6309 = vmatpush1.bf16.msra.mxu0 %v6284
        %6310 = vmatprep.subr.bf16.mxu0 0
        %6311 = vmatpush1.bf16.msra.mxu0 %v6285
        %6312 = vmatprep.subr.bf16.mxu0 0
        %6313 = vmatpush1.bf16.msra.mxu0 %v6286
        %6314 = vmatprep.subr.bf16.mxu0 0
        %6315 = vmatpush1.bf16.msra.mxu0 %v6287
        %6316 = vmatprep.subr.bf16.mxu0 0
        %6317 = vmatpush1.bf16.msra.mxu0 %v6288
        %6318 = vmatprep.subr.bf16.mxu0 0
        %6319 = vmatpush1.bf16.msra.mxu0 %v6302
        %6320 = vmatprep.subr.bf16.mxu0 0
        %6321 = vmatpush1.bf16.msra.mxu0 0
        %6322 = vmatprep.subr.bf16.mxu0 0
        %6323 = vmatpush1.bf16.msra.mxu0 0
        %6324 = vmatprep.subr.bf16.mxu0 0
        %6325 = vmatpush1.bf16.msra.mxu0 0
        %6326 = vmatprep.subr.bf16.mxu0 0
        %6327 = vmatpush1.bf16.msra.mxu0 0
        %6328 = vmatprep.subr.bf16.mxu0 0
        %6329 = vmatpush1.bf16.msra.mxu0 0
        %6330 = vmatprep.subr.bf16.mxu0 0
        %6331 = vmatpush1.bf16.msra.mxu0 0
        %6332 = vmatprep.subr.bf16.mxu0 0
        %6333 = vmatpush1.bf16.msra.mxu0 0
        %6334 = vmatprep.subr.bf16.mxu0 0
        %6335 = vmatpush1.bf16.msra.mxu0 0
        %6336 = vmatprep.mubr.bf16.mxu0 0
        %6337 = vmatmul.mubr.bf16.gmra.mrb[0].mxu0 %v6299
        %v6338 = vpop.f32.mrb[0].mxu0
        %v6339 = vadd.f32 %v6251, %v6338
        %v6340 = vpop.f32.mrb[0].mxu0
        %v6341 = vpop.f32.mrb[0].mxu0
        %v6342 = vpop.f32.mrb[0].mxu0
        %6343 = vdwg.mxu0
        %v6344 = vmax.f32 %v6339, 0.0
        %v6345 = vpack.c.bf16 %v6344, %v6344
        %v6346 = vld [vmem:[%s15] sm:$0xf]
        %v6347 = vld [vmem:[%s15 + $0x4] sm:$0xf]
        %v6348 = vld [vmem:[%s15 + $0x8] sm:$0xf]
        %v6349 = vld [vmem:[%s15 + $0xc] sm:$0xf]
        %v6350 = vld [vmem:[%s15 + $0x10] sm:$0xf]
        %v6351 = vld [vmem:[%s15 + $0x14] sm:$0xf]
        %v6352 = vld [vmem:[%s15 + $0x18] sm:$0xf]
        %v6353 = vld [vmem:[%s15 + $0x1c] sm:$0xf]
        %v6354 = vld [vmem:[%s15 + $0x20] sm:$0xf]
        %v6355 = vld [vmem:[%s15 + $0x24] sm:$0xf]
        %v6356 = vld [vmem:[%s15 + $0x28] sm:$0x3]
        %v6357 = vld [vmem:[%s16] sm:$0x1]
        %v6369 = vunpack.c.l.b16 %v6346
        %v6370 = vunpack.c.l.b16 %v6347
        %v6371 = vunpack.c.l.b16 %v6348
        %v6372 = vunpack.c.l.b16 %v6349
        %v6373 = vunpack.c.l.b16 %v6350
        %v6374 = vunpack.c.l.b16 %v6351
        %v6375 = vunpack.c.l.b16 %v6352
        %v6376 = vunpack.c.l.b16 %v6353
        %v6377 = vunpack.c.l.b16 %v6354
        %v6378 = vunpack.c.l.b16 %v6355
        %v6379 = vunpack.c.l.b16 %v6356
        %v6380 = vpack.c.b16 %v6370, %v6369
        %v6381 = vpack.c.b16 %v6372, %v6371
        %v6382 = vpack.c.b16 %v6374, %v6373
        %v6383 = vpack.c.b16 %v6376, %v6375
        %v6384 = vpack.c.b16 %v6378, %v6377
        %v6385 = vpack.c.b16 %v6379, %v6379
        %vm6391 = vcmask 687104
        %v6393 = vsel %vm6391, %v6345, 0
        %vm6395 = vcmask 1041408
        %v6397 = vsel %vm6395, %v6385, 0
        %6399 = vmatprep.subr.bf16.mxu0 0
        %6400 = vmatpush1.bf16.msra.mxu0 %v6380
        %6401 = vmatprep.subr.bf16.mxu0 0
        %6402 = vmatpush1.bf16.msra.mxu0 %v6381
        %6403 = vmatprep.subr.bf16.mxu0 0
        %6404 = vmatpush1.bf16.msra.mxu0 %v6382
        %6405 = vmatprep.subr.bf16.mxu0 0
        %6406 = vmatpush1.bf16.msra.mxu0 %v6383
        %6407 = vmatprep.subr.bf16.mxu0 0
        %6408 = vmatpush1.bf16.msra.mxu0 %v6384
        %6409 = vmatprep.subr.bf16.mxu0 0
        %6410 = vmatpush1.bf16.msra.mxu0 %v6397
        %6411 = vmatprep.subr.bf16.mxu0 0
        %6412 = vmatpush1.bf16.msra.mxu0 0
        %6413 = vmatprep.subr.bf16.mxu0 0
        %6414 = vmatpush1.bf16.msra.mxu0 0
        %6415 = vmatprep.subr.bf16.mxu0 0
        %6416 = vmatpush1.bf16.msra.mxu0 0
        %6417 = vmatprep.subr.bf16.mxu0 0
        %6418 = vmatpush1.bf16.msra.mxu0 0
        %6419 = vmatprep.subr.bf16.mxu0 0
        %6420 = vmatpush1.bf16.msra.mxu0 0
        %6421 = vmatprep.subr.bf16.mxu0 0
        %6422 = vmatpush1.bf16.msra.mxu0 0
        %6423 = vmatprep.subr.bf16.mxu0 0
        %6424 = vmatpush1.bf16.msra.mxu0 0
        %6425 = vmatprep.subr.bf16.mxu0 0
        %6426 = vmatpush1.bf16.msra.mxu0 0
        %6427 = vmatprep.subr.bf16.mxu0 0
        %6428 = vmatpush1.bf16.msra.mxu0 0
        %6429 = vmatprep.subr.bf16.mxu0 0
        %6430 = vmatpush1.bf16.msra.mxu0 0
        %6431 = vmatprep.mubr.bf16.mxu0 0
        %6432 = vmatmul.mubr.bf16.gmra.mrb[0].mxu0 %v6393
        %v6433 = vpop.f32.mrb[0].mxu0
        %v6434 = vadd.f32 %v6357, %v6433
        %v6435 = vpop.f32.mrb[0].mxu0
        %v6436 = vpop.f32.mrb[0].mxu0
        %v6437 = vpop.f32.mrb[0].mxu0
        %6438 = vdwg.mxu0
        %vm6439 = vcmask 73728
        %6440 = vst.msk [vmem:[%s540] sm:$0x1] %vm6439, %v6434
        %s6441 = sand.u32 %s401, 1
        %s6442 = scalar_lea.sflag [#allocation6], %s6441
        %s6443 = sand.u32 %s401, 1
        %s6444 = scalar_lea.vmem [#allocation5], %s6443
        // Predicated region
        $region89: #{net_forward.1} parent=87 // pred_check
          %p6445 = pneg %p411
        $region90: #{net_forward.1} parent=87 // pred_check_branch
          %6447 = sbr.rel (%p6445) target = $region92
        $region91: #{net_forward.1} parent=87 // pred_region
          %s6449 = ssub.s32 16, 16
          %6450 = vsyncadd %s6442, %s6449
          %s6451 = smul.addr %s31, 16
          %s6452 = scalar_lea.hbm %s17, %s6451
          %s6454 = sshll.u32 %s6444, 4
          %s6455 = int_to_ptr.vmem [resolvable:$true] %s6454
          %6457 = dma.vmem_to_hbm [thread:$0]  %s6455, 16, %s6452, %s6442
        $region92: #{net_forward.1} parent=87 // pred_fallthru
          _
      $region88: #{net_forward.1} parent=5 // pred_fallthru
        _
      %p6458 = scmp.le.s32.totalorder 2, %s26
      // Predicated region
      $region93: #{net_forward.1} parent=5 // pred_check
        %p6459 = pneg %p6458
      $region94: #{net_forward.1} parent=5 // pred_check_branch
        %6461 = sbr.rel (%p6459) target = $region96
      $region95: #{net_forward.1} parent=5 // pred_region
        %s6462 = ssub.s32 %s26, 2
        // Predicated region
        $region97: #{net_forward.1} parent=95 // pred_check
          %p6463 = pneg %p417
        $region98: #{net_forward.1} parent=95 // pred_check_branch
          %6465 = sbr.rel (%p6463) target = $region100
        $region99: #{net_forward.1} parent=95 // pred_region
          %s6466 = sand.u32 %s402, 1
          %s6467 = scalar_lea.sflag [#allocation6], %s6466
          %s6468 = sand.u32 %s402, 1
          %s6469 = scalar_lea.vmem [#allocation5], %s6468
          %6470 = dma.done %s6467, 16
        $region100: #{net_forward.1} parent=95 // pred_fallthru
          _
      $region96: #{net_forward.1} parent=5 // pred_fallthru
        _
    $region6: #{net_forward.1} parent=1 // loop_footer
      %s30 = sadd.s32 1, %s26
    $region7: #{net_forward.1} parent=1 // loop_footer_branch
      %25 = sbr.rel target = $region3
    $region8: #{net_forward.1} parent=1 // loop_exit
      _
    %6471 = vsyncpa [#allocation6], 1
    %s6472 = scalar_lea.sflag [#allocation6], 1
    %6473 = vsyncpa %s6472, 1

</llo_original>
